<compile_context>
chip_gen: v7x
topology: tpu7x:2x2x1
jax: 0.10.0
libtpu: 0.0.40
codegen_flags: <defaults>
</compile_context>

<pallas_src>
import jax
import jax.numpy as jnp
from jax.experimental import pallas as pl
from jax.experimental.pallas import tpu as pltpu

MODEL_DIM = 512
FFN_DIM = 1024
LN_EPS = 1e-5


def ffn_kernel(x_ref, w1_ref, b1_ref, w2_ref, b2_ref, g_ref, beta_ref, o_ref):
    # x_ref: (TM, MODEL_DIM) f32 tile of tokens.
    x = x_ref[...]                                   # f32, kept for residual/LN
    x_bf = x.astype(jnp.bfloat16)                    # bf16 MXU operand

    # fc1 + ReLU (bf16 x bf16 -> f32 accumulate)
    h = jnp.dot(x_bf, w1_ref[...], preferred_element_type=jnp.float32)
    h = jnp.maximum(h + b1_ref[...], 0.0)

    # fc2 (bf16 operands, f32 accumulate) + bias + residual in f32
    y = jnp.dot(h.astype(jnp.bfloat16), w2_ref[...],
                preferred_element_type=jnp.float32)
    y = y + b2_ref[...] + x

    # LayerNorm over model_dim, single pass (sum and sum of squares)
    inv_d = 1.0 / MODEL_DIM
    mean = jnp.sum(y, axis=-1, keepdims=True) * inv_d
    mean_sq = jnp.sum(y * y, axis=-1, keepdims=True) * inv_d
    var = mean_sq - mean * mean
    inv_std = jax.lax.rsqrt(var + LN_EPS)
    out = (y - mean) * inv_std * g_ref[...] + beta_ref[...]

    o_ref[...] = out.astype(o_ref.dtype)


def feed_forward(x, w1, b1, w2, b2, gamma, beta, *, tm=256):
    """x: (batch, seq, MODEL_DIM) float32. Returns same shape/dtype.

    Weights w1: (512, 1024), w2: (1024, 512) stored as (in, out), f32; they are
    cast to bf16 here (MXU operands). Biases / gamma / beta stay f32.
    """
    batch, seq, d = x.shape
    assert d == MODEL_DIM
    n = batch * seq
    n_pad = pl.cdiv(n, tm) * tm                      # pad rows up to tile size

    x2 = x.reshape(n, d)
    if n_pad != n:
        x2 = jnp.pad(x2, ((0, n_pad - n), (0, 0)))

    w1_bf = w1.astype(jnp.bfloat16)
    w2_bf = w2.astype(jnp.bfloat16)
    b1_2 = b1.reshape(1, FFN_DIM).astype(jnp.float32)
    b2_2 = b2.reshape(1, MODEL_DIM).astype(jnp.float32)
    g_2 = gamma.reshape(1, MODEL_DIM).astype(jnp.float32)
    beta_2 = beta.reshape(1, MODEL_DIM).astype(jnp.float32)

    grid = (n_pad // tm,)

    out = pl.pallas_call(
        ffn_kernel,
        out_shape=jax.ShapeDtypeStruct((n_pad, MODEL_DIM), x.dtype),
        grid_spec=pltpu.PrefetchScalarGridSpec(
            num_scalar_prefetch=0,
            grid=grid,
            in_specs=[
                pl.BlockSpec((tm, MODEL_DIM), lambda i: (i, 0)),       # x tile
                pl.BlockSpec((MODEL_DIM, FFN_DIM), lambda i: (0, 0)),  # w1 (resident)
                pl.BlockSpec((1, FFN_DIM), lambda i: (0, 0)),          # b1
                pl.BlockSpec((FFN_DIM, MODEL_DIM), lambda i: (0, 0)),  # w2 (resident)
                pl.BlockSpec((1, MODEL_DIM), lambda i: (0, 0)),        # b2
                pl.BlockSpec((1, MODEL_DIM), lambda i: (0, 0)),        # gamma
                pl.BlockSpec((1, MODEL_DIM), lambda i: (0, 0)),        # beta
            ],
            out_specs=pl.BlockSpec((tm, MODEL_DIM), lambda i: (i, 0)),
        ),
        compiler_params=pltpu.CompilerParams(
            dimension_semantics=("parallel",),        # rows shard across TCs
            vmem_limit_bytes=32 * 1024 * 1024,        # valid on v5e/v6e/v7x
        ),
    )(x2, w1_bf, b1_2, w2_bf, b2_2, g_2, beta_2)

    return out[:n].reshape(batch, seq, d)


def reference_f32(x, w1, b1, w2, b2, gamma, beta):
    h = jnp.maximum(jnp.dot(x, w1) + b1, 0.0)
    y = jnp.dot(h, w2) + b2 + x
    mean = jnp.mean(y, axis=-1, keepdims=True)
    var = jnp.mean((y - mean) ** 2, axis=-1, keepdims=True)
    return (y - mean) * jax.lax.rsqrt(var + LN_EPS) * gamma + beta


def reference_bf16(x, w1, b1, w2, b2, gamma, beta):
    # Mirrors the kernel's bf16-operand / f32-accumulate matmul path.
    xb = x.astype(jnp.bfloat16)
    w1b = w1.astype(jnp.bfloat16)
    w2b = w2.astype(jnp.bfloat16)
    h = jnp.dot(xb, w1b, preferred_element_type=jnp.float32) + b1
    h = jnp.maximum(h, 0.0)
    y = jnp.dot(h.astype(jnp.bfloat16), w2b,
                preferred_element_type=jnp.float32) + b2 + x
    mean = jnp.mean(y, axis=-1, keepdims=True)
    var = jnp.mean((y - mean) ** 2, axis=-1, keepdims=True)
    return (y - mean) * jax.lax.rsqrt(var + LN_EPS) * gamma + beta


if __name__ == "__main__":
    key = jax.random.PRNGKey(0)
    k_x, k_w1, k_b1, k_w2, k_b2 = jax.random.split(key, 5)

    batch, seq = 2, 8
    x = jax.random.normal(k_x, (batch, seq, MODEL_DIM), dtype=jnp.float32)

    # Deterministic parameter init (uniform like PyTorch Linear defaults),
    # stored as (in, out) for x @ W.
    lim1 = 1.0 / (MODEL_DIM ** 0.5)
    lim2 = 1.0 / (FFN_DIM ** 0.5)
    w1 = jax.random.uniform(k_w1, (MODEL_DIM, FFN_DIM), jnp.float32, -lim1, lim1)
    b1 = jax.random.uniform(k_b1, (FFN_DIM,), jnp.float32, -lim1, lim1)
    w2 = jax.random.uniform(k_w2, (FFN_DIM, MODEL_DIM), jnp.float32, -lim2, lim2)
    b2 = jax.random.uniform(k_b2, (MODEL_DIM,), jnp.float32, -lim2, lim2)
    gamma = jnp.ones((MODEL_DIM,), jnp.float32)   # nn.LayerNorm defaults
    beta = jnp.zeros((MODEL_DIM,), jnp.float32)

    out = feed_forward(x, w1, b1, w2, b2, gamma, beta)
    out = jax.block_until_ready(out)
    assert out.shape == (batch, seq, MODEL_DIM)

    # Tight check vs a reference that uses the same bf16-operand matmul path.
    ref_bf = reference_bf16(x, w1, b1, w2, b2, gamma, beta)
    assert jnp.allclose(out, ref_bf, atol=2e-3, rtol=2e-3), \
        "mismatch vs bf16-operand reference"

    # Loose sanity check vs the pure-f32 reference (bf16 operand rounding).
    ref_f32 = reference_f32(x, w1, b1, w2, b2, gamma, beta)
    assert jnp.allclose(out, ref_f32, atol=5e-2, rtol=5e-2), \
        "mismatch vs f32 reference"

    print("KERNEL_OK")
</pallas_src>

<mosaic_0001>
module attributes {stable_mosaic.version = 11 : i64} {
  func.func @ffn_kernel(%arg0: i32, %arg1: memref<256x512xf32, #tpu.memory_space<vmem>>, %arg2: memref<512x1024xbf16, #tpu.memory_space<vmem>>, %arg3: memref<1x1024xf32, #tpu.memory_space<vmem>>, %arg4: memref<1024x512xbf16, #tpu.memory_space<vmem>>, %arg5: memref<1x512xf32, #tpu.memory_space<vmem>>, %arg6: memref<1x512xf32, #tpu.memory_space<vmem>>, %arg7: memref<1x512xf32, #tpu.memory_space<vmem>>, %arg8: memref<256x512xf32, #tpu.memory_space<vmem>>) attributes {dimension_semantics = [#tpu.dimension_semantics<parallel>], iteration_bounds = array<i64: 1>, scalar_prefetch = 0 : i64, scratch_operands = 0 : i64, tpu.core_type = #tpu.core_type<tc>, window_params = [{transform_indices = @transform_0, window_bounds = array<i64: 256, 512>}, {pipeline_mode = #tpu.pipeline_mode<synchronous>, transform_indices = @transform_1, window_bounds = array<i64: 512, 1024>}, {pipeline_mode = #tpu.pipeline_mode<synchronous>, transform_indices = @transform_2, window_bounds = array<i64: 1, 1024>}, {pipeline_mode = #tpu.pipeline_mode<synchronous>, transform_indices = @transform_3, window_bounds = array<i64: 1024, 512>}, {pipeline_mode = #tpu.pipeline_mode<synchronous>, transform_indices = @transform_4, window_bounds = array<i64: 1, 512>}, {pipeline_mode = #tpu.pipeline_mode<synchronous>, transform_indices = @transform_5, window_bounds = array<i64: 1, 512>}, {pipeline_mode = #tpu.pipeline_mode<synchronous>, transform_indices = @transform_6, window_bounds = array<i64: 1, 512>}, {transform_indices = @transform_7, window_bounds = array<i64: 256, 512>}]} {
    %c0 = arith.constant 0 : index
    %c0_0 = arith.constant 0 : index
    %0 = vector.load %arg1[%c0, %c0_0] : memref<256x512xf32, #tpu.memory_space<vmem>>, vector<256x512xf32>
    %1 = arith.truncf %0 : vector<256x512xf32> to vector<256x512xbf16>
    %c0_1 = arith.constant 0 : index
    %c0_2 = arith.constant 0 : index
    %2 = vector.load %arg2[%c0_1, %c0_2] : memref<512x1024xbf16, #tpu.memory_space<vmem>>, vector<512x1024xbf16>
    %cst = arith.constant dense<0.000000e+00> : vector<256x1024xf32>
    %3 = tpu.matmul %1, %2, %cst {dimension_numbers = #tpu.dot_dimension_numbers<[1], [0], [0], [1], [0, 0, 1, 1], [], []>} : vector<256x512xbf16>, vector<512x1024xbf16>, vector<256x1024xf32> -> vector<256x1024xf32>
    %c0_3 = arith.constant 0 : index
    %c0_4 = arith.constant 0 : index
    %4 = vector.load %arg3[%c0_3, %c0_4] : memref<1x1024xf32, #tpu.memory_space<vmem>>, vector<1x1024xf32>
    %5 = vector.broadcast %4 : vector<1x1024xf32> to vector<256x1024xf32>
    %6 = arith.addf %3, %5 : vector<256x1024xf32>
    %cst_5 = arith.constant 0.000000e+00 : f32
    %7 = vector.broadcast %cst_5 : f32 to vector<256x1024xf32>
    %8 = arith.maximumf %6, %7 : vector<256x1024xf32>
    %9 = arith.truncf %8 : vector<256x1024xf32> to vector<256x1024xbf16>
    %c0_6 = arith.constant 0 : index
    %c0_7 = arith.constant 0 : index
    %10 = vector.load %arg4[%c0_6, %c0_7] : memref<1024x512xbf16, #tpu.memory_space<vmem>>, vector<1024x512xbf16>
    %cst_8 = arith.constant dense<0.000000e+00> : vector<256x512xf32>
    %11 = tpu.matmul %9, %10, %cst_8 {dimension_numbers = #tpu.dot_dimension_numbers<[1], [0], [0], [1], [0, 0, 1, 1], [], []>} : vector<256x1024xbf16>, vector<1024x512xbf16>, vector<256x512xf32> -> vector<256x512xf32>
    %c0_9 = arith.constant 0 : index
    %c0_10 = arith.constant 0 : index
    %12 = vector.load %arg5[%c0_9, %c0_10] : memref<1x512xf32, #tpu.memory_space<vmem>>, vector<1x512xf32>
    %13 = vector.broadcast %12 : vector<1x512xf32> to vector<256x512xf32>
    %14 = arith.addf %11, %13 : vector<256x512xf32>
    %15 = arith.addf %14, %0 : vector<256x512xf32>
    %cst_11 = arith.constant dense<0.000000e+00> : vector<256xf32>
    %16 = vector.multi_reduction <add>, %15, %cst_11 [1] : vector<256x512xf32> to vector<256xf32>
    %17 = vector.shape_cast %16 : vector<256xf32> to vector<256x1xf32>
    %cst_12 = arith.constant 0.001953125 : f32
    %18 = vector.broadcast %cst_12 : f32 to vector<256x1xf32>
    %19 = arith.mulf %17, %18 : vector<256x1xf32>
    %20 = arith.mulf %15, %15 : vector<256x512xf32>
    %cst_13 = arith.constant dense<0.000000e+00> : vector<256xf32>
    %21 = vector.multi_reduction <add>, %20, %cst_13 [1] : vector<256x512xf32> to vector<256xf32>
    %22 = vector.shape_cast %21 : vector<256xf32> to vector<256x1xf32>
    %cst_14 = arith.constant 0.001953125 : f32
    %23 = vector.broadcast %cst_14 : f32 to vector<256x1xf32>
    %24 = arith.mulf %22, %23 : vector<256x1xf32>
    %25 = arith.mulf %19, %19 : vector<256x1xf32>
    %26 = arith.subf %24, %25 : vector<256x1xf32>
    %cst_15 = arith.constant 9.99999974E-6 : f32
    %27 = vector.broadcast %cst_15 : f32 to vector<256x1xf32>
    %28 = arith.addf %26, %27 : vector<256x1xf32>
    %29 = math.rsqrt %28 : vector<256x1xf32>
    %30 = vector.broadcast %19 : vector<256x1xf32> to vector<256x512xf32>
    %31 = arith.subf %15, %30 : vector<256x512xf32>
    %32 = vector.broadcast %29 : vector<256x1xf32> to vector<256x512xf32>
    %33 = arith.mulf %31, %32 : vector<256x512xf32>
    %c0_16 = arith.constant 0 : index
    %c0_17 = arith.constant 0 : index
    %34 = vector.load %arg6[%c0_16, %c0_17] : memref<1x512xf32, #tpu.memory_space<vmem>>, vector<1x512xf32>
    %35 = vector.broadcast %34 : vector<1x512xf32> to vector<256x512xf32>
    %36 = arith.mulf %33, %35 : vector<256x512xf32>
    %c0_18 = arith.constant 0 : index
    %c0_19 = arith.constant 0 : index
    %37 = vector.load %arg7[%c0_18, %c0_19] : memref<1x512xf32, #tpu.memory_space<vmem>>, vector<1x512xf32>
    %38 = vector.broadcast %37 : vector<1x512xf32> to vector<256x512xf32>
    %39 = arith.addf %36, %38 : vector<256x512xf32>
    %c0_20 = arith.constant 0 : index
    %c0_21 = arith.constant 0 : index
    %40 = vector.load %arg8[%c0_20, %c0_21] : memref<256x512xf32, #tpu.memory_space<vmem>>, vector<256x512xf32>
    tpu.vector_store %arg8[%c0_20, %c0_21], %39 {strides = array<i32>} : memref<256x512xf32, #tpu.memory_space<vmem>>, vector<256x512xf32>,
    return
  }
  func.func @transform_0(%arg0: i32) -> (i32, i32) {
    %c0_i32 = arith.constant 0 : i32
    %c0_i32_0 = arith.constant 0 : i32
    return %arg0, %c0_i32 : i32, i32
  }
  func.func @transform_1(%arg0: i32) -> (i32, i32) {
    %c0_i32 = arith.constant 0 : i32
    %c0_i32_0 = arith.constant 0 : i32
    %c0_i32_1 = arith.constant 0 : i32
    return %c0_i32, %c0_i32_0 : i32, i32
  }
  func.func @transform_2(%arg0: i32) -> (i32, i32) {
    %c0_i32 = arith.constant 0 : i32
    %c0_i32_0 = arith.constant 0 : i32
    %c0_i32_1 = arith.constant 0 : i32
    return %c0_i32, %c0_i32_0 : i32, i32
  }
  func.func @transform_3(%arg0: i32) -> (i32, i32) {
    %c0_i32 = arith.constant 0 : i32
    %c0_i32_0 = arith.constant 0 : i32
    %c0_i32_1 = arith.constant 0 : i32
    return %c0_i32, %c0_i32_0 : i32, i32
  }
  func.func @transform_4(%arg0: i32) -> (i32, i32) {
    %c0_i32 = arith.constant 0 : i32
    %c0_i32_0 = arith.constant 0 : i32
    %c0_i32_1 = arith.constant 0 : i32
    return %c0_i32, %c0_i32_0 : i32, i32
  }
  func.func @transform_5(%arg0: i32) -> (i32, i32) {
    %c0_i32 = arith.constant 0 : i32
    %c0_i32_0 = arith.constant 0 : i32
    %c0_i32_1 = arith.constant 0 : i32
    return %c0_i32, %c0_i32_0 : i32, i32
  }
  func.func @transform_6(%arg0: i32) -> (i32, i32) {
    %c0_i32 = arith.constant 0 : i32
    %c0_i32_0 = arith.constant 0 : i32
    %c0_i32_1 = arith.constant 0 : i32
    return %c0_i32, %c0_i32_0 : i32, i32
  }
  func.func @transform_7(%arg0: i32) -> (i32, i32) {
    %c0_i32 = arith.constant 0 : i32
    %c0_i32_0 = arith.constant 0 : i32
    return %arg0, %c0_i32 : i32, i32
  }
}

</mosaic_0001>

<llo_original>
// kernel: tpu_custom_call.1
$region0: #{tpu_custom_call.1}
  #allocation0 [shape = 'u32[]', space=smem, size = 0x4, offset = 0x4, fixed_abs, tag = 'smem constant byte address 0x4 - core index']
  #allocation1 [shape = 'u32[144,128]{1,0:T(1,128)}', space=vmem, size = 0x12000, scoped, tag = 'internal scratch']
  %s0 = inlined_call_operand.hbm [shape: f32[256,512], index: 0, kind: input, shape index: {}]
  %s1 = inlined_call_operand.hbm [shape: bf16[512,1024], index: 1, kind: input, shape index: {}]
  %s2 = inlined_call_operand.hbm [shape: f32[1,1024], index: 2, kind: input, shape index: {}]
  %s3 = inlined_call_operand.hbm [shape: bf16[1024,512], index: 3, kind: input, shape index: {}]
  %s4 = inlined_call_operand.vmem [shape: f32[1,512], index: 4, kind: input, shape index: {}]
  %s5 = inlined_call_operand.vmem [shape: f32[1,512], index: 5, kind: input, shape index: {}]
  %s6 = inlined_call_operand.vmem [shape: f32[1,512], index: 6, kind: input, shape index: {}]
  %s7 = inlined_call_operand.hbm [shape: f32[256,512], index: 7, kind: output, shape index: {}]
  %s8 = sld [smem:[#allocation0]]
  $region54: #{tpu_custom_call.1} parent=0
    _
  %s10 = ssub.s32 1, %s8
  %s11 = scalar_select 0, %s10, %s8
  $region1: #{tpu_custom_call.1} parent=0
    #allocation2 [shape = 'u8[524288]{0}', space=vmem, size = 0x80000, scoped, tag = 'input window, operand 0, single buffered']
    #allocation3 [shape = 's32[1]{0}', space=sflag, size = 0x4, scoped, tag = 'scoped memory for tpu_custom_call.1']
    #allocation4 [shape = 's32[1]{0}', space=sflag, size = 0x4, scoped, tag = 'scoped memory for tpu_custom_call.1']
    #allocation5 [shape = 'u8[1048576]{0}', space=vmem, size = 0x100000, scoped, tag = 'input window, operand 1, single buffered']
    #allocation6 [shape = 's32[1]{0}', space=sflag, size = 0x4, scoped, tag = 'scoped memory for tpu_custom_call.1']
    #allocation7 [shape = 'u8[4096]{0}', space=vmem, size = 0x1000, scoped, tag = 'input window, operand 2, single buffered']
    #allocation8 [shape = 'u8[1048576]{0}', space=vmem, size = 0x100000, scoped, tag = 'input window, operand 3, single buffered']
    #allocation9 [shape = 's32[1]{0}', space=sflag, size = 0x4, scoped, tag = 'scoped memory for tpu_custom_call.1']
    #allocation10 [shape = 'u8[524288]{0}', space=vmem, size = 0x80000, scoped, tag = 'output window, operand 0, single buffered']
    %12 = vsyncpa [#allocation3], 0
    %13 = vsyncpa [#allocation6], 0
    %14 = vsyncpa [#allocation9], 0
    %15 = vsyncpa [#allocation4], 0
    // Predicated region
    $region2: #{tpu_custom_call.1} parent=1 // pred_check
      _
    $region3: #{tpu_custom_call.1} parent=1 // pred_check_branch
      %17 = sbr.rel (0) target = $region5
    $region4: #{tpu_custom_call.1} parent=1 // pred_region
      %s19 = ssub.s32 16384, 16384
      %20 = vsyncadd [#allocation3], %s19
      %s21 = sshll.u32 [#allocation2], 4
      %s22 = int_to_ptr.vmem [resolvable:$true] %s21
      %27 = dma.hbm_to_vmem [thread:$0]  %s0, 16384, %s22, [#allocation3], 512, 512, 32
    $region5: #{tpu_custom_call.1} parent=1 // pred_fallthru
      _
    // Predicated region
    $region6: #{tpu_custom_call.1} parent=1 // pred_check
      _
    $region7: #{tpu_custom_call.1} parent=1 // pred_check_branch
      %29 = sbr.rel (0) target = $region9
    $region8: #{tpu_custom_call.1} parent=1 // pred_region
      %s31 = ssub.s32 32768, 32768
      %32 = vsyncadd [#allocation6], %s31
      %s33 = sshll.u32 [#allocation5], 4
      %s34 = int_to_ptr.vmem [resolvable:$true] %s33
      %39 = dma.hbm_to_vmem [thread:$0]  %s1, 32768, %s34, [#allocation6], 512, 512, 32
    $region9: #{tpu_custom_call.1} parent=1 // pred_fallthru
      _
    // Predicated region
    $region10: #{tpu_custom_call.1} parent=1 // pred_check
      _
    $region11: #{tpu_custom_call.1} parent=1 // pred_check_branch
      %41 = sbr.rel (0) target = $region13
    $region12: #{tpu_custom_call.1} parent=1 // pred_region
      %s43 = ssub.s32 128, 128
      %44 = vsyncadd [#allocation6], %s43
      %s46 = sshll.u32 [#allocation7], 4
      %s47 = int_to_ptr.vmem [resolvable:$true] %s46
      %49 = dma.hbm_to_vmem [thread:$0]  %s2, 128, %s47, [#allocation6]
    $region13: #{tpu_custom_call.1} parent=1 // pred_fallthru
      _
    // Predicated region
    $region14: #{tpu_custom_call.1} parent=1 // pred_check
      _
    $region15: #{tpu_custom_call.1} parent=1 // pred_check_branch
      %51 = sbr.rel (0) target = $region17
    $region16: #{tpu_custom_call.1} parent=1 // pred_region
      %s53 = ssub.s32 32768, 32768
      %54 = vsyncadd [#allocation9], %s53
      %s55 = sshll.u32 [#allocation8], 4
      %s56 = int_to_ptr.vmem [resolvable:$true] %s55
      %61 = dma.hbm_to_vmem [thread:$0]  %s3, 32768, %s56, [#allocation9], 256, 256, 16
    $region17: #{tpu_custom_call.1} parent=1 // pred_fallthru
      _
    // Predicated region
    $region18: #{tpu_custom_call.1} parent=1 // pred_check
      _
    $region19: #{tpu_custom_call.1} parent=1 // pred_check_branch
      %63 = sbr.rel (0) target = $region21
    $region20: #{tpu_custom_call.1} parent=1 // pred_region
      _
    $region21: #{tpu_custom_call.1} parent=1 // pred_fallthru
      _
    // Predicated region
    $region22: #{tpu_custom_call.1} parent=1 // pred_check
      _
    $region23: #{tpu_custom_call.1} parent=1 // pred_check_branch
      %65 = sbr.rel (0) target = $region25
    $region24: #{tpu_custom_call.1} parent=1 // pred_region
      _
    $region25: #{tpu_custom_call.1} parent=1 // pred_fallthru
      _
    // Predicated region
    $region26: #{tpu_custom_call.1} parent=1 // pred_check
      _
    $region27: #{tpu_custom_call.1} parent=1 // pred_check_branch
      %67 = sbr.rel (0) target = $region29
    $region28: #{tpu_custom_call.1} parent=1 // pred_region
      _
    $region29: #{tpu_custom_call.1} parent=1 // pred_fallthru
      _
    // Predicated region
    $region30: #{tpu_custom_call.1} parent=1 // pred_check
      _
    $region31: #{tpu_custom_call.1} parent=1 // pred_check_branch
      %69 = sbr.rel (0) target = $region33
    $region32: #{tpu_custom_call.1} parent=1 // pred_region
      %70 = dma.done [#allocation3], 16384
    $region33: #{tpu_custom_call.1} parent=1 // pred_fallthru
      _
    // Predicated region
    $region34: #{tpu_custom_call.1} parent=1 // pred_check
      _
    $region35: #{tpu_custom_call.1} parent=1 // pred_check_branch
      %72 = sbr.rel (0) target = $region37
    $region36: #{tpu_custom_call.1} parent=1 // pred_region
      %73 = dma.done [#allocation6], 32768
    $region37: #{tpu_custom_call.1} parent=1 // pred_fallthru
      _
    // Predicated region
    $region38: #{tpu_custom_call.1} parent=1 // pred_check
      _
    $region39: #{tpu_custom_call.1} parent=1 // pred_check_branch
      %75 = sbr.rel (0) target = $region41
    $region40: #{tpu_custom_call.1} parent=1 // pred_region
      %76 = dma.done [#allocation6], 128
    $region41: #{tpu_custom_call.1} parent=1 // pred_fallthru
      _
    // Predicated region
    $region42: #{tpu_custom_call.1} parent=1 // pred_check
      _
    $region43: #{tpu_custom_call.1} parent=1 // pred_check_branch
      %78 = sbr.rel (0) target = $region45
    $region44: #{tpu_custom_call.1} parent=1 // pred_region
      %79 = dma.done [#allocation9], 32768
    $region45: #{tpu_custom_call.1} parent=1 // pred_fallthru
      _
    %v80 = vld [vmem:[#allocation2] sm:$0xff]
    %v81 = vld [vmem:[#allocation2 + $0x8] sm:$0xff]
    %v82 = vld [vmem:[#allocation2 + $0x10] sm:$0xff]
    %v83 = vld [vmem:[#allocation2 + $0x18] sm:$0xff]
    %v84 = vld [vmem:[#allocation2 + $0x20] sm:$0xff]
    %v85 = vld [vmem:[#allocation2 + $0x28] sm:$0xff]
    %v86 = vld [vmem:[#allocation2 + $0x30] sm:$0xff]
    %v87 = vld [vmem:[#allocation2 + $0x38] sm:$0xff]
    %v88 = vld [vmem:[#allocation2 + $0x40] sm:$0xff]
    %v89 = vld [vmem:[#allocation2 + $0x48] sm:$0xff]
    %v90 = vld [vmem:[#allocation2 + $0x50] sm:$0xff]
    %v91 = vld [vmem:[#allocation2 + $0x58] sm:$0xff]
    %v92 = vld [vmem:[#allocation2 + $0x60] sm:$0xff]
    %v93 = vld [vmem:[#allocation2 + $0x68] sm:$0xff]
    %v94 = vld [vmem:[#allocation2 + $0x70] sm:$0xff]
    %v95 = vld [vmem:[#allocation2 + $0x78] sm:$0xff]
    %v96 = vld [vmem:[#allocation2 + $0x80] sm:$0xff]
    %v97 = vld [vmem:[#allocation2 + $0x88] sm:$0xff]
    %v98 = vld [vmem:[#allocation2 + $0x90] sm:$0xff]
    %v99 = vld [vmem:[#allocation2 + $0x98] sm:$0xff]
    %v100 = vld [vmem:[#allocation2 + $0xa0] sm:$0xff]
    %v101 = vld [vmem:[#allocation2 + $0xa8] sm:$0xff]
    %v102 = vld [vmem:[#allocation2 + $0xb0] sm:$0xff]
    %v103 = vld [vmem:[#allocation2 + $0xb8] sm:$0xff]
    %v104 = vld [vmem:[#allocation2 + $0xc0] sm:$0xff]
    %v105 = vld [vmem:[#allocation2 + $0xc8] sm:$0xff]
    %v106 = vld [vmem:[#allocation2 + $0xd0] sm:$0xff]
    %v107 = vld [vmem:[#allocation2 + $0xd8] sm:$0xff]
    %v108 = vld [vmem:[#allocation2 + $0xe0] sm:$0xff]
    %v109 = vld [vmem:[#allocation2 + $0xe8] sm:$0xff]
    %v110 = vld [vmem:[#allocation2 + $0xf0] sm:$0xff]
    %v111 = vld [vmem:[#allocation2 + $0xf8] sm:$0xff]
    %v112 = vld [vmem:[#allocation2 + $0x100] sm:$0xff]
    %v113 = vld [vmem:[#allocation2 + $0x108] sm:$0xff]
    %v114 = vld [vmem:[#allocation2 + $0x110] sm:$0xff]
    %v115 = vld [vmem:[#allocation2 + $0x118] sm:$0xff]
    %v116 = vld [vmem:[#allocation2 + $0x120] sm:$0xff]
    %v117 = vld [vmem:[#allocation2 + $0x128] sm:$0xff]
    %v118 = vld [vmem:[#allocation2 + $0x130] sm:$0xff]
    %v119 = vld [vmem:[#allocation2 + $0x138] sm:$0xff]
    %v120 = vld [vmem:[#allocation2 + $0x140] sm:$0xff]
    %v121 = vld [vmem:[#allocation2 + $0x148] sm:$0xff]
    %v122 = vld [vmem:[#allocation2 + $0x150] sm:$0xff]
    %v123 = vld [vmem:[#allocation2 + $0x158] sm:$0xff]
    %v124 = vld [vmem:[#allocation2 + $0x160] sm:$0xff]
    %v125 = vld [vmem:[#allocation2 + $0x168] sm:$0xff]
    %v126 = vld [vmem:[#allocation2 + $0x170] sm:$0xff]
    %v127 = vld [vmem:[#allocation2 + $0x178] sm:$0xff]
    %v128 = vld [vmem:[#allocation2 + $0x180] sm:$0xff]
    %v129 = vld [vmem:[#allocation2 + $0x188] sm:$0xff]
    %v130 = vld [vmem:[#allocation2 + $0x190] sm:$0xff]
    %v131 = vld [vmem:[#allocation2 + $0x198] sm:$0xff]
    %v132 = vld [vmem:[#allocation2 + $0x1a0] sm:$0xff]
    %v133 = vld [vmem:[#allocation2 + $0x1a8] sm:$0xff]
    %v134 = vld [vmem:[#allocation2 + $0x1b0] sm:$0xff]
    %v135 = vld [vmem:[#allocation2 + $0x1b8] sm:$0xff]
    %v136 = vld [vmem:[#allocation2 + $0x1c0] sm:$0xff]
    %v137 = vld [vmem:[#allocation2 + $0x1c8] sm:$0xff]
    %v138 = vld [vmem:[#allocation2 + $0x1d0] sm:$0xff]
    %v139 = vld [vmem:[#allocation2 + $0x1d8] sm:$0xff]
    %v140 = vld [vmem:[#allocation2 + $0x1e0] sm:$0xff]
    %v141 = vld [vmem:[#allocation2 + $0x1e8] sm:$0xff]
    %v142 = vld [vmem:[#allocation2 + $0x1f0] sm:$0xff]
    %v143 = vld [vmem:[#allocation2 + $0x1f8] sm:$0xff]
    %v144 = vld [vmem:[#allocation2 + $0x200] sm:$0xff]
    %v145 = vld [vmem:[#allocation2 + $0x208] sm:$0xff]
    %v146 = vld [vmem:[#allocation2 + $0x210] sm:$0xff]
    %v147 = vld [vmem:[#allocation2 + $0x218] sm:$0xff]
    %v148 = vld [vmem:[#allocation2 + $0x220] sm:$0xff]
    %v149 = vld [vmem:[#allocation2 + $0x228] sm:$0xff]
    %v150 = vld [vmem:[#allocation2 + $0x230] sm:$0xff]
    %v151 = vld [vmem:[#allocation2 + $0x238] sm:$0xff]
    %v152 = vld [vmem:[#allocation2 + $0x240] sm:$0xff]
    %v153 = vld [vmem:[#allocation2 + $0x248] sm:$0xff]
    %v154 = vld [vmem:[#allocation2 + $0x250] sm:$0xff]
    %v155 = vld [vmem:[#allocation2 + $0x258] sm:$0xff]
    %v156 = vld [vmem:[#allocation2 + $0x260] sm:$0xff]
    %v157 = vld [vmem:[#allocation2 + $0x268] sm:$0xff]
    %v158 = vld [vmem:[#allocation2 + $0x270] sm:$0xff]
    %v159 = vld [vmem:[#allocation2 + $0x278] sm:$0xff]
    %v160 = vld [vmem:[#allocation2 + $0x280] sm:$0xff]
    %v161 = vld [vmem:[#allocation2 + $0x288] sm:$0xff]
    %v162 = vld [vmem:[#allocation2 + $0x290] sm:$0xff]
    %v163 = vld [vmem:[#allocation2 + $0x298] sm:$0xff]
    %v164 = vld [vmem:[#allocation2 + $0x2a0] sm:$0xff]
    %v165 = vld [vmem:[#allocation2 + $0x2a8] sm:$0xff]
    %v166 = vld [vmem:[#allocation2 + $0x2b0] sm:$0xff]
    %v167 = vld [vmem:[#allocation2 + $0x2b8] sm:$0xff]
    %v168 = vld [vmem:[#allocation2 + $0x2c0] sm:$0xff]
    %v169 = vld [vmem:[#allocation2 + $0x2c8] sm:$0xff]
    %v170 = vld [vmem:[#allocation2 + $0x2d0] sm:$0xff]
    %v171 = vld [vmem:[#allocation2 + $0x2d8] sm:$0xff]
    %v172 = vld [vmem:[#allocation2 + $0x2e0] sm:$0xff]
    %v173 = vld [vmem:[#allocation2 + $0x2e8] sm:$0xff]
    %v174 = vld [vmem:[#allocation2 + $0x2f0] sm:$0xff]
    %v175 = vld [vmem:[#allocation2 + $0x2f8] sm:$0xff]
    %v176 = vld [vmem:[#allocation2 + $0x300] sm:$0xff]
    %v177 = vld [vmem:[#allocation2 + $0x308] sm:$0xff]
    %v178 = vld [vmem:[#allocation2 + $0x310] sm:$0xff]
    %v179 = vld [vmem:[#allocation2 + $0x318] sm:$0xff]
    %v180 = vld [vmem:[#allocation2 + $0x320] sm:$0xff]
    %v181 = vld [vmem:[#allocation2 + $0x328] sm:$0xff]
    %v182 = vld [vmem:[#allocation2 + $0x330] sm:$0xff]
    %v183 = vld [vmem:[#allocation2 + $0x338] sm:$0xff]
    %v184 = vld [vmem:[#allocation2 + $0x340] sm:$0xff]
    %v185 = vld [vmem:[#allocation2 + $0x348] sm:$0xff]
    %v186 = vld [vmem:[#allocation2 + $0x350] sm:$0xff]
    %v187 = vld [vmem:[#allocation2 + $0x358] sm:$0xff]
    %v188 = vld [vmem:[#allocation2 + $0x360] sm:$0xff]
    %v189 = vld [vmem:[#allocation2 + $0x368] sm:$0xff]
    %v190 = vld [vmem:[#allocation2 + $0x370] sm:$0xff]
    %v191 = vld [vmem:[#allocation2 + $0x378] sm:$0xff]
    %v192 = vld [vmem:[#allocation2 + $0x380] sm:$0xff]
    %v193 = vld [vmem:[#allocation2 + $0x388] sm:$0xff]
    %v194 = vld [vmem:[#allocation2 + $0x390] sm:$0xff]
    %v195 = vld [vmem:[#allocation2 + $0x398] sm:$0xff]
    %v196 = vld [vmem:[#allocation2 + $0x3a0] sm:$0xff]
    %v197 = vld [vmem:[#allocation2 + $0x3a8] sm:$0xff]
    %v198 = vld [vmem:[#allocation2 + $0x3b0] sm:$0xff]
    %v199 = vld [vmem:[#allocation2 + $0x3b8] sm:$0xff]
    %v200 = vld [vmem:[#allocation2 + $0x3c0] sm:$0xff]
    %v201 = vld [vmem:[#allocation2 + $0x3c8] sm:$0xff]
    %v202 = vld [vmem:[#allocation2 + $0x3d0] sm:$0xff]
    %v203 = vld [vmem:[#allocation2 + $0x3d8] sm:$0xff]
    %v204 = vld [vmem:[#allocation2 + $0x3e0] sm:$0xff]
    %v205 = vld [vmem:[#allocation2 + $0x3e8] sm:$0xff]
    %v206 = vld [vmem:[#allocation2 + $0x3f0] sm:$0xff]
    %v207 = vld [vmem:[#allocation2 + $0x3f8] sm:$0xff]
    %v208 = vpack.c.bf16 %v84, %v80
    %v209 = vpack.c.bf16 %v85, %v81
    %v210 = vpack.c.bf16 %v86, %v82
    %v211 = vpack.c.bf16 %v87, %v83
    %v212 = vpack.c.bf16 %v92, %v88
    %v213 = vpack.c.bf16 %v93, %v89
    %v214 = vpack.c.bf16 %v94, %v90
    %v215 = vpack.c.bf16 %v95, %v91
    %v216 = vpack.c.bf16 %v100, %v96
    %v217 = vpack.c.bf16 %v101, %v97
    %v218 = vpack.c.bf16 %v102, %v98
    %v219 = vpack.c.bf16 %v103, %v99
    %v220 = vpack.c.bf16 %v108, %v104
    %v221 = vpack.c.bf16 %v109, %v105
    %v222 = vpack.c.bf16 %v110, %v106
    %v223 = vpack.c.bf16 %v111, %v107
    %v224 = vpack.c.bf16 %v116, %v112
    %v225 = vpack.c.bf16 %v117, %v113
    %v226 = vpack.c.bf16 %v118, %v114
    %v227 = vpack.c.bf16 %v119, %v115
    %v228 = vpack.c.bf16 %v124, %v120
    %v229 = vpack.c.bf16 %v125, %v121
    %v230 = vpack.c.bf16 %v126, %v122
    %v231 = vpack.c.bf16 %v127, %v123
    %v232 = vpack.c.bf16 %v132, %v128
    %v233 = vpack.c.bf16 %v133, %v129
    %v234 = vpack.c.bf16 %v134, %v130
    %v235 = vpack.c.bf16 %v135, %v131
    %v236 = vpack.c.bf16 %v140, %v136
    %v237 = vpack.c.bf16 %v141, %v137
    %v238 = vpack.c.bf16 %v142, %v138
    %v239 = vpack.c.bf16 %v143, %v139
    %v240 = vpack.c.bf16 %v148, %v144
    %v241 = vpack.c.bf16 %v149, %v145
    %v242 = vpack.c.bf16 %v150, %v146
    %v243 = vpack.c.bf16 %v151, %v147
    %v244 = vpack.c.bf16 %v156, %v152
    %v245 = vpack.c.bf16 %v157, %v153
    %v246 = vpack.c.bf16 %v158, %v154
    %v247 = vpack.c.bf16 %v159, %v155
    %v248 = vpack.c.bf16 %v164, %v160
    %v249 = vpack.c.bf16 %v165, %v161
    %v250 = vpack.c.bf16 %v166, %v162
    %v251 = vpack.c.bf16 %v167, %v163
    %v252 = vpack.c.bf16 %v172, %v168
    %v253 = vpack.c.bf16 %v173, %v169
    %v254 = vpack.c.bf16 %v174, %v170
    %v255 = vpack.c.bf16 %v175, %v171
    %v256 = vpack.c.bf16 %v180, %v176
    %v257 = vpack.c.bf16 %v181, %v177
    %v258 = vpack.c.bf16 %v182, %v178
    %v259 = vpack.c.bf16 %v183, %v179
    %v260 = vpack.c.bf16 %v188, %v184
    %v261 = vpack.c.bf16 %v189, %v185
    %v262 = vpack.c.bf16 %v190, %v186
    %v263 = vpack.c.bf16 %v191, %v187
    %v264 = vpack.c.bf16 %v196, %v192
    %v265 = vpack.c.bf16 %v197, %v193
    %v266 = vpack.c.bf16 %v198, %v194
    %v267 = vpack.c.bf16 %v199, %v195
    %v268 = vpack.c.bf16 %v204, %v200
    %v269 = vpack.c.bf16 %v205, %v201
    %v270 = vpack.c.bf16 %v206, %v202
    %v271 = vpack.c.bf16 %v207, %v203
    %v272 = vld [vmem:[#allocation5] sm:$0xff]
    %v273 = vld [vmem:[#allocation5 + $0x8] sm:$0xff]
    %v274 = vld [vmem:[#allocation5 + $0x10] sm:$0xff]
    %v275 = vld [vmem:[#allocation5 + $0x18] sm:$0xff]
    %v276 = vld [vmem:[#allocation5 + $0x20] sm:$0xff]
    %v277 = vld [vmem:[#allocation5 + $0x28] sm:$0xff]
    %v278 = vld [vmem:[#allocation5 + $0x30] sm:$0xff]
    %v279 = vld [vmem:[#allocation5 + $0x38] sm:$0xff]
    %v280 = vld [vmem:[#allocation5 + $0x40] sm:$0xff]
    %v281 = vld [vmem:[#allocation5 + $0x48] sm:$0xff]
    %v282 = vld [vmem:[#allocation5 + $0x50] sm:$0xff]
    %v283 = vld [vmem:[#allocation5 + $0x58] sm:$0xff]
    %v284 = vld [vmem:[#allocation5 + $0x60] sm:$0xff]
    %v285 = vld [vmem:[#allocation5 + $0x68] sm:$0xff]
    %v286 = vld [vmem:[#allocation5 + $0x70] sm:$0xff]
    %v287 = vld [vmem:[#allocation5 + $0x78] sm:$0xff]
    %v288 = vld [vmem:[#allocation5 + $0x80] sm:$0xff]
    %v289 = vld [vmem:[#allocation5 + $0x88] sm:$0xff]
    %v290 = vld [vmem:[#allocation5 + $0x90] sm:$0xff]
    %v291 = vld [vmem:[#allocation5 + $0x98] sm:$0xff]
    %v292 = vld [vmem:[#allocation5 + $0xa0] sm:$0xff]
    %v293 = vld [vmem:[#allocation5 + $0xa8] sm:$0xff]
    %v294 = vld [vmem:[#allocation5 + $0xb0] sm:$0xff]
    %v295 = vld [vmem:[#allocation5 + $0xb8] sm:$0xff]
    %v296 = vld [vmem:[#allocation5 + $0xc0] sm:$0xff]
    %v297 = vld [vmem:[#allocation5 + $0xc8] sm:$0xff]
    %v298 = vld [vmem:[#allocation5 + $0xd0] sm:$0xff]
    %v299 = vld [vmem:[#allocation5 + $0xd8] sm:$0xff]
    %v300 = vld [vmem:[#allocation5 + $0xe0] sm:$0xff]
    %v301 = vld [vmem:[#allocation5 + $0xe8] sm:$0xff]
    %v302 = vld [vmem:[#allocation5 + $0xf0] sm:$0xff]
    %v303 = vld [vmem:[#allocation5 + $0xf8] sm:$0xff]
    %v304 = vld [vmem:[#allocation5 + $0x100] sm:$0xff]
    %v305 = vld [vmem:[#allocation5 + $0x108] sm:$0xff]
    %v306 = vld [vmem:[#allocation5 + $0x110] sm:$0xff]
    %v307 = vld [vmem:[#allocation5 + $0x118] sm:$0xff]
    %v308 = vld [vmem:[#allocation5 + $0x120] sm:$0xff]
    %v309 = vld [vmem:[#allocation5 + $0x128] sm:$0xff]
    %v310 = vld [vmem:[#allocation5 + $0x130] sm:$0xff]
    %v311 = vld [vmem:[#allocation5 + $0x138] sm:$0xff]
    %v312 = vld [vmem:[#allocation5 + $0x140] sm:$0xff]
    %v313 = vld [vmem:[#allocation5 + $0x148] sm:$0xff]
    %v314 = vld [vmem:[#allocation5 + $0x150] sm:$0xff]
    %v315 = vld [vmem:[#allocation5 + $0x158] sm:$0xff]
    %v316 = vld [vmem:[#allocation5 + $0x160] sm:$0xff]
    %v317 = vld [vmem:[#allocation5 + $0x168] sm:$0xff]
    %v318 = vld [vmem:[#allocation5 + $0x170] sm:$0xff]
    %v319 = vld [vmem:[#allocation5 + $0x178] sm:$0xff]
    %v320 = vld [vmem:[#allocation5 + $0x180] sm:$0xff]
    %v321 = vld [vmem:[#allocation5 + $0x188] sm:$0xff]
    %v322 = vld [vmem:[#allocation5 + $0x190] sm:$0xff]
    %v323 = vld [vmem:[#allocation5 + $0x198] sm:$0xff]
    %v324 = vld [vmem:[#allocation5 + $0x1a0] sm:$0xff]
    %v325 = vld [vmem:[#allocation5 + $0x1a8] sm:$0xff]
    %v326 = vld [vmem:[#allocation5 + $0x1b0] sm:$0xff]
    %v327 = vld [vmem:[#allocation5 + $0x1b8] sm:$0xff]
    %v328 = vld [vmem:[#allocation5 + $0x1c0] sm:$0xff]
    %v329 = vld [vmem:[#allocation5 + $0x1c8] sm:$0xff]
    %v330 = vld [vmem:[#allocation5 + $0x1d0] sm:$0xff]
    %v331 = vld [vmem:[#allocation5 + $0x1d8] sm:$0xff]
    %v332 = vld [vmem:[#allocation5 + $0x1e0] sm:$0xff]
    %v333 = vld [vmem:[#allocation5 + $0x1e8] sm:$0xff]
    %v334 = vld [vmem:[#allocation5 + $0x1f0] sm:$0xff]
    %v335 = vld [vmem:[#allocation5 + $0x1f8] sm:$0xff]
    %v336 = vld [vmem:[#allocation5 + $0x200] sm:$0xff]
    %v337 = vld [vmem:[#allocation5 + $0x208] sm:$0xff]
    %v338 = vld [vmem:[#allocation5 + $0x210] sm:$0xff]
    %v339 = vld [vmem:[#allocation5 + $0x218] sm:$0xff]
    %v340 = vld [vmem:[#allocation5 + $0x220] sm:$0xff]
    %v341 = vld [vmem:[#allocation5 + $0x228] sm:$0xff]
    %v342 = vld [vmem:[#allocation5 + $0x230] sm:$0xff]
    %v343 = vld [vmem:[#allocation5 + $0x238] sm:$0xff]
    %v344 = vld [vmem:[#allocation5 + $0x240] sm:$0xff]
    %v345 = vld [vmem:[#allocation5 + $0x248] sm:$0xff]
    %v346 = vld [vmem:[#allocation5 + $0x250] sm:$0xff]
    %v347 = vld [vmem:[#allocation5 + $0x258] sm:$0xff]
    %v348 = vld [vmem:[#allocation5 + $0x260] sm:$0xff]
    %v349 = vld [vmem:[#allocation5 + $0x268] sm:$0xff]
    %v350 = vld [vmem:[#allocation5 + $0x270] sm:$0xff]
    %v351 = vld [vmem:[#allocation5 + $0x278] sm:$0xff]
    %v352 = vld [vmem:[#allocation5 + $0x280] sm:$0xff]
    %v353 = vld [vmem:[#allocation5 + $0x288] sm:$0xff]
    %v354 = vld [vmem:[#allocation5 + $0x290] sm:$0xff]
    %v355 = vld [vmem:[#allocation5 + $0x298] sm:$0xff]
    %v356 = vld [vmem:[#allocation5 + $0x2a0] sm:$0xff]
    %v357 = vld [vmem:[#allocation5 + $0x2a8] sm:$0xff]
    %v358 = vld [vmem:[#allocation5 + $0x2b0] sm:$0xff]
    %v359 = vld [vmem:[#allocation5 + $0x2b8] sm:$0xff]
    %v360 = vld [vmem:[#allocation5 + $0x2c0] sm:$0xff]
    %v361 = vld [vmem:[#allocation5 + $0x2c8] sm:$0xff]
    %v362 = vld [vmem:[#allocation5 + $0x2d0] sm:$0xff]
    %v363 = vld [vmem:[#allocation5 + $0x2d8] sm:$0xff]
    %v364 = vld [vmem:[#allocation5 + $0x2e0] sm:$0xff]
    %v365 = vld [vmem:[#allocation5 + $0x2e8] sm:$0xff]
    %v366 = vld [vmem:[#allocation5 + $0x2f0] sm:$0xff]
    %v367 = vld [vmem:[#allocation5 + $0x2f8] sm:$0xff]
    %v368 = vld [vmem:[#allocation5 + $0x300] sm:$0xff]
    %v369 = vld [vmem:[#allocation5 + $0x308] sm:$0xff]
    %v370 = vld [vmem:[#allocation5 + $0x310] sm:$0xff]
    %v371 = vld [vmem:[#allocation5 + $0x318] sm:$0xff]
    %v372 = vld [vmem:[#allocation5 + $0x320] sm:$0xff]
    %v373 = vld [vmem:[#allocation5 + $0x328] sm:$0xff]
    %v374 = vld [vmem:[#allocation5 + $0x330] sm:$0xff]
    %v375 = vld [vmem:[#allocation5 + $0x338] sm:$0xff]
    %v376 = vld [vmem:[#allocation5 + $0x340] sm:$0xff]
    %v377 = vld [vmem:[#allocation5 + $0x348] sm:$0xff]
    %v378 = vld [vmem:[#allocation5 + $0x350] sm:$0xff]
    %v379 = vld [vmem:[#allocation5 + $0x358] sm:$0xff]
    %v380 = vld [vmem:[#allocation5 + $0x360] sm:$0xff]
    %v381 = vld [vmem:[#allocation5 + $0x368] sm:$0xff]
    %v382 = vld [vmem:[#allocation5 + $0x370] sm:$0xff]
    %v383 = vld [vmem:[#allocation5 + $0x378] sm:$0xff]
    %v384 = vld [vmem:[#allocation5 + $0x380] sm:$0xff]
    %v385 = vld [vmem:[#allocation5 + $0x388] sm:$0xff]
    %v386 = vld [vmem:[#allocation5 + $0x390] sm:$0xff]
    %v387 = vld [vmem:[#allocation5 + $0x398] sm:$0xff]
    %v388 = vld [vmem:[#allocation5 + $0x3a0] sm:$0xff]
    %v389 = vld [vmem:[#allocation5 + $0x3a8] sm:$0xff]
    %v390 = vld [vmem:[#allocation5 + $0x3b0] sm:$0xff]
    %v391 = vld [vmem:[#allocation5 + $0x3b8] sm:$0xff]
    %v392 = vld [vmem:[#allocation5 + $0x3c0] sm:$0xff]
    %v393 = vld [vmem:[#allocation5 + $0x3c8] sm:$0xff]
    %v394 = vld [vmem:[#allocation5 + $0x3d0] sm:$0xff]
    %v395 = vld [vmem:[#allocation5 + $0x3d8] sm:$0xff]
    %v396 = vld [vmem:[#allocation5 + $0x3e0] sm:$0xff]
    %v397 = vld [vmem:[#allocation5 + $0x3e8] sm:$0xff]
    %v398 = vld [vmem:[#allocation5 + $0x3f0] sm:$0xff]
    %v399 = vld [vmem:[#allocation5 + $0x3f8] sm:$0xff]
    %v400 = vld [vmem:[#allocation5 + $0x400] sm:$0xff]
    %v401 = vld [vmem:[#allocation5 + $0x408] sm:$0xff]
    %v402 = vld [vmem:[#allocation5 + $0x410] sm:$0xff]
    %v403 = vld [vmem:[#allocation5 + $0x418] sm:$0xff]
    %v404 = vld [vmem:[#allocation5 + $0x420] sm:$0xff]
    %v405 = vld [vmem:[#allocation5 + $0x428] sm:$0xff]
    %v406 = vld [vmem:[#allocation5 + $0x430] sm:$0xff]
    %v407 = vld [vmem:[#allocation5 + $0x438] sm:$0xff]
    %v408 = vld [vmem:[#allocation5 + $0x440] sm:$0xff]
    %v409 = vld [vmem:[#allocation5 + $0x448] sm:$0xff]
    %v410 = vld [vmem:[#allocation5 + $0x450] sm:$0xff]
    %v411 = vld [vmem:[#allocation5 + $0x458] sm:$0xff]
    %v412 = vld [vmem:[#allocation5 + $0x460] sm:$0xff]
    %v413 = vld [vmem:[#allocation5 + $0x468] sm:$0xff]
    %v414 = vld [vmem:[#allocation5 + $0x470] sm:$0xff]
    %v415 = vld [vmem:[#allocation5 + $0x478] sm:$0xff]
    %v416 = vld [vmem:[#allocation5 + $0x480] sm:$0xff]
    %v417 = vld [vmem:[#allocation5 + $0x488] sm:$0xff]
    %v418 = vld [vmem:[#allocation5 + $0x490] sm:$0xff]
    %v419 = vld [vmem:[#allocation5 + $0x498] sm:$0xff]
    %v420 = vld [vmem:[#allocation5 + $0x4a0] sm:$0xff]
    %v421 = vld [vmem:[#allocation5 + $0x4a8] sm:$0xff]
    %v422 = vld [vmem:[#allocation5 + $0x4b0] sm:$0xff]
    %v423 = vld [vmem:[#allocation5 + $0x4b8] sm:$0xff]
    %v424 = vld [vmem:[#allocation5 + $0x4c0] sm:$0xff]
    %v425 = vld [vmem:[#allocation5 + $0x4c8] sm:$0xff]
    %v426 = vld [vmem:[#allocation5 + $0x4d0] sm:$0xff]
    %v427 = vld [vmem:[#allocation5 + $0x4d8] sm:$0xff]
    %v428 = vld [vmem:[#allocation5 + $0x4e0] sm:$0xff]
    %v429 = vld [vmem:[#allocation5 + $0x4e8] sm:$0xff]
    %v430 = vld [vmem:[#allocation5 + $0x4f0] sm:$0xff]
    %v431 = vld [vmem:[#allocation5 + $0x4f8] sm:$0xff]
    %v432 = vld [vmem:[#allocation5 + $0x500] sm:$0xff]
    %v433 = vld [vmem:[#allocation5 + $0x508] sm:$0xff]
    %v434 = vld [vmem:[#allocation5 + $0x510] sm:$0xff]
    %v435 = vld [vmem:[#allocation5 + $0x518] sm:$0xff]
    %v436 = vld [vmem:[#allocation5 + $0x520] sm:$0xff]
    %v437 = vld [vmem:[#allocation5 + $0x528] sm:$0xff]
    %v438 = vld [vmem:[#allocation5 + $0x530] sm:$0xff]
    %v439 = vld [vmem:[#allocation5 + $0x538] sm:$0xff]
    %v440 = vld [vmem:[#allocation5 + $0x540] sm:$0xff]
    %v441 = vld [vmem:[#allocation5 + $0x548] sm:$0xff]
    %v442 = vld [vmem:[#allocation5 + $0x550] sm:$0xff]
    %v443 = vld [vmem:[#allocation5 + $0x558] sm:$0xff]
    %v444 = vld [vmem:[#allocation5 + $0x560] sm:$0xff]
    %v445 = vld [vmem:[#allocation5 + $0x568] sm:$0xff]
    %v446 = vld [vmem:[#allocation5 + $0x570] sm:$0xff]
    %v447 = vld [vmem:[#allocation5 + $0x578] sm:$0xff]
    %v448 = vld [vmem:[#allocation5 + $0x580] sm:$0xff]
    %v449 = vld [vmem:[#allocation5 + $0x588] sm:$0xff]
    %v450 = vld [vmem:[#allocation5 + $0x590] sm:$0xff]
    %v451 = vld [vmem:[#allocation5 + $0x598] sm:$0xff]
    %v452 = vld [vmem:[#allocation5 + $0x5a0] sm:$0xff]
    %v453 = vld [vmem:[#allocation5 + $0x5a8] sm:$0xff]
    %v454 = vld [vmem:[#allocation5 + $0x5b0] sm:$0xff]
    %v455 = vld [vmem:[#allocation5 + $0x5b8] sm:$0xff]
    %v456 = vld [vmem:[#allocation5 + $0x5c0] sm:$0xff]
    %v457 = vld [vmem:[#allocation5 + $0x5c8] sm:$0xff]
    %v458 = vld [vmem:[#allocation5 + $0x5d0] sm:$0xff]
    %v459 = vld [vmem:[#allocation5 + $0x5d8] sm:$0xff]
    %v460 = vld [vmem:[#allocation5 + $0x5e0] sm:$0xff]
    %v461 = vld [vmem:[#allocation5 + $0x5e8] sm:$0xff]
    %v462 = vld [vmem:[#allocation5 + $0x5f0] sm:$0xff]
    %v463 = vld [vmem:[#allocation5 + $0x5f8] sm:$0xff]
    %v464 = vld [vmem:[#allocation5 + $0x600] sm:$0xff]
    %v465 = vld [vmem:[#allocation5 + $0x608] sm:$0xff]
    %v466 = vld [vmem:[#allocation5 + $0x610] sm:$0xff]
    %v467 = vld [vmem:[#allocation5 + $0x618] sm:$0xff]
    %v468 = vld [vmem:[#allocation5 + $0x620] sm:$0xff]
    %v469 = vld [vmem:[#allocation5 + $0x628] sm:$0xff]
    %v470 = vld [vmem:[#allocation5 + $0x630] sm:$0xff]
    %v471 = vld [vmem:[#allocation5 + $0x638] sm:$0xff]
    %v472 = vld [vmem:[#allocation5 + $0x640] sm:$0xff]
    %v473 = vld [vmem:[#allocation5 + $0x648] sm:$0xff]
    %v474 = vld [vmem:[#allocation5 + $0x650] sm:$0xff]
    %v475 = vld [vmem:[#allocation5 + $0x658] sm:$0xff]
    %v476 = vld [vmem:[#allocation5 + $0x660] sm:$0xff]
    %v477 = vld [vmem:[#allocation5 + $0x668] sm:$0xff]
    %v478 = vld [vmem:[#allocation5 + $0x670] sm:$0xff]
    %v479 = vld [vmem:[#allocation5 + $0x678] sm:$0xff]
    %v480 = vld [vmem:[#allocation5 + $0x680] sm:$0xff]
    %v481 = vld [vmem:[#allocation5 + $0x688] sm:$0xff]
    %v482 = vld [vmem:[#allocation5 + $0x690] sm:$0xff]
    %v483 = vld [vmem:[#allocation5 + $0x698] sm:$0xff]
    %v484 = vld [vmem:[#allocation5 + $0x6a0] sm:$0xff]
    %v485 = vld [vmem:[#allocation5 + $0x6a8] sm:$0xff]
    %v486 = vld [vmem:[#allocation5 + $0x6b0] sm:$0xff]
    %v487 = vld [vmem:[#allocation5 + $0x6b8] sm:$0xff]
    %v488 = vld [vmem:[#allocation5 + $0x6c0] sm:$0xff]
    %v489 = vld [vmem:[#allocation5 + $0x6c8] sm:$0xff]
    %v490 = vld [vmem:[#allocation5 + $0x6d0] sm:$0xff]
    %v491 = vld [vmem:[#allocation5 + $0x6d8] sm:$0xff]
    %v492 = vld [vmem:[#allocation5 + $0x6e0] sm:$0xff]
    %v493 = vld [vmem:[#allocation5 + $0x6e8] sm:$0xff]
    %v494 = vld [vmem:[#allocation5 + $0x6f0] sm:$0xff]
    %v495 = vld [vmem:[#allocation5 + $0x6f8] sm:$0xff]
    %v496 = vld [vmem:[#allocation5 + $0x700] sm:$0xff]
    %v497 = vld [vmem:[#allocation5 + $0x708] sm:$0xff]
    %v498 = vld [vmem:[#allocation5 + $0x710] sm:$0xff]
    %v499 = vld [vmem:[#allocation5 + $0x718] sm:$0xff]
    %v500 = vld [vmem:[#allocation5 + $0x720] sm:$0xff]
    %v501 = vld [vmem:[#allocation5 + $0x728] sm:$0xff]
    %v502 = vld [vmem:[#allocation5 + $0x730] sm:$0xff]
    %v503 = vld [vmem:[#allocation5 + $0x738] sm:$0xff]
    %v504 = vld [vmem:[#allocation5 + $0x740] sm:$0xff]
    %v505 = vld [vmem:[#allocation5 + $0x748] sm:$0xff]
    %v506 = vld [vmem:[#allocation5 + $0x750] sm:$0xff]
    %v507 = vld [vmem:[#allocation5 + $0x758] sm:$0xff]
    %v508 = vld [vmem:[#allocation5 + $0x760] sm:$0xff]
    %v509 = vld [vmem:[#allocation5 + $0x768] sm:$0xff]
    %v510 = vld [vmem:[#allocation5 + $0x770] sm:$0xff]
    %v511 = vld [vmem:[#allocation5 + $0x778] sm:$0xff]
    %v512 = vld [vmem:[#allocation5 + $0x780] sm:$0xff]
    %v513 = vld [vmem:[#allocation5 + $0x788] sm:$0xff]
    %v514 = vld [vmem:[#allocation5 + $0x790] sm:$0xff]
    %v515 = vld [vmem:[#allocation5 + $0x798] sm:$0xff]
    %v516 = vld [vmem:[#allocation5 + $0x7a0] sm:$0xff]
    %v517 = vld [vmem:[#allocation5 + $0x7a8] sm:$0xff]
    %v518 = vld [vmem:[#allocation5 + $0x7b0] sm:$0xff]
    %v519 = vld [vmem:[#allocation5 + $0x7b8] sm:$0xff]
    %v520 = vld [vmem:[#allocation5 + $0x7c0] sm:$0xff]
    %v521 = vld [vmem:[#allocation5 + $0x7c8] sm:$0xff]
    %v522 = vld [vmem:[#allocation5 + $0x7d0] sm:$0xff]
    %v523 = vld [vmem:[#allocation5 + $0x7d8] sm:$0xff]
    %v524 = vld [vmem:[#allocation5 + $0x7e0] sm:$0xff]
    %v525 = vld [vmem:[#allocation5 + $0x7e8] sm:$0xff]
    %v526 = vld [vmem:[#allocation5 + $0x7f0] sm:$0xff]
    %v527 = vld [vmem:[#allocation5 + $0x7f8] sm:$0xff]
    %v528 = vld [vmem:[#allocation7] sm:$0xff]
    %v530 = vlaneseq
    %v531 = vshrl.u32 %v530, 7
    %v532 = vsub.s32 0, %v531
    %v533 = vrot.slane %v528, %v532
    %v534 = vlaneseq
    %v535 = vshrl.u32 %v534, 7
    %v536 = vsub.s32 1, %v535
    %v537 = vrot.slane %v528, %v536
    %v538 = vlaneseq
    %v539 = vshrl.u32 %v538, 7
    %v540 = vsub.s32 2, %v539
    %v541 = vrot.slane %v528, %v540
    %v542 = vlaneseq
    %v543 = vshrl.u32 %v542, 7
    %v544 = vsub.s32 3, %v543
    %v545 = vrot.slane %v528, %v544
    %v546 = vlaneseq
    %v547 = vshrl.u32 %v546, 7
    %v548 = vsub.s32 4, %v547
    %v549 = vrot.slane %v528, %v548
    %v550 = vlaneseq
    %v551 = vshrl.u32 %v550, 7
    %v552 = vsub.s32 5, %v551
    %v553 = vrot.slane %v528, %v552
    %v554 = vlaneseq
    %v555 = vshrl.u32 %v554, 7
    %v556 = vsub.s32 6, %v555
    %v557 = vrot.slane %v528, %v556
    %v558 = vlaneseq
    %v559 = vshrl.u32 %v558, 7
    %v560 = vsub.s32 7, %v559
    %v561 = vrot.slane %v528, %v560
    %v826 = vunpack.c.l.b16 %v272
    %v827 = vunpack.c.h.b16 %v272
    %v828 = vunpack.c.l.b16 %v273
    %v829 = vunpack.c.h.b16 %v273
    %v830 = vunpack.c.l.b16 %v274
    %v831 = vunpack.c.h.b16 %v274
    %v832 = vunpack.c.l.b16 %v275
    %v833 = vunpack.c.h.b16 %v275
    %v834 = vunpack.c.l.b16 %v276
    %v835 = vunpack.c.h.b16 %v276
    %v836 = vunpack.c.l.b16 %v277
    %v837 = vunpack.c.h.b16 %v277
    %v838 = vunpack.c.l.b16 %v278
    %v839 = vunpack.c.h.b16 %v278
    %v840 = vunpack.c.l.b16 %v279
    %v841 = vunpack.c.h.b16 %v279
    %v842 = vunpack.c.l.b16 %v280
    %v843 = vunpack.c.h.b16 %v280
    %v844 = vunpack.c.l.b16 %v281
    %v845 = vunpack.c.h.b16 %v281
    %v846 = vunpack.c.l.b16 %v282
    %v847 = vunpack.c.h.b16 %v282
    %v848 = vunpack.c.l.b16 %v283
    %v849 = vunpack.c.h.b16 %v283
    %v850 = vunpack.c.l.b16 %v284
    %v851 = vunpack.c.h.b16 %v284
    %v852 = vunpack.c.l.b16 %v285
    %v853 = vunpack.c.h.b16 %v285
    %v854 = vunpack.c.l.b16 %v286
    %v855 = vunpack.c.h.b16 %v286
    %v856 = vunpack.c.l.b16 %v287
    %v857 = vunpack.c.h.b16 %v287
    %v858 = vunpack.c.l.b16 %v288
    %v859 = vunpack.c.h.b16 %v288
    %v860 = vunpack.c.l.b16 %v289
    %v861 = vunpack.c.h.b16 %v289
    %v862 = vunpack.c.l.b16 %v290
    %v863 = vunpack.c.h.b16 %v290
    %v864 = vunpack.c.l.b16 %v291
    %v865 = vunpack.c.h.b16 %v291
    %v866 = vunpack.c.l.b16 %v292
    %v867 = vunpack.c.h.b16 %v292
    %v868 = vunpack.c.l.b16 %v293
    %v869 = vunpack.c.h.b16 %v293
    %v870 = vunpack.c.l.b16 %v294
    %v871 = vunpack.c.h.b16 %v294
    %v872 = vunpack.c.l.b16 %v295
    %v873 = vunpack.c.h.b16 %v295
    %v874 = vunpack.c.l.b16 %v296
    %v875 = vunpack.c.h.b16 %v296
    %v876 = vunpack.c.l.b16 %v297
    %v877 = vunpack.c.h.b16 %v297
    %v878 = vunpack.c.l.b16 %v298
    %v879 = vunpack.c.h.b16 %v298
    %v880 = vunpack.c.l.b16 %v299
    %v881 = vunpack.c.h.b16 %v299
    %v882 = vunpack.c.l.b16 %v300
    %v883 = vunpack.c.h.b16 %v300
    %v884 = vunpack.c.l.b16 %v301
    %v885 = vunpack.c.h.b16 %v301
    %v886 = vunpack.c.l.b16 %v302
    %v887 = vunpack.c.h.b16 %v302
    %v888 = vunpack.c.l.b16 %v303
    %v889 = vunpack.c.h.b16 %v303
    %v890 = vunpack.c.l.b16 %v304
    %v891 = vunpack.c.h.b16 %v304
    %v892 = vunpack.c.l.b16 %v305
    %v893 = vunpack.c.h.b16 %v305
    %v894 = vunpack.c.l.b16 %v306
    %v895 = vunpack.c.h.b16 %v306
    %v896 = vunpack.c.l.b16 %v307
    %v897 = vunpack.c.h.b16 %v307
    %v898 = vunpack.c.l.b16 %v308
    %v899 = vunpack.c.h.b16 %v308
    %v900 = vunpack.c.l.b16 %v309
    %v901 = vunpack.c.h.b16 %v309
    %v902 = vunpack.c.l.b16 %v310
    %v903 = vunpack.c.h.b16 %v310
    %v904 = vunpack.c.l.b16 %v311
    %v905 = vunpack.c.h.b16 %v311
    %v906 = vunpack.c.l.b16 %v312
    %v907 = vunpack.c.h.b16 %v312
    %v908 = vunpack.c.l.b16 %v313
    %v909 = vunpack.c.h.b16 %v313
    %v910 = vunpack.c.l.b16 %v314
    %v911 = vunpack.c.h.b16 %v314
    %v912 = vunpack.c.l.b16 %v315
    %v913 = vunpack.c.h.b16 %v315
    %v914 = vunpack.c.l.b16 %v316
    %v915 = vunpack.c.h.b16 %v316
    %v916 = vunpack.c.l.b16 %v317
    %v917 = vunpack.c.h.b16 %v317
    %v918 = vunpack.c.l.b16 %v318
    %v919 = vunpack.c.h.b16 %v318
    %v920 = vunpack.c.l.b16 %v319
    %v921 = vunpack.c.h.b16 %v319
    %v922 = vunpack.c.l.b16 %v320
    %v923 = vunpack.c.h.b16 %v320
    %v924 = vunpack.c.l.b16 %v321
    %v925 = vunpack.c.h.b16 %v321
    %v926 = vunpack.c.l.b16 %v322
    %v927 = vunpack.c.h.b16 %v322
    %v928 = vunpack.c.l.b16 %v323
    %v929 = vunpack.c.h.b16 %v323
    %v930 = vunpack.c.l.b16 %v324
    %v931 = vunpack.c.h.b16 %v324
    %v932 = vunpack.c.l.b16 %v325
    %v933 = vunpack.c.h.b16 %v325
    %v934 = vunpack.c.l.b16 %v326
    %v935 = vunpack.c.h.b16 %v326
    %v936 = vunpack.c.l.b16 %v327
    %v937 = vunpack.c.h.b16 %v327
    %v938 = vunpack.c.l.b16 %v328
    %v939 = vunpack.c.h.b16 %v328
    %v940 = vunpack.c.l.b16 %v329
    %v941 = vunpack.c.h.b16 %v329
    %v942 = vunpack.c.l.b16 %v330
    %v943 = vunpack.c.h.b16 %v330
    %v944 = vunpack.c.l.b16 %v331
    %v945 = vunpack.c.h.b16 %v331
    %v946 = vunpack.c.l.b16 %v332
    %v947 = vunpack.c.h.b16 %v332
    %v948 = vunpack.c.l.b16 %v333
    %v949 = vunpack.c.h.b16 %v333
    %v950 = vunpack.c.l.b16 %v334
    %v951 = vunpack.c.h.b16 %v334
    %v952 = vunpack.c.l.b16 %v335
    %v953 = vunpack.c.h.b16 %v335
    %v954 = vunpack.c.l.b16 %v336
    %v955 = vunpack.c.h.b16 %v336
    %v956 = vunpack.c.l.b16 %v337
    %v957 = vunpack.c.h.b16 %v337
    %v958 = vunpack.c.l.b16 %v338
    %v959 = vunpack.c.h.b16 %v338
    %v960 = vunpack.c.l.b16 %v339
    %v961 = vunpack.c.h.b16 %v339
    %v962 = vunpack.c.l.b16 %v340
    %v963 = vunpack.c.h.b16 %v340
    %v964 = vunpack.c.l.b16 %v341
    %v965 = vunpack.c.h.b16 %v341
    %v966 = vunpack.c.l.b16 %v342
    %v967 = vunpack.c.h.b16 %v342
    %v968 = vunpack.c.l.b16 %v343
    %v969 = vunpack.c.h.b16 %v343
    %v970 = vunpack.c.l.b16 %v344
    %v971 = vunpack.c.h.b16 %v344
    %v972 = vunpack.c.l.b16 %v345
    %v973 = vunpack.c.h.b16 %v345
    %v974 = vunpack.c.l.b16 %v346
    %v975 = vunpack.c.h.b16 %v346
    %v976 = vunpack.c.l.b16 %v347
    %v977 = vunpack.c.h.b16 %v347
    %v978 = vunpack.c.l.b16 %v348
    %v979 = vunpack.c.h.b16 %v348
    %v980 = vunpack.c.l.b16 %v349
    %v981 = vunpack.c.h.b16 %v349
    %v982 = vunpack.c.l.b16 %v350
    %v983 = vunpack.c.h.b16 %v350
    %v984 = vunpack.c.l.b16 %v351
    %v985 = vunpack.c.h.b16 %v351
    %v986 = vunpack.c.l.b16 %v352
    %v987 = vunpack.c.h.b16 %v352
    %v988 = vunpack.c.l.b16 %v353
    %v989 = vunpack.c.h.b16 %v353
    %v990 = vunpack.c.l.b16 %v354
    %v991 = vunpack.c.h.b16 %v354
    %v992 = vunpack.c.l.b16 %v355
    %v993 = vunpack.c.h.b16 %v355
    %v994 = vunpack.c.l.b16 %v356
    %v995 = vunpack.c.h.b16 %v356
    %v996 = vunpack.c.l.b16 %v357
    %v997 = vunpack.c.h.b16 %v357
    %v998 = vunpack.c.l.b16 %v358
    %v999 = vunpack.c.h.b16 %v358
    %v1000 = vunpack.c.l.b16 %v359
    %v1001 = vunpack.c.h.b16 %v359
    %v1002 = vunpack.c.l.b16 %v360
    %v1003 = vunpack.c.h.b16 %v360
    %v1004 = vunpack.c.l.b16 %v361
    %v1005 = vunpack.c.h.b16 %v361
    %v1006 = vunpack.c.l.b16 %v362
    %v1007 = vunpack.c.h.b16 %v362
    %v1008 = vunpack.c.l.b16 %v363
    %v1009 = vunpack.c.h.b16 %v363
    %v1010 = vunpack.c.l.b16 %v364
    %v1011 = vunpack.c.h.b16 %v364
    %v1012 = vunpack.c.l.b16 %v365
    %v1013 = vunpack.c.h.b16 %v365
    %v1014 = vunpack.c.l.b16 %v366
    %v1015 = vunpack.c.h.b16 %v366
    %v1016 = vunpack.c.l.b16 %v367
    %v1017 = vunpack.c.h.b16 %v367
    %v1018 = vunpack.c.l.b16 %v368
    %v1019 = vunpack.c.h.b16 %v368
    %v1020 = vunpack.c.l.b16 %v369
    %v1021 = vunpack.c.h.b16 %v369
    %v1022 = vunpack.c.l.b16 %v370
    %v1023 = vunpack.c.h.b16 %v370
    %v1024 = vunpack.c.l.b16 %v371
    %v1025 = vunpack.c.h.b16 %v371
    %v1026 = vunpack.c.l.b16 %v372
    %v1027 = vunpack.c.h.b16 %v372
    %v1028 = vunpack.c.l.b16 %v373
    %v1029 = vunpack.c.h.b16 %v373
    %v1030 = vunpack.c.l.b16 %v374
    %v1031 = vunpack.c.h.b16 %v374
    %v1032 = vunpack.c.l.b16 %v375
    %v1033 = vunpack.c.h.b16 %v375
    %v1034 = vunpack.c.l.b16 %v376
    %v1035 = vunpack.c.h.b16 %v376
    %v1036 = vunpack.c.l.b16 %v377
    %v1037 = vunpack.c.h.b16 %v377
    %v1038 = vunpack.c.l.b16 %v378
    %v1039 = vunpack.c.h.b16 %v378
    %v1040 = vunpack.c.l.b16 %v379
    %v1041 = vunpack.c.h.b16 %v379
    %v1042 = vunpack.c.l.b16 %v380
    %v1043 = vunpack.c.h.b16 %v380
    %v1044 = vunpack.c.l.b16 %v381
    %v1045 = vunpack.c.h.b16 %v381
    %v1046 = vunpack.c.l.b16 %v382
    %v1047 = vunpack.c.h.b16 %v382
    %v1048 = vunpack.c.l.b16 %v383
    %v1049 = vunpack.c.h.b16 %v383
    %v1050 = vunpack.c.l.b16 %v384
    %v1051 = vunpack.c.h.b16 %v384
    %v1052 = vunpack.c.l.b16 %v385
    %v1053 = vunpack.c.h.b16 %v385
    %v1054 = vunpack.c.l.b16 %v386
    %v1055 = vunpack.c.h.b16 %v386
    %v1056 = vunpack.c.l.b16 %v387
    %v1057 = vunpack.c.h.b16 %v387
    %v1058 = vunpack.c.l.b16 %v388
    %v1059 = vunpack.c.h.b16 %v388
    %v1060 = vunpack.c.l.b16 %v389
    %v1061 = vunpack.c.h.b16 %v389
    %v1062 = vunpack.c.l.b16 %v390
    %v1063 = vunpack.c.h.b16 %v390
    %v1064 = vunpack.c.l.b16 %v391
    %v1065 = vunpack.c.h.b16 %v391
    %v1066 = vunpack.c.l.b16 %v392
    %v1067 = vunpack.c.h.b16 %v392
    %v1068 = vunpack.c.l.b16 %v393
    %v1069 = vunpack.c.h.b16 %v393
    %v1070 = vunpack.c.l.b16 %v394
    %v1071 = vunpack.c.h.b16 %v394
    %v1072 = vunpack.c.l.b16 %v395
    %v1073 = vunpack.c.h.b16 %v395
    %v1074 = vunpack.c.l.b16 %v396
    %v1075 = vunpack.c.h.b16 %v396
    %v1076 = vunpack.c.l.b16 %v397
    %v1077 = vunpack.c.h.b16 %v397
    %v1078 = vunpack.c.l.b16 %v398
    %v1079 = vunpack.c.h.b16 %v398
    %v1080 = vunpack.c.l.b16 %v399
    %v1081 = vunpack.c.h.b16 %v399
    %v1082 = vunpack.c.l.b16 %v400
    %v1083 = vunpack.c.h.b16 %v400
    %v1084 = vunpack.c.l.b16 %v401
    %v1085 = vunpack.c.h.b16 %v401
    %v1086 = vunpack.c.l.b16 %v402
    %v1087 = vunpack.c.h.b16 %v402
    %v1088 = vunpack.c.l.b16 %v403
    %v1089 = vunpack.c.h.b16 %v403
    %v1090 = vunpack.c.l.b16 %v404
    %v1091 = vunpack.c.h.b16 %v404
    %v1092 = vunpack.c.l.b16 %v405
    %v1093 = vunpack.c.h.b16 %v405
    %v1094 = vunpack.c.l.b16 %v406
    %v1095 = vunpack.c.h.b16 %v406
    %v1096 = vunpack.c.l.b16 %v407
    %v1097 = vunpack.c.h.b16 %v407
    %v1098 = vunpack.c.l.b16 %v408
    %v1099 = vunpack.c.h.b16 %v408
    %v1100 = vunpack.c.l.b16 %v409
    %v1101 = vunpack.c.h.b16 %v409
    %v1102 = vunpack.c.l.b16 %v410
    %v1103 = vunpack.c.h.b16 %v410
    %v1104 = vunpack.c.l.b16 %v411
    %v1105 = vunpack.c.h.b16 %v411
    %v1106 = vunpack.c.l.b16 %v412
    %v1107 = vunpack.c.h.b16 %v412
    %v1108 = vunpack.c.l.b16 %v413
    %v1109 = vunpack.c.h.b16 %v413
    %v1110 = vunpack.c.l.b16 %v414
    %v1111 = vunpack.c.h.b16 %v414
    %v1112 = vunpack.c.l.b16 %v415
    %v1113 = vunpack.c.h.b16 %v415
    %v1114 = vunpack.c.l.b16 %v416
    %v1115 = vunpack.c.h.b16 %v416
    %v1116 = vunpack.c.l.b16 %v417
    %v1117 = vunpack.c.h.b16 %v417
    %v1118 = vunpack.c.l.b16 %v418
    %v1119 = vunpack.c.h.b16 %v418
    %v1120 = vunpack.c.l.b16 %v419
    %v1121 = vunpack.c.h.b16 %v419
    %v1122 = vunpack.c.l.b16 %v420
    %v1123 = vunpack.c.h.b16 %v420
    %v1124 = vunpack.c.l.b16 %v421
    %v1125 = vunpack.c.h.b16 %v421
    %v1126 = vunpack.c.l.b16 %v422
    %v1127 = vunpack.c.h.b16 %v422
    %v1128 = vunpack.c.l.b16 %v423
    %v1129 = vunpack.c.h.b16 %v423
    %v1130 = vunpack.c.l.b16 %v424
    %v1131 = vunpack.c.h.b16 %v424
    %v1132 = vunpack.c.l.b16 %v425
    %v1133 = vunpack.c.h.b16 %v425
    %v1134 = vunpack.c.l.b16 %v426
    %v1135 = vunpack.c.h.b16 %v426
    %v1136 = vunpack.c.l.b16 %v427
    %v1137 = vunpack.c.h.b16 %v427
    %v1138 = vunpack.c.l.b16 %v428
    %v1139 = vunpack.c.h.b16 %v428
    %v1140 = vunpack.c.l.b16 %v429
    %v1141 = vunpack.c.h.b16 %v429
    %v1142 = vunpack.c.l.b16 %v430
    %v1143 = vunpack.c.h.b16 %v430
    %v1144 = vunpack.c.l.b16 %v431
    %v1145 = vunpack.c.h.b16 %v431
    %v1146 = vunpack.c.l.b16 %v432
    %v1147 = vunpack.c.h.b16 %v432
    %v1148 = vunpack.c.l.b16 %v433
    %v1149 = vunpack.c.h.b16 %v433
    %v1150 = vunpack.c.l.b16 %v434
    %v1151 = vunpack.c.h.b16 %v434
    %v1152 = vunpack.c.l.b16 %v435
    %v1153 = vunpack.c.h.b16 %v435
    %v1154 = vunpack.c.l.b16 %v436
    %v1155 = vunpack.c.h.b16 %v436
    %v1156 = vunpack.c.l.b16 %v437
    %v1157 = vunpack.c.h.b16 %v437
    %v1158 = vunpack.c.l.b16 %v438
    %v1159 = vunpack.c.h.b16 %v438
    %v1160 = vunpack.c.l.b16 %v439
    %v1161 = vunpack.c.h.b16 %v439
    %v1162 = vunpack.c.l.b16 %v440
    %v1163 = vunpack.c.h.b16 %v440
    %v1164 = vunpack.c.l.b16 %v441
    %v1165 = vunpack.c.h.b16 %v441
    %v1166 = vunpack.c.l.b16 %v442
    %v1167 = vunpack.c.h.b16 %v442
    %v1168 = vunpack.c.l.b16 %v443
    %v1169 = vunpack.c.h.b16 %v443
    %v1170 = vunpack.c.l.b16 %v444
    %v1171 = vunpack.c.h.b16 %v444
    %v1172 = vunpack.c.l.b16 %v445
    %v1173 = vunpack.c.h.b16 %v445
    %v1174 = vunpack.c.l.b16 %v446
    %v1175 = vunpack.c.h.b16 %v446
    %v1176 = vunpack.c.l.b16 %v447
    %v1177 = vunpack.c.h.b16 %v447
    %v1178 = vunpack.c.l.b16 %v448
    %v1179 = vunpack.c.h.b16 %v448
    %v1180 = vunpack.c.l.b16 %v449
    %v1181 = vunpack.c.h.b16 %v449
    %v1182 = vunpack.c.l.b16 %v450
    %v1183 = vunpack.c.h.b16 %v450
    %v1184 = vunpack.c.l.b16 %v451
    %v1185 = vunpack.c.h.b16 %v451
    %v1186 = vunpack.c.l.b16 %v452
    %v1187 = vunpack.c.h.b16 %v452
    %v1188 = vunpack.c.l.b16 %v453
    %v1189 = vunpack.c.h.b16 %v453
    %v1190 = vunpack.c.l.b16 %v454
    %v1191 = vunpack.c.h.b16 %v454
    %v1192 = vunpack.c.l.b16 %v455
    %v1193 = vunpack.c.h.b16 %v455
    %v1194 = vunpack.c.l.b16 %v456
    %v1195 = vunpack.c.h.b16 %v456
    %v1196 = vunpack.c.l.b16 %v457
    %v1197 = vunpack.c.h.b16 %v457
    %v1198 = vunpack.c.l.b16 %v458
    %v1199 = vunpack.c.h.b16 %v458
    %v1200 = vunpack.c.l.b16 %v459
    %v1201 = vunpack.c.h.b16 %v459
    %v1202 = vunpack.c.l.b16 %v460
    %v1203 = vunpack.c.h.b16 %v460
    %v1204 = vunpack.c.l.b16 %v461
    %v1205 = vunpack.c.h.b16 %v461
    %v1206 = vunpack.c.l.b16 %v462
    %v1207 = vunpack.c.h.b16 %v462
    %v1208 = vunpack.c.l.b16 %v463
    %v1209 = vunpack.c.h.b16 %v463
    %v1210 = vunpack.c.l.b16 %v464
    %v1211 = vunpack.c.h.b16 %v464
    %v1212 = vunpack.c.l.b16 %v465
    %v1213 = vunpack.c.h.b16 %v465
    %v1214 = vunpack.c.l.b16 %v466
    %v1215 = vunpack.c.h.b16 %v466
    %v1216 = vunpack.c.l.b16 %v467
    %v1217 = vunpack.c.h.b16 %v467
    %v1218 = vunpack.c.l.b16 %v468
    %v1219 = vunpack.c.h.b16 %v468
    %v1220 = vunpack.c.l.b16 %v469
    %v1221 = vunpack.c.h.b16 %v469
    %v1222 = vunpack.c.l.b16 %v470
    %v1223 = vunpack.c.h.b16 %v470
    %v1224 = vunpack.c.l.b16 %v471
    %v1225 = vunpack.c.h.b16 %v471
    %v1226 = vunpack.c.l.b16 %v472
    %v1227 = vunpack.c.h.b16 %v472
    %v1228 = vunpack.c.l.b16 %v473
    %v1229 = vunpack.c.h.b16 %v473
    %v1230 = vunpack.c.l.b16 %v474
    %v1231 = vunpack.c.h.b16 %v474
    %v1232 = vunpack.c.l.b16 %v475
    %v1233 = vunpack.c.h.b16 %v475
    %v1234 = vunpack.c.l.b16 %v476
    %v1235 = vunpack.c.h.b16 %v476
    %v1236 = vunpack.c.l.b16 %v477
    %v1237 = vunpack.c.h.b16 %v477
    %v1238 = vunpack.c.l.b16 %v478
    %v1239 = vunpack.c.h.b16 %v478
    %v1240 = vunpack.c.l.b16 %v479
    %v1241 = vunpack.c.h.b16 %v479
    %v1242 = vunpack.c.l.b16 %v480
    %v1243 = vunpack.c.h.b16 %v480
    %v1244 = vunpack.c.l.b16 %v481
    %v1245 = vunpack.c.h.b16 %v481
    %v1246 = vunpack.c.l.b16 %v482
    %v1247 = vunpack.c.h.b16 %v482
    %v1248 = vunpack.c.l.b16 %v483
    %v1249 = vunpack.c.h.b16 %v483
    %v1250 = vunpack.c.l.b16 %v484
    %v1251 = vunpack.c.h.b16 %v484
    %v1252 = vunpack.c.l.b16 %v485
    %v1253 = vunpack.c.h.b16 %v485
    %v1254 = vunpack.c.l.b16 %v486
    %v1255 = vunpack.c.h.b16 %v486
    %v1256 = vunpack.c.l.b16 %v487
    %v1257 = vunpack.c.h.b16 %v487
    %v1258 = vunpack.c.l.b16 %v488
    %v1259 = vunpack.c.h.b16 %v488
    %v1260 = vunpack.c.l.b16 %v489
    %v1261 = vunpack.c.h.b16 %v489
    %v1262 = vunpack.c.l.b16 %v490
    %v1263 = vunpack.c.h.b16 %v490
    %v1264 = vunpack.c.l.b16 %v491
    %v1265 = vunpack.c.h.b16 %v491
    %v1266 = vunpack.c.l.b16 %v492
    %v1267 = vunpack.c.h.b16 %v492
    %v1268 = vunpack.c.l.b16 %v493
    %v1269 = vunpack.c.h.b16 %v493
    %v1270 = vunpack.c.l.b16 %v494
    %v1271 = vunpack.c.h.b16 %v494
    %v1272 = vunpack.c.l.b16 %v495
    %v1273 = vunpack.c.h.b16 %v495
    %v1274 = vunpack.c.l.b16 %v496
    %v1275 = vunpack.c.h.b16 %v496
    %v1276 = vunpack.c.l.b16 %v497
    %v1277 = vunpack.c.h.b16 %v497
    %v1278 = vunpack.c.l.b16 %v498
    %v1279 = vunpack.c.h.b16 %v498
    %v1280 = vunpack.c.l.b16 %v499
    %v1281 = vunpack.c.h.b16 %v499
    %v1282 = vunpack.c.l.b16 %v500
    %v1283 = vunpack.c.h.b16 %v500
    %v1284 = vunpack.c.l.b16 %v501
    %v1285 = vunpack.c.h.b16 %v501
    %v1286 = vunpack.c.l.b16 %v502
    %v1287 = vunpack.c.h.b16 %v502
    %v1288 = vunpack.c.l.b16 %v503
    %v1289 = vunpack.c.h.b16 %v503
    %v1290 = vunpack.c.l.b16 %v504
    %v1291 = vunpack.c.h.b16 %v504
    %v1292 = vunpack.c.l.b16 %v505
    %v1293 = vunpack.c.h.b16 %v505
    %v1294 = vunpack.c.l.b16 %v506
    %v1295 = vunpack.c.h.b16 %v506
    %v1296 = vunpack.c.l.b16 %v507
    %v1297 = vunpack.c.h.b16 %v507
    %v1298 = vunpack.c.l.b16 %v508
    %v1299 = vunpack.c.h.b16 %v508
    %v1300 = vunpack.c.l.b16 %v509
    %v1301 = vunpack.c.h.b16 %v509
    %v1302 = vunpack.c.l.b16 %v510
    %v1303 = vunpack.c.h.b16 %v510
    %v1304 = vunpack.c.l.b16 %v511
    %v1305 = vunpack.c.h.b16 %v511
    %v1306 = vunpack.c.l.b16 %v512
    %v1307 = vunpack.c.h.b16 %v512
    %v1308 = vunpack.c.l.b16 %v513
    %v1309 = vunpack.c.h.b16 %v513
    %v1310 = vunpack.c.l.b16 %v514
    %v1311 = vunpack.c.h.b16 %v514
    %v1312 = vunpack.c.l.b16 %v515
    %v1313 = vunpack.c.h.b16 %v515
    %v1314 = vunpack.c.l.b16 %v516
    %v1315 = vunpack.c.h.b16 %v516
    %v1316 = vunpack.c.l.b16 %v517
    %v1317 = vunpack.c.h.b16 %v517
    %v1318 = vunpack.c.l.b16 %v518
    %v1319 = vunpack.c.h.b16 %v518
    %v1320 = vunpack.c.l.b16 %v519
    %v1321 = vunpack.c.h.b16 %v519
    %v1322 = vunpack.c.l.b16 %v520
    %v1323 = vunpack.c.h.b16 %v520
    %v1324 = vunpack.c.l.b16 %v521
    %v1325 = vunpack.c.h.b16 %v521
    %v1326 = vunpack.c.l.b16 %v522
    %v1327 = vunpack.c.h.b16 %v522
    %v1328 = vunpack.c.l.b16 %v523
    %v1329 = vunpack.c.h.b16 %v523
    %v1330 = vunpack.c.l.b16 %v524
    %v1331 = vunpack.c.h.b16 %v524
    %v1332 = vunpack.c.l.b16 %v525
    %v1333 = vunpack.c.h.b16 %v525
    %v1334 = vunpack.c.l.b16 %v526
    %v1335 = vunpack.c.h.b16 %v526
    %v1336 = vunpack.c.l.b16 %v527
    %v1337 = vunpack.c.h.b16 %v527
    %v1338 = vpack.c.b16 %v834, %v826
    %v1339 = vpack.c.b16 %v835, %v827
    %v1340 = vpack.c.b16 %v836, %v828
    %v1341 = vpack.c.b16 %v837, %v829
    %v1342 = vpack.c.b16 %v838, %v830
    %v1343 = vpack.c.b16 %v839, %v831
    %v1344 = vpack.c.b16 %v840, %v832
    %v1345 = vpack.c.b16 %v841, %v833
    %v1346 = vpack.c.b16 %v850, %v842
    %v1347 = vpack.c.b16 %v851, %v843
    %v1348 = vpack.c.b16 %v852, %v844
    %v1349 = vpack.c.b16 %v853, %v845
    %v1350 = vpack.c.b16 %v854, %v846
    %v1351 = vpack.c.b16 %v855, %v847
    %v1352 = vpack.c.b16 %v856, %v848
    %v1353 = vpack.c.b16 %v857, %v849
    %v1354 = vpack.c.b16 %v866, %v858
    %v1355 = vpack.c.b16 %v867, %v859
    %v1356 = vpack.c.b16 %v868, %v860
    %v1357 = vpack.c.b16 %v869, %v861
    %v1358 = vpack.c.b16 %v870, %v862
    %v1359 = vpack.c.b16 %v871, %v863
    %v1360 = vpack.c.b16 %v872, %v864
    %v1361 = vpack.c.b16 %v873, %v865
    %v1362 = vpack.c.b16 %v882, %v874
    %v1363 = vpack.c.b16 %v883, %v875
    %v1364 = vpack.c.b16 %v884, %v876
    %v1365 = vpack.c.b16 %v885, %v877
    %v1366 = vpack.c.b16 %v886, %v878
    %v1367 = vpack.c.b16 %v887, %v879
    %v1368 = vpack.c.b16 %v888, %v880
    %v1369 = vpack.c.b16 %v889, %v881
    %v1370 = vpack.c.b16 %v898, %v890
    %v1371 = vpack.c.b16 %v899, %v891
    %v1372 = vpack.c.b16 %v900, %v892
    %v1373 = vpack.c.b16 %v901, %v893
    %v1374 = vpack.c.b16 %v902, %v894
    %v1375 = vpack.c.b16 %v903, %v895
    %v1376 = vpack.c.b16 %v904, %v896
    %v1377 = vpack.c.b16 %v905, %v897
    %v1378 = vpack.c.b16 %v914, %v906
    %v1379 = vpack.c.b16 %v915, %v907
    %v1380 = vpack.c.b16 %v916, %v908
    %v1381 = vpack.c.b16 %v917, %v909
    %v1382 = vpack.c.b16 %v918, %v910
    %v1383 = vpack.c.b16 %v919, %v911
    %v1384 = vpack.c.b16 %v920, %v912
    %v1385 = vpack.c.b16 %v921, %v913
    %v1386 = vpack.c.b16 %v930, %v922
    %v1387 = vpack.c.b16 %v931, %v923
    %v1388 = vpack.c.b16 %v932, %v924
    %v1389 = vpack.c.b16 %v933, %v925
    %v1390 = vpack.c.b16 %v934, %v926
    %v1391 = vpack.c.b16 %v935, %v927
    %v1392 = vpack.c.b16 %v936, %v928
    %v1393 = vpack.c.b16 %v937, %v929
    %v1394 = vpack.c.b16 %v946, %v938
    %v1395 = vpack.c.b16 %v947, %v939
    %v1396 = vpack.c.b16 %v948, %v940
    %v1397 = vpack.c.b16 %v949, %v941
    %v1398 = vpack.c.b16 %v950, %v942
    %v1399 = vpack.c.b16 %v951, %v943
    %v1400 = vpack.c.b16 %v952, %v944
    %v1401 = vpack.c.b16 %v953, %v945
    %v1402 = vpack.c.b16 %v962, %v954
    %v1403 = vpack.c.b16 %v963, %v955
    %v1404 = vpack.c.b16 %v964, %v956
    %v1405 = vpack.c.b16 %v965, %v957
    %v1406 = vpack.c.b16 %v966, %v958
    %v1407 = vpack.c.b16 %v967, %v959
    %v1408 = vpack.c.b16 %v968, %v960
    %v1409 = vpack.c.b16 %v969, %v961
    %v1410 = vpack.c.b16 %v978, %v970
    %v1411 = vpack.c.b16 %v979, %v971
    %v1412 = vpack.c.b16 %v980, %v972
    %v1413 = vpack.c.b16 %v981, %v973
    %v1414 = vpack.c.b16 %v982, %v974
    %v1415 = vpack.c.b16 %v983, %v975
    %v1416 = vpack.c.b16 %v984, %v976
    %v1417 = vpack.c.b16 %v985, %v977
    %v1418 = vpack.c.b16 %v994, %v986
    %v1419 = vpack.c.b16 %v995, %v987
    %v1420 = vpack.c.b16 %v996, %v988
    %v1421 = vpack.c.b16 %v997, %v989
    %v1422 = vpack.c.b16 %v998, %v990
    %v1423 = vpack.c.b16 %v999, %v991
    %v1424 = vpack.c.b16 %v1000, %v992
    %v1425 = vpack.c.b16 %v1001, %v993
    %v1426 = vpack.c.b16 %v1010, %v1002
    %v1427 = vpack.c.b16 %v1011, %v1003
    %v1428 = vpack.c.b16 %v1012, %v1004
    %v1429 = vpack.c.b16 %v1013, %v1005
    %v1430 = vpack.c.b16 %v1014, %v1006
    %v1431 = vpack.c.b16 %v1015, %v1007
    %v1432 = vpack.c.b16 %v1016, %v1008
    %v1433 = vpack.c.b16 %v1017, %v1009
    %v1434 = vpack.c.b16 %v1026, %v1018
    %v1435 = vpack.c.b16 %v1027, %v1019
    %v1436 = vpack.c.b16 %v1028, %v1020
    %v1437 = vpack.c.b16 %v1029, %v1021
    %v1438 = vpack.c.b16 %v1030, %v1022
    %v1439 = vpack.c.b16 %v1031, %v1023
    %v1440 = vpack.c.b16 %v1032, %v1024
    %v1441 = vpack.c.b16 %v1033, %v1025
    %v1442 = vpack.c.b16 %v1042, %v1034
    %v1443 = vpack.c.b16 %v1043, %v1035
    %v1444 = vpack.c.b16 %v1044, %v1036
    %v1445 = vpack.c.b16 %v1045, %v1037
    %v1446 = vpack.c.b16 %v1046, %v1038
    %v1447 = vpack.c.b16 %v1047, %v1039
    %v1448 = vpack.c.b16 %v1048, %v1040
    %v1449 = vpack.c.b16 %v1049, %v1041
    %v1450 = vpack.c.b16 %v1058, %v1050
    %v1451 = vpack.c.b16 %v1059, %v1051
    %v1452 = vpack.c.b16 %v1060, %v1052
    %v1453 = vpack.c.b16 %v1061, %v1053
    %v1454 = vpack.c.b16 %v1062, %v1054
    %v1455 = vpack.c.b16 %v1063, %v1055
    %v1456 = vpack.c.b16 %v1064, %v1056
    %v1457 = vpack.c.b16 %v1065, %v1057
    %v1458 = vpack.c.b16 %v1074, %v1066
    %v1459 = vpack.c.b16 %v1075, %v1067
    %v1460 = vpack.c.b16 %v1076, %v1068
    %v1461 = vpack.c.b16 %v1077, %v1069
    %v1462 = vpack.c.b16 %v1078, %v1070
    %v1463 = vpack.c.b16 %v1079, %v1071
    %v1464 = vpack.c.b16 %v1080, %v1072
    %v1465 = vpack.c.b16 %v1081, %v1073
    %v1466 = vpack.c.b16 %v1090, %v1082
    %v1467 = vpack.c.b16 %v1091, %v1083
    %v1468 = vpack.c.b16 %v1092, %v1084
    %v1469 = vpack.c.b16 %v1093, %v1085
    %v1470 = vpack.c.b16 %v1094, %v1086
    %v1471 = vpack.c.b16 %v1095, %v1087
    %v1472 = vpack.c.b16 %v1096, %v1088
    %v1473 = vpack.c.b16 %v1097, %v1089
    %v1474 = vpack.c.b16 %v1106, %v1098
    %v1475 = vpack.c.b16 %v1107, %v1099
    %v1476 = vpack.c.b16 %v1108, %v1100
    %v1477 = vpack.c.b16 %v1109, %v1101
    %v1478 = vpack.c.b16 %v1110, %v1102
    %v1479 = vpack.c.b16 %v1111, %v1103
    %v1480 = vpack.c.b16 %v1112, %v1104
    %v1481 = vpack.c.b16 %v1113, %v1105
    %v1482 = vpack.c.b16 %v1122, %v1114
    %v1483 = vpack.c.b16 %v1123, %v1115
    %v1484 = vpack.c.b16 %v1124, %v1116
    %v1485 = vpack.c.b16 %v1125, %v1117
    %v1486 = vpack.c.b16 %v1126, %v1118
    %v1487 = vpack.c.b16 %v1127, %v1119
    %v1488 = vpack.c.b16 %v1128, %v1120
    %v1489 = vpack.c.b16 %v1129, %v1121
    %v1490 = vpack.c.b16 %v1138, %v1130
    %v1491 = vpack.c.b16 %v1139, %v1131
    %v1492 = vpack.c.b16 %v1140, %v1132
    %v1493 = vpack.c.b16 %v1141, %v1133
    %v1494 = vpack.c.b16 %v1142, %v1134
    %v1495 = vpack.c.b16 %v1143, %v1135
    %v1496 = vpack.c.b16 %v1144, %v1136
    %v1497 = vpack.c.b16 %v1145, %v1137
    %v1498 = vpack.c.b16 %v1154, %v1146
    %v1499 = vpack.c.b16 %v1155, %v1147
    %v1500 = vpack.c.b16 %v1156, %v1148
    %v1501 = vpack.c.b16 %v1157, %v1149
    %v1502 = vpack.c.b16 %v1158, %v1150
    %v1503 = vpack.c.b16 %v1159, %v1151
    %v1504 = vpack.c.b16 %v1160, %v1152
    %v1505 = vpack.c.b16 %v1161, %v1153
    %v1506 = vpack.c.b16 %v1170, %v1162
    %v1507 = vpack.c.b16 %v1171, %v1163
    %v1508 = vpack.c.b16 %v1172, %v1164
    %v1509 = vpack.c.b16 %v1173, %v1165
    %v1510 = vpack.c.b16 %v1174, %v1166
    %v1511 = vpack.c.b16 %v1175, %v1167
    %v1512 = vpack.c.b16 %v1176, %v1168
    %v1513 = vpack.c.b16 %v1177, %v1169
    %v1514 = vpack.c.b16 %v1186, %v1178
    %v1515 = vpack.c.b16 %v1187, %v1179
    %v1516 = vpack.c.b16 %v1188, %v1180
    %v1517 = vpack.c.b16 %v1189, %v1181
    %v1518 = vpack.c.b16 %v1190, %v1182
    %v1519 = vpack.c.b16 %v1191, %v1183
    %v1520 = vpack.c.b16 %v1192, %v1184
    %v1521 = vpack.c.b16 %v1193, %v1185
    %v1522 = vpack.c.b16 %v1202, %v1194
    %v1523 = vpack.c.b16 %v1203, %v1195
    %v1524 = vpack.c.b16 %v1204, %v1196
    %v1525 = vpack.c.b16 %v1205, %v1197
    %v1526 = vpack.c.b16 %v1206, %v1198
    %v1527 = vpack.c.b16 %v1207, %v1199
    %v1528 = vpack.c.b16 %v1208, %v1200
    %v1529 = vpack.c.b16 %v1209, %v1201
    %v1530 = vpack.c.b16 %v1218, %v1210
    %v1531 = vpack.c.b16 %v1219, %v1211
    %v1532 = vpack.c.b16 %v1220, %v1212
    %v1533 = vpack.c.b16 %v1221, %v1213
    %v1534 = vpack.c.b16 %v1222, %v1214
    %v1535 = vpack.c.b16 %v1223, %v1215
    %v1536 = vpack.c.b16 %v1224, %v1216
    %v1537 = vpack.c.b16 %v1225, %v1217
    %v1538 = vpack.c.b16 %v1234, %v1226
    %v1539 = vpack.c.b16 %v1235, %v1227
    %v1540 = vpack.c.b16 %v1236, %v1228
    %v1541 = vpack.c.b16 %v1237, %v1229
    %v1542 = vpack.c.b16 %v1238, %v1230
    %v1543 = vpack.c.b16 %v1239, %v1231
    %v1544 = vpack.c.b16 %v1240, %v1232
    %v1545 = vpack.c.b16 %v1241, %v1233
    %v1546 = vpack.c.b16 %v1250, %v1242
    %v1547 = vpack.c.b16 %v1251, %v1243
    %v1548 = vpack.c.b16 %v1252, %v1244
    %v1549 = vpack.c.b16 %v1253, %v1245
    %v1550 = vpack.c.b16 %v1254, %v1246
    %v1551 = vpack.c.b16 %v1255, %v1247
    %v1552 = vpack.c.b16 %v1256, %v1248
    %v1553 = vpack.c.b16 %v1257, %v1249
    %v1554 = vpack.c.b16 %v1266, %v1258
    %v1555 = vpack.c.b16 %v1267, %v1259
    %v1556 = vpack.c.b16 %v1268, %v1260
    %v1557 = vpack.c.b16 %v1269, %v1261
    %v1558 = vpack.c.b16 %v1270, %v1262
    %v1559 = vpack.c.b16 %v1271, %v1263
    %v1560 = vpack.c.b16 %v1272, %v1264
    %v1561 = vpack.c.b16 %v1273, %v1265
    %v1562 = vpack.c.b16 %v1282, %v1274
    %v1563 = vpack.c.b16 %v1283, %v1275
    %v1564 = vpack.c.b16 %v1284, %v1276
    %v1565 = vpack.c.b16 %v1285, %v1277
    %v1566 = vpack.c.b16 %v1286, %v1278
    %v1567 = vpack.c.b16 %v1287, %v1279
    %v1568 = vpack.c.b16 %v1288, %v1280
    %v1569 = vpack.c.b16 %v1289, %v1281
    %v1570 = vpack.c.b16 %v1298, %v1290
    %v1571 = vpack.c.b16 %v1299, %v1291
    %v1572 = vpack.c.b16 %v1300, %v1292
    %v1573 = vpack.c.b16 %v1301, %v1293
    %v1574 = vpack.c.b16 %v1302, %v1294
    %v1575 = vpack.c.b16 %v1303, %v1295
    %v1576 = vpack.c.b16 %v1304, %v1296
    %v1577 = vpack.c.b16 %v1305, %v1297
    %v1578 = vpack.c.b16 %v1314, %v1306
    %v1579 = vpack.c.b16 %v1315, %v1307
    %v1580 = vpack.c.b16 %v1316, %v1308
    %v1581 = vpack.c.b16 %v1317, %v1309
    %v1582 = vpack.c.b16 %v1318, %v1310
    %v1583 = vpack.c.b16 %v1319, %v1311
    %v1584 = vpack.c.b16 %v1320, %v1312
    %v1585 = vpack.c.b16 %v1321, %v1313
    %v1586 = vpack.c.b16 %v1330, %v1322
    %v1587 = vpack.c.b16 %v1331, %v1323
    %v1588 = vpack.c.b16 %v1332, %v1324
    %v1589 = vpack.c.b16 %v1333, %v1325
    %v1590 = vpack.c.b16 %v1334, %v1326
    %v1591 = vpack.c.b16 %v1335, %v1327
    %v1592 = vpack.c.b16 %v1336, %v1328
    %v1593 = vpack.c.b16 %v1337, %v1329
    %1850 = vmatprep.subr.bf16.mxu0 %v1339
    %1851 = vmatpush1.bf16.msra.mxu0 %v1338
    %1852 = vmatprep.subr.bf16.mxu0 %v1347
    %1853 = vmatpush1.bf16.msra.mxu0 %v1346
    %1854 = vmatprep.subr.bf16.mxu0 %v1355
    %1855 = vmatpush1.bf16.msra.mxu0 %v1354
    %1856 = vmatprep.subr.bf16.mxu0 %v1363
    %1857 = vmatpush1.bf16.msra.mxu0 %v1362
    %1858 = vmatprep.subr.bf16.mxu0 %v1371
    %1859 = vmatpush1.bf16.msra.mxu0 %v1370
    %1860 = vmatprep.subr.bf16.mxu0 %v1379
    %1861 = vmatpush1.bf16.msra.mxu0 %v1378
    %1862 = vmatprep.subr.bf16.mxu0 %v1387
    %1863 = vmatpush1.bf16.msra.mxu0 %v1386
    %1864 = vmatprep.subr.bf16.mxu0 %v1395
    %1865 = vmatpush1.bf16.msra.mxu0 %v1394
    %1866 = vmatprep.subr.bf16.mxu0 %v1403
    %1867 = vmatpush1.bf16.msra.mxu0 %v1402
    %1868 = vmatprep.subr.bf16.mxu0 %v1411
    %1869 = vmatpush1.bf16.msra.mxu0 %v1410
    %1870 = vmatprep.subr.bf16.mxu0 %v1419
    %1871 = vmatpush1.bf16.msra.mxu0 %v1418
    %1872 = vmatprep.subr.bf16.mxu0 %v1427
    %1873 = vmatpush1.bf16.msra.mxu0 %v1426
    %1874 = vmatprep.subr.bf16.mxu0 %v1435
    %1875 = vmatpush1.bf16.msra.mxu0 %v1434
    %1876 = vmatprep.subr.bf16.mxu0 %v1443
    %1877 = vmatpush1.bf16.msra.mxu0 %v1442
    %1878 = vmatprep.subr.bf16.mxu0 %v1451
    %1879 = vmatpush1.bf16.msra.mxu0 %v1450
    %1880 = vmatprep.subr.bf16.mxu0 %v1459
    %1881 = vmatpush1.bf16.msra.mxu0 %v1458
    %1882 = vmatprep.mubr.bf16.mxu0 %v209
    %1883 = vmatmul.mubr.bf16.gmra.mrb[0].mxu0 %v208
    %v1884 = vpop.f32.mrb[0].mxu0
    %v1885 = vadd.f32 %v533, %v1884
    %v1886 = vpop.f32.mrb[0].mxu0
    %v1887 = vadd.f32 %v537, %v1886
    %v1888 = vpop.f32.mrb[0].mxu0
    %v1889 = vadd.f32 %v533, %v1888
    %v1890 = vpop.f32.mrb[0].mxu0
    %v1891 = vadd.f32 %v537, %v1890
    %1892 = vmatprep.mubr.bf16.mxu0 %v213
    %1893 = vmatmul.mubr.bf16.gmra.mrb[0].mxu0 %v212
    %v1894 = vpop.f32.mrb[0].mxu0
    %v1895 = vadd.f32 %v533, %v1894
    %v1896 = vpop.f32.mrb[0].mxu0
    %v1897 = vadd.f32 %v537, %v1896
    %v1898 = vpop.f32.mrb[0].mxu0
    %v1899 = vadd.f32 %v533, %v1898
    %v1900 = vpop.f32.mrb[0].mxu0
    %v1901 = vadd.f32 %v537, %v1900
    %1902 = vmatprep.mubr.bf16.mxu0 %v217
    %1903 = vmatmul.mubr.bf16.gmra.mrb[0].mxu0 %v216
    %v1904 = vpop.f32.mrb[0].mxu0
    %v1905 = vadd.f32 %v533, %v1904
    %v1906 = vpop.f32.mrb[0].mxu0
    %v1907 = vadd.f32 %v537, %v1906
    %v1908 = vpop.f32.mrb[0].mxu0
    %v1909 = vadd.f32 %v533, %v1908
    %v1910 = vpop.f32.mrb[0].mxu0
    %v1911 = vadd.f32 %v537, %v1910
    %1912 = vmatprep.mubr.bf16.mxu0 %v221
    %1913 = vmatmul.mubr.bf16.gmra.mrb[0].mxu0 %v220
    %v1914 = vpop.f32.mrb[0].mxu0
    %v1915 = vadd.f32 %v533, %v1914
    %v1916 = vpop.f32.mrb[0].mxu0
    %v1917 = vadd.f32 %v537, %v1916
    %v1918 = vpop.f32.mrb[0].mxu0
    %v1919 = vadd.f32 %v533, %v1918
    %v1920 = vpop.f32.mrb[0].mxu0
    %v1921 = vadd.f32 %v537, %v1920
    %1922 = vmatprep.mubr.bf16.mxu0 %v225
    %1923 = vmatmul.mubr.bf16.gmra.mrb[0].mxu0 %v224
    %v1924 = vpop.f32.mrb[0].mxu0
    %v1925 = vadd.f32 %v533, %v1924
    %v1926 = vpop.f32.mrb[0].mxu0
    %v1927 = vadd.f32 %v537, %v1926
    %v1928 = vpop.f32.mrb[0].mxu0
    %v1929 = vadd.f32 %v533, %v1928
    %v1930 = vpop.f32.mrb[0].mxu0
    %v1931 = vadd.f32 %v537, %v1930
    %1932 = vmatprep.mubr.bf16.mxu0 %v229
    %1933 = vmatmul.mubr.bf16.gmra.mrb[0].mxu0 %v228
    %v1934 = vpop.f32.mrb[0].mxu0
    %v1935 = vadd.f32 %v533, %v1934
    %v1936 = vpop.f32.mrb[0].mxu0
    %v1937 = vadd.f32 %v537, %v1936
    %v1938 = vpop.f32.mrb[0].mxu0
    %v1939 = vadd.f32 %v533, %v1938
    %v1940 = vpop.f32.mrb[0].mxu0
    %v1941 = vadd.f32 %v537, %v1940
    %1942 = vmatprep.mubr.bf16.mxu0 %v233
    %1943 = vmatmul.mubr.bf16.gmra.mrb[0].mxu0 %v232
    %v1944 = vpop.f32.mrb[0].mxu0
    %v1945 = vadd.f32 %v533, %v1944
    %v1946 = vpop.f32.mrb[0].mxu0
    %v1947 = vadd.f32 %v537, %v1946
    %v1948 = vpop.f32.mrb[0].mxu0
    %v1949 = vadd.f32 %v533, %v1948
    %v1950 = vpop.f32.mrb[0].mxu0
    %v1951 = vadd.f32 %v537, %v1950
    %1952 = vmatprep.mubr.bf16.mxu0 %v237
    %1953 = vmatmul.mubr.bf16.gmra.mrb[0].mxu0 %v236
    %v1954 = vpop.f32.mrb[0].mxu0
    %v1955 = vadd.f32 %v533, %v1954
    %v1956 = vpop.f32.mrb[0].mxu0
    %v1957 = vadd.f32 %v537, %v1956
    %v1958 = vpop.f32.mrb[0].mxu0
    %v1959 = vadd.f32 %v533, %v1958
    %v1960 = vpop.f32.mrb[0].mxu0
    %v1961 = vadd.f32 %v537, %v1960
    %1962 = vmatprep.mubr.bf16.mxu0 %v241
    %1963 = vmatmul.mubr.bf16.gmra.mrb[0].mxu0 %v240
    %v1964 = vpop.f32.mrb[0].mxu0
    %v1965 = vadd.f32 %v533, %v1964
    %v1966 = vpop.f32.mrb[0].mxu0
    %v1967 = vadd.f32 %v537, %v1966
    %v1968 = vpop.f32.mrb[0].mxu0
    %v1969 = vadd.f32 %v533, %v1968
    %v1970 = vpop.f32.mrb[0].mxu0
    %v1971 = vadd.f32 %v537, %v1970
    %1972 = vmatprep.mubr.bf16.mxu0 %v245
    %1973 = vmatmul.mubr.bf16.gmra.mrb[0].mxu0 %v244
    %v1974 = vpop.f32.mrb[0].mxu0
    %v1975 = vadd.f32 %v533, %v1974
    %v1976 = vpop.f32.mrb[0].mxu0
    %v1977 = vadd.f32 %v537, %v1976
    %v1978 = vpop.f32.mrb[0].mxu0
    %v1979 = vadd.f32 %v533, %v1978
    %v1980 = vpop.f32.mrb[0].mxu0
    %v1981 = vadd.f32 %v537, %v1980
    %1982 = vmatprep.mubr.bf16.mxu0 %v249
    %1983 = vmatmul.mubr.bf16.gmra.mrb[0].mxu0 %v248
    %v1984 = vpop.f32.mrb[0].mxu0
    %v1985 = vadd.f32 %v533, %v1984
    %v1986 = vpop.f32.mrb[0].mxu0
    %v1987 = vadd.f32 %v537, %v1986
    %v1988 = vpop.f32.mrb[0].mxu0
    %v1989 = vadd.f32 %v533, %v1988
    %v1990 = vpop.f32.mrb[0].mxu0
    %v1991 = vadd.f32 %v537, %v1990
    %1992 = vmatprep.mubr.bf16.mxu0 %v253
    %1993 = vmatmul.mubr.bf16.gmra.mrb[0].mxu0 %v252
    %v1994 = vpop.f32.mrb[0].mxu0
    %v1995 = vadd.f32 %v533, %v1994
    %v1996 = vpop.f32.mrb[0].mxu0
    %v1997 = vadd.f32 %v537, %v1996
    %v1998 = vpop.f32.mrb[0].mxu0
    %v1999 = vadd.f32 %v533, %v1998
    %v2000 = vpop.f32.mrb[0].mxu0
    %v2001 = vadd.f32 %v537, %v2000
    %2002 = vmatprep.mubr.bf16.mxu0 %v257
    %2003 = vmatmul.mubr.bf16.gmra.mrb[0].mxu0 %v256
    %v2004 = vpop.f32.mrb[0].mxu0
    %v2005 = vadd.f32 %v533, %v2004
    %v2006 = vpop.f32.mrb[0].mxu0
    %v2007 = vadd.f32 %v537, %v2006
    %v2008 = vpop.f32.mrb[0].mxu0
    %v2009 = vadd.f32 %v533, %v2008
    %v2010 = vpop.f32.mrb[0].mxu0
    %v2011 = vadd.f32 %v537, %v2010
    %2012 = vmatprep.mubr.bf16.mxu0 %v261
    %2013 = vmatmul.mubr.bf16.gmra.mrb[0].mxu0 %v260
    %v2014 = vpop.f32.mrb[0].mxu0
    %v2015 = vadd.f32 %v533, %v2014
    %v2016 = vpop.f32.mrb[0].mxu0
    %v2017 = vadd.f32 %v537, %v2016
    %v2018 = vpop.f32.mrb[0].mxu0
    %v2019 = vadd.f32 %v533, %v2018
    %v2020 = vpop.f32.mrb[0].mxu0
    %v2021 = vadd.f32 %v537, %v2020
    %2022 = vmatprep.mubr.bf16.mxu0 %v265
    %2023 = vmatmul.mubr.bf16.gmra.mrb[0].mxu0 %v264
    %v2024 = vpop.f32.mrb[0].mxu0
    %v2025 = vadd.f32 %v533, %v2024
    %v2026 = vpop.f32.mrb[0].mxu0
    %v2027 = vadd.f32 %v537, %v2026
    %v2028 = vpop.f32.mrb[0].mxu0
    %v2029 = vadd.f32 %v533, %v2028
    %v2030 = vpop.f32.mrb[0].mxu0
    %v2031 = vadd.f32 %v537, %v2030
    %2032 = vmatprep.mubr.bf16.mxu0 %v269
    %2033 = vmatmul.mubr.bf16.gmra.mrb[0].mxu0 %v268
    %v2034 = vpop.f32.mrb[0].mxu0
    %v2035 = vadd.f32 %v533, %v2034
    %v2036 = vpop.f32.mrb[0].mxu0
    %v2037 = vadd.f32 %v537, %v2036
    %v2038 = vpop.f32.mrb[0].mxu0
    %v2039 = vadd.f32 %v533, %v2038
    %v2040 = vpop.f32.mrb[0].mxu0
    %v2041 = vadd.f32 %v537, %v2040
    %2042 = vdwg.mxu0
    %2043 = vmatprep.subr.bf16.mxu0 %v1467
    %2044 = vmatpush1.bf16.msra.mxu0 %v1466
    %2045 = vmatprep.subr.bf16.mxu0 %v1475
    %2046 = vmatpush1.bf16.msra.mxu0 %v1474
    %2047 = vmatprep.subr.bf16.mxu0 %v1483
    %2048 = vmatpush1.bf16.msra.mxu0 %v1482
    %2049 = vmatprep.subr.bf16.mxu0 %v1491
    %2050 = vmatpush1.bf16.msra.mxu0 %v1490
    %2051 = vmatprep.subr.bf16.mxu0 %v1499
    %2052 = vmatpush1.bf16.msra.mxu0 %v1498
    %2053 = vmatprep.subr.bf16.mxu0 %v1507
    %2054 = vmatpush1.bf16.msra.mxu0 %v1506
    %2055 = vmatprep.subr.bf16.mxu0 %v1515
    %2056 = vmatpush1.bf16.msra.mxu0 %v1514
    %2057 = vmatprep.subr.bf16.mxu0 %v1523
    %2058 = vmatpush1.bf16.msra.mxu0 %v1522
    %2059 = vmatprep.subr.bf16.mxu0 %v1531
    %2060 = vmatpush1.bf16.msra.mxu0 %v1530
    %2061 = vmatprep.subr.bf16.mxu0 %v1539
    %2062 = vmatpush1.bf16.msra.mxu0 %v1538
    %2063 = vmatprep.subr.bf16.mxu0 %v1547
    %2064 = vmatpush1.bf16.msra.mxu0 %v1546
    %2065 = vmatprep.subr.bf16.mxu0 %v1555
    %2066 = vmatpush1.bf16.msra.mxu0 %v1554
    %2067 = vmatprep.subr.bf16.mxu0 %v1563
    %2068 = vmatpush1.bf16.msra.mxu0 %v1562
    %2069 = vmatprep.subr.bf16.mxu0 %v1571
    %2070 = vmatpush1.bf16.msra.mxu0 %v1570
    %2071 = vmatprep.subr.bf16.mxu0 %v1579
    %2072 = vmatpush1.bf16.msra.mxu0 %v1578
    %2073 = vmatprep.subr.bf16.mxu0 %v1587
    %2074 = vmatpush1.bf16.msra.mxu0 %v1586
    %2075 = vmatprep.mubr.bf16.mxu0 %v211
    %2076 = vmatmul.mubr.bf16.gmra.mrb[0].mxu0 %v210
    %v2077 = vpop.f32.mrb[0].mxu0
    %v2078 = vadd.f32 %v1885, %v2077
    %v2079 = vpop.f32.mrb[0].mxu0
    %v2080 = vadd.f32 %v1887, %v2079
    %v2081 = vpop.f32.mrb[0].mxu0
    %v2082 = vadd.f32 %v1889, %v2081
    %v2083 = vpop.f32.mrb[0].mxu0
    %v2084 = vadd.f32 %v1891, %v2083
    %2085 = vmatprep.mubr.bf16.mxu0 %v215
    %2086 = vmatmul.mubr.bf16.gmra.mrb[0].mxu0 %v214
    %v2087 = vpop.f32.mrb[0].mxu0
    %v2088 = vadd.f32 %v1895, %v2087
    %v2089 = vpop.f32.mrb[0].mxu0
    %v2090 = vadd.f32 %v1897, %v2089
    %v2091 = vpop.f32.mrb[0].mxu0
    %v2092 = vadd.f32 %v1899, %v2091
    %v2093 = vpop.f32.mrb[0].mxu0
    %v2094 = vadd.f32 %v1901, %v2093
    %2095 = vmatprep.mubr.bf16.mxu0 %v219
    %2096 = vmatmul.mubr.bf16.gmra.mrb[0].mxu0 %v218
    %v2097 = vpop.f32.mrb[0].mxu0
    %v2098 = vadd.f32 %v1905, %v2097
    %v2099 = vpop.f32.mrb[0].mxu0
    %v2100 = vadd.f32 %v1907, %v2099
    %v2101 = vpop.f32.mrb[0].mxu0
    %v2102 = vadd.f32 %v1909, %v2101
    %v2103 = vpop.f32.mrb[0].mxu0
    %v2104 = vadd.f32 %v1911, %v2103
    %2105 = vmatprep.mubr.bf16.mxu0 %v223
    %2106 = vmatmul.mubr.bf16.gmra.mrb[0].mxu0 %v222
    %v2107 = vpop.f32.mrb[0].mxu0
    %v2108 = vadd.f32 %v1915, %v2107
    %v2109 = vpop.f32.mrb[0].mxu0
    %v2110 = vadd.f32 %v1917, %v2109
    %v2111 = vpop.f32.mrb[0].mxu0
    %v2112 = vadd.f32 %v1919, %v2111
    %v2113 = vpop.f32.mrb[0].mxu0
    %v2114 = vadd.f32 %v1921, %v2113
    %2115 = vmatprep.mubr.bf16.mxu0 %v227
    %2116 = vmatmul.mubr.bf16.gmra.mrb[0].mxu0 %v226
    %v2117 = vpop.f32.mrb[0].mxu0
    %v2118 = vadd.f32 %v1925, %v2117
    %v2119 = vpop.f32.mrb[0].mxu0
    %v2120 = vadd.f32 %v1927, %v2119
    %v2121 = vpop.f32.mrb[0].mxu0
    %v2122 = vadd.f32 %v1929, %v2121
    %v2123 = vpop.f32.mrb[0].mxu0
    %v2124 = vadd.f32 %v1931, %v2123
    %2125 = vmatprep.mubr.bf16.mxu0 %v231
    %2126 = vmatmul.mubr.bf16.gmra.mrb[0].mxu0 %v230
    %v2127 = vpop.f32.mrb[0].mxu0
    %v2128 = vadd.f32 %v1935, %v2127
    %v2129 = vpop.f32.mrb[0].mxu0
    %v2130 = vadd.f32 %v1937, %v2129
    %v2131 = vpop.f32.mrb[0].mxu0
    %v2132 = vadd.f32 %v1939, %v2131
    %v2133 = vpop.f32.mrb[0].mxu0
    %v2134 = vadd.f32 %v1941, %v2133
    %2135 = vmatprep.mubr.bf16.mxu0 %v235
    %2136 = vmatmul.mubr.bf16.gmra.mrb[0].mxu0 %v234
    %v2137 = vpop.f32.mrb[0].mxu0
    %v2138 = vadd.f32 %v1945, %v2137
    %v2139 = vpop.f32.mrb[0].mxu0
    %v2140 = vadd.f32 %v1947, %v2139
    %v2141 = vpop.f32.mrb[0].mxu0
    %v2142 = vadd.f32 %v1949, %v2141
    %v2143 = vpop.f32.mrb[0].mxu0
    %v2144 = vadd.f32 %v1951, %v2143
    %2145 = vmatprep.mubr.bf16.mxu0 %v239
    %2146 = vmatmul.mubr.bf16.gmra.mrb[0].mxu0 %v238
    %v2147 = vpop.f32.mrb[0].mxu0
    %v2148 = vadd.f32 %v1955, %v2147
    %v2149 = vpop.f32.mrb[0].mxu0
    %v2150 = vadd.f32 %v1957, %v2149
    %v2151 = vpop.f32.mrb[0].mxu0
    %v2152 = vadd.f32 %v1959, %v2151
    %v2153 = vpop.f32.mrb[0].mxu0
    %v2154 = vadd.f32 %v1961, %v2153
    %2155 = vmatprep.mubr.bf16.mxu0 %v243
    %2156 = vmatmul.mubr.bf16.gmra.mrb[0].mxu0 %v242
    %v2157 = vpop.f32.mrb[0].mxu0
    %v2158 = vadd.f32 %v1965, %v2157
    %v2159 = vpop.f32.mrb[0].mxu0
    %v2160 = vadd.f32 %v1967, %v2159
    %v2161 = vpop.f32.mrb[0].mxu0
    %v2162 = vadd.f32 %v1969, %v2161
    %v2163 = vpop.f32.mrb[0].mxu0
    %v2164 = vadd.f32 %v1971, %v2163
    %2165 = vmatprep.mubr.bf16.mxu0 %v247
    %2166 = vmatmul.mubr.bf16.gmra.mrb[0].mxu0 %v246
    %v2167 = vpop.f32.mrb[0].mxu0
    %v2168 = vadd.f32 %v1975, %v2167
    %v2169 = vpop.f32.mrb[0].mxu0
    %v2170 = vadd.f32 %v1977, %v2169
    %v2171 = vpop.f32.mrb[0].mxu0
    %v2172 = vadd.f32 %v1979, %v2171
    %v2173 = vpop.f32.mrb[0].mxu0
    %v2174 = vadd.f32 %v1981, %v2173
    %2175 = vmatprep.mubr.bf16.mxu0 %v251
    %2176 = vmatmul.mubr.bf16.gmra.mrb[0].mxu0 %v250
    %v2177 = vpop.f32.mrb[0].mxu0
    %v2178 = vadd.f32 %v1985, %v2177
    %v2179 = vpop.f32.mrb[0].mxu0
    %v2180 = vadd.f32 %v1987, %v2179
    %v2181 = vpop.f32.mrb[0].mxu0
    %v2182 = vadd.f32 %v1989, %v2181
    %v2183 = vpop.f32.mrb[0].mxu0
    %v2184 = vadd.f32 %v1991, %v2183
    %2185 = vmatprep.mubr.bf16.mxu0 %v255
    %2186 = vmatmul.mubr.bf16.gmra.mrb[0].mxu0 %v254
    %v2187 = vpop.f32.mrb[0].mxu0
    %v2188 = vadd.f32 %v1995, %v2187
    %v2189 = vpop.f32.mrb[0].mxu0
    %v2190 = vadd.f32 %v1997, %v2189
    %v2191 = vpop.f32.mrb[0].mxu0
    %v2192 = vadd.f32 %v1999, %v2191
    %v2193 = vpop.f32.mrb[0].mxu0
    %v2194 = vadd.f32 %v2001, %v2193
    %2195 = vmatprep.mubr.bf16.mxu0 %v259
    %2196 = vmatmul.mubr.bf16.gmra.mrb[0].mxu0 %v258
    %v2197 = vpop.f32.mrb[0].mxu0
    %v2198 = vadd.f32 %v2005, %v2197
    %v2199 = vpop.f32.mrb[0].mxu0
    %v2200 = vadd.f32 %v2007, %v2199
    %v2201 = vpop.f32.mrb[0].mxu0
    %v2202 = vadd.f32 %v2009, %v2201
    %v2203 = vpop.f32.mrb[0].mxu0
    %v2204 = vadd.f32 %v2011, %v2203
    %2205 = vmatprep.mubr.bf16.mxu0 %v263
    %2206 = vmatmul.mubr.bf16.gmra.mrb[0].mxu0 %v262
    %v2207 = vpop.f32.mrb[0].mxu0
    %v2208 = vadd.f32 %v2015, %v2207
    %v2209 = vpop.f32.mrb[0].mxu0
    %v2210 = vadd.f32 %v2017, %v2209
    %v2211 = vpop.f32.mrb[0].mxu0
    %v2212 = vadd.f32 %v2019, %v2211
    %v2213 = vpop.f32.mrb[0].mxu0
    %v2214 = vadd.f32 %v2021, %v2213
    %2215 = vmatprep.mubr.bf16.mxu0 %v267
    %2216 = vmatmul.mubr.bf16.gmra.mrb[0].mxu0 %v266
    %v2217 = vpop.f32.mrb[0].mxu0
    %v2218 = vadd.f32 %v2025, %v2217
    %v2219 = vpop.f32.mrb[0].mxu0
    %v2220 = vadd.f32 %v2027, %v2219
    %v2221 = vpop.f32.mrb[0].mxu0
    %v2222 = vadd.f32 %v2029, %v2221
    %v2223 = vpop.f32.mrb[0].mxu0
    %v2224 = vadd.f32 %v2031, %v2223
    %2225 = vmatprep.mubr.bf16.mxu0 %v271
    %2226 = vmatmul.mubr.bf16.gmra.mrb[0].mxu0 %v270
    %v2227 = vpop.f32.mrb[0].mxu0
    %v2228 = vadd.f32 %v2035, %v2227
    %v2229 = vpop.f32.mrb[0].mxu0
    %v2230 = vadd.f32 %v2037, %v2229
    %v2231 = vpop.f32.mrb[0].mxu0
    %v2232 = vadd.f32 %v2039, %v2231
    %v2233 = vpop.f32.mrb[0].mxu0
    %v2234 = vadd.f32 %v2041, %v2233
    %2235 = vdwg.mxu0
    %2236 = vmatprep.subr.bf16.mxu0 %v1341
    %2237 = vmatpush1.bf16.msra.mxu0 %v1340
    %2238 = vmatprep.subr.bf16.mxu0 %v1349
    %2239 = vmatpush1.bf16.msra.mxu0 %v1348
    %2240 = vmatprep.subr.bf16.mxu0 %v1357
    %2241 = vmatpush1.bf16.msra.mxu0 %v1356
    %2242 = vmatprep.subr.bf16.mxu0 %v1365
    %2243 = vmatpush1.bf16.msra.mxu0 %v1364
    %2244 = vmatprep.subr.bf16.mxu0 %v1373
    %2245 = vmatpush1.bf16.msra.mxu0 %v1372
    %2246 = vmatprep.subr.bf16.mxu0 %v1381
    %2247 = vmatpush1.bf16.msra.mxu0 %v1380
    %2248 = vmatprep.subr.bf16.mxu0 %v1389
    %2249 = vmatpush1.bf16.msra.mxu0 %v1388
    %2250 = vmatprep.subr.bf16.mxu0 %v1397
    %2251 = vmatpush1.bf16.msra.mxu0 %v1396
    %2252 = vmatprep.subr.bf16.mxu0 %v1405
    %2253 = vmatpush1.bf16.msra.mxu0 %v1404
    %2254 = vmatprep.subr.bf16.mxu0 %v1413
    %2255 = vmatpush1.bf16.msra.mxu0 %v1412
    %2256 = vmatprep.subr.bf16.mxu0 %v1421
    %2257 = vmatpush1.bf16.msra.mxu0 %v1420
    %2258 = vmatprep.subr.bf16.mxu0 %v1429
    %2259 = vmatpush1.bf16.msra.mxu0 %v1428
    %2260 = vmatprep.subr.bf16.mxu0 %v1437
    %2261 = vmatpush1.bf16.msra.mxu0 %v1436
    %2262 = vmatprep.subr.bf16.mxu0 %v1445
    %2263 = vmatpush1.bf16.msra.mxu0 %v1444
    %2264 = vmatprep.subr.bf16.mxu0 %v1453
    %2265 = vmatpush1.bf16.msra.mxu0 %v1452
    %2266 = vmatprep.subr.bf16.mxu0 %v1461
    %2267 = vmatpush1.bf16.msra.mxu0 %v1460
    %2268 = vmatprep.mubr.bf16.mxu0 %v209
    %2269 = vmatmul.mubr.bf16.gmra.mrb[0].mxu0 %v208
    %v2270 = vpop.f32.mrb[0].mxu0
    %v2271 = vadd.f32 %v541, %v2270
    %v2272 = vpop.f32.mrb[0].mxu0
    %v2273 = vadd.f32 %v545, %v2272
    %v2274 = vpop.f32.mrb[0].mxu0
    %v2275 = vadd.f32 %v541, %v2274
    %v2276 = vpop.f32.mrb[0].mxu0
    %v2277 = vadd.f32 %v545, %v2276
    %2278 = vmatprep.mubr.bf16.mxu0 %v213
    %2279 = vmatmul.mubr.bf16.gmra.mrb[0].mxu0 %v212
    %v2280 = vpop.f32.mrb[0].mxu0
    %v2281 = vadd.f32 %v541, %v2280
    %v2282 = vpop.f32.mrb[0].mxu0
    %v2283 = vadd.f32 %v545, %v2282
    %v2284 = vpop.f32.mrb[0].mxu0
    %v2285 = vadd.f32 %v541, %v2284
    %v2286 = vpop.f32.mrb[0].mxu0
    %v2287 = vadd.f32 %v545, %v2286
    %2288 = vmatprep.mubr.bf16.mxu0 %v217
    %2289 = vmatmul.mubr.bf16.gmra.mrb[0].mxu0 %v216
    %v2290 = vpop.f32.mrb[0].mxu0
    %v2291 = vadd.f32 %v541, %v2290
    %v2292 = vpop.f32.mrb[0].mxu0
    %v2293 = vadd.f32 %v545, %v2292
    %v2294 = vpop.f32.mrb[0].mxu0
    %v2295 = vadd.f32 %v541, %v2294
    %v2296 = vpop.f32.mrb[0].mxu0
    %v2297 = vadd.f32 %v545, %v2296
    %2298 = vmatprep.mubr.bf16.mxu0 %v221
    %2299 = vmatmul.mubr.bf16.gmra.mrb[0].mxu0 %v220
    %v2300 = vpop.f32.mrb[0].mxu0
    %v2301 = vadd.f32 %v541, %v2300
    %v2302 = vpop.f32.mrb[0].mxu0
    %v2303 = vadd.f32 %v545, %v2302
    %v2304 = vpop.f32.mrb[0].mxu0
    %v2305 = vadd.f32 %v541, %v2304
    %v2306 = vpop.f32.mrb[0].mxu0
    %v2307 = vadd.f32 %v545, %v2306
    %2308 = vmatprep.mubr.bf16.mxu0 %v225
    %2309 = vmatmul.mubr.bf16.gmra.mrb[0].mxu0 %v224
    %v2310 = vpop.f32.mrb[0].mxu0
    %v2311 = vadd.f32 %v541, %v2310
    %v2312 = vpop.f32.mrb[0].mxu0
    %v2313 = vadd.f32 %v545, %v2312
    %v2314 = vpop.f32.mrb[0].mxu0
    %v2315 = vadd.f32 %v541, %v2314
    %v2316 = vpop.f32.mrb[0].mxu0
    %v2317 = vadd.f32 %v545, %v2316
    %2318 = vmatprep.mubr.bf16.mxu0 %v229
    %2319 = vmatmul.mubr.bf16.gmra.mrb[0].mxu0 %v228
    %v2320 = vpop.f32.mrb[0].mxu0
    %v2321 = vadd.f32 %v541, %v2320
    %v2322 = vpop.f32.mrb[0].mxu0
    %v2323 = vadd.f32 %v545, %v2322
    %v2324 = vpop.f32.mrb[0].mxu0
    %v2325 = vadd.f32 %v541, %v2324
    %v2326 = vpop.f32.mrb[0].mxu0
    %v2327 = vadd.f32 %v545, %v2326
    %2328 = vmatprep.mubr.bf16.mxu0 %v233
    %2329 = vmatmul.mubr.bf16.gmra.mrb[0].mxu0 %v232
    %v2330 = vpop.f32.mrb[0].mxu0
    %v2331 = vadd.f32 %v541, %v2330
    %v2332 = vpop.f32.mrb[0].mxu0
    %v2333 = vadd.f32 %v545, %v2332
    %v2334 = vpop.f32.mrb[0].mxu0
    %v2335 = vadd.f32 %v541, %v2334
    %v2336 = vpop.f32.mrb[0].mxu0
    %v2337 = vadd.f32 %v545, %v2336
    %2338 = vmatprep.mubr.bf16.mxu0 %v237
    %2339 = vmatmul.mubr.bf16.gmra.mrb[0].mxu0 %v236
    %v2340 = vpop.f32.mrb[0].mxu0
    %v2341 = vadd.f32 %v541, %v2340
    %v2342 = vpop.f32.mrb[0].mxu0
    %v2343 = vadd.f32 %v545, %v2342
    %v2344 = vpop.f32.mrb[0].mxu0
    %v2345 = vadd.f32 %v541, %v2344
    %v2346 = vpop.f32.mrb[0].mxu0
    %v2347 = vadd.f32 %v545, %v2346
    %2348 = vmatprep.mubr.bf16.mxu0 %v241
    %2349 = vmatmul.mubr.bf16.gmra.mrb[0].mxu0 %v240
    %v2350 = vpop.f32.mrb[0].mxu0
    %v2351 = vadd.f32 %v541, %v2350
    %v2352 = vpop.f32.mrb[0].mxu0
    %v2353 = vadd.f32 %v545, %v2352
    %v2354 = vpop.f32.mrb[0].mxu0
    %v2355 = vadd.f32 %v541, %v2354
    %v2356 = vpop.f32.mrb[0].mxu0
    %v2357 = vadd.f32 %v545, %v2356
    %2358 = vmatprep.mubr.bf16.mxu0 %v245
    %2359 = vmatmul.mubr.bf16.gmra.mrb[0].mxu0 %v244
    %v2360 = vpop.f32.mrb[0].mxu0
    %v2361 = vadd.f32 %v541, %v2360
    %v2362 = vpop.f32.mrb[0].mxu0
    %v2363 = vadd.f32 %v545, %v2362
    %v2364 = vpop.f32.mrb[0].mxu0
    %v2365 = vadd.f32 %v541, %v2364
    %v2366 = vpop.f32.mrb[0].mxu0
    %v2367 = vadd.f32 %v545, %v2366
    %2368 = vmatprep.mubr.bf16.mxu0 %v249
    %2369 = vmatmul.mubr.bf16.gmra.mrb[0].mxu0 %v248
    %v2370 = vpop.f32.mrb[0].mxu0
    %v2371 = vadd.f32 %v541, %v2370
    %v2372 = vpop.f32.mrb[0].mxu0
    %v2373 = vadd.f32 %v545, %v2372
    %v2374 = vpop.f32.mrb[0].mxu0
    %v2375 = vadd.f32 %v541, %v2374
    %v2376 = vpop.f32.mrb[0].mxu0
    %v2377 = vadd.f32 %v545, %v2376
    %2378 = vmatprep.mubr.bf16.mxu0 %v253
    %2379 = vmatmul.mubr.bf16.gmra.mrb[0].mxu0 %v252
    %v2380 = vpop.f32.mrb[0].mxu0
    %v2381 = vadd.f32 %v541, %v2380
    %v2382 = vpop.f32.mrb[0].mxu0
    %v2383 = vadd.f32 %v545, %v2382
    %v2384 = vpop.f32.mrb[0].mxu0
    %v2385 = vadd.f32 %v541, %v2384
    %v2386 = vpop.f32.mrb[0].mxu0
    %v2387 = vadd.f32 %v545, %v2386
    %2388 = vmatprep.mubr.bf16.mxu0 %v257
    %2389 = vmatmul.mubr.bf16.gmra.mrb[0].mxu0 %v256
    %v2390 = vpop.f32.mrb[0].mxu0
    %v2391 = vadd.f32 %v541, %v2390
    %v2392 = vpop.f32.mrb[0].mxu0
    %v2393 = vadd.f32 %v545, %v2392
    %v2394 = vpop.f32.mrb[0].mxu0
    %v2395 = vadd.f32 %v541, %v2394
    %v2396 = vpop.f32.mrb[0].mxu0
    %v2397 = vadd.f32 %v545, %v2396
    %2398 = vmatprep.mubr.bf16.mxu0 %v261
    %2399 = vmatmul.mubr.bf16.gmra.mrb[0].mxu0 %v260
    %v2400 = vpop.f32.mrb[0].mxu0
    %v2401 = vadd.f32 %v541, %v2400
    %v2402 = vpop.f32.mrb[0].mxu0
    %v2403 = vadd.f32 %v545, %v2402
    %v2404 = vpop.f32.mrb[0].mxu0
    %v2405 = vadd.f32 %v541, %v2404
    %v2406 = vpop.f32.mrb[0].mxu0
    %v2407 = vadd.f32 %v545, %v2406
    %2408 = vmatprep.mubr.bf16.mxu0 %v265
    %2409 = vmatmul.mubr.bf16.gmra.mrb[0].mxu0 %v264
    %v2410 = vpop.f32.mrb[0].mxu0
    %v2411 = vadd.f32 %v541, %v2410
    %v2412 = vpop.f32.mrb[0].mxu0
    %v2413 = vadd.f32 %v545, %v2412
    %v2414 = vpop.f32.mrb[0].mxu0
    %v2415 = vadd.f32 %v541, %v2414
    %v2416 = vpop.f32.mrb[0].mxu0
    %v2417 = vadd.f32 %v545, %v2416
    %2418 = vmatprep.mubr.bf16.mxu0 %v269
    %2419 = vmatmul.mubr.bf16.gmra.mrb[0].mxu0 %v268
    %v2420 = vpop.f32.mrb[0].mxu0
    %v2421 = vadd.f32 %v541, %v2420
    %v2422 = vpop.f32.mrb[0].mxu0
    %v2423 = vadd.f32 %v545, %v2422
    %v2424 = vpop.f32.mrb[0].mxu0
    %v2425 = vadd.f32 %v541, %v2424
    %v2426 = vpop.f32.mrb[0].mxu0
    %v2427 = vadd.f32 %v545, %v2426
    %2428 = vdwg.mxu0
    %2429 = vmatprep.subr.bf16.mxu0 %v1469
    %2430 = vmatpush1.bf16.msra.mxu0 %v1468
    %2431 = vmatprep.subr.bf16.mxu0 %v1477
    %2432 = vmatpush1.bf16.msra.mxu0 %v1476
    %2433 = vmatprep.subr.bf16.mxu0 %v1485
    %2434 = vmatpush1.bf16.msra.mxu0 %v1484
    %2435 = vmatprep.subr.bf16.mxu0 %v1493
    %2436 = vmatpush1.bf16.msra.mxu0 %v1492
    %2437 = vmatprep.subr.bf16.mxu0 %v1501
    %2438 = vmatpush1.bf16.msra.mxu0 %v1500
    %2439 = vmatprep.subr.bf16.mxu0 %v1509
    %2440 = vmatpush1.bf16.msra.mxu0 %v1508
    %2441 = vmatprep.subr.bf16.mxu0 %v1517
    %2442 = vmatpush1.bf16.msra.mxu0 %v1516
    %2443 = vmatprep.subr.bf16.mxu0 %v1525
    %2444 = vmatpush1.bf16.msra.mxu0 %v1524
    %2445 = vmatprep.subr.bf16.mxu0 %v1533
    %2446 = vmatpush1.bf16.msra.mxu0 %v1532
    %2447 = vmatprep.subr.bf16.mxu0 %v1541
    %2448 = vmatpush1.bf16.msra.mxu0 %v1540
    %2449 = vmatprep.subr.bf16.mxu0 %v1549
    %2450 = vmatpush1.bf16.msra.mxu0 %v1548
    %2451 = vmatprep.subr.bf16.mxu0 %v1557
    %2452 = vmatpush1.bf16.msra.mxu0 %v1556
    %2453 = vmatprep.subr.bf16.mxu0 %v1565
    %2454 = vmatpush1.bf16.msra.mxu0 %v1564
    %2455 = vmatprep.subr.bf16.mxu0 %v1573
    %2456 = vmatpush1.bf16.msra.mxu0 %v1572
    %2457 = vmatprep.subr.bf16.mxu0 %v1581
    %2458 = vmatpush1.bf16.msra.mxu0 %v1580
    %2459 = vmatprep.subr.bf16.mxu0 %v1589
    %2460 = vmatpush1.bf16.msra.mxu0 %v1588
    %2461 = vmatprep.mubr.bf16.mxu0 %v211
    %2462 = vmatmul.mubr.bf16.gmra.mrb[0].mxu0 %v210
    %v2463 = vpop.f32.mrb[0].mxu0
    %v2464 = vadd.f32 %v2271, %v2463
    %v2465 = vpop.f32.mrb[0].mxu0
    %v2466 = vadd.f32 %v2273, %v2465
    %v2467 = vpop.f32.mrb[0].mxu0
    %v2468 = vadd.f32 %v2275, %v2467
    %v2469 = vpop.f32.mrb[0].mxu0
    %v2470 = vadd.f32 %v2277, %v2469
    %2471 = vmatprep.mubr.bf16.mxu0 %v215
    %2472 = vmatmul.mubr.bf16.gmra.mrb[0].mxu0 %v214
    %v2473 = vpop.f32.mrb[0].mxu0
    %v2474 = vadd.f32 %v2281, %v2473
    %v2475 = vpop.f32.mrb[0].mxu0
    %v2476 = vadd.f32 %v2283, %v2475
    %v2477 = vpop.f32.mrb[0].mxu0
    %v2478 = vadd.f32 %v2285, %v2477
    %v2479 = vpop.f32.mrb[0].mxu0
    %v2480 = vadd.f32 %v2287, %v2479
    %2481 = vmatprep.mubr.bf16.mxu0 %v219
    %2482 = vmatmul.mubr.bf16.gmra.mrb[0].mxu0 %v218
    %v2483 = vpop.f32.mrb[0].mxu0
    %v2484 = vadd.f32 %v2291, %v2483
    %v2485 = vpop.f32.mrb[0].mxu0
    %v2486 = vadd.f32 %v2293, %v2485
    %v2487 = vpop.f32.mrb[0].mxu0
    %v2488 = vadd.f32 %v2295, %v2487
    %v2489 = vpop.f32.mrb[0].mxu0
    %v2490 = vadd.f32 %v2297, %v2489
    %2491 = vmatprep.mubr.bf16.mxu0 %v223
    %2492 = vmatmul.mubr.bf16.gmra.mrb[0].mxu0 %v222
    %v2493 = vpop.f32.mrb[0].mxu0
    %v2494 = vadd.f32 %v2301, %v2493
    %v2495 = vpop.f32.mrb[0].mxu0
    %v2496 = vadd.f32 %v2303, %v2495
    %v2497 = vpop.f32.mrb[0].mxu0
    %v2498 = vadd.f32 %v2305, %v2497
    %v2499 = vpop.f32.mrb[0].mxu0
    %v2500 = vadd.f32 %v2307, %v2499
    %2501 = vmatprep.mubr.bf16.mxu0 %v227
    %2502 = vmatmul.mubr.bf16.gmra.mrb[0].mxu0 %v226
    %v2503 = vpop.f32.mrb[0].mxu0
    %v2504 = vadd.f32 %v2311, %v2503
    %v2505 = vpop.f32.mrb[0].mxu0
    %v2506 = vadd.f32 %v2313, %v2505
    %v2507 = vpop.f32.mrb[0].mxu0
    %v2508 = vadd.f32 %v2315, %v2507
    %v2509 = vpop.f32.mrb[0].mxu0
    %v2510 = vadd.f32 %v2317, %v2509
    %2511 = vmatprep.mubr.bf16.mxu0 %v231
    %2512 = vmatmul.mubr.bf16.gmra.mrb[0].mxu0 %v230
    %v2513 = vpop.f32.mrb[0].mxu0
    %v2514 = vadd.f32 %v2321, %v2513
    %v2515 = vpop.f32.mrb[0].mxu0
    %v2516 = vadd.f32 %v2323, %v2515
    %v2517 = vpop.f32.mrb[0].mxu0
    %v2518 = vadd.f32 %v2325, %v2517
    %v2519 = vpop.f32.mrb[0].mxu0
    %v2520 = vadd.f32 %v2327, %v2519
    %2521 = vmatprep.mubr.bf16.mxu0 %v235
    %2522 = vmatmul.mubr.bf16.gmra.mrb[0].mxu0 %v234
    %v2523 = vpop.f32.mrb[0].mxu0
    %v2524 = vadd.f32 %v2331, %v2523
    %v2525 = vpop.f32.mrb[0].mxu0
    %v2526 = vadd.f32 %v2333, %v2525
    %v2527 = vpop.f32.mrb[0].mxu0
    %v2528 = vadd.f32 %v2335, %v2527
    %v2529 = vpop.f32.mrb[0].mxu0
    %v2530 = vadd.f32 %v2337, %v2529
    %2531 = vmatprep.mubr.bf16.mxu0 %v239
    %2532 = vmatmul.mubr.bf16.gmra.mrb[0].mxu0 %v238
    %v2533 = vpop.f32.mrb[0].mxu0
    %v2534 = vadd.f32 %v2341, %v2533
    %v2535 = vpop.f32.mrb[0].mxu0
    %v2536 = vadd.f32 %v2343, %v2535
    %v2537 = vpop.f32.mrb[0].mxu0
    %v2538 = vadd.f32 %v2345, %v2537
    %v2539 = vpop.f32.mrb[0].mxu0
    %v2540 = vadd.f32 %v2347, %v2539
    %2541 = vmatprep.mubr.bf16.mxu0 %v243
    %2542 = vmatmul.mubr.bf16.gmra.mrb[0].mxu0 %v242
    %v2543 = vpop.f32.mrb[0].mxu0
    %v2544 = vadd.f32 %v2351, %v2543
    %v2545 = vpop.f32.mrb[0].mxu0
    %v2546 = vadd.f32 %v2353, %v2545
    %v2547 = vpop.f32.mrb[0].mxu0
    %v2548 = vadd.f32 %v2355, %v2547
    %v2549 = vpop.f32.mrb[0].mxu0
    %v2550 = vadd.f32 %v2357, %v2549
    %2551 = vmatprep.mubr.bf16.mxu0 %v247
    %2552 = vmatmul.mubr.bf16.gmra.mrb[0].mxu0 %v246
    %v2553 = vpop.f32.mrb[0].mxu0
    %v2554 = vadd.f32 %v2361, %v2553
    %v2555 = vpop.f32.mrb[0].mxu0
    %v2556 = vadd.f32 %v2363, %v2555
    %v2557 = vpop.f32.mrb[0].mxu0
    %v2558 = vadd.f32 %v2365, %v2557
    %v2559 = vpop.f32.mrb[0].mxu0
    %v2560 = vadd.f32 %v2367, %v2559
    %2561 = vmatprep.mubr.bf16.mxu0 %v251
    %2562 = vmatmul.mubr.bf16.gmra.mrb[0].mxu0 %v250
    %v2563 = vpop.f32.mrb[0].mxu0
    %v2564 = vadd.f32 %v2371, %v2563
    %v2565 = vpop.f32.mrb[0].mxu0
    %v2566 = vadd.f32 %v2373, %v2565
    %v2567 = vpop.f32.mrb[0].mxu0
    %v2568 = vadd.f32 %v2375, %v2567
    %v2569 = vpop.f32.mrb[0].mxu0
    %v2570 = vadd.f32 %v2377, %v2569
    %2571 = vmatprep.mubr.bf16.mxu0 %v255
    %2572 = vmatmul.mubr.bf16.gmra.mrb[0].mxu0 %v254
    %v2573 = vpop.f32.mrb[0].mxu0
    %v2574 = vadd.f32 %v2381, %v2573
    %v2575 = vpop.f32.mrb[0].mxu0
    %v2576 = vadd.f32 %v2383, %v2575
    %v2577 = vpop.f32.mrb[0].mxu0
    %v2578 = vadd.f32 %v2385, %v2577
    %v2579 = vpop.f32.mrb[0].mxu0
    %v2580 = vadd.f32 %v2387, %v2579
    %2581 = vmatprep.mubr.bf16.mxu0 %v259
    %2582 = vmatmul.mubr.bf16.gmra.mrb[0].mxu0 %v258
    %v2583 = vpop.f32.mrb[0].mxu0
    %v2584 = vadd.f32 %v2391, %v2583
    %v2585 = vpop.f32.mrb[0].mxu0
    %v2586 = vadd.f32 %v2393, %v2585
    %v2587 = vpop.f32.mrb[0].mxu0
    %v2588 = vadd.f32 %v2395, %v2587
    %v2589 = vpop.f32.mrb[0].mxu0
    %v2590 = vadd.f32 %v2397, %v2589
    %2591 = vmatprep.mubr.bf16.mxu0 %v263
    %2592 = vmatmul.mubr.bf16.gmra.mrb[0].mxu0 %v262
    %v2593 = vpop.f32.mrb[0].mxu0
    %v2594 = vadd.f32 %v2401, %v2593
    %v2595 = vpop.f32.mrb[0].mxu0
    %v2596 = vadd.f32 %v2403, %v2595
    %v2597 = vpop.f32.mrb[0].mxu0
    %v2598 = vadd.f32 %v2405, %v2597
    %v2599 = vpop.f32.mrb[0].mxu0
    %v2600 = vadd.f32 %v2407, %v2599
    %2601 = vmatprep.mubr.bf16.mxu0 %v267
    %2602 = vmatmul.mubr.bf16.gmra.mrb[0].mxu0 %v266
    %v2603 = vpop.f32.mrb[0].mxu0
    %v2604 = vadd.f32 %v2411, %v2603
    %v2605 = vpop.f32.mrb[0].mxu0
    %v2606 = vadd.f32 %v2413, %v2605
    %v2607 = vpop.f32.mrb[0].mxu0
    %v2608 = vadd.f32 %v2415, %v2607
    %v2609 = vpop.f32.mrb[0].mxu0
    %v2610 = vadd.f32 %v2417, %v2609
    %2611 = vmatprep.mubr.bf16.mxu0 %v271
    %2612 = vmatmul.mubr.bf16.gmra.mrb[0].mxu0 %v270
    %v2613 = vpop.f32.mrb[0].mxu0
    %v2614 = vadd.f32 %v2421, %v2613
    %v2615 = vpop.f32.mrb[0].mxu0
    %v2616 = vadd.f32 %v2423, %v2615
    %v2617 = vpop.f32.mrb[0].mxu0
    %v2618 = vadd.f32 %v2425, %v2617
    %v2619 = vpop.f32.mrb[0].mxu0
    %v2620 = vadd.f32 %v2427, %v2619
    %2621 = vdwg.mxu0
    %2622 = vmatprep.subr.bf16.mxu0 %v1343
    %2623 = vmatpush1.bf16.msra.mxu0 %v1342
    %2624 = vmatprep.subr.bf16.mxu0 %v1351
    %2625 = vmatpush1.bf16.msra.mxu0 %v1350
    %2626 = vmatprep.subr.bf16.mxu0 %v1359
    %2627 = vmatpush1.bf16.msra.mxu0 %v1358
    %2628 = vmatprep.subr.bf16.mxu0 %v1367
    %2629 = vmatpush1.bf16.msra.mxu0 %v1366
    %2630 = vmatprep.subr.bf16.mxu0 %v1375
    %2631 = vmatpush1.bf16.msra.mxu0 %v1374
    %2632 = vmatprep.subr.bf16.mxu0 %v1383
    %2633 = vmatpush1.bf16.msra.mxu0 %v1382
    %2634 = vmatprep.subr.bf16.mxu0 %v1391
    %2635 = vmatpush1.bf16.msra.mxu0 %v1390
    %2636 = vmatprep.subr.bf16.mxu0 %v1399
    %2637 = vmatpush1.bf16.msra.mxu0 %v1398
    %2638 = vmatprep.subr.bf16.mxu0 %v1407
    %2639 = vmatpush1.bf16.msra.mxu0 %v1406
    %2640 = vmatprep.subr.bf16.mxu0 %v1415
    %2641 = vmatpush1.bf16.msra.mxu0 %v1414
    %2642 = vmatprep.subr.bf16.mxu0 %v1423
    %2643 = vmatpush1.bf16.msra.mxu0 %v1422
    %2644 = vmatprep.subr.bf16.mxu0 %v1431
    %2645 = vmatpush1.bf16.msra.mxu0 %v1430
    %2646 = vmatprep.subr.bf16.mxu0 %v1439
    %2647 = vmatpush1.bf16.msra.mxu0 %v1438
    %2648 = vmatprep.subr.bf16.mxu0 %v1447
    %2649 = vmatpush1.bf16.msra.mxu0 %v1446
    %2650 = vmatprep.subr.bf16.mxu0 %v1455
    %2651 = vmatpush1.bf16.msra.mxu0 %v1454
    %2652 = vmatprep.subr.bf16.mxu0 %v1463
    %2653 = vmatpush1.bf16.msra.mxu0 %v1462
    %2654 = vmatprep.mubr.bf16.mxu0 %v209
    %2655 = vmatmul.mubr.bf16.gmra.mrb[0].mxu0 %v208
    %v2656 = vpop.f32.mrb[0].mxu0
    %v2657 = vadd.f32 %v549, %v2656
    %v2658 = vpop.f32.mrb[0].mxu0
    %v2659 = vadd.f32 %v553, %v2658
    %v2660 = vpop.f32.mrb[0].mxu0
    %v2661 = vadd.f32 %v549, %v2660
    %v2662 = vpop.f32.mrb[0].mxu0
    %v2663 = vadd.f32 %v553, %v2662
    %2664 = vmatprep.mubr.bf16.mxu0 %v213
    %2665 = vmatmul.mubr.bf16.gmra.mrb[0].mxu0 %v212
    %v2666 = vpop.f32.mrb[0].mxu0
    %v2667 = vadd.f32 %v549, %v2666
    %v2668 = vpop.f32.mrb[0].mxu0
    %v2669 = vadd.f32 %v553, %v2668
    %v2670 = vpop.f32.mrb[0].mxu0
    %v2671 = vadd.f32 %v549, %v2670
    %v2672 = vpop.f32.mrb[0].mxu0
    %v2673 = vadd.f32 %v553, %v2672
    %2674 = vmatprep.mubr.bf16.mxu0 %v217
    %2675 = vmatmul.mubr.bf16.gmra.mrb[0].mxu0 %v216
    %v2676 = vpop.f32.mrb[0].mxu0
    %v2677 = vadd.f32 %v549, %v2676
    %v2678 = vpop.f32.mrb[0].mxu0
    %v2679 = vadd.f32 %v553, %v2678
    %v2680 = vpop.f32.mrb[0].mxu0
    %v2681 = vadd.f32 %v549, %v2680
    %v2682 = vpop.f32.mrb[0].mxu0
    %v2683 = vadd.f32 %v553, %v2682
    %2684 = vmatprep.mubr.bf16.mxu0 %v221
    %2685 = vmatmul.mubr.bf16.gmra.mrb[0].mxu0 %v220
    %v2686 = vpop.f32.mrb[0].mxu0
    %v2687 = vadd.f32 %v549, %v2686
    %v2688 = vpop.f32.mrb[0].mxu0
    %v2689 = vadd.f32 %v553, %v2688
    %v2690 = vpop.f32.mrb[0].mxu0
    %v2691 = vadd.f32 %v549, %v2690
    %v2692 = vpop.f32.mrb[0].mxu0
    %v2693 = vadd.f32 %v553, %v2692
    %2694 = vmatprep.mubr.bf16.mxu0 %v225
    %2695 = vmatmul.mubr.bf16.gmra.mrb[0].mxu0 %v224
    %v2696 = vpop.f32.mrb[0].mxu0
    %v2697 = vadd.f32 %v549, %v2696
    %v2698 = vpop.f32.mrb[0].mxu0
    %v2699 = vadd.f32 %v553, %v2698
    %v2700 = vpop.f32.mrb[0].mxu0
    %v2701 = vadd.f32 %v549, %v2700
    %v2702 = vpop.f32.mrb[0].mxu0
    %v2703 = vadd.f32 %v553, %v2702
    %2704 = vmatprep.mubr.bf16.mxu0 %v229
    %2705 = vmatmul.mubr.bf16.gmra.mrb[0].mxu0 %v228
    %v2706 = vpop.f32.mrb[0].mxu0
    %v2707 = vadd.f32 %v549, %v2706
    %v2708 = vpop.f32.mrb[0].mxu0
    %v2709 = vadd.f32 %v553, %v2708
    %v2710 = vpop.f32.mrb[0].mxu0
    %v2711 = vadd.f32 %v549, %v2710
    %v2712 = vpop.f32.mrb[0].mxu0
    %v2713 = vadd.f32 %v553, %v2712
    %2714 = vmatprep.mubr.bf16.mxu0 %v233
    %2715 = vmatmul.mubr.bf16.gmra.mrb[0].mxu0 %v232
    %v2716 = vpop.f32.mrb[0].mxu0
    %v2717 = vadd.f32 %v549, %v2716
    %v2718 = vpop.f32.mrb[0].mxu0
    %v2719 = vadd.f32 %v553, %v2718
    %v2720 = vpop.f32.mrb[0].mxu0
    %v2721 = vadd.f32 %v549, %v2720
    %v2722 = vpop.f32.mrb[0].mxu0
    %v2723 = vadd.f32 %v553, %v2722
    %2724 = vmatprep.mubr.bf16.mxu0 %v237
    %2725 = vmatmul.mubr.bf16.gmra.mrb[0].mxu0 %v236
    %v2726 = vpop.f32.mrb[0].mxu0
    %v2727 = vadd.f32 %v549, %v2726
    %v2728 = vpop.f32.mrb[0].mxu0
    %v2729 = vadd.f32 %v553, %v2728
    %v2730 = vpop.f32.mrb[0].mxu0
    %v2731 = vadd.f32 %v549, %v2730
    %v2732 = vpop.f32.mrb[0].mxu0
    %v2733 = vadd.f32 %v553, %v2732
    %2734 = vmatprep.mubr.bf16.mxu0 %v241
    %2735 = vmatmul.mubr.bf16.gmra.mrb[0].mxu0 %v240
    %v2736 = vpop.f32.mrb[0].mxu0
    %v2737 = vadd.f32 %v549, %v2736
    %v2738 = vpop.f32.mrb[0].mxu0
    %v2739 = vadd.f32 %v553, %v2738
    %v2740 = vpop.f32.mrb[0].mxu0
    %v2741 = vadd.f32 %v549, %v2740
    %v2742 = vpop.f32.mrb[0].mxu0
    %v2743 = vadd.f32 %v553, %v2742
    %2744 = vmatprep.mubr.bf16.mxu0 %v245
    %2745 = vmatmul.mubr.bf16.gmra.mrb[0].mxu0 %v244
    %v2746 = vpop.f32.mrb[0].mxu0
    %v2747 = vadd.f32 %v549, %v2746
    %v2748 = vpop.f32.mrb[0].mxu0
    %v2749 = vadd.f32 %v553, %v2748
    %v2750 = vpop.f32.mrb[0].mxu0
    %v2751 = vadd.f32 %v549, %v2750
    %v2752 = vpop.f32.mrb[0].mxu0
    %v2753 = vadd.f32 %v553, %v2752
    %2754 = vmatprep.mubr.bf16.mxu0 %v249
    %2755 = vmatmul.mubr.bf16.gmra.mrb[0].mxu0 %v248
    %v2756 = vpop.f32.mrb[0].mxu0
    %v2757 = vadd.f32 %v549, %v2756
    %v2758 = vpop.f32.mrb[0].mxu0
    %v2759 = vadd.f32 %v553, %v2758
    %v2760 = vpop.f32.mrb[0].mxu0
    %v2761 = vadd.f32 %v549, %v2760
    %v2762 = vpop.f32.mrb[0].mxu0
    %v2763 = vadd.f32 %v553, %v2762
    %2764 = vmatprep.mubr.bf16.mxu0 %v253
    %2765 = vmatmul.mubr.bf16.gmra.mrb[0].mxu0 %v252
    %v2766 = vpop.f32.mrb[0].mxu0
    %v2767 = vadd.f32 %v549, %v2766
    %v2768 = vpop.f32.mrb[0].mxu0
    %v2769 = vadd.f32 %v553, %v2768
    %v2770 = vpop.f32.mrb[0].mxu0
    %v2771 = vadd.f32 %v549, %v2770
    %v2772 = vpop.f32.mrb[0].mxu0
    %v2773 = vadd.f32 %v553, %v2772
    %2774 = vmatprep.mubr.bf16.mxu0 %v257
    %2775 = vmatmul.mubr.bf16.gmra.mrb[0].mxu0 %v256
    %v2776 = vpop.f32.mrb[0].mxu0
    %v2777 = vadd.f32 %v549, %v2776
    %v2778 = vpop.f32.mrb[0].mxu0
    %v2779 = vadd.f32 %v553, %v2778
    %v2780 = vpop.f32.mrb[0].mxu0
    %v2781 = vadd.f32 %v549, %v2780
    %v2782 = vpop.f32.mrb[0].mxu0
    %v2783 = vadd.f32 %v553, %v2782
    %2784 = vmatprep.mubr.bf16.mxu0 %v261
    %2785 = vmatmul.mubr.bf16.gmra.mrb[0].mxu0 %v260
    %v2786 = vpop.f32.mrb[0].mxu0
    %v2787 = vadd.f32 %v549, %v2786
    %v2788 = vpop.f32.mrb[0].mxu0
    %v2789 = vadd.f32 %v553, %v2788
    %v2790 = vpop.f32.mrb[0].mxu0
    %v2791 = vadd.f32 %v549, %v2790
    %v2792 = vpop.f32.mrb[0].mxu0
    %v2793 = vadd.f32 %v553, %v2792
    %2794 = vmatprep.mubr.bf16.mxu0 %v265
    %2795 = vmatmul.mubr.bf16.gmra.mrb[0].mxu0 %v264
    %v2796 = vpop.f32.mrb[0].mxu0
    %v2797 = vadd.f32 %v549, %v2796
    %v2798 = vpop.f32.mrb[0].mxu0
    %v2799 = vadd.f32 %v553, %v2798
    %v2800 = vpop.f32.mrb[0].mxu0
    %v2801 = vadd.f32 %v549, %v2800
    %v2802 = vpop.f32.mrb[0].mxu0
    %v2803 = vadd.f32 %v553, %v2802
    %2804 = vmatprep.mubr.bf16.mxu0 %v269
    %2805 = vmatmul.mubr.bf16.gmra.mrb[0].mxu0 %v268
    %v2806 = vpop.f32.mrb[0].mxu0
    %v2807 = vadd.f32 %v549, %v2806
    %v2808 = vpop.f32.mrb[0].mxu0
    %v2809 = vadd.f32 %v553, %v2808
    %v2810 = vpop.f32.mrb[0].mxu0
    %v2811 = vadd.f32 %v549, %v2810
    %v2812 = vpop.f32.mrb[0].mxu0
    %v2813 = vadd.f32 %v553, %v2812
    %2814 = vdwg.mxu0
    %2815 = vmatprep.subr.bf16.mxu0 %v1471
    %2816 = vmatpush1.bf16.msra.mxu0 %v1470
    %2817 = vmatprep.subr.bf16.mxu0 %v1479
    %2818 = vmatpush1.bf16.msra.mxu0 %v1478
    %2819 = vmatprep.subr.bf16.mxu0 %v1487
    %2820 = vmatpush1.bf16.msra.mxu0 %v1486
    %2821 = vmatprep.subr.bf16.mxu0 %v1495
    %2822 = vmatpush1.bf16.msra.mxu0 %v1494
    %2823 = vmatprep.subr.bf16.mxu0 %v1503
    %2824 = vmatpush1.bf16.msra.mxu0 %v1502
    %2825 = vmatprep.subr.bf16.mxu0 %v1511
    %2826 = vmatpush1.bf16.msra.mxu0 %v1510
    %2827 = vmatprep.subr.bf16.mxu0 %v1519
    %2828 = vmatpush1.bf16.msra.mxu0 %v1518
    %2829 = vmatprep.subr.bf16.mxu0 %v1527
    %2830 = vmatpush1.bf16.msra.mxu0 %v1526
    %2831 = vmatprep.subr.bf16.mxu0 %v1535
    %2832 = vmatpush1.bf16.msra.mxu0 %v1534
    %2833 = vmatprep.subr.bf16.mxu0 %v1543
    %2834 = vmatpush1.bf16.msra.mxu0 %v1542
    %2835 = vmatprep.subr.bf16.mxu0 %v1551
    %2836 = vmatpush1.bf16.msra.mxu0 %v1550
    %2837 = vmatprep.subr.bf16.mxu0 %v1559
    %2838 = vmatpush1.bf16.msra.mxu0 %v1558
    %2839 = vmatprep.subr.bf16.mxu0 %v1567
    %2840 = vmatpush1.bf16.msra.mxu0 %v1566
    %2841 = vmatprep.subr.bf16.mxu0 %v1575
    %2842 = vmatpush1.bf16.msra.mxu0 %v1574
    %2843 = vmatprep.subr.bf16.mxu0 %v1583
    %2844 = vmatpush1.bf16.msra.mxu0 %v1582
    %2845 = vmatprep.subr.bf16.mxu0 %v1591
    %2846 = vmatpush1.bf16.msra.mxu0 %v1590
    %2847 = vmatprep.mubr.bf16.mxu0 %v211
    %2848 = vmatmul.mubr.bf16.gmra.mrb[0].mxu0 %v210
    %v2849 = vpop.f32.mrb[0].mxu0
    %v2850 = vadd.f32 %v2657, %v2849
    %v2851 = vpop.f32.mrb[0].mxu0
    %v2852 = vadd.f32 %v2659, %v2851
    %v2853 = vpop.f32.mrb[0].mxu0
    %v2854 = vadd.f32 %v2661, %v2853
    %v2855 = vpop.f32.mrb[0].mxu0
    %v2856 = vadd.f32 %v2663, %v2855
    %2857 = vmatprep.mubr.bf16.mxu0 %v215
    %2858 = vmatmul.mubr.bf16.gmra.mrb[0].mxu0 %v214
    %v2859 = vpop.f32.mrb[0].mxu0
    %v2860 = vadd.f32 %v2667, %v2859
    %v2861 = vpop.f32.mrb[0].mxu0
    %v2862 = vadd.f32 %v2669, %v2861
    %v2863 = vpop.f32.mrb[0].mxu0
    %v2864 = vadd.f32 %v2671, %v2863
    %v2865 = vpop.f32.mrb[0].mxu0
    %v2866 = vadd.f32 %v2673, %v2865
    %2867 = vmatprep.mubr.bf16.mxu0 %v219
    %2868 = vmatmul.mubr.bf16.gmra.mrb[0].mxu0 %v218
    %v2869 = vpop.f32.mrb[0].mxu0
    %v2870 = vadd.f32 %v2677, %v2869
    %v2871 = vpop.f32.mrb[0].mxu0
    %v2872 = vadd.f32 %v2679, %v2871
    %v2873 = vpop.f32.mrb[0].mxu0
    %v2874 = vadd.f32 %v2681, %v2873
    %v2875 = vpop.f32.mrb[0].mxu0
    %v2876 = vadd.f32 %v2683, %v2875
    %2877 = vmatprep.mubr.bf16.mxu0 %v223
    %2878 = vmatmul.mubr.bf16.gmra.mrb[0].mxu0 %v222
    %v2879 = vpop.f32.mrb[0].mxu0
    %v2880 = vadd.f32 %v2687, %v2879
    %v2881 = vpop.f32.mrb[0].mxu0
    %v2882 = vadd.f32 %v2689, %v2881
    %v2883 = vpop.f32.mrb[0].mxu0
    %v2884 = vadd.f32 %v2691, %v2883
    %v2885 = vpop.f32.mrb[0].mxu0
    %v2886 = vadd.f32 %v2693, %v2885
    %2887 = vmatprep.mubr.bf16.mxu0 %v227
    %2888 = vmatmul.mubr.bf16.gmra.mrb[0].mxu0 %v226
    %v2889 = vpop.f32.mrb[0].mxu0
    %v2890 = vadd.f32 %v2697, %v2889
    %v2891 = vpop.f32.mrb[0].mxu0
    %v2892 = vadd.f32 %v2699, %v2891
    %v2893 = vpop.f32.mrb[0].mxu0
    %v2894 = vadd.f32 %v2701, %v2893
    %v2895 = vpop.f32.mrb[0].mxu0
    %v2896 = vadd.f32 %v2703, %v2895
    %2897 = vmatprep.mubr.bf16.mxu0 %v231
    %2898 = vmatmul.mubr.bf16.gmra.mrb[0].mxu0 %v230
    %v2899 = vpop.f32.mrb[0].mxu0
    %v2900 = vadd.f32 %v2707, %v2899
    %v2901 = vpop.f32.mrb[0].mxu0
    %v2902 = vadd.f32 %v2709, %v2901
    %v2903 = vpop.f32.mrb[0].mxu0
    %v2904 = vadd.f32 %v2711, %v2903
    %v2905 = vpop.f32.mrb[0].mxu0
    %v2906 = vadd.f32 %v2713, %v2905
    %2907 = vmatprep.mubr.bf16.mxu0 %v235
    %2908 = vmatmul.mubr.bf16.gmra.mrb[0].mxu0 %v234
    %v2909 = vpop.f32.mrb[0].mxu0
    %v2910 = vadd.f32 %v2717, %v2909
    %v2911 = vpop.f32.mrb[0].mxu0
    %v2912 = vadd.f32 %v2719, %v2911
    %v2913 = vpop.f32.mrb[0].mxu0
    %v2914 = vadd.f32 %v2721, %v2913
    %v2915 = vpop.f32.mrb[0].mxu0
    %v2916 = vadd.f32 %v2723, %v2915
    %2917 = vmatprep.mubr.bf16.mxu0 %v239
    %2918 = vmatmul.mubr.bf16.gmra.mrb[0].mxu0 %v238
    %v2919 = vpop.f32.mrb[0].mxu0
    %v2920 = vadd.f32 %v2727, %v2919
    %v2921 = vpop.f32.mrb[0].mxu0
    %v2922 = vadd.f32 %v2729, %v2921
    %v2923 = vpop.f32.mrb[0].mxu0
    %v2924 = vadd.f32 %v2731, %v2923
    %v2925 = vpop.f32.mrb[0].mxu0
    %v2926 = vadd.f32 %v2733, %v2925
    %2927 = vmatprep.mubr.bf16.mxu0 %v243
    %2928 = vmatmul.mubr.bf16.gmra.mrb[0].mxu0 %v242
    %v2929 = vpop.f32.mrb[0].mxu0
    %v2930 = vadd.f32 %v2737, %v2929
    %v2931 = vpop.f32.mrb[0].mxu0
    %v2932 = vadd.f32 %v2739, %v2931
    %v2933 = vpop.f32.mrb[0].mxu0
    %v2934 = vadd.f32 %v2741, %v2933
    %v2935 = vpop.f32.mrb[0].mxu0
    %v2936 = vadd.f32 %v2743, %v2935
    %2937 = vmatprep.mubr.bf16.mxu0 %v247
    %2938 = vmatmul.mubr.bf16.gmra.mrb[0].mxu0 %v246
    %v2939 = vpop.f32.mrb[0].mxu0
    %v2940 = vadd.f32 %v2747, %v2939
    %v2941 = vpop.f32.mrb[0].mxu0
    %v2942 = vadd.f32 %v2749, %v2941
    %v2943 = vpop.f32.mrb[0].mxu0
    %v2944 = vadd.f32 %v2751, %v2943
    %v2945 = vpop.f32.mrb[0].mxu0
    %v2946 = vadd.f32 %v2753, %v2945
    %2947 = vmatprep.mubr.bf16.mxu0 %v251
    %2948 = vmatmul.mubr.bf16.gmra.mrb[0].mxu0 %v250
    %v2949 = vpop.f32.mrb[0].mxu0
    %v2950 = vadd.f32 %v2757, %v2949
    %v2951 = vpop.f32.mrb[0].mxu0
    %v2952 = vadd.f32 %v2759, %v2951
    %v2953 = vpop.f32.mrb[0].mxu0
    %v2954 = vadd.f32 %v2761, %v2953
    %v2955 = vpop.f32.mrb[0].mxu0
    %v2956 = vadd.f32 %v2763, %v2955
    %2957 = vmatprep.mubr.bf16.mxu0 %v255
    %2958 = vmatmul.mubr.bf16.gmra.mrb[0].mxu0 %v254
    %v2959 = vpop.f32.mrb[0].mxu0
    %v2960 = vadd.f32 %v2767, %v2959
    %v2961 = vpop.f32.mrb[0].mxu0
    %v2962 = vadd.f32 %v2769, %v2961
    %v2963 = vpop.f32.mrb[0].mxu0
    %v2964 = vadd.f32 %v2771, %v2963
    %v2965 = vpop.f32.mrb[0].mxu0
    %v2966 = vadd.f32 %v2773, %v2965
    %2967 = vmatprep.mubr.bf16.mxu0 %v259
    %2968 = vmatmul.mubr.bf16.gmra.mrb[0].mxu0 %v258
    %v2969 = vpop.f32.mrb[0].mxu0
    %v2970 = vadd.f32 %v2777, %v2969
    %v2971 = vpop.f32.mrb[0].mxu0
    %v2972 = vadd.f32 %v2779, %v2971
    %v2973 = vpop.f32.mrb[0].mxu0
    %v2974 = vadd.f32 %v2781, %v2973
    %v2975 = vpop.f32.mrb[0].mxu0
    %v2976 = vadd.f32 %v2783, %v2975
    %2977 = vmatprep.mubr.bf16.mxu0 %v263
    %2978 = vmatmul.mubr.bf16.gmra.mrb[0].mxu0 %v262
    %v2979 = vpop.f32.mrb[0].mxu0
    %v2980 = vadd.f32 %v2787, %v2979
    %v2981 = vpop.f32.mrb[0].mxu0
    %v2982 = vadd.f32 %v2789, %v2981
    %v2983 = vpop.f32.mrb[0].mxu0
    %v2984 = vadd.f32 %v2791, %v2983
    %v2985 = vpop.f32.mrb[0].mxu0
    %v2986 = vadd.f32 %v2793, %v2985
    %2987 = vmatprep.mubr.bf16.mxu0 %v267
    %2988 = vmatmul.mubr.bf16.gmra.mrb[0].mxu0 %v266
    %v2989 = vpop.f32.mrb[0].mxu0
    %v2990 = vadd.f32 %v2797, %v2989
    %v2991 = vpop.f32.mrb[0].mxu0
    %v2992 = vadd.f32 %v2799, %v2991
    %v2993 = vpop.f32.mrb[0].mxu0
    %v2994 = vadd.f32 %v2801, %v2993
    %v2995 = vpop.f32.mrb[0].mxu0
    %v2996 = vadd.f32 %v2803, %v2995
    %2997 = vmatprep.mubr.bf16.mxu0 %v271
    %2998 = vmatmul.mubr.bf16.gmra.mrb[0].mxu0 %v270
    %v2999 = vpop.f32.mrb[0].mxu0
    %v3000 = vadd.f32 %v2807, %v2999
    %v3001 = vpop.f32.mrb[0].mxu0
    %v3002 = vadd.f32 %v2809, %v3001
    %v3003 = vpop.f32.mrb[0].mxu0
    %v3004 = vadd.f32 %v2811, %v3003
    %v3005 = vpop.f32.mrb[0].mxu0
    %v3006 = vadd.f32 %v2813, %v3005
    %3007 = vdwg.mxu0
    %3008 = vmatprep.subr.bf16.mxu0 %v1345
    %3009 = vmatpush1.bf16.msra.mxu0 %v1344
    %3010 = vmatprep.subr.bf16.mxu0 %v1353
    %3011 = vmatpush1.bf16.msra.mxu0 %v1352
    %3012 = vmatprep.subr.bf16.mxu0 %v1361
    %3013 = vmatpush1.bf16.msra.mxu0 %v1360
    %3014 = vmatprep.subr.bf16.mxu0 %v1369
    %3015 = vmatpush1.bf16.msra.mxu0 %v1368
    %3016 = vmatprep.subr.bf16.mxu0 %v1377
    %3017 = vmatpush1.bf16.msra.mxu0 %v1376
    %3018 = vmatprep.subr.bf16.mxu0 %v1385
    %3019 = vmatpush1.bf16.msra.mxu0 %v1384
    %3020 = vmatprep.subr.bf16.mxu0 %v1393
    %3021 = vmatpush1.bf16.msra.mxu0 %v1392
    %3022 = vmatprep.subr.bf16.mxu0 %v1401
    %3023 = vmatpush1.bf16.msra.mxu0 %v1400
    %3024 = vmatprep.subr.bf16.mxu0 %v1409
    %3025 = vmatpush1.bf16.msra.mxu0 %v1408
    %3026 = vmatprep.subr.bf16.mxu0 %v1417
    %3027 = vmatpush1.bf16.msra.mxu0 %v1416
    %3028 = vmatprep.subr.bf16.mxu0 %v1425
    %3029 = vmatpush1.bf16.msra.mxu0 %v1424
    %3030 = vmatprep.subr.bf16.mxu0 %v1433
    %3031 = vmatpush1.bf16.msra.mxu0 %v1432
    %3032 = vmatprep.subr.bf16.mxu0 %v1441
    %3033 = vmatpush1.bf16.msra.mxu0 %v1440
    %3034 = vmatprep.subr.bf16.mxu0 %v1449
    %3035 = vmatpush1.bf16.msra.mxu0 %v1448
    %3036 = vmatprep.subr.bf16.mxu0 %v1457
    %3037 = vmatpush1.bf16.msra.mxu0 %v1456
    %3038 = vmatprep.subr.bf16.mxu0 %v1465
    %3039 = vmatpush1.bf16.msra.mxu0 %v1464
    %3040 = vmatprep.mubr.bf16.mxu0 %v209
    %3041 = vmatmul.mubr.bf16.gmra.mrb[0].mxu0 %v208
    %v3042 = vpop.f32.mrb[0].mxu0
    %v3043 = vadd.f32 %v557, %v3042
    %v3044 = vpop.f32.mrb[0].mxu0
    %v3045 = vadd.f32 %v561, %v3044
    %v3046 = vpop.f32.mrb[0].mxu0
    %v3047 = vadd.f32 %v557, %v3046
    %v3048 = vpop.f32.mrb[0].mxu0
    %v3049 = vadd.f32 %v561, %v3048
    %3050 = vmatprep.mubr.bf16.mxu0 %v213
    %3051 = vmatmul.mubr.bf16.gmra.mrb[0].mxu0 %v212
    %v3052 = vpop.f32.mrb[0].mxu0
    %v3053 = vadd.f32 %v557, %v3052
    %v3054 = vpop.f32.mrb[0].mxu0
    %v3055 = vadd.f32 %v561, %v3054
    %v3056 = vpop.f32.mrb[0].mxu0
    %v3057 = vadd.f32 %v557, %v3056
    %v3058 = vpop.f32.mrb[0].mxu0
    %v3059 = vadd.f32 %v561, %v3058
    %3060 = vmatprep.mubr.bf16.mxu0 %v217
    %3061 = vmatmul.mubr.bf16.gmra.mrb[0].mxu0 %v216
    %v3062 = vpop.f32.mrb[0].mxu0
    %v3063 = vadd.f32 %v557, %v3062
    %v3064 = vpop.f32.mrb[0].mxu0
    %v3065 = vadd.f32 %v561, %v3064
    %v3066 = vpop.f32.mrb[0].mxu0
    %v3067 = vadd.f32 %v557, %v3066
    %v3068 = vpop.f32.mrb[0].mxu0
    %v3069 = vadd.f32 %v561, %v3068
    %3070 = vmatprep.mubr.bf16.mxu0 %v221
    %3071 = vmatmul.mubr.bf16.gmra.mrb[0].mxu0 %v220
    %v3072 = vpop.f32.mrb[0].mxu0
    %v3073 = vadd.f32 %v557, %v3072
    %v3074 = vpop.f32.mrb[0].mxu0
    %v3075 = vadd.f32 %v561, %v3074
    %v3076 = vpop.f32.mrb[0].mxu0
    %v3077 = vadd.f32 %v557, %v3076
    %v3078 = vpop.f32.mrb[0].mxu0
    %v3079 = vadd.f32 %v561, %v3078
    %3080 = vmatprep.mubr.bf16.mxu0 %v225
    %3081 = vmatmul.mubr.bf16.gmra.mrb[0].mxu0 %v224
    %v3082 = vpop.f32.mrb[0].mxu0
    %v3083 = vadd.f32 %v557, %v3082
    %v3084 = vpop.f32.mrb[0].mxu0
    %v3085 = vadd.f32 %v561, %v3084
    %v3086 = vpop.f32.mrb[0].mxu0
    %v3087 = vadd.f32 %v557, %v3086
    %v3088 = vpop.f32.mrb[0].mxu0
    %v3089 = vadd.f32 %v561, %v3088
    %3090 = vmatprep.mubr.bf16.mxu0 %v229
    %3091 = vmatmul.mubr.bf16.gmra.mrb[0].mxu0 %v228
    %v3092 = vpop.f32.mrb[0].mxu0
    %v3093 = vadd.f32 %v557, %v3092
    %v3094 = vpop.f32.mrb[0].mxu0
    %v3095 = vadd.f32 %v561, %v3094
    %v3096 = vpop.f32.mrb[0].mxu0
    %v3097 = vadd.f32 %v557, %v3096
    %v3098 = vpop.f32.mrb[0].mxu0
    %v3099 = vadd.f32 %v561, %v3098
    %3100 = vmatprep.mubr.bf16.mxu0 %v233
    %3101 = vmatmul.mubr.bf16.gmra.mrb[0].mxu0 %v232
    %v3102 = vpop.f32.mrb[0].mxu0
    %v3103 = vadd.f32 %v557, %v3102
    %v3104 = vpop.f32.mrb[0].mxu0
    %v3105 = vadd.f32 %v561, %v3104
    %v3106 = vpop.f32.mrb[0].mxu0
    %v3107 = vadd.f32 %v557, %v3106
    %v3108 = vpop.f32.mrb[0].mxu0
    %v3109 = vadd.f32 %v561, %v3108
    %3110 = vmatprep.mubr.bf16.mxu0 %v237
    %3111 = vmatmul.mubr.bf16.gmra.mrb[0].mxu0 %v236
    %v3112 = vpop.f32.mrb[0].mxu0
    %v3113 = vadd.f32 %v557, %v3112
    %v3114 = vpop.f32.mrb[0].mxu0
    %v3115 = vadd.f32 %v561, %v3114
    %v3116 = vpop.f32.mrb[0].mxu0
    %v3117 = vadd.f32 %v557, %v3116
    %v3118 = vpop.f32.mrb[0].mxu0
    %v3119 = vadd.f32 %v561, %v3118
    %3120 = vmatprep.mubr.bf16.mxu0 %v241
    %3121 = vmatmul.mubr.bf16.gmra.mrb[0].mxu0 %v240
    %v3122 = vpop.f32.mrb[0].mxu0
    %v3123 = vadd.f32 %v557, %v3122
    %v3124 = vpop.f32.mrb[0].mxu0
    %v3125 = vadd.f32 %v561, %v3124
    %v3126 = vpop.f32.mrb[0].mxu0
    %v3127 = vadd.f32 %v557, %v3126
    %v3128 = vpop.f32.mrb[0].mxu0
    %v3129 = vadd.f32 %v561, %v3128
    %3130 = vmatprep.mubr.bf16.mxu0 %v245
    %3131 = vmatmul.mubr.bf16.gmra.mrb[0].mxu0 %v244
    %v3132 = vpop.f32.mrb[0].mxu0
    %v3133 = vadd.f32 %v557, %v3132
    %v3134 = vpop.f32.mrb[0].mxu0
    %v3135 = vadd.f32 %v561, %v3134
    %v3136 = vpop.f32.mrb[0].mxu0
    %v3137 = vadd.f32 %v557, %v3136
    %v3138 = vpop.f32.mrb[0].mxu0
    %v3139 = vadd.f32 %v561, %v3138
    %3140 = vmatprep.mubr.bf16.mxu0 %v249
    %3141 = vmatmul.mubr.bf16.gmra.mrb[0].mxu0 %v248
    %v3142 = vpop.f32.mrb[0].mxu0
    %v3143 = vadd.f32 %v557, %v3142
    %v3144 = vpop.f32.mrb[0].mxu0
    %v3145 = vadd.f32 %v561, %v3144
    %v3146 = vpop.f32.mrb[0].mxu0
    %v3147 = vadd.f32 %v557, %v3146
    %v3148 = vpop.f32.mrb[0].mxu0
    %v3149 = vadd.f32 %v561, %v3148
    %3150 = vmatprep.mubr.bf16.mxu0 %v253
    %3151 = vmatmul.mubr.bf16.gmra.mrb[0].mxu0 %v252
    %v3152 = vpop.f32.mrb[0].mxu0
    %v3153 = vadd.f32 %v557, %v3152
    %v3154 = vpop.f32.mrb[0].mxu0
    %v3155 = vadd.f32 %v561, %v3154
    %v3156 = vpop.f32.mrb[0].mxu0
    %v3157 = vadd.f32 %v557, %v3156
    %v3158 = vpop.f32.mrb[0].mxu0
    %v3159 = vadd.f32 %v561, %v3158
    %3160 = vmatprep.mubr.bf16.mxu0 %v257
    %3161 = vmatmul.mubr.bf16.gmra.mrb[0].mxu0 %v256
    %v3162 = vpop.f32.mrb[0].mxu0
    %v3163 = vadd.f32 %v557, %v3162
    %v3164 = vpop.f32.mrb[0].mxu0
    %v3165 = vadd.f32 %v561, %v3164
    %v3166 = vpop.f32.mrb[0].mxu0
    %v3167 = vadd.f32 %v557, %v3166
    %v3168 = vpop.f32.mrb[0].mxu0
    %v3169 = vadd.f32 %v561, %v3168
    %3170 = vmatprep.mubr.bf16.mxu0 %v261
    %3171 = vmatmul.mubr.bf16.gmra.mrb[0].mxu0 %v260
    %v3172 = vpop.f32.mrb[0].mxu0
    %v3173 = vadd.f32 %v557, %v3172
    %v3174 = vpop.f32.mrb[0].mxu0
    %v3175 = vadd.f32 %v561, %v3174
    %v3176 = vpop.f32.mrb[0].mxu0
    %v3177 = vadd.f32 %v557, %v3176
    %v3178 = vpop.f32.mrb[0].mxu0
    %v3179 = vadd.f32 %v561, %v3178
    %3180 = vmatprep.mubr.bf16.mxu0 %v265
    %3181 = vmatmul.mubr.bf16.gmra.mrb[0].mxu0 %v264
    %v3182 = vpop.f32.mrb[0].mxu0
    %v3183 = vadd.f32 %v557, %v3182
    %v3184 = vpop.f32.mrb[0].mxu0
    %v3185 = vadd.f32 %v561, %v3184
    %v3186 = vpop.f32.mrb[0].mxu0
    %v3187 = vadd.f32 %v557, %v3186
    %v3188 = vpop.f32.mrb[0].mxu0
    %v3189 = vadd.f32 %v561, %v3188
    %3190 = vmatprep.mubr.bf16.mxu0 %v269
    %3191 = vmatmul.mubr.bf16.gmra.mrb[0].mxu0 %v268
    %v3192 = vpop.f32.mrb[0].mxu0
    %v3193 = vadd.f32 %v557, %v3192
    %v3194 = vpop.f32.mrb[0].mxu0
    %v3195 = vadd.f32 %v561, %v3194
    %v3196 = vpop.f32.mrb[0].mxu0
    %v3197 = vadd.f32 %v557, %v3196
    %v3198 = vpop.f32.mrb[0].mxu0
    %v3199 = vadd.f32 %v561, %v3198
    %3200 = vdwg.mxu0
    %3201 = vmatprep.subr.bf16.mxu0 %v1473
    %3202 = vmatpush1.bf16.msra.mxu0 %v1472
    %3203 = vmatprep.subr.bf16.mxu0 %v1481
    %3204 = vmatpush1.bf16.msra.mxu0 %v1480
    %3205 = vmatprep.subr.bf16.mxu0 %v1489
    %3206 = vmatpush1.bf16.msra.mxu0 %v1488
    %3207 = vmatprep.subr.bf16.mxu0 %v1497
    %3208 = vmatpush1.bf16.msra.mxu0 %v1496
    %3209 = vmatprep.subr.bf16.mxu0 %v1505
    %3210 = vmatpush1.bf16.msra.mxu0 %v1504
    %3211 = vmatprep.subr.bf16.mxu0 %v1513
    %3212 = vmatpush1.bf16.msra.mxu0 %v1512
    %3213 = vmatprep.subr.bf16.mxu0 %v1521
    %3214 = vmatpush1.bf16.msra.mxu0 %v1520
    %3215 = vmatprep.subr.bf16.mxu0 %v1529
    %3216 = vmatpush1.bf16.msra.mxu0 %v1528
    %3217 = vmatprep.subr.bf16.mxu0 %v1537
    %3218 = vmatpush1.bf16.msra.mxu0 %v1536
    %3219 = vmatprep.subr.bf16.mxu0 %v1545
    %3220 = vmatpush1.bf16.msra.mxu0 %v1544
    %3221 = vmatprep.subr.bf16.mxu0 %v1553
    %3222 = vmatpush1.bf16.msra.mxu0 %v1552
    %3223 = vmatprep.subr.bf16.mxu0 %v1561
    %3224 = vmatpush1.bf16.msra.mxu0 %v1560
    %3225 = vmatprep.subr.bf16.mxu0 %v1569
    %3226 = vmatpush1.bf16.msra.mxu0 %v1568
    %3227 = vmatprep.subr.bf16.mxu0 %v1577
    %3228 = vmatpush1.bf16.msra.mxu0 %v1576
    %3229 = vmatprep.subr.bf16.mxu0 %v1585
    %3230 = vmatpush1.bf16.msra.mxu0 %v1584
    %3231 = vmatprep.subr.bf16.mxu0 %v1593
    %3232 = vmatpush1.bf16.msra.mxu0 %v1592
    %3233 = vmatprep.mubr.bf16.mxu0 %v211
    %3234 = vmatmul.mubr.bf16.gmra.mrb[0].mxu0 %v210
    %v3235 = vpop.f32.mrb[0].mxu0
    %v3236 = vadd.f32 %v3043, %v3235
    %v3237 = vpop.f32.mrb[0].mxu0
    %v3238 = vadd.f32 %v3045, %v3237
    %v3239 = vpop.f32.mrb[0].mxu0
    %v3240 = vadd.f32 %v3047, %v3239
    %v3241 = vpop.f32.mrb[0].mxu0
    %v3242 = vadd.f32 %v3049, %v3241
    %3243 = vmatprep.mubr.bf16.mxu0 %v215
    %3244 = vmatmul.mubr.bf16.gmra.mrb[0].mxu0 %v214
    %v3245 = vpop.f32.mrb[0].mxu0
    %v3246 = vadd.f32 %v3053, %v3245
    %v3247 = vpop.f32.mrb[0].mxu0
    %v3248 = vadd.f32 %v3055, %v3247
    %v3249 = vpop.f32.mrb[0].mxu0
    %v3250 = vadd.f32 %v3057, %v3249
    %v3251 = vpop.f32.mrb[0].mxu0
    %v3252 = vadd.f32 %v3059, %v3251
    %3253 = vmatprep.mubr.bf16.mxu0 %v219
    %3254 = vmatmul.mubr.bf16.gmra.mrb[0].mxu0 %v218
    %v3255 = vpop.f32.mrb[0].mxu0
    %v3256 = vadd.f32 %v3063, %v3255
    %v3257 = vpop.f32.mrb[0].mxu0
    %v3258 = vadd.f32 %v3065, %v3257
    %v3259 = vpop.f32.mrb[0].mxu0
    %v3260 = vadd.f32 %v3067, %v3259
    %v3261 = vpop.f32.mrb[0].mxu0
    %v3262 = vadd.f32 %v3069, %v3261
    %3263 = vmatprep.mubr.bf16.mxu0 %v223
    %3264 = vmatmul.mubr.bf16.gmra.mrb[0].mxu0 %v222
    %v3265 = vpop.f32.mrb[0].mxu0
    %v3266 = vadd.f32 %v3073, %v3265
    %v3267 = vpop.f32.mrb[0].mxu0
    %v3268 = vadd.f32 %v3075, %v3267
    %v3269 = vpop.f32.mrb[0].mxu0
    %v3270 = vadd.f32 %v3077, %v3269
    %v3271 = vpop.f32.mrb[0].mxu0
    %v3272 = vadd.f32 %v3079, %v3271
    %3273 = vmatprep.mubr.bf16.mxu0 %v227
    %3274 = vmatmul.mubr.bf16.gmra.mrb[0].mxu0 %v226
    %v3275 = vpop.f32.mrb[0].mxu0
    %v3276 = vadd.f32 %v3083, %v3275
    %v3277 = vpop.f32.mrb[0].mxu0
    %v3278 = vadd.f32 %v3085, %v3277
    %v3279 = vpop.f32.mrb[0].mxu0
    %v3280 = vadd.f32 %v3087, %v3279
    %v3281 = vpop.f32.mrb[0].mxu0
    %v3282 = vadd.f32 %v3089, %v3281
    %3283 = vmatprep.mubr.bf16.mxu0 %v231
    %3284 = vmatmul.mubr.bf16.gmra.mrb[0].mxu0 %v230
    %v3285 = vpop.f32.mrb[0].mxu0
    %v3286 = vadd.f32 %v3093, %v3285
    %v3287 = vpop.f32.mrb[0].mxu0
    %v3288 = vadd.f32 %v3095, %v3287
    %v3289 = vpop.f32.mrb[0].mxu0
    %v3290 = vadd.f32 %v3097, %v3289
    %v3291 = vpop.f32.mrb[0].mxu0
    %v3292 = vadd.f32 %v3099, %v3291
    %3293 = vmatprep.mubr.bf16.mxu0 %v235
    %3294 = vmatmul.mubr.bf16.gmra.mrb[0].mxu0 %v234
    %v3295 = vpop.f32.mrb[0].mxu0
    %v3296 = vadd.f32 %v3103, %v3295
    %v3297 = vpop.f32.mrb[0].mxu0
    %v3298 = vadd.f32 %v3105, %v3297
    %v3299 = vpop.f32.mrb[0].mxu0
    %v3300 = vadd.f32 %v3107, %v3299
    %v3301 = vpop.f32.mrb[0].mxu0
    %v3302 = vadd.f32 %v3109, %v3301
    %3303 = vmatprep.mubr.bf16.mxu0 %v239
    %3304 = vmatmul.mubr.bf16.gmra.mrb[0].mxu0 %v238
    %v3305 = vpop.f32.mrb[0].mxu0
    %v3306 = vadd.f32 %v3113, %v3305
    %v3307 = vpop.f32.mrb[0].mxu0
    %v3308 = vadd.f32 %v3115, %v3307
    %v3309 = vpop.f32.mrb[0].mxu0
    %v3310 = vadd.f32 %v3117, %v3309
    %v3311 = vpop.f32.mrb[0].mxu0
    %v3312 = vadd.f32 %v3119, %v3311
    %3313 = vmatprep.mubr.bf16.mxu0 %v243
    %3314 = vmatmul.mubr.bf16.gmra.mrb[0].mxu0 %v242
    %v3315 = vpop.f32.mrb[0].mxu0
    %v3316 = vadd.f32 %v3123, %v3315
    %v3317 = vpop.f32.mrb[0].mxu0
    %v3318 = vadd.f32 %v3125, %v3317
    %v3319 = vpop.f32.mrb[0].mxu0
    %v3320 = vadd.f32 %v3127, %v3319
    %v3321 = vpop.f32.mrb[0].mxu0
    %v3322 = vadd.f32 %v3129, %v3321
    %3323 = vmatprep.mubr.bf16.mxu0 %v247
    %3324 = vmatmul.mubr.bf16.gmra.mrb[0].mxu0 %v246
    %v3325 = vpop.f32.mrb[0].mxu0
    %v3326 = vadd.f32 %v3133, %v3325
    %v3327 = vpop.f32.mrb[0].mxu0
    %v3328 = vadd.f32 %v3135, %v3327
    %v3329 = vpop.f32.mrb[0].mxu0
    %v3330 = vadd.f32 %v3137, %v3329
    %v3331 = vpop.f32.mrb[0].mxu0
    %v3332 = vadd.f32 %v3139, %v3331
    %3333 = vmatprep.mubr.bf16.mxu0 %v251
    %3334 = vmatmul.mubr.bf16.gmra.mrb[0].mxu0 %v250
    %v3335 = vpop.f32.mrb[0].mxu0
    %v3336 = vadd.f32 %v3143, %v3335
    %v3337 = vpop.f32.mrb[0].mxu0
    %v3338 = vadd.f32 %v3145, %v3337
    %v3339 = vpop.f32.mrb[0].mxu0
    %v3340 = vadd.f32 %v3147, %v3339
    %v3341 = vpop.f32.mrb[0].mxu0
    %v3342 = vadd.f32 %v3149, %v3341
    %3343 = vmatprep.mubr.bf16.mxu0 %v255
    %3344 = vmatmul.mubr.bf16.gmra.mrb[0].mxu0 %v254
    %v3345 = vpop.f32.mrb[0].mxu0
    %v3346 = vadd.f32 %v3153, %v3345
    %v3347 = vpop.f32.mrb[0].mxu0
    %v3348 = vadd.f32 %v3155, %v3347
    %v3349 = vpop.f32.mrb[0].mxu0
    %v3350 = vadd.f32 %v3157, %v3349
    %v3351 = vpop.f32.mrb[0].mxu0
    %v3352 = vadd.f32 %v3159, %v3351
    %3353 = vmatprep.mubr.bf16.mxu0 %v259
    %3354 = vmatmul.mubr.bf16.gmra.mrb[0].mxu0 %v258
    %v3355 = vpop.f32.mrb[0].mxu0
    %v3356 = vadd.f32 %v3163, %v3355
    %v3357 = vpop.f32.mrb[0].mxu0
    %v3358 = vadd.f32 %v3165, %v3357
    %v3359 = vpop.f32.mrb[0].mxu0
    %v3360 = vadd.f32 %v3167, %v3359
    %v3361 = vpop.f32.mrb[0].mxu0
    %v3362 = vadd.f32 %v3169, %v3361
    %3363 = vmatprep.mubr.bf16.mxu0 %v263
    %3364 = vmatmul.mubr.bf16.gmra.mrb[0].mxu0 %v262
    %v3365 = vpop.f32.mrb[0].mxu0
    %v3366 = vadd.f32 %v3173, %v3365
    %v3367 = vpop.f32.mrb[0].mxu0
    %v3368 = vadd.f32 %v3175, %v3367
    %v3369 = vpop.f32.mrb[0].mxu0
    %v3370 = vadd.f32 %v3177, %v3369
    %v3371 = vpop.f32.mrb[0].mxu0
    %v3372 = vadd.f32 %v3179, %v3371
    %3373 = vmatprep.mubr.bf16.mxu0 %v267
    %3374 = vmatmul.mubr.bf16.gmra.mrb[0].mxu0 %v266
    %v3375 = vpop.f32.mrb[0].mxu0
    %v3376 = vadd.f32 %v3183, %v3375
    %v3377 = vpop.f32.mrb[0].mxu0
    %v3378 = vadd.f32 %v3185, %v3377
    %v3379 = vpop.f32.mrb[0].mxu0
    %v3380 = vadd.f32 %v3187, %v3379
    %v3381 = vpop.f32.mrb[0].mxu0
    %v3382 = vadd.f32 %v3189, %v3381
    %3383 = vmatprep.mubr.bf16.mxu0 %v271
    %3384 = vmatmul.mubr.bf16.gmra.mrb[0].mxu0 %v270
    %v3385 = vpop.f32.mrb[0].mxu0
    %v3386 = vadd.f32 %v3193, %v3385
    %v3387 = vpop.f32.mrb[0].mxu0
    %v3388 = vadd.f32 %v3195, %v3387
    %v3389 = vpop.f32.mrb[0].mxu0
    %v3390 = vadd.f32 %v3197, %v3389
    %v3391 = vpop.f32.mrb[0].mxu0
    %v3392 = vadd.f32 %v3199, %v3391
    %3393 = vdwg.mxu0
    %v3394 = vmax.f32 %v2078, 0.0
    %v3395 = vmax.f32 %v2080, 0.0
    %v3396 = vmax.f32 %v2464, 0.0
    %v3397 = vmax.f32 %v2466, 0.0
    %v3398 = vmax.f32 %v2850, 0.0
    %v3399 = vmax.f32 %v2852, 0.0
    %v3400 = vmax.f32 %v3236, 0.0
    %v3401 = vmax.f32 %v3238, 0.0
    %v3402 = vmax.f32 %v2082, 0.0
    %v3403 = vmax.f32 %v2084, 0.0
    %v3404 = vmax.f32 %v2468, 0.0
    %v3405 = vmax.f32 %v2470, 0.0
    %v3406 = vmax.f32 %v2854, 0.0
    %v3407 = vmax.f32 %v2856, 0.0
    %v3408 = vmax.f32 %v3240, 0.0
    %v3409 = vmax.f32 %v3242, 0.0
    %v3410 = vmax.f32 %v2088, 0.0
    %v3411 = vmax.f32 %v2090, 0.0
    %v3412 = vmax.f32 %v2474, 0.0
    %v3413 = vmax.f32 %v2476, 0.0
    %v3414 = vmax.f32 %v2860, 0.0
    %v3415 = vmax.f32 %v2862, 0.0
    %v3416 = vmax.f32 %v3246, 0.0
    %v3417 = vmax.f32 %v3248, 0.0
    %v3418 = vmax.f32 %v2092, 0.0
    %v3419 = vmax.f32 %v2094, 0.0
    %v3420 = vmax.f32 %v2478, 0.0
    %v3421 = vmax.f32 %v2480, 0.0
    %v3422 = vmax.f32 %v2864, 0.0
    %v3423 = vmax.f32 %v2866, 0.0
    %v3424 = vmax.f32 %v3250, 0.0
    %v3425 = vmax.f32 %v3252, 0.0
    %v3426 = vmax.f32 %v2098, 0.0
    %v3427 = vmax.f32 %v2100, 0.0
    %v3428 = vmax.f32 %v2484, 0.0
    %v3429 = vmax.f32 %v2486, 0.0
    %v3430 = vmax.f32 %v2870, 0.0
    %v3431 = vmax.f32 %v2872, 0.0
    %v3432 = vmax.f32 %v3256, 0.0
    %v3433 = vmax.f32 %v3258, 0.0
    %v3434 = vmax.f32 %v2102, 0.0
    %v3435 = vmax.f32 %v2104, 0.0
    %v3436 = vmax.f32 %v2488, 0.0
    %v3437 = vmax.f32 %v2490, 0.0
    %v3438 = vmax.f32 %v2874, 0.0
    %v3439 = vmax.f32 %v2876, 0.0
    %v3440 = vmax.f32 %v3260, 0.0
    %v3441 = vmax.f32 %v3262, 0.0
    %v3442 = vmax.f32 %v2108, 0.0
    %v3443 = vmax.f32 %v2110, 0.0
    %v3444 = vmax.f32 %v2494, 0.0
    %v3445 = vmax.f32 %v2496, 0.0
    %v3446 = vmax.f32 %v2880, 0.0
    %v3447 = vmax.f32 %v2882, 0.0
    %v3448 = vmax.f32 %v3266, 0.0
    %v3449 = vmax.f32 %v3268, 0.0
    %v3450 = vmax.f32 %v2112, 0.0
    %v3451 = vmax.f32 %v2114, 0.0
    %v3452 = vmax.f32 %v2498, 0.0
    %v3453 = vmax.f32 %v2500, 0.0
    %v3454 = vmax.f32 %v2884, 0.0
    %v3455 = vmax.f32 %v2886, 0.0
    %v3456 = vmax.f32 %v3270, 0.0
    %v3457 = vmax.f32 %v3272, 0.0
    %v3458 = vmax.f32 %v2118, 0.0
    %v3459 = vmax.f32 %v2120, 0.0
    %v3460 = vmax.f32 %v2504, 0.0
    %v3461 = vmax.f32 %v2506, 0.0
    %v3462 = vmax.f32 %v2890, 0.0
    %v3463 = vmax.f32 %v2892, 0.0
    %v3464 = vmax.f32 %v3276, 0.0
    %v3465 = vmax.f32 %v3278, 0.0
    %v3466 = vmax.f32 %v2122, 0.0
    %v3467 = vmax.f32 %v2124, 0.0
    %v3468 = vmax.f32 %v2508, 0.0
    %v3469 = vmax.f32 %v2510, 0.0
    %v3470 = vmax.f32 %v2894, 0.0
    %v3471 = vmax.f32 %v2896, 0.0
    %v3472 = vmax.f32 %v3280, 0.0
    %v3473 = vmax.f32 %v3282, 0.0
    %v3474 = vmax.f32 %v2128, 0.0
    %v3475 = vmax.f32 %v2130, 0.0
    %v3476 = vmax.f32 %v2514, 0.0
    %v3477 = vmax.f32 %v2516, 0.0
    %v3478 = vmax.f32 %v2900, 0.0
    %v3479 = vmax.f32 %v2902, 0.0
    %v3480 = vmax.f32 %v3286, 0.0
    %v3481 = vmax.f32 %v3288, 0.0
    %v3482 = vmax.f32 %v2132, 0.0
    %v3483 = vmax.f32 %v2134, 0.0
    %v3484 = vmax.f32 %v2518, 0.0
    %v3485 = vmax.f32 %v2520, 0.0
    %v3486 = vmax.f32 %v2904, 0.0
    %v3487 = vmax.f32 %v2906, 0.0
    %v3488 = vmax.f32 %v3290, 0.0
    %v3489 = vmax.f32 %v3292, 0.0
    %v3490 = vmax.f32 %v2138, 0.0
    %v3491 = vmax.f32 %v2140, 0.0
    %v3492 = vmax.f32 %v2524, 0.0
    %v3493 = vmax.f32 %v2526, 0.0
    %v3494 = vmax.f32 %v2910, 0.0
    %v3495 = vmax.f32 %v2912, 0.0
    %v3496 = vmax.f32 %v3296, 0.0
    %v3497 = vmax.f32 %v3298, 0.0
    %v3498 = vmax.f32 %v2142, 0.0
    %v3499 = vmax.f32 %v2144, 0.0
    %v3500 = vmax.f32 %v2528, 0.0
    %v3501 = vmax.f32 %v2530, 0.0
    %v3502 = vmax.f32 %v2914, 0.0
    %v3503 = vmax.f32 %v2916, 0.0
    %v3504 = vmax.f32 %v3300, 0.0
    %v3505 = vmax.f32 %v3302, 0.0
    %v3506 = vmax.f32 %v2148, 0.0
    %v3507 = vmax.f32 %v2150, 0.0
    %v3508 = vmax.f32 %v2534, 0.0
    %v3509 = vmax.f32 %v2536, 0.0
    %v3510 = vmax.f32 %v2920, 0.0
    %v3511 = vmax.f32 %v2922, 0.0
    %v3512 = vmax.f32 %v3306, 0.0
    %v3513 = vmax.f32 %v3308, 0.0
    %v3514 = vmax.f32 %v2152, 0.0
    %v3515 = vmax.f32 %v2154, 0.0
    %v3516 = vmax.f32 %v2538, 0.0
    %v3517 = vmax.f32 %v2540, 0.0
    %v3518 = vmax.f32 %v2924, 0.0
    %v3519 = vmax.f32 %v2926, 0.0
    %v3520 = vmax.f32 %v3310, 0.0
    %v3521 = vmax.f32 %v3312, 0.0
    %v3522 = vmax.f32 %v2158, 0.0
    %v3523 = vmax.f32 %v2160, 0.0
    %v3524 = vmax.f32 %v2544, 0.0
    %v3525 = vmax.f32 %v2546, 0.0
    %v3526 = vmax.f32 %v2930, 0.0
    %v3527 = vmax.f32 %v2932, 0.0
    %v3528 = vmax.f32 %v3316, 0.0
    %v3529 = vmax.f32 %v3318, 0.0
    %v3530 = vmax.f32 %v2162, 0.0
    %v3531 = vmax.f32 %v2164, 0.0
    %v3532 = vmax.f32 %v2548, 0.0
    %v3533 = vmax.f32 %v2550, 0.0
    %v3534 = vmax.f32 %v2934, 0.0
    %v3535 = vmax.f32 %v2936, 0.0
    %v3536 = vmax.f32 %v3320, 0.0
    %v3537 = vmax.f32 %v3322, 0.0
    %v3538 = vmax.f32 %v2168, 0.0
    %v3539 = vmax.f32 %v2170, 0.0
    %v3540 = vmax.f32 %v2554, 0.0
    %v3541 = vmax.f32 %v2556, 0.0
    %v3542 = vmax.f32 %v2940, 0.0
    %v3543 = vmax.f32 %v2942, 0.0
    %v3544 = vmax.f32 %v3326, 0.0
    %v3545 = vmax.f32 %v3328, 0.0
    %v3546 = vmax.f32 %v2172, 0.0
    %v3547 = vmax.f32 %v2174, 0.0
    %v3548 = vmax.f32 %v2558, 0.0
    %v3549 = vmax.f32 %v2560, 0.0
    %v3550 = vmax.f32 %v2944, 0.0
    %v3551 = vmax.f32 %v2946, 0.0
    %v3552 = vmax.f32 %v3330, 0.0
    %v3553 = vmax.f32 %v3332, 0.0
    %v3554 = vmax.f32 %v2178, 0.0
    %v3555 = vmax.f32 %v2180, 0.0
    %v3556 = vmax.f32 %v2564, 0.0
    %v3557 = vmax.f32 %v2566, 0.0
    %v3558 = vmax.f32 %v2950, 0.0
    %v3559 = vmax.f32 %v2952, 0.0
    %v3560 = vmax.f32 %v3336, 0.0
    %v3561 = vmax.f32 %v3338, 0.0
    %v3562 = vmax.f32 %v2182, 0.0
    %v3563 = vmax.f32 %v2184, 0.0
    %v3564 = vmax.f32 %v2568, 0.0
    %v3565 = vmax.f32 %v2570, 0.0
    %v3566 = vmax.f32 %v2954, 0.0
    %v3567 = vmax.f32 %v2956, 0.0
    %v3568 = vmax.f32 %v3340, 0.0
    %v3569 = vmax.f32 %v3342, 0.0
    %v3570 = vmax.f32 %v2188, 0.0
    %v3571 = vmax.f32 %v2190, 0.0
    %v3572 = vmax.f32 %v2574, 0.0
    %v3573 = vmax.f32 %v2576, 0.0
    %v3574 = vmax.f32 %v2960, 0.0
    %v3575 = vmax.f32 %v2962, 0.0
    %v3576 = vmax.f32 %v3346, 0.0
    %v3577 = vmax.f32 %v3348, 0.0
    %v3578 = vmax.f32 %v2192, 0.0
    %v3579 = vmax.f32 %v2194, 0.0
    %v3580 = vmax.f32 %v2578, 0.0
    %v3581 = vmax.f32 %v2580, 0.0
    %v3582 = vmax.f32 %v2964, 0.0
    %v3583 = vmax.f32 %v2966, 0.0
    %v3584 = vmax.f32 %v3350, 0.0
    %v3585 = vmax.f32 %v3352, 0.0
    %v3586 = vmax.f32 %v2198, 0.0
    %v3587 = vmax.f32 %v2200, 0.0
    %v3588 = vmax.f32 %v2584, 0.0
    %v3589 = vmax.f32 %v2586, 0.0
    %v3590 = vmax.f32 %v2970, 0.0
    %v3591 = vmax.f32 %v2972, 0.0
    %v3592 = vmax.f32 %v3356, 0.0
    %v3593 = vmax.f32 %v3358, 0.0
    %v3594 = vmax.f32 %v2202, 0.0
    %v3595 = vmax.f32 %v2204, 0.0
    %v3596 = vmax.f32 %v2588, 0.0
    %v3597 = vmax.f32 %v2590, 0.0
    %v3598 = vmax.f32 %v2974, 0.0
    %v3599 = vmax.f32 %v2976, 0.0
    %v3600 = vmax.f32 %v3360, 0.0
    %v3601 = vmax.f32 %v3362, 0.0
    %v3602 = vmax.f32 %v2208, 0.0
    %v3603 = vmax.f32 %v2210, 0.0
    %v3604 = vmax.f32 %v2594, 0.0
    %v3605 = vmax.f32 %v2596, 0.0
    %v3606 = vmax.f32 %v2980, 0.0
    %v3607 = vmax.f32 %v2982, 0.0
    %v3608 = vmax.f32 %v3366, 0.0
    %v3609 = vmax.f32 %v3368, 0.0
    %v3610 = vmax.f32 %v2212, 0.0
    %v3611 = vmax.f32 %v2214, 0.0
    %v3612 = vmax.f32 %v2598, 0.0
    %v3613 = vmax.f32 %v2600, 0.0
    %v3614 = vmax.f32 %v2984, 0.0
    %v3615 = vmax.f32 %v2986, 0.0
    %v3616 = vmax.f32 %v3370, 0.0
    %v3617 = vmax.f32 %v3372, 0.0
    %v3618 = vmax.f32 %v2218, 0.0
    %v3619 = vmax.f32 %v2220, 0.0
    %v3620 = vmax.f32 %v2604, 0.0
    %v3621 = vmax.f32 %v2606, 0.0
    %v3622 = vmax.f32 %v2990, 0.0
    %v3623 = vmax.f32 %v2992, 0.0
    %v3624 = vmax.f32 %v3376, 0.0
    %v3625 = vmax.f32 %v3378, 0.0
    %v3626 = vmax.f32 %v2222, 0.0
    %v3627 = vmax.f32 %v2224, 0.0
    %v3628 = vmax.f32 %v2608, 0.0
    %v3629 = vmax.f32 %v2610, 0.0
    %v3630 = vmax.f32 %v2994, 0.0
    %v3631 = vmax.f32 %v2996, 0.0
    %v3632 = vmax.f32 %v3380, 0.0
    %v3633 = vmax.f32 %v3382, 0.0
    %v3634 = vmax.f32 %v2228, 0.0
    %v3635 = vmax.f32 %v2230, 0.0
    %v3636 = vmax.f32 %v2614, 0.0
    %v3637 = vmax.f32 %v2616, 0.0
    %v3638 = vmax.f32 %v3000, 0.0
    %v3639 = vmax.f32 %v3002, 0.0
    %v3640 = vmax.f32 %v3386, 0.0
    %v3641 = vmax.f32 %v3388, 0.0
    %v3642 = vmax.f32 %v2232, 0.0
    %v3643 = vmax.f32 %v2234, 0.0
    %v3644 = vmax.f32 %v2618, 0.0
    %v3645 = vmax.f32 %v2620, 0.0
    %v3646 = vmax.f32 %v3004, 0.0
    %v3647 = vmax.f32 %v3006, 0.0
    %v3648 = vmax.f32 %v3390, 0.0
    %v3649 = vmax.f32 %v3392, 0.0
    %v3650 = vpack.c.bf16 %v3402, %v3394
    %v3651 = vpack.c.bf16 %v3403, %v3395
    %v3652 = vpack.c.bf16 %v3404, %v3396
    %v3653 = vpack.c.bf16 %v3405, %v3397
    %v3654 = vpack.c.bf16 %v3406, %v3398
    %v3655 = vpack.c.bf16 %v3407, %v3399
    %v3656 = vpack.c.bf16 %v3408, %v3400
    %v3657 = vpack.c.bf16 %v3409, %v3401
    %v3658 = vpack.c.bf16 %v3418, %v3410
    %v3659 = vpack.c.bf16 %v3419, %v3411
    %v3660 = vpack.c.bf16 %v3420, %v3412
    %v3661 = vpack.c.bf16 %v3421, %v3413
    %v3662 = vpack.c.bf16 %v3422, %v3414
    %v3663 = vpack.c.bf16 %v3423, %v3415
    %v3664 = vpack.c.bf16 %v3424, %v3416
    %v3665 = vpack.c.bf16 %v3425, %v3417
    %v3666 = vpack.c.bf16 %v3434, %v3426
    %v3667 = vpack.c.bf16 %v3435, %v3427
    %v3668 = vpack.c.bf16 %v3436, %v3428
    %v3669 = vpack.c.bf16 %v3437, %v3429
    %v3670 = vpack.c.bf16 %v3438, %v3430
    %v3671 = vpack.c.bf16 %v3439, %v3431
    %v3672 = vpack.c.bf16 %v3440, %v3432
    %v3673 = vpack.c.bf16 %v3441, %v3433
    %v3674 = vpack.c.bf16 %v3450, %v3442
    %v3675 = vpack.c.bf16 %v3451, %v3443
    %v3676 = vpack.c.bf16 %v3452, %v3444
    %v3677 = vpack.c.bf16 %v3453, %v3445
    %v3678 = vpack.c.bf16 %v3454, %v3446
    %v3679 = vpack.c.bf16 %v3455, %v3447
    %v3680 = vpack.c.bf16 %v3456, %v3448
    %v3681 = vpack.c.bf16 %v3457, %v3449
    %v3682 = vpack.c.bf16 %v3466, %v3458
    %v3683 = vpack.c.bf16 %v3467, %v3459
    %v3684 = vpack.c.bf16 %v3468, %v3460
    %v3685 = vpack.c.bf16 %v3469, %v3461
    %v3686 = vpack.c.bf16 %v3470, %v3462
    %v3687 = vpack.c.bf16 %v3471, %v3463
    %v3688 = vpack.c.bf16 %v3472, %v3464
    %v3689 = vpack.c.bf16 %v3473, %v3465
    %v3690 = vpack.c.bf16 %v3482, %v3474
    %v3691 = vpack.c.bf16 %v3483, %v3475
    %v3692 = vpack.c.bf16 %v3484, %v3476
    %v3693 = vpack.c.bf16 %v3485, %v3477
    %v3694 = vpack.c.bf16 %v3486, %v3478
    %v3695 = vpack.c.bf16 %v3487, %v3479
    %v3696 = vpack.c.bf16 %v3488, %v3480
    %v3697 = vpack.c.bf16 %v3489, %v3481
    %v3698 = vpack.c.bf16 %v3498, %v3490
    %v3699 = vpack.c.bf16 %v3499, %v3491
    %v3700 = vpack.c.bf16 %v3500, %v3492
    %v3701 = vpack.c.bf16 %v3501, %v3493
    %v3702 = vpack.c.bf16 %v3502, %v3494
    %v3703 = vpack.c.bf16 %v3503, %v3495
    %v3704 = vpack.c.bf16 %v3504, %v3496
    %v3705 = vpack.c.bf16 %v3505, %v3497
    %v3706 = vpack.c.bf16 %v3514, %v3506
    %v3707 = vpack.c.bf16 %v3515, %v3507
    %v3708 = vpack.c.bf16 %v3516, %v3508
    %v3709 = vpack.c.bf16 %v3517, %v3509
    %v3710 = vpack.c.bf16 %v3518, %v3510
    %v3711 = vpack.c.bf16 %v3519, %v3511
    %v3712 = vpack.c.bf16 %v3520, %v3512
    %v3713 = vpack.c.bf16 %v3521, %v3513
    %v3714 = vpack.c.bf16 %v3530, %v3522
    %v3715 = vpack.c.bf16 %v3531, %v3523
    %v3716 = vpack.c.bf16 %v3532, %v3524
    %v3717 = vpack.c.bf16 %v3533, %v3525
    %v3718 = vpack.c.bf16 %v3534, %v3526
    %v3719 = vpack.c.bf16 %v3535, %v3527
    %v3720 = vpack.c.bf16 %v3536, %v3528
    %v3721 = vpack.c.bf16 %v3537, %v3529
    %v3722 = vpack.c.bf16 %v3546, %v3538
    %v3723 = vpack.c.bf16 %v3547, %v3539
    %v3724 = vpack.c.bf16 %v3548, %v3540
    %v3725 = vpack.c.bf16 %v3549, %v3541
    %v3726 = vpack.c.bf16 %v3550, %v3542
    %v3727 = vpack.c.bf16 %v3551, %v3543
    %v3728 = vpack.c.bf16 %v3552, %v3544
    %v3729 = vpack.c.bf16 %v3553, %v3545
    %v3730 = vpack.c.bf16 %v3562, %v3554
    %v3731 = vpack.c.bf16 %v3563, %v3555
    %v3732 = vpack.c.bf16 %v3564, %v3556
    %v3733 = vpack.c.bf16 %v3565, %v3557
    %v3734 = vpack.c.bf16 %v3566, %v3558
    %v3735 = vpack.c.bf16 %v3567, %v3559
    %v3736 = vpack.c.bf16 %v3568, %v3560
    %v3737 = vpack.c.bf16 %v3569, %v3561
    %v3738 = vpack.c.bf16 %v3578, %v3570
    %v3739 = vpack.c.bf16 %v3579, %v3571
    %v3740 = vpack.c.bf16 %v3580, %v3572
    %v3741 = vpack.c.bf16 %v3581, %v3573
    %v3742 = vpack.c.bf16 %v3582, %v3574
    %v3743 = vpack.c.bf16 %v3583, %v3575
    %v3744 = vpack.c.bf16 %v3584, %v3576
    %v3745 = vpack.c.bf16 %v3585, %v3577
    %v3746 = vpack.c.bf16 %v3594, %v3586
    %v3747 = vpack.c.bf16 %v3595, %v3587
    %v3748 = vpack.c.bf16 %v3596, %v3588
    %v3749 = vpack.c.bf16 %v3597, %v3589
    %v3750 = vpack.c.bf16 %v3598, %v3590
    %v3751 = vpack.c.bf16 %v3599, %v3591
    %v3752 = vpack.c.bf16 %v3600, %v3592
    %v3753 = vpack.c.bf16 %v3601, %v3593
    %v3754 = vpack.c.bf16 %v3610, %v3602
    %v3755 = vpack.c.bf16 %v3611, %v3603
    %v3756 = vpack.c.bf16 %v3612, %v3604
    %v3757 = vpack.c.bf16 %v3613, %v3605
    %v3758 = vpack.c.bf16 %v3614, %v3606
    %v3759 = vpack.c.bf16 %v3615, %v3607
    %v3760 = vpack.c.bf16 %v3616, %v3608
    %v3761 = vpack.c.bf16 %v3617, %v3609
    %v3762 = vpack.c.bf16 %v3626, %v3618
    %v3763 = vpack.c.bf16 %v3627, %v3619
    %v3764 = vpack.c.bf16 %v3628, %v3620
    %v3765 = vpack.c.bf16 %v3629, %v3621
    %v3766 = vpack.c.bf16 %v3630, %v3622
    %v3767 = vpack.c.bf16 %v3631, %v3623
    %v3768 = vpack.c.bf16 %v3632, %v3624
    %v3769 = vpack.c.bf16 %v3633, %v3625
    %v3770 = vpack.c.bf16 %v3642, %v3634
    %v3771 = vpack.c.bf16 %v3643, %v3635
    %v3772 = vpack.c.bf16 %v3644, %v3636
    %v3773 = vpack.c.bf16 %v3645, %v3637
    %v3774 = vpack.c.bf16 %v3646, %v3638
    %v3775 = vpack.c.bf16 %v3647, %v3639
    %v3776 = vpack.c.bf16 %v3648, %v3640
    %v3777 = vpack.c.bf16 %v3649, %v3641
    %v3778 = vld [vmem:[#allocation8] sm:$0xff]
    %v3779 = vld [vmem:[#allocation8 + $0x8] sm:$0xff]
    %v3780 = vld [vmem:[#allocation8 + $0x10] sm:$0xff]
    %v3781 = vld [vmem:[#allocation8 + $0x18] sm:$0xff]
    %v3782 = vld [vmem:[#allocation8 + $0x20] sm:$0xff]
    %v3783 = vld [vmem:[#allocation8 + $0x28] sm:$0xff]
    %v3784 = vld [vmem:[#allocation8 + $0x30] sm:$0xff]
    %v3785 = vld [vmem:[#allocation8 + $0x38] sm:$0xff]
    %v3786 = vld [vmem:[#allocation8 + $0x40] sm:$0xff]
    %v3787 = vld [vmem:[#allocation8 + $0x48] sm:$0xff]
    %v3788 = vld [vmem:[#allocation8 + $0x50] sm:$0xff]
    %v3789 = vld [vmem:[#allocation8 + $0x58] sm:$0xff]
    %v3790 = vld [vmem:[#allocation8 + $0x60] sm:$0xff]
    %v3791 = vld [vmem:[#allocation8 + $0x68] sm:$0xff]
    %v3792 = vld [vmem:[#allocation8 + $0x70] sm:$0xff]
    %v3793 = vld [vmem:[#allocation8 + $0x78] sm:$0xff]
    %v3794 = vld [vmem:[#allocation8 + $0x80] sm:$0xff]
    %v3795 = vld [vmem:[#allocation8 + $0x88] sm:$0xff]
    %v3796 = vld [vmem:[#allocation8 + $0x90] sm:$0xff]
    %v3797 = vld [vmem:[#allocation8 + $0x98] sm:$0xff]
    %v3798 = vld [vmem:[#allocation8 + $0xa0] sm:$0xff]
    %v3799 = vld [vmem:[#allocation8 + $0xa8] sm:$0xff]
    %v3800 = vld [vmem:[#allocation8 + $0xb0] sm:$0xff]
    %v3801 = vld [vmem:[#allocation8 + $0xb8] sm:$0xff]
    %v3802 = vld [vmem:[#allocation8 + $0xc0] sm:$0xff]
    %v3803 = vld [vmem:[#allocation8 + $0xc8] sm:$0xff]
    %v3804 = vld [vmem:[#allocation8 + $0xd0] sm:$0xff]
    %v3805 = vld [vmem:[#allocation8 + $0xd8] sm:$0xff]
    %v3806 = vld [vmem:[#allocation8 + $0xe0] sm:$0xff]
    %v3807 = vld [vmem:[#allocation8 + $0xe8] sm:$0xff]
    %v3808 = vld [vmem:[#allocation8 + $0xf0] sm:$0xff]
    %v3809 = vld [vmem:[#allocation8 + $0xf8] sm:$0xff]
    %v3810 = vld [vmem:[#allocation8 + $0x100] sm:$0xff]
    %v3811 = vld [vmem:[#allocation8 + $0x108] sm:$0xff]
    %v3812 = vld [vmem:[#allocation8 + $0x110] sm:$0xff]
    %v3813 = vld [vmem:[#allocation8 + $0x118] sm:$0xff]
    %v3814 = vld [vmem:[#allocation8 + $0x120] sm:$0xff]
    %v3815 = vld [vmem:[#allocation8 + $0x128] sm:$0xff]
    %v3816 = vld [vmem:[#allocation8 + $0x130] sm:$0xff]
    %v3817 = vld [vmem:[#allocation8 + $0x138] sm:$0xff]
    %v3818 = vld [vmem:[#allocation8 + $0x140] sm:$0xff]
    %v3819 = vld [vmem:[#allocation8 + $0x148] sm:$0xff]
    %v3820 = vld [vmem:[#allocation8 + $0x150] sm:$0xff]
    %v3821 = vld [vmem:[#allocation8 + $0x158] sm:$0xff]
    %v3822 = vld [vmem:[#allocation8 + $0x160] sm:$0xff]
    %v3823 = vld [vmem:[#allocation8 + $0x168] sm:$0xff]
    %v3824 = vld [vmem:[#allocation8 + $0x170] sm:$0xff]
    %v3825 = vld [vmem:[#allocation8 + $0x178] sm:$0xff]
    %v3826 = vld [vmem:[#allocation8 + $0x180] sm:$0xff]
    %v3827 = vld [vmem:[#allocation8 + $0x188] sm:$0xff]
    %v3828 = vld [vmem:[#allocation8 + $0x190] sm:$0xff]
    %v3829 = vld [vmem:[#allocation8 + $0x198] sm:$0xff]
    %v3830 = vld [vmem:[#allocation8 + $0x1a0] sm:$0xff]
    %v3831 = vld [vmem:[#allocation8 + $0x1a8] sm:$0xff]
    %v3832 = vld [vmem:[#allocation8 + $0x1b0] sm:$0xff]
    %v3833 = vld [vmem:[#allocation8 + $0x1b8] sm:$0xff]
    %v3834 = vld [vmem:[#allocation8 + $0x1c0] sm:$0xff]
    %v3835 = vld [vmem:[#allocation8 + $0x1c8] sm:$0xff]
    %v3836 = vld [vmem:[#allocation8 + $0x1d0] sm:$0xff]
    %v3837 = vld [vmem:[#allocation8 + $0x1d8] sm:$0xff]
    %v3838 = vld [vmem:[#allocation8 + $0x1e0] sm:$0xff]
    %v3839 = vld [vmem:[#allocation8 + $0x1e8] sm:$0xff]
    %v3840 = vld [vmem:[#allocation8 + $0x1f0] sm:$0xff]
    %v3841 = vld [vmem:[#allocation8 + $0x1f8] sm:$0xff]
    %v3842 = vld [vmem:[#allocation8 + $0x200] sm:$0xff]
    %v3843 = vld [vmem:[#allocation8 + $0x208] sm:$0xff]
    %v3844 = vld [vmem:[#allocation8 + $0x210] sm:$0xff]
    %v3845 = vld [vmem:[#allocation8 + $0x218] sm:$0xff]
    %v3846 = vld [vmem:[#allocation8 + $0x220] sm:$0xff]
    %v3847 = vld [vmem:[#allocation8 + $0x228] sm:$0xff]
    %v3848 = vld [vmem:[#allocation8 + $0x230] sm:$0xff]
    %v3849 = vld [vmem:[#allocation8 + $0x238] sm:$0xff]
    %v3850 = vld [vmem:[#allocation8 + $0x240] sm:$0xff]
    %v3851 = vld [vmem:[#allocation8 + $0x248] sm:$0xff]
    %v3852 = vld [vmem:[#allocation8 + $0x250] sm:$0xff]
    %v3853 = vld [vmem:[#allocation8 + $0x258] sm:$0xff]
    %v3854 = vld [vmem:[#allocation8 + $0x260] sm:$0xff]
    %v3855 = vld [vmem:[#allocation8 + $0x268] sm:$0xff]
    %v3856 = vld [vmem:[#allocation8 + $0x270] sm:$0xff]
    %v3857 = vld [vmem:[#allocation8 + $0x278] sm:$0xff]
    %v3858 = vld [vmem:[#allocation8 + $0x280] sm:$0xff]
    %v3859 = vld [vmem:[#allocation8 + $0x288] sm:$0xff]
    %v3860 = vld [vmem:[#allocation8 + $0x290] sm:$0xff]
    %v3861 = vld [vmem:[#allocation8 + $0x298] sm:$0xff]
    %v3862 = vld [vmem:[#allocation8 + $0x2a0] sm:$0xff]
    %v3863 = vld [vmem:[#allocation8 + $0x2a8] sm:$0xff]
    %v3864 = vld [vmem:[#allocation8 + $0x2b0] sm:$0xff]
    %v3865 = vld [vmem:[#allocation8 + $0x2b8] sm:$0xff]
    %v3866 = vld [vmem:[#allocation8 + $0x2c0] sm:$0xff]
    %v3867 = vld [vmem:[#allocation8 + $0x2c8] sm:$0xff]
    %v3868 = vld [vmem:[#allocation8 + $0x2d0] sm:$0xff]
    %v3869 = vld [vmem:[#allocation8 + $0x2d8] sm:$0xff]
    %v3870 = vld [vmem:[#allocation8 + $0x2e0] sm:$0xff]
    %v3871 = vld [vmem:[#allocation8 + $0x2e8] sm:$0xff]
    %v3872 = vld [vmem:[#allocation8 + $0x2f0] sm:$0xff]
    %v3873 = vld [vmem:[#allocation8 + $0x2f8] sm:$0xff]
    %v3874 = vld [vmem:[#allocation8 + $0x300] sm:$0xff]
    %v3875 = vld [vmem:[#allocation8 + $0x308] sm:$0xff]
    %v3876 = vld [vmem:[#allocation8 + $0x310] sm:$0xff]
    %v3877 = vld [vmem:[#allocation8 + $0x318] sm:$0xff]
    %v3878 = vld [vmem:[#allocation8 + $0x320] sm:$0xff]
    %v3879 = vld [vmem:[#allocation8 + $0x328] sm:$0xff]
    %v3880 = vld [vmem:[#allocation8 + $0x330] sm:$0xff]
    %v3881 = vld [vmem:[#allocation8 + $0x338] sm:$0xff]
    %v3882 = vld [vmem:[#allocation8 + $0x340] sm:$0xff]
    %v3883 = vld [vmem:[#allocation8 + $0x348] sm:$0xff]
    %v3884 = vld [vmem:[#allocation8 + $0x350] sm:$0xff]
    %v3885 = vld [vmem:[#allocation8 + $0x358] sm:$0xff]
    %v3886 = vld [vmem:[#allocation8 + $0x360] sm:$0xff]
    %v3887 = vld [vmem:[#allocation8 + $0x368] sm:$0xff]
    %v3888 = vld [vmem:[#allocation8 + $0x370] sm:$0xff]
    %v3889 = vld [vmem:[#allocation8 + $0x378] sm:$0xff]
    %v3890 = vld [vmem:[#allocation8 + $0x380] sm:$0xff]
    %v3891 = vld [vmem:[#allocation8 + $0x388] sm:$0xff]
    %v3892 = vld [vmem:[#allocation8 + $0x390] sm:$0xff]
    %v3893 = vld [vmem:[#allocation8 + $0x398] sm:$0xff]
    %v3894 = vld [vmem:[#allocation8 + $0x3a0] sm:$0xff]
    %v3895 = vld [vmem:[#allocation8 + $0x3a8] sm:$0xff]
    %v3896 = vld [vmem:[#allocation8 + $0x3b0] sm:$0xff]
    %v3897 = vld [vmem:[#allocation8 + $0x3b8] sm:$0xff]
    %v3898 = vld [vmem:[#allocation8 + $0x3c0] sm:$0xff]
    %v3899 = vld [vmem:[#allocation8 + $0x3c8] sm:$0xff]
    %v3900 = vld [vmem:[#allocation8 + $0x3d0] sm:$0xff]
    %v3901 = vld [vmem:[#allocation8 + $0x3d8] sm:$0xff]
    %v3902 = vld [vmem:[#allocation8 + $0x3e0] sm:$0xff]
    %v3903 = vld [vmem:[#allocation8 + $0x3e8] sm:$0xff]
    %v3904 = vld [vmem:[#allocation8 + $0x3f0] sm:$0xff]
    %v3905 = vld [vmem:[#allocation8 + $0x3f8] sm:$0xff]
    %v3906 = vld [vmem:[#allocation8 + $0x400] sm:$0xff]
    %v3907 = vld [vmem:[#allocation8 + $0x408] sm:$0xff]
    %v3908 = vld [vmem:[#allocation8 + $0x410] sm:$0xff]
    %v3909 = vld [vmem:[#allocation8 + $0x418] sm:$0xff]
    %v3910 = vld [vmem:[#allocation8 + $0x420] sm:$0xff]
    %v3911 = vld [vmem:[#allocation8 + $0x428] sm:$0xff]
    %v3912 = vld [vmem:[#allocation8 + $0x430] sm:$0xff]
    %v3913 = vld [vmem:[#allocation8 + $0x438] sm:$0xff]
    %v3914 = vld [vmem:[#allocation8 + $0x440] sm:$0xff]
    %v3915 = vld [vmem:[#allocation8 + $0x448] sm:$0xff]
    %v3916 = vld [vmem:[#allocation8 + $0x450] sm:$0xff]
    %v3917 = vld [vmem:[#allocation8 + $0x458] sm:$0xff]
    %v3918 = vld [vmem:[#allocation8 + $0x460] sm:$0xff]
    %v3919 = vld [vmem:[#allocation8 + $0x468] sm:$0xff]
    %v3920 = vld [vmem:[#allocation8 + $0x470] sm:$0xff]
    %v3921 = vld [vmem:[#allocation8 + $0x478] sm:$0xff]
    %v3922 = vld [vmem:[#allocation8 + $0x480] sm:$0xff]
    %v3923 = vld [vmem:[#allocation8 + $0x488] sm:$0xff]
    %v3924 = vld [vmem:[#allocation8 + $0x490] sm:$0xff]
    %v3925 = vld [vmem:[#allocation8 + $0x498] sm:$0xff]
    %v3926 = vld [vmem:[#allocation8 + $0x4a0] sm:$0xff]
    %v3927 = vld [vmem:[#allocation8 + $0x4a8] sm:$0xff]
    %v3928 = vld [vmem:[#allocation8 + $0x4b0] sm:$0xff]
    %v3929 = vld [vmem:[#allocation8 + $0x4b8] sm:$0xff]
    %v3930 = vld [vmem:[#allocation8 + $0x4c0] sm:$0xff]
    %v3931 = vld [vmem:[#allocation8 + $0x4c8] sm:$0xff]
    %v3932 = vld [vmem:[#allocation8 + $0x4d0] sm:$0xff]
    %v3933 = vld [vmem:[#allocation8 + $0x4d8] sm:$0xff]
    %v3934 = vld [vmem:[#allocation8 + $0x4e0] sm:$0xff]
    %v3935 = vld [vmem:[#allocation8 + $0x4e8] sm:$0xff]
    %v3936 = vld [vmem:[#allocation8 + $0x4f0] sm:$0xff]
    %v3937 = vld [vmem:[#allocation8 + $0x4f8] sm:$0xff]
    %v3938 = vld [vmem:[#allocation8 + $0x500] sm:$0xff]
    %v3939 = vld [vmem:[#allocation8 + $0x508] sm:$0xff]
    %v3940 = vld [vmem:[#allocation8 + $0x510] sm:$0xff]
    %v3941 = vld [vmem:[#allocation8 + $0x518] sm:$0xff]
    %v3942 = vld [vmem:[#allocation8 + $0x520] sm:$0xff]
    %v3943 = vld [vmem:[#allocation8 + $0x528] sm:$0xff]
    %v3944 = vld [vmem:[#allocation8 + $0x530] sm:$0xff]
    %v3945 = vld [vmem:[#allocation8 + $0x538] sm:$0xff]
    %v3946 = vld [vmem:[#allocation8 + $0x540] sm:$0xff]
    %v3947 = vld [vmem:[#allocation8 + $0x548] sm:$0xff]
    %v3948 = vld [vmem:[#allocation8 + $0x550] sm:$0xff]
    %v3949 = vld [vmem:[#allocation8 + $0x558] sm:$0xff]
    %v3950 = vld [vmem:[#allocation8 + $0x560] sm:$0xff]
    %v3951 = vld [vmem:[#allocation8 + $0x568] sm:$0xff]
    %v3952 = vld [vmem:[#allocation8 + $0x570] sm:$0xff]
    %v3953 = vld [vmem:[#allocation8 + $0x578] sm:$0xff]
    %v3954 = vld [vmem:[#allocation8 + $0x580] sm:$0xff]
    %v3955 = vld [vmem:[#allocation8 + $0x588] sm:$0xff]
    %v3956 = vld [vmem:[#allocation8 + $0x590] sm:$0xff]
    %v3957 = vld [vmem:[#allocation8 + $0x598] sm:$0xff]
    %v3958 = vld [vmem:[#allocation8 + $0x5a0] sm:$0xff]
    %v3959 = vld [vmem:[#allocation8 + $0x5a8] sm:$0xff]
    %v3960 = vld [vmem:[#allocation8 + $0x5b0] sm:$0xff]
    %v3961 = vld [vmem:[#allocation8 + $0x5b8] sm:$0xff]
    %v3962 = vld [vmem:[#allocation8 + $0x5c0] sm:$0xff]
    %v3963 = vld [vmem:[#allocation8 + $0x5c8] sm:$0xff]
    %v3964 = vld [vmem:[#allocation8 + $0x5d0] sm:$0xff]
    %v3965 = vld [vmem:[#allocation8 + $0x5d8] sm:$0xff]
    %v3966 = vld [vmem:[#allocation8 + $0x5e0] sm:$0xff]
    %v3967 = vld [vmem:[#allocation8 + $0x5e8] sm:$0xff]
    %v3968 = vld [vmem:[#allocation8 + $0x5f0] sm:$0xff]
    %v3969 = vld [vmem:[#allocation8 + $0x5f8] sm:$0xff]
    %v3970 = vld [vmem:[#allocation8 + $0x600] sm:$0xff]
    %v3971 = vld [vmem:[#allocation8 + $0x608] sm:$0xff]
    %v3972 = vld [vmem:[#allocation8 + $0x610] sm:$0xff]
    %v3973 = vld [vmem:[#allocation8 + $0x618] sm:$0xff]
    %v3974 = vld [vmem:[#allocation8 + $0x620] sm:$0xff]
    %v3975 = vld [vmem:[#allocation8 + $0x628] sm:$0xff]
    %v3976 = vld [vmem:[#allocation8 + $0x630] sm:$0xff]
    %v3977 = vld [vmem:[#allocation8 + $0x638] sm:$0xff]
    %v3978 = vld [vmem:[#allocation8 + $0x640] sm:$0xff]
    %v3979 = vld [vmem:[#allocation8 + $0x648] sm:$0xff]
    %v3980 = vld [vmem:[#allocation8 + $0x650] sm:$0xff]
    %v3981 = vld [vmem:[#allocation8 + $0x658] sm:$0xff]
    %v3982 = vld [vmem:[#allocation8 + $0x660] sm:$0xff]
    %v3983 = vld [vmem:[#allocation8 + $0x668] sm:$0xff]
    %v3984 = vld [vmem:[#allocation8 + $0x670] sm:$0xff]
    %v3985 = vld [vmem:[#allocation8 + $0x678] sm:$0xff]
    %v3986 = vld [vmem:[#allocation8 + $0x680] sm:$0xff]
    %v3987 = vld [vmem:[#allocation8 + $0x688] sm:$0xff]
    %v3988 = vld [vmem:[#allocation8 + $0x690] sm:$0xff]
    %v3989 = vld [vmem:[#allocation8 + $0x698] sm:$0xff]
    %v3990 = vld [vmem:[#allocation8 + $0x6a0] sm:$0xff]
    %v3991 = vld [vmem:[#allocation8 + $0x6a8] sm:$0xff]
    %v3992 = vld [vmem:[#allocation8 + $0x6b0] sm:$0xff]
    %v3993 = vld [vmem:[#allocation8 + $0x6b8] sm:$0xff]
    %v3994 = vld [vmem:[#allocation8 + $0x6c0] sm:$0xff]
    %v3995 = vld [vmem:[#allocation8 + $0x6c8] sm:$0xff]
    %v3996 = vld [vmem:[#allocation8 + $0x6d0] sm:$0xff]
    %v3997 = vld [vmem:[#allocation8 + $0x6d8] sm:$0xff]
    %v3998 = vld [vmem:[#allocation8 + $0x6e0] sm:$0xff]
    %v3999 = vld [vmem:[#allocation8 + $0x6e8] sm:$0xff]
    %v4000 = vld [vmem:[#allocation8 + $0x6f0] sm:$0xff]
    %v4001 = vld [vmem:[#allocation8 + $0x6f8] sm:$0xff]
    %v4002 = vld [vmem:[#allocation8 + $0x700] sm:$0xff]
    %v4003 = vld [vmem:[#allocation8 + $0x708] sm:$0xff]
    %v4004 = vld [vmem:[#allocation8 + $0x710] sm:$0xff]
    %v4005 = vld [vmem:[#allocation8 + $0x718] sm:$0xff]
    %v4006 = vld [vmem:[#allocation8 + $0x720] sm:$0xff]
    %v4007 = vld [vmem:[#allocation8 + $0x728] sm:$0xff]
    %v4008 = vld [vmem:[#allocation8 + $0x730] sm:$0xff]
    %v4009 = vld [vmem:[#allocation8 + $0x738] sm:$0xff]
    %v4010 = vld [vmem:[#allocation8 + $0x740] sm:$0xff]
    %v4011 = vld [vmem:[#allocation8 + $0x748] sm:$0xff]
    %v4012 = vld [vmem:[#allocation8 + $0x750] sm:$0xff]
    %v4013 = vld [vmem:[#allocation8 + $0x758] sm:$0xff]
    %v4014 = vld [vmem:[#allocation8 + $0x760] sm:$0xff]
    %v4015 = vld [vmem:[#allocation8 + $0x768] sm:$0xff]
    %v4016 = vld [vmem:[#allocation8 + $0x770] sm:$0xff]
    %v4017 = vld [vmem:[#allocation8 + $0x778] sm:$0xff]
    %v4018 = vld [vmem:[#allocation8 + $0x780] sm:$0xff]
    %v4019 = vld [vmem:[#allocation8 + $0x788] sm:$0xff]
    %v4020 = vld [vmem:[#allocation8 + $0x790] sm:$0xff]
    %v4021 = vld [vmem:[#allocation8 + $0x798] sm:$0xff]
    %v4022 = vld [vmem:[#allocation8 + $0x7a0] sm:$0xff]
    %v4023 = vld [vmem:[#allocation8 + $0x7a8] sm:$0xff]
    %v4024 = vld [vmem:[#allocation8 + $0x7b0] sm:$0xff]
    %v4025 = vld [vmem:[#allocation8 + $0x7b8] sm:$0xff]
    %v4026 = vld [vmem:[#allocation8 + $0x7c0] sm:$0xff]
    %v4027 = vld [vmem:[#allocation8 + $0x7c8] sm:$0xff]
    %v4028 = vld [vmem:[#allocation8 + $0x7d0] sm:$0xff]
    %v4029 = vld [vmem:[#allocation8 + $0x7d8] sm:$0xff]
    %v4030 = vld [vmem:[#allocation8 + $0x7e0] sm:$0xff]
    %v4031 = vld [vmem:[#allocation8 + $0x7e8] sm:$0xff]
    %v4032 = vld [vmem:[#allocation8 + $0x7f0] sm:$0xff]
    %v4033 = vld [vmem:[#allocation8 + $0x7f8] sm:$0xff]
    %v4034 = vld [vmem:[%s4] sm:$0xf]
    %v4036 = vlaneseq
    %v4037 = vshrl.u32 %v4036, 7
    %v4038 = vsub.s32 0, %v4037
    %v4039 = vrot.slane %v4034, %v4038
    %v4040 = vlaneseq
    %v4041 = vshrl.u32 %v4040, 7
    %v4042 = vsub.s32 1, %v4041
    %v4043 = vrot.slane %v4034, %v4042
    %v4044 = vlaneseq
    %v4045 = vshrl.u32 %v4044, 7
    %v4046 = vsub.s32 2, %v4045
    %v4047 = vrot.slane %v4034, %v4046
    %v4048 = vlaneseq
    %v4049 = vshrl.u32 %v4048, 7
    %v4050 = vsub.s32 3, %v4049
    %v4051 = vrot.slane %v4034, %v4050
    %v4312 = vunpack.c.l.b16 %v3778
    %v4313 = vunpack.c.h.b16 %v3778
    %v4314 = vunpack.c.l.b16 %v3779
    %v4315 = vunpack.c.h.b16 %v3779
    %v4316 = vunpack.c.l.b16 %v3780
    %v4317 = vunpack.c.h.b16 %v3780
    %v4318 = vunpack.c.l.b16 %v3781
    %v4319 = vunpack.c.h.b16 %v3781
    %v4320 = vunpack.c.l.b16 %v3782
    %v4321 = vunpack.c.h.b16 %v3782
    %v4322 = vunpack.c.l.b16 %v3783
    %v4323 = vunpack.c.h.b16 %v3783
    %v4324 = vunpack.c.l.b16 %v3784
    %v4325 = vunpack.c.h.b16 %v3784
    %v4326 = vunpack.c.l.b16 %v3785
    %v4327 = vunpack.c.h.b16 %v3785
    %v4328 = vunpack.c.l.b16 %v3786
    %v4329 = vunpack.c.h.b16 %v3786
    %v4330 = vunpack.c.l.b16 %v3787
    %v4331 = vunpack.c.h.b16 %v3787
    %v4332 = vunpack.c.l.b16 %v3788
    %v4333 = vunpack.c.h.b16 %v3788
    %v4334 = vunpack.c.l.b16 %v3789
    %v4335 = vunpack.c.h.b16 %v3789
    %v4336 = vunpack.c.l.b16 %v3790
    %v4337 = vunpack.c.h.b16 %v3790
    %v4338 = vunpack.c.l.b16 %v3791
    %v4339 = vunpack.c.h.b16 %v3791
    %v4340 = vunpack.c.l.b16 %v3792
    %v4341 = vunpack.c.h.b16 %v3792
    %v4342 = vunpack.c.l.b16 %v3793
    %v4343 = vunpack.c.h.b16 %v3793
    %v4344 = vunpack.c.l.b16 %v3794
    %v4345 = vunpack.c.h.b16 %v3794
    %v4346 = vunpack.c.l.b16 %v3795
    %v4347 = vunpack.c.h.b16 %v3795
    %v4348 = vunpack.c.l.b16 %v3796
    %v4349 = vunpack.c.h.b16 %v3796
    %v4350 = vunpack.c.l.b16 %v3797
    %v4351 = vunpack.c.h.b16 %v3797
    %v4352 = vunpack.c.l.b16 %v3798
    %v4353 = vunpack.c.h.b16 %v3798
    %v4354 = vunpack.c.l.b16 %v3799
    %v4355 = vunpack.c.h.b16 %v3799
    %v4356 = vunpack.c.l.b16 %v3800
    %v4357 = vunpack.c.h.b16 %v3800
    %v4358 = vunpack.c.l.b16 %v3801
    %v4359 = vunpack.c.h.b16 %v3801
    %v4360 = vunpack.c.l.b16 %v3802
    %v4361 = vunpack.c.h.b16 %v3802
    %v4362 = vunpack.c.l.b16 %v3803
    %v4363 = vunpack.c.h.b16 %v3803
    %v4364 = vunpack.c.l.b16 %v3804
    %v4365 = vunpack.c.h.b16 %v3804
    %v4366 = vunpack.c.l.b16 %v3805
    %v4367 = vunpack.c.h.b16 %v3805
    %v4368 = vunpack.c.l.b16 %v3806
    %v4369 = vunpack.c.h.b16 %v3806
    %v4370 = vunpack.c.l.b16 %v3807
    %v4371 = vunpack.c.h.b16 %v3807
    %v4372 = vunpack.c.l.b16 %v3808
    %v4373 = vunpack.c.h.b16 %v3808
    %v4374 = vunpack.c.l.b16 %v3809
    %v4375 = vunpack.c.h.b16 %v3809
    %v4376 = vunpack.c.l.b16 %v3810
    %v4377 = vunpack.c.h.b16 %v3810
    %v4378 = vunpack.c.l.b16 %v3811
    %v4379 = vunpack.c.h.b16 %v3811
    %v4380 = vunpack.c.l.b16 %v3812
    %v4381 = vunpack.c.h.b16 %v3812
    %v4382 = vunpack.c.l.b16 %v3813
    %v4383 = vunpack.c.h.b16 %v3813
    %v4384 = vunpack.c.l.b16 %v3814
    %v4385 = vunpack.c.h.b16 %v3814
    %v4386 = vunpack.c.l.b16 %v3815
    %v4387 = vunpack.c.h.b16 %v3815
    %v4388 = vunpack.c.l.b16 %v3816
    %v4389 = vunpack.c.h.b16 %v3816
    %v4390 = vunpack.c.l.b16 %v3817
    %v4391 = vunpack.c.h.b16 %v3817
    %v4392 = vunpack.c.l.b16 %v3818
    %v4393 = vunpack.c.h.b16 %v3818
    %v4394 = vunpack.c.l.b16 %v3819
    %v4395 = vunpack.c.h.b16 %v3819
    %v4396 = vunpack.c.l.b16 %v3820
    %v4397 = vunpack.c.h.b16 %v3820
    %v4398 = vunpack.c.l.b16 %v3821
    %v4399 = vunpack.c.h.b16 %v3821
    %v4400 = vunpack.c.l.b16 %v3822
    %v4401 = vunpack.c.h.b16 %v3822
    %v4402 = vunpack.c.l.b16 %v3823
    %v4403 = vunpack.c.h.b16 %v3823
    %v4404 = vunpack.c.l.b16 %v3824
    %v4405 = vunpack.c.h.b16 %v3824
    %v4406 = vunpack.c.l.b16 %v3825
    %v4407 = vunpack.c.h.b16 %v3825
    %v4408 = vunpack.c.l.b16 %v3826
    %v4409 = vunpack.c.h.b16 %v3826
    %v4410 = vunpack.c.l.b16 %v3827
    %v4411 = vunpack.c.h.b16 %v3827
    %v4412 = vunpack.c.l.b16 %v3828
    %v4413 = vunpack.c.h.b16 %v3828
    %v4414 = vunpack.c.l.b16 %v3829
    %v4415 = vunpack.c.h.b16 %v3829
    %v4416 = vunpack.c.l.b16 %v3830
    %v4417 = vunpack.c.h.b16 %v3830
    %v4418 = vunpack.c.l.b16 %v3831
    %v4419 = vunpack.c.h.b16 %v3831
    %v4420 = vunpack.c.l.b16 %v3832
    %v4421 = vunpack.c.h.b16 %v3832
    %v4422 = vunpack.c.l.b16 %v3833
    %v4423 = vunpack.c.h.b16 %v3833
    %v4424 = vunpack.c.l.b16 %v3834
    %v4425 = vunpack.c.h.b16 %v3834
    %v4426 = vunpack.c.l.b16 %v3835
    %v4427 = vunpack.c.h.b16 %v3835
    %v4428 = vunpack.c.l.b16 %v3836
    %v4429 = vunpack.c.h.b16 %v3836
    %v4430 = vunpack.c.l.b16 %v3837
    %v4431 = vunpack.c.h.b16 %v3837
    %v4432 = vunpack.c.l.b16 %v3838
    %v4433 = vunpack.c.h.b16 %v3838
    %v4434 = vunpack.c.l.b16 %v3839
    %v4435 = vunpack.c.h.b16 %v3839
    %v4436 = vunpack.c.l.b16 %v3840
    %v4437 = vunpack.c.h.b16 %v3840
    %v4438 = vunpack.c.l.b16 %v3841
    %v4439 = vunpack.c.h.b16 %v3841
    %v4440 = vunpack.c.l.b16 %v3842
    %v4441 = vunpack.c.h.b16 %v3842
    %v4442 = vunpack.c.l.b16 %v3843
    %v4443 = vunpack.c.h.b16 %v3843
    %v4444 = vunpack.c.l.b16 %v3844
    %v4445 = vunpack.c.h.b16 %v3844
    %v4446 = vunpack.c.l.b16 %v3845
    %v4447 = vunpack.c.h.b16 %v3845
    %v4448 = vunpack.c.l.b16 %v3846
    %v4449 = vunpack.c.h.b16 %v3846
    %v4450 = vunpack.c.l.b16 %v3847
    %v4451 = vunpack.c.h.b16 %v3847
    %v4452 = vunpack.c.l.b16 %v3848
    %v4453 = vunpack.c.h.b16 %v3848
    %v4454 = vunpack.c.l.b16 %v3849
    %v4455 = vunpack.c.h.b16 %v3849
    %v4456 = vunpack.c.l.b16 %v3850
    %v4457 = vunpack.c.h.b16 %v3850
    %v4458 = vunpack.c.l.b16 %v3851
    %v4459 = vunpack.c.h.b16 %v3851
    %v4460 = vunpack.c.l.b16 %v3852
    %v4461 = vunpack.c.h.b16 %v3852
    %v4462 = vunpack.c.l.b16 %v3853
    %v4463 = vunpack.c.h.b16 %v3853
    %v4464 = vunpack.c.l.b16 %v3854
    %v4465 = vunpack.c.h.b16 %v3854
    %v4466 = vunpack.c.l.b16 %v3855
    %v4467 = vunpack.c.h.b16 %v3855
    %v4468 = vunpack.c.l.b16 %v3856
    %v4469 = vunpack.c.h.b16 %v3856
    %v4470 = vunpack.c.l.b16 %v3857
    %v4471 = vunpack.c.h.b16 %v3857
    %v4472 = vunpack.c.l.b16 %v3858
    %v4473 = vunpack.c.h.b16 %v3858
    %v4474 = vunpack.c.l.b16 %v3859
    %v4475 = vunpack.c.h.b16 %v3859
    %v4476 = vunpack.c.l.b16 %v3860
    %v4477 = vunpack.c.h.b16 %v3860
    %v4478 = vunpack.c.l.b16 %v3861
    %v4479 = vunpack.c.h.b16 %v3861
    %v4480 = vunpack.c.l.b16 %v3862
    %v4481 = vunpack.c.h.b16 %v3862
    %v4482 = vunpack.c.l.b16 %v3863
    %v4483 = vunpack.c.h.b16 %v3863
    %v4484 = vunpack.c.l.b16 %v3864
    %v4485 = vunpack.c.h.b16 %v3864
    %v4486 = vunpack.c.l.b16 %v3865
    %v4487 = vunpack.c.h.b16 %v3865
    %v4488 = vunpack.c.l.b16 %v3866
    %v4489 = vunpack.c.h.b16 %v3866
    %v4490 = vunpack.c.l.b16 %v3867
    %v4491 = vunpack.c.h.b16 %v3867
    %v4492 = vunpack.c.l.b16 %v3868
    %v4493 = vunpack.c.h.b16 %v3868
    %v4494 = vunpack.c.l.b16 %v3869
    %v4495 = vunpack.c.h.b16 %v3869
    %v4496 = vunpack.c.l.b16 %v3870
    %v4497 = vunpack.c.h.b16 %v3870
    %v4498 = vunpack.c.l.b16 %v3871
    %v4499 = vunpack.c.h.b16 %v3871
    %v4500 = vunpack.c.l.b16 %v3872
    %v4501 = vunpack.c.h.b16 %v3872
    %v4502 = vunpack.c.l.b16 %v3873
    %v4503 = vunpack.c.h.b16 %v3873
    %v4504 = vunpack.c.l.b16 %v3874
    %v4505 = vunpack.c.h.b16 %v3874
    %v4506 = vunpack.c.l.b16 %v3875
    %v4507 = vunpack.c.h.b16 %v3875
    %v4508 = vunpack.c.l.b16 %v3876
    %v4509 = vunpack.c.h.b16 %v3876
    %v4510 = vunpack.c.l.b16 %v3877
    %v4511 = vunpack.c.h.b16 %v3877
    %v4512 = vunpack.c.l.b16 %v3878
    %v4513 = vunpack.c.h.b16 %v3878
    %v4514 = vunpack.c.l.b16 %v3879
    %v4515 = vunpack.c.h.b16 %v3879
    %v4516 = vunpack.c.l.b16 %v3880
    %v4517 = vunpack.c.h.b16 %v3880
    %v4518 = vunpack.c.l.b16 %v3881
    %v4519 = vunpack.c.h.b16 %v3881
    %v4520 = vunpack.c.l.b16 %v3882
    %v4521 = vunpack.c.h.b16 %v3882
    %v4522 = vunpack.c.l.b16 %v3883
    %v4523 = vunpack.c.h.b16 %v3883
    %v4524 = vunpack.c.l.b16 %v3884
    %v4525 = vunpack.c.h.b16 %v3884
    %v4526 = vunpack.c.l.b16 %v3885
    %v4527 = vunpack.c.h.b16 %v3885
    %v4528 = vunpack.c.l.b16 %v3886
    %v4529 = vunpack.c.h.b16 %v3886
    %v4530 = vunpack.c.l.b16 %v3887
    %v4531 = vunpack.c.h.b16 %v3887
    %v4532 = vunpack.c.l.b16 %v3888
    %v4533 = vunpack.c.h.b16 %v3888
    %v4534 = vunpack.c.l.b16 %v3889
    %v4535 = vunpack.c.h.b16 %v3889
    %v4536 = vunpack.c.l.b16 %v3890
    %v4537 = vunpack.c.h.b16 %v3890
    %v4538 = vunpack.c.l.b16 %v3891
    %v4539 = vunpack.c.h.b16 %v3891
    %v4540 = vunpack.c.l.b16 %v3892
    %v4541 = vunpack.c.h.b16 %v3892
    %v4542 = vunpack.c.l.b16 %v3893
    %v4543 = vunpack.c.h.b16 %v3893
    %v4544 = vunpack.c.l.b16 %v3894
    %v4545 = vunpack.c.h.b16 %v3894
    %v4546 = vunpack.c.l.b16 %v3895
    %v4547 = vunpack.c.h.b16 %v3895
    %v4548 = vunpack.c.l.b16 %v3896
    %v4549 = vunpack.c.h.b16 %v3896
    %v4550 = vunpack.c.l.b16 %v3897
    %v4551 = vunpack.c.h.b16 %v3897
    %v4552 = vunpack.c.l.b16 %v3898
    %v4553 = vunpack.c.h.b16 %v3898
    %v4554 = vunpack.c.l.b16 %v3899
    %v4555 = vunpack.c.h.b16 %v3899
    %v4556 = vunpack.c.l.b16 %v3900
    %v4557 = vunpack.c.h.b16 %v3900
    %v4558 = vunpack.c.l.b16 %v3901
    %v4559 = vunpack.c.h.b16 %v3901
    %v4560 = vunpack.c.l.b16 %v3902
    %v4561 = vunpack.c.h.b16 %v3902
    %v4562 = vunpack.c.l.b16 %v3903
    %v4563 = vunpack.c.h.b16 %v3903
    %v4564 = vunpack.c.l.b16 %v3904
    %v4565 = vunpack.c.h.b16 %v3904
    %v4566 = vunpack.c.l.b16 %v3905
    %v4567 = vunpack.c.h.b16 %v3905
    %v4568 = vunpack.c.l.b16 %v3906
    %v4569 = vunpack.c.h.b16 %v3906
    %v4570 = vunpack.c.l.b16 %v3907
    %v4571 = vunpack.c.h.b16 %v3907
    %v4572 = vunpack.c.l.b16 %v3908
    %v4573 = vunpack.c.h.b16 %v3908
    %v4574 = vunpack.c.l.b16 %v3909
    %v4575 = vunpack.c.h.b16 %v3909
    %v4576 = vunpack.c.l.b16 %v3910
    %v4577 = vunpack.c.h.b16 %v3910
    %v4578 = vunpack.c.l.b16 %v3911
    %v4579 = vunpack.c.h.b16 %v3911
    %v4580 = vunpack.c.l.b16 %v3912
    %v4581 = vunpack.c.h.b16 %v3912
    %v4582 = vunpack.c.l.b16 %v3913
    %v4583 = vunpack.c.h.b16 %v3913
    %v4584 = vunpack.c.l.b16 %v3914
    %v4585 = vunpack.c.h.b16 %v3914
    %v4586 = vunpack.c.l.b16 %v3915
    %v4587 = vunpack.c.h.b16 %v3915
    %v4588 = vunpack.c.l.b16 %v3916
    %v4589 = vunpack.c.h.b16 %v3916
    %v4590 = vunpack.c.l.b16 %v3917
    %v4591 = vunpack.c.h.b16 %v3917
    %v4592 = vunpack.c.l.b16 %v3918
    %v4593 = vunpack.c.h.b16 %v3918
    %v4594 = vunpack.c.l.b16 %v3919
    %v4595 = vunpack.c.h.b16 %v3919
    %v4596 = vunpack.c.l.b16 %v3920
    %v4597 = vunpack.c.h.b16 %v3920
    %v4598 = vunpack.c.l.b16 %v3921
    %v4599 = vunpack.c.h.b16 %v3921
    %v4600 = vunpack.c.l.b16 %v3922
    %v4601 = vunpack.c.h.b16 %v3922
    %v4602 = vunpack.c.l.b16 %v3923
    %v4603 = vunpack.c.h.b16 %v3923
    %v4604 = vunpack.c.l.b16 %v3924
    %v4605 = vunpack.c.h.b16 %v3924
    %v4606 = vunpack.c.l.b16 %v3925
    %v4607 = vunpack.c.h.b16 %v3925
    %v4608 = vunpack.c.l.b16 %v3926
    %v4609 = vunpack.c.h.b16 %v3926
    %v4610 = vunpack.c.l.b16 %v3927
    %v4611 = vunpack.c.h.b16 %v3927
    %v4612 = vunpack.c.l.b16 %v3928
    %v4613 = vunpack.c.h.b16 %v3928
    %v4614 = vunpack.c.l.b16 %v3929
    %v4615 = vunpack.c.h.b16 %v3929
    %v4616 = vunpack.c.l.b16 %v3930
    %v4617 = vunpack.c.h.b16 %v3930
    %v4618 = vunpack.c.l.b16 %v3931
    %v4619 = vunpack.c.h.b16 %v3931
    %v4620 = vunpack.c.l.b16 %v3932
    %v4621 = vunpack.c.h.b16 %v3932
    %v4622 = vunpack.c.l.b16 %v3933
    %v4623 = vunpack.c.h.b16 %v3933
    %v4624 = vunpack.c.l.b16 %v3934
    %v4625 = vunpack.c.h.b16 %v3934
    %v4626 = vunpack.c.l.b16 %v3935
    %v4627 = vunpack.c.h.b16 %v3935
    %v4628 = vunpack.c.l.b16 %v3936
    %v4629 = vunpack.c.h.b16 %v3936
    %v4630 = vunpack.c.l.b16 %v3937
    %v4631 = vunpack.c.h.b16 %v3937
    %v4632 = vunpack.c.l.b16 %v3938
    %v4633 = vunpack.c.h.b16 %v3938
    %v4634 = vunpack.c.l.b16 %v3939
    %v4635 = vunpack.c.h.b16 %v3939
    %v4636 = vunpack.c.l.b16 %v3940
    %v4637 = vunpack.c.h.b16 %v3940
    %v4638 = vunpack.c.l.b16 %v3941
    %v4639 = vunpack.c.h.b16 %v3941
    %v4640 = vunpack.c.l.b16 %v3942
    %v4641 = vunpack.c.h.b16 %v3942
    %v4642 = vunpack.c.l.b16 %v3943
    %v4643 = vunpack.c.h.b16 %v3943
    %v4644 = vunpack.c.l.b16 %v3944
    %v4645 = vunpack.c.h.b16 %v3944
    %v4646 = vunpack.c.l.b16 %v3945
    %v4647 = vunpack.c.h.b16 %v3945
    %v4648 = vunpack.c.l.b16 %v3946
    %v4649 = vunpack.c.h.b16 %v3946
    %v4650 = vunpack.c.l.b16 %v3947
    %v4651 = vunpack.c.h.b16 %v3947
    %v4652 = vunpack.c.l.b16 %v3948
    %v4653 = vunpack.c.h.b16 %v3948
    %v4654 = vunpack.c.l.b16 %v3949
    %v4655 = vunpack.c.h.b16 %v3949
    %v4656 = vunpack.c.l.b16 %v3950
    %v4657 = vunpack.c.h.b16 %v3950
    %v4658 = vunpack.c.l.b16 %v3951
    %v4659 = vunpack.c.h.b16 %v3951
    %v4660 = vunpack.c.l.b16 %v3952
    %v4661 = vunpack.c.h.b16 %v3952
    %v4662 = vunpack.c.l.b16 %v3953
    %v4663 = vunpack.c.h.b16 %v3953
    %v4664 = vunpack.c.l.b16 %v3954
    %v4665 = vunpack.c.h.b16 %v3954
    %v4666 = vunpack.c.l.b16 %v3955
    %v4667 = vunpack.c.h.b16 %v3955
    %v4668 = vunpack.c.l.b16 %v3956
    %v4669 = vunpack.c.h.b16 %v3956
    %v4670 = vunpack.c.l.b16 %v3957
    %v4671 = vunpack.c.h.b16 %v3957
    %v4672 = vunpack.c.l.b16 %v3958
    %v4673 = vunpack.c.h.b16 %v3958
    %v4674 = vunpack.c.l.b16 %v3959
    %v4675 = vunpack.c.h.b16 %v3959
    %v4676 = vunpack.c.l.b16 %v3960
    %v4677 = vunpack.c.h.b16 %v3960
    %v4678 = vunpack.c.l.b16 %v3961
    %v4679 = vunpack.c.h.b16 %v3961
    %v4680 = vunpack.c.l.b16 %v3962
    %v4681 = vunpack.c.h.b16 %v3962
    %v4682 = vunpack.c.l.b16 %v3963
    %v4683 = vunpack.c.h.b16 %v3963
    %v4684 = vunpack.c.l.b16 %v3964
    %v4685 = vunpack.c.h.b16 %v3964
    %v4686 = vunpack.c.l.b16 %v3965
    %v4687 = vunpack.c.h.b16 %v3965
    %v4688 = vunpack.c.l.b16 %v3966
    %v4689 = vunpack.c.h.b16 %v3966
    %v4690 = vunpack.c.l.b16 %v3967
    %v4691 = vunpack.c.h.b16 %v3967
    %v4692 = vunpack.c.l.b16 %v3968
    %v4693 = vunpack.c.h.b16 %v3968
    %v4694 = vunpack.c.l.b16 %v3969
    %v4695 = vunpack.c.h.b16 %v3969
    %v4696 = vunpack.c.l.b16 %v3970
    %v4697 = vunpack.c.h.b16 %v3970
    %v4698 = vunpack.c.l.b16 %v3971
    %v4699 = vunpack.c.h.b16 %v3971
    %v4700 = vunpack.c.l.b16 %v3972
    %v4701 = vunpack.c.h.b16 %v3972
    %v4702 = vunpack.c.l.b16 %v3973
    %v4703 = vunpack.c.h.b16 %v3973
    %v4704 = vunpack.c.l.b16 %v3974
    %v4705 = vunpack.c.h.b16 %v3974
    %v4706 = vunpack.c.l.b16 %v3975
    %v4707 = vunpack.c.h.b16 %v3975
    %v4708 = vunpack.c.l.b16 %v3976
    %v4709 = vunpack.c.h.b16 %v3976
    %v4710 = vunpack.c.l.b16 %v3977
    %v4711 = vunpack.c.h.b16 %v3977
    %v4712 = vunpack.c.l.b16 %v3978
    %v4713 = vunpack.c.h.b16 %v3978
    %v4714 = vunpack.c.l.b16 %v3979
    %v4715 = vunpack.c.h.b16 %v3979
    %v4716 = vunpack.c.l.b16 %v3980
    %v4717 = vunpack.c.h.b16 %v3980
    %v4718 = vunpack.c.l.b16 %v3981
    %v4719 = vunpack.c.h.b16 %v3981
    %v4720 = vunpack.c.l.b16 %v3982
    %v4721 = vunpack.c.h.b16 %v3982
    %v4722 = vunpack.c.l.b16 %v3983
    %v4723 = vunpack.c.h.b16 %v3983
    %v4724 = vunpack.c.l.b16 %v3984
    %v4725 = vunpack.c.h.b16 %v3984
    %v4726 = vunpack.c.l.b16 %v3985
    %v4727 = vunpack.c.h.b16 %v3985
    %v4728 = vunpack.c.l.b16 %v3986
    %v4729 = vunpack.c.h.b16 %v3986
    %v4730 = vunpack.c.l.b16 %v3987
    %v4731 = vunpack.c.h.b16 %v3987
    %v4732 = vunpack.c.l.b16 %v3988
    %v4733 = vunpack.c.h.b16 %v3988
    %v4734 = vunpack.c.l.b16 %v3989
    %v4735 = vunpack.c.h.b16 %v3989
    %v4736 = vunpack.c.l.b16 %v3990
    %v4737 = vunpack.c.h.b16 %v3990
    %v4738 = vunpack.c.l.b16 %v3991
    %v4739 = vunpack.c.h.b16 %v3991
    %v4740 = vunpack.c.l.b16 %v3992
    %v4741 = vunpack.c.h.b16 %v3992
    %v4742 = vunpack.c.l.b16 %v3993
    %v4743 = vunpack.c.h.b16 %v3993
    %v4744 = vunpack.c.l.b16 %v3994
    %v4745 = vunpack.c.h.b16 %v3994
    %v4746 = vunpack.c.l.b16 %v3995
    %v4747 = vunpack.c.h.b16 %v3995
    %v4748 = vunpack.c.l.b16 %v3996
    %v4749 = vunpack.c.h.b16 %v3996
    %v4750 = vunpack.c.l.b16 %v3997
    %v4751 = vunpack.c.h.b16 %v3997
    %v4752 = vunpack.c.l.b16 %v3998
    %v4753 = vunpack.c.h.b16 %v3998
    %v4754 = vunpack.c.l.b16 %v3999
    %v4755 = vunpack.c.h.b16 %v3999
    %v4756 = vunpack.c.l.b16 %v4000
    %v4757 = vunpack.c.h.b16 %v4000
    %v4758 = vunpack.c.l.b16 %v4001
    %v4759 = vunpack.c.h.b16 %v4001
    %v4760 = vunpack.c.l.b16 %v4002
    %v4761 = vunpack.c.h.b16 %v4002
    %v4762 = vunpack.c.l.b16 %v4003
    %v4763 = vunpack.c.h.b16 %v4003
    %v4764 = vunpack.c.l.b16 %v4004
    %v4765 = vunpack.c.h.b16 %v4004
    %v4766 = vunpack.c.l.b16 %v4005
    %v4767 = vunpack.c.h.b16 %v4005
    %v4768 = vunpack.c.l.b16 %v4006
    %v4769 = vunpack.c.h.b16 %v4006
    %v4770 = vunpack.c.l.b16 %v4007
    %v4771 = vunpack.c.h.b16 %v4007
    %v4772 = vunpack.c.l.b16 %v4008
    %v4773 = vunpack.c.h.b16 %v4008
    %v4774 = vunpack.c.l.b16 %v4009
    %v4775 = vunpack.c.h.b16 %v4009
    %v4776 = vunpack.c.l.b16 %v4010
    %v4777 = vunpack.c.h.b16 %v4010
    %v4778 = vunpack.c.l.b16 %v4011
    %v4779 = vunpack.c.h.b16 %v4011
    %v4780 = vunpack.c.l.b16 %v4012
    %v4781 = vunpack.c.h.b16 %v4012
    %v4782 = vunpack.c.l.b16 %v4013
    %v4783 = vunpack.c.h.b16 %v4013
    %v4784 = vunpack.c.l.b16 %v4014
    %v4785 = vunpack.c.h.b16 %v4014
    %v4786 = vunpack.c.l.b16 %v4015
    %v4787 = vunpack.c.h.b16 %v4015
    %v4788 = vunpack.c.l.b16 %v4016
    %v4789 = vunpack.c.h.b16 %v4016
    %v4790 = vunpack.c.l.b16 %v4017
    %v4791 = vunpack.c.h.b16 %v4017
    %v4792 = vunpack.c.l.b16 %v4018
    %v4793 = vunpack.c.h.b16 %v4018
    %v4794 = vunpack.c.l.b16 %v4019
    %v4795 = vunpack.c.h.b16 %v4019
    %v4796 = vunpack.c.l.b16 %v4020
    %v4797 = vunpack.c.h.b16 %v4020
    %v4798 = vunpack.c.l.b16 %v4021
    %v4799 = vunpack.c.h.b16 %v4021
    %v4800 = vunpack.c.l.b16 %v4022
    %v4801 = vunpack.c.h.b16 %v4022
    %v4802 = vunpack.c.l.b16 %v4023
    %v4803 = vunpack.c.h.b16 %v4023
    %v4804 = vunpack.c.l.b16 %v4024
    %v4805 = vunpack.c.h.b16 %v4024
    %v4806 = vunpack.c.l.b16 %v4025
    %v4807 = vunpack.c.h.b16 %v4025
    %v4808 = vunpack.c.l.b16 %v4026
    %v4809 = vunpack.c.h.b16 %v4026
    %v4810 = vunpack.c.l.b16 %v4027
    %v4811 = vunpack.c.h.b16 %v4027
    %v4812 = vunpack.c.l.b16 %v4028
    %v4813 = vunpack.c.h.b16 %v4028
    %v4814 = vunpack.c.l.b16 %v4029
    %v4815 = vunpack.c.h.b16 %v4029
    %v4816 = vunpack.c.l.b16 %v4030
    %v4817 = vunpack.c.h.b16 %v4030
    %v4818 = vunpack.c.l.b16 %v4031
    %v4819 = vunpack.c.h.b16 %v4031
    %v4820 = vunpack.c.l.b16 %v4032
    %v4821 = vunpack.c.h.b16 %v4032
    %v4822 = vunpack.c.l.b16 %v4033
    %v4823 = vunpack.c.h.b16 %v4033
    %v4824 = vpack.c.b16 %v4316, %v4312
    %v4825 = vpack.c.b16 %v4317, %v4313
    %v4826 = vpack.c.b16 %v4318, %v4314
    %v4827 = vpack.c.b16 %v4319, %v4315
    %v4828 = vpack.c.b16 %v4324, %v4320
    %v4829 = vpack.c.b16 %v4325, %v4321
    %v4830 = vpack.c.b16 %v4326, %v4322
    %v4831 = vpack.c.b16 %v4327, %v4323
    %v4832 = vpack.c.b16 %v4332, %v4328
    %v4833 = vpack.c.b16 %v4333, %v4329
    %v4834 = vpack.c.b16 %v4334, %v4330
    %v4835 = vpack.c.b16 %v4335, %v4331
    %v4836 = vpack.c.b16 %v4340, %v4336
    %v4837 = vpack.c.b16 %v4341, %v4337
    %v4838 = vpack.c.b16 %v4342, %v4338
    %v4839 = vpack.c.b16 %v4343, %v4339
    %v4840 = vpack.c.b16 %v4348, %v4344
    %v4841 = vpack.c.b16 %v4349, %v4345
    %v4842 = vpack.c.b16 %v4350, %v4346
    %v4843 = vpack.c.b16 %v4351, %v4347
    %v4844 = vpack.c.b16 %v4356, %v4352
    %v4845 = vpack.c.b16 %v4357, %v4353
    %v4846 = vpack.c.b16 %v4358, %v4354
    %v4847 = vpack.c.b16 %v4359, %v4355
    %v4848 = vpack.c.b16 %v4364, %v4360
    %v4849 = vpack.c.b16 %v4365, %v4361
    %v4850 = vpack.c.b16 %v4366, %v4362
    %v4851 = vpack.c.b16 %v4367, %v4363
    %v4852 = vpack.c.b16 %v4372, %v4368
    %v4853 = vpack.c.b16 %v4373, %v4369
    %v4854 = vpack.c.b16 %v4374, %v4370
    %v4855 = vpack.c.b16 %v4375, %v4371
    %v4856 = vpack.c.b16 %v4380, %v4376
    %v4857 = vpack.c.b16 %v4381, %v4377
    %v4858 = vpack.c.b16 %v4382, %v4378
    %v4859 = vpack.c.b16 %v4383, %v4379
    %v4860 = vpack.c.b16 %v4388, %v4384
    %v4861 = vpack.c.b16 %v4389, %v4385
    %v4862 = vpack.c.b16 %v4390, %v4386
    %v4863 = vpack.c.b16 %v4391, %v4387
    %v4864 = vpack.c.b16 %v4396, %v4392
    %v4865 = vpack.c.b16 %v4397, %v4393
    %v4866 = vpack.c.b16 %v4398, %v4394
    %v4867 = vpack.c.b16 %v4399, %v4395
    %v4868 = vpack.c.b16 %v4404, %v4400
    %v4869 = vpack.c.b16 %v4405, %v4401
    %v4870 = vpack.c.b16 %v4406, %v4402
    %v4871 = vpack.c.b16 %v4407, %v4403
    %v4872 = vpack.c.b16 %v4412, %v4408
    %v4873 = vpack.c.b16 %v4413, %v4409
    %v4874 = vpack.c.b16 %v4414, %v4410
    %v4875 = vpack.c.b16 %v4415, %v4411
    %v4876 = vpack.c.b16 %v4420, %v4416
    %v4877 = vpack.c.b16 %v4421, %v4417
    %v4878 = vpack.c.b16 %v4422, %v4418
    %v4879 = vpack.c.b16 %v4423, %v4419
    %v4880 = vpack.c.b16 %v4428, %v4424
    %v4881 = vpack.c.b16 %v4429, %v4425
    %v4882 = vpack.c.b16 %v4430, %v4426
    %v4883 = vpack.c.b16 %v4431, %v4427
    %v4884 = vpack.c.b16 %v4436, %v4432
    %v4885 = vpack.c.b16 %v4437, %v4433
    %v4886 = vpack.c.b16 %v4438, %v4434
    %v4887 = vpack.c.b16 %v4439, %v4435
    %v4888 = vpack.c.b16 %v4444, %v4440
    %v4889 = vpack.c.b16 %v4445, %v4441
    %v4890 = vpack.c.b16 %v4446, %v4442
    %v4891 = vpack.c.b16 %v4447, %v4443
    %v4892 = vpack.c.b16 %v4452, %v4448
    %v4893 = vpack.c.b16 %v4453, %v4449
    %v4894 = vpack.c.b16 %v4454, %v4450
    %v4895 = vpack.c.b16 %v4455, %v4451
    %v4896 = vpack.c.b16 %v4460, %v4456
    %v4897 = vpack.c.b16 %v4461, %v4457
    %v4898 = vpack.c.b16 %v4462, %v4458
    %v4899 = vpack.c.b16 %v4463, %v4459
    %v4900 = vpack.c.b16 %v4468, %v4464
    %v4901 = vpack.c.b16 %v4469, %v4465
    %v4902 = vpack.c.b16 %v4470, %v4466
    %v4903 = vpack.c.b16 %v4471, %v4467
    %v4904 = vpack.c.b16 %v4476, %v4472
    %v4905 = vpack.c.b16 %v4477, %v4473
    %v4906 = vpack.c.b16 %v4478, %v4474
    %v4907 = vpack.c.b16 %v4479, %v4475
    %v4908 = vpack.c.b16 %v4484, %v4480
    %v4909 = vpack.c.b16 %v4485, %v4481
    %v4910 = vpack.c.b16 %v4486, %v4482
    %v4911 = vpack.c.b16 %v4487, %v4483
    %v4912 = vpack.c.b16 %v4492, %v4488
    %v4913 = vpack.c.b16 %v4493, %v4489
    %v4914 = vpack.c.b16 %v4494, %v4490
    %v4915 = vpack.c.b16 %v4495, %v4491
    %v4916 = vpack.c.b16 %v4500, %v4496
    %v4917 = vpack.c.b16 %v4501, %v4497
    %v4918 = vpack.c.b16 %v4502, %v4498
    %v4919 = vpack.c.b16 %v4503, %v4499
    %v4920 = vpack.c.b16 %v4508, %v4504
    %v4921 = vpack.c.b16 %v4509, %v4505
    %v4922 = vpack.c.b16 %v4510, %v4506
    %v4923 = vpack.c.b16 %v4511, %v4507
    %v4924 = vpack.c.b16 %v4516, %v4512
    %v4925 = vpack.c.b16 %v4517, %v4513
    %v4926 = vpack.c.b16 %v4518, %v4514
    %v4927 = vpack.c.b16 %v4519, %v4515
    %v4928 = vpack.c.b16 %v4524, %v4520
    %v4929 = vpack.c.b16 %v4525, %v4521
    %v4930 = vpack.c.b16 %v4526, %v4522
    %v4931 = vpack.c.b16 %v4527, %v4523
    %v4932 = vpack.c.b16 %v4532, %v4528
    %v4933 = vpack.c.b16 %v4533, %v4529
    %v4934 = vpack.c.b16 %v4534, %v4530
    %v4935 = vpack.c.b16 %v4535, %v4531
    %v4936 = vpack.c.b16 %v4540, %v4536
    %v4937 = vpack.c.b16 %v4541, %v4537
    %v4938 = vpack.c.b16 %v4542, %v4538
    %v4939 = vpack.c.b16 %v4543, %v4539
    %v4940 = vpack.c.b16 %v4548, %v4544
    %v4941 = vpack.c.b16 %v4549, %v4545
    %v4942 = vpack.c.b16 %v4550, %v4546
    %v4943 = vpack.c.b16 %v4551, %v4547
    %v4944 = vpack.c.b16 %v4556, %v4552
    %v4945 = vpack.c.b16 %v4557, %v4553
    %v4946 = vpack.c.b16 %v4558, %v4554
    %v4947 = vpack.c.b16 %v4559, %v4555
    %v4948 = vpack.c.b16 %v4564, %v4560
    %v4949 = vpack.c.b16 %v4565, %v4561
    %v4950 = vpack.c.b16 %v4566, %v4562
    %v4951 = vpack.c.b16 %v4567, %v4563
    %v4952 = vpack.c.b16 %v4572, %v4568
    %v4953 = vpack.c.b16 %v4573, %v4569
    %v4954 = vpack.c.b16 %v4574, %v4570
    %v4955 = vpack.c.b16 %v4575, %v4571
    %v4956 = vpack.c.b16 %v4580, %v4576
    %v4957 = vpack.c.b16 %v4581, %v4577
    %v4958 = vpack.c.b16 %v4582, %v4578
    %v4959 = vpack.c.b16 %v4583, %v4579
    %v4960 = vpack.c.b16 %v4588, %v4584
    %v4961 = vpack.c.b16 %v4589, %v4585
    %v4962 = vpack.c.b16 %v4590, %v4586
    %v4963 = vpack.c.b16 %v4591, %v4587
    %v4964 = vpack.c.b16 %v4596, %v4592
    %v4965 = vpack.c.b16 %v4597, %v4593
    %v4966 = vpack.c.b16 %v4598, %v4594
    %v4967 = vpack.c.b16 %v4599, %v4595
    %v4968 = vpack.c.b16 %v4604, %v4600
    %v4969 = vpack.c.b16 %v4605, %v4601
    %v4970 = vpack.c.b16 %v4606, %v4602
    %v4971 = vpack.c.b16 %v4607, %v4603
    %v4972 = vpack.c.b16 %v4612, %v4608
    %v4973 = vpack.c.b16 %v4613, %v4609
    %v4974 = vpack.c.b16 %v4614, %v4610
    %v4975 = vpack.c.b16 %v4615, %v4611
    %v4976 = vpack.c.b16 %v4620, %v4616
    %v4977 = vpack.c.b16 %v4621, %v4617
    %v4978 = vpack.c.b16 %v4622, %v4618
    %v4979 = vpack.c.b16 %v4623, %v4619
    %v4980 = vpack.c.b16 %v4628, %v4624
    %v4981 = vpack.c.b16 %v4629, %v4625
    %v4982 = vpack.c.b16 %v4630, %v4626
    %v4983 = vpack.c.b16 %v4631, %v4627
    %v4984 = vpack.c.b16 %v4636, %v4632
    %v4985 = vpack.c.b16 %v4637, %v4633
    %v4986 = vpack.c.b16 %v4638, %v4634
    %v4987 = vpack.c.b16 %v4639, %v4635
    %v4988 = vpack.c.b16 %v4644, %v4640
    %v4989 = vpack.c.b16 %v4645, %v4641
    %v4990 = vpack.c.b16 %v4646, %v4642
    %v4991 = vpack.c.b16 %v4647, %v4643
    %v4992 = vpack.c.b16 %v4652, %v4648
    %v4993 = vpack.c.b16 %v4653, %v4649
    %v4994 = vpack.c.b16 %v4654, %v4650
    %v4995 = vpack.c.b16 %v4655, %v4651
    %v4996 = vpack.c.b16 %v4660, %v4656
    %v4997 = vpack.c.b16 %v4661, %v4657
    %v4998 = vpack.c.b16 %v4662, %v4658
    %v4999 = vpack.c.b16 %v4663, %v4659
    %v5000 = vpack.c.b16 %v4668, %v4664
    %v5001 = vpack.c.b16 %v4669, %v4665
    %v5002 = vpack.c.b16 %v4670, %v4666
    %v5003 = vpack.c.b16 %v4671, %v4667
    %v5004 = vpack.c.b16 %v4676, %v4672
    %v5005 = vpack.c.b16 %v4677, %v4673
    %v5006 = vpack.c.b16 %v4678, %v4674
    %v5007 = vpack.c.b16 %v4679, %v4675
    %v5008 = vpack.c.b16 %v4684, %v4680
    %v5009 = vpack.c.b16 %v4685, %v4681
    %v5010 = vpack.c.b16 %v4686, %v4682
    %v5011 = vpack.c.b16 %v4687, %v4683
    %v5012 = vpack.c.b16 %v4692, %v4688
    %v5013 = vpack.c.b16 %v4693, %v4689
    %v5014 = vpack.c.b16 %v4694, %v4690
    %v5015 = vpack.c.b16 %v4695, %v4691
    %v5016 = vpack.c.b16 %v4700, %v4696
    %v5017 = vpack.c.b16 %v4701, %v4697
    %v5018 = vpack.c.b16 %v4702, %v4698
    %v5019 = vpack.c.b16 %v4703, %v4699
    %v5020 = vpack.c.b16 %v4708, %v4704
    %v5021 = vpack.c.b16 %v4709, %v4705
    %v5022 = vpack.c.b16 %v4710, %v4706
    %v5023 = vpack.c.b16 %v4711, %v4707
    %v5024 = vpack.c.b16 %v4716, %v4712
    %v5025 = vpack.c.b16 %v4717, %v4713
    %v5026 = vpack.c.b16 %v4718, %v4714
    %v5027 = vpack.c.b16 %v4719, %v4715
    %v5028 = vpack.c.b16 %v4724, %v4720
    %v5029 = vpack.c.b16 %v4725, %v4721
    %v5030 = vpack.c.b16 %v4726, %v4722
    %v5031 = vpack.c.b16 %v4727, %v4723
    %v5032 = vpack.c.b16 %v4732, %v4728
    %v5033 = vpack.c.b16 %v4733, %v4729
    %v5034 = vpack.c.b16 %v4734, %v4730
    %v5035 = vpack.c.b16 %v4735, %v4731
    %v5036 = vpack.c.b16 %v4740, %v4736
    %v5037 = vpack.c.b16 %v4741, %v4737
    %v5038 = vpack.c.b16 %v4742, %v4738
    %v5039 = vpack.c.b16 %v4743, %v4739
    %v5040 = vpack.c.b16 %v4748, %v4744
    %v5041 = vpack.c.b16 %v4749, %v4745
    %v5042 = vpack.c.b16 %v4750, %v4746
    %v5043 = vpack.c.b16 %v4751, %v4747
    %v5044 = vpack.c.b16 %v4756, %v4752
    %v5045 = vpack.c.b16 %v4757, %v4753
    %v5046 = vpack.c.b16 %v4758, %v4754
    %v5047 = vpack.c.b16 %v4759, %v4755
    %v5048 = vpack.c.b16 %v4764, %v4760
    %v5049 = vpack.c.b16 %v4765, %v4761
    %v5050 = vpack.c.b16 %v4766, %v4762
    %v5051 = vpack.c.b16 %v4767, %v4763
    %v5052 = vpack.c.b16 %v4772, %v4768
    %v5053 = vpack.c.b16 %v4773, %v4769
    %v5054 = vpack.c.b16 %v4774, %v4770
    %v5055 = vpack.c.b16 %v4775, %v4771
    %v5056 = vpack.c.b16 %v4780, %v4776
    %v5057 = vpack.c.b16 %v4781, %v4777
    %v5058 = vpack.c.b16 %v4782, %v4778
    %v5059 = vpack.c.b16 %v4783, %v4779
    %v5060 = vpack.c.b16 %v4788, %v4784
    %v5061 = vpack.c.b16 %v4789, %v4785
    %v5062 = vpack.c.b16 %v4790, %v4786
    %v5063 = vpack.c.b16 %v4791, %v4787
    %v5064 = vpack.c.b16 %v4796, %v4792
    %v5065 = vpack.c.b16 %v4797, %v4793
    %v5066 = vpack.c.b16 %v4798, %v4794
    %v5067 = vpack.c.b16 %v4799, %v4795
    %v5068 = vpack.c.b16 %v4804, %v4800
    %v5069 = vpack.c.b16 %v4805, %v4801
    %v5070 = vpack.c.b16 %v4806, %v4802
    %v5071 = vpack.c.b16 %v4807, %v4803
    %v5072 = vpack.c.b16 %v4812, %v4808
    %v5073 = vpack.c.b16 %v4813, %v4809
    %v5074 = vpack.c.b16 %v4814, %v4810
    %v5075 = vpack.c.b16 %v4815, %v4811
    %v5076 = vpack.c.b16 %v4820, %v4816
    %v5077 = vpack.c.b16 %v4821, %v4817
    %v5078 = vpack.c.b16 %v4822, %v4818
    %v5079 = vpack.c.b16 %v4823, %v4819
    %5336 = vmatprep.subr.bf16.mxu0 %v4825
    %5337 = vmatpush1.bf16.msra.mxu0 %v4824
    %5338 = vmatprep.subr.bf16.mxu0 %v4829
    %5339 = vmatpush1.bf16.msra.mxu0 %v4828
    %5340 = vmatprep.subr.bf16.mxu0 %v4833
    %5341 = vmatpush1.bf16.msra.mxu0 %v4832
    %5342 = vmatprep.subr.bf16.mxu0 %v4837
    %5343 = vmatpush1.bf16.msra.mxu0 %v4836
    %5344 = vmatprep.subr.bf16.mxu0 %v4841
    %5345 = vmatpush1.bf16.msra.mxu0 %v4840
    %5346 = vmatprep.subr.bf16.mxu0 %v4845
    %5347 = vmatpush1.bf16.msra.mxu0 %v4844
    %5348 = vmatprep.subr.bf16.mxu0 %v4849
    %5349 = vmatpush1.bf16.msra.mxu0 %v4848
    %5350 = vmatprep.subr.bf16.mxu0 %v4853
    %5351 = vmatpush1.bf16.msra.mxu0 %v4852
    %5352 = vmatprep.subr.bf16.mxu0 %v4857
    %5353 = vmatpush1.bf16.msra.mxu0 %v4856
    %5354 = vmatprep.subr.bf16.mxu0 %v4861
    %5355 = vmatpush1.bf16.msra.mxu0 %v4860
    %5356 = vmatprep.subr.bf16.mxu0 %v4865
    %5357 = vmatpush1.bf16.msra.mxu0 %v4864
    %5358 = vmatprep.subr.bf16.mxu0 %v4869
    %5359 = vmatpush1.bf16.msra.mxu0 %v4868
    %5360 = vmatprep.subr.bf16.mxu0 %v4873
    %5361 = vmatpush1.bf16.msra.mxu0 %v4872
    %5362 = vmatprep.subr.bf16.mxu0 %v4877
    %5363 = vmatpush1.bf16.msra.mxu0 %v4876
    %5364 = vmatprep.subr.bf16.mxu0 %v4881
    %5365 = vmatpush1.bf16.msra.mxu0 %v4880
    %5366 = vmatprep.subr.bf16.mxu0 %v4885
    %5367 = vmatpush1.bf16.msra.mxu0 %v4884
    %5368 = vmatprep.mubr.bf16.mxu0 %v3651
    %5369 = vmatmul.mubr.bf16.gmra.mrb[0].mxu0 %v3650
    %v5370 = vpop.f32.mrb[0].mxu0
    %v5371 = vadd.f32 %v4039, %v5370
    %v5372 = vpop.f32.mrb[0].mxu0
    %v5373 = vadd.f32 %v4043, %v5372
    %v5374 = vpop.f32.mrb[0].mxu0
    %v5375 = vadd.f32 %v4039, %v5374
    %v5376 = vpop.f32.mrb[0].mxu0
    %v5377 = vadd.f32 %v4043, %v5376
    %5378 = vmatprep.mubr.bf16.mxu0 %v3659
    %5379 = vmatmul.mubr.bf16.gmra.mrb[0].mxu0 %v3658
    %v5380 = vpop.f32.mrb[0].mxu0
    %v5381 = vadd.f32 %v4039, %v5380
    %v5382 = vpop.f32.mrb[0].mxu0
    %v5383 = vadd.f32 %v4043, %v5382
    %v5384 = vpop.f32.mrb[0].mxu0
    %v5385 = vadd.f32 %v4039, %v5384
    %v5386 = vpop.f32.mrb[0].mxu0
    %v5387 = vadd.f32 %v4043, %v5386
    %5388 = vmatprep.mubr.bf16.mxu0 %v3667
    %5389 = vmatmul.mubr.bf16.gmra.mrb[0].mxu0 %v3666
    %v5390 = vpop.f32.mrb[0].mxu0
    %v5391 = vadd.f32 %v4039, %v5390
    %v5392 = vpop.f32.mrb[0].mxu0
    %v5393 = vadd.f32 %v4043, %v5392
    %v5394 = vpop.f32.mrb[0].mxu0
    %v5395 = vadd.f32 %v4039, %v5394
    %v5396 = vpop.f32.mrb[0].mxu0
    %v5397 = vadd.f32 %v4043, %v5396
    %5398 = vmatprep.mubr.bf16.mxu0 %v3675
    %5399 = vmatmul.mubr.bf16.gmra.mrb[0].mxu0 %v3674
    %v5400 = vpop.f32.mrb[0].mxu0
    %v5401 = vadd.f32 %v4039, %v5400
    %v5402 = vpop.f32.mrb[0].mxu0
    %v5403 = vadd.f32 %v4043, %v5402
    %v5404 = vpop.f32.mrb[0].mxu0
    %v5405 = vadd.f32 %v4039, %v5404
    %v5406 = vpop.f32.mrb[0].mxu0
    %v5407 = vadd.f32 %v4043, %v5406
    %5408 = vmatprep.mubr.bf16.mxu0 %v3683
    %5409 = vmatmul.mubr.bf16.gmra.mrb[0].mxu0 %v3682
    %v5410 = vpop.f32.mrb[0].mxu0
    %v5411 = vadd.f32 %v4039, %v5410
    %v5412 = vpop.f32.mrb[0].mxu0
    %v5413 = vadd.f32 %v4043, %v5412
    %v5414 = vpop.f32.mrb[0].mxu0
    %v5415 = vadd.f32 %v4039, %v5414
    %v5416 = vpop.f32.mrb[0].mxu0
    %v5417 = vadd.f32 %v4043, %v5416
    %5418 = vmatprep.mubr.bf16.mxu0 %v3691
    %5419 = vmatmul.mubr.bf16.gmra.mrb[0].mxu0 %v3690
    %v5420 = vpop.f32.mrb[0].mxu0
    %v5421 = vadd.f32 %v4039, %v5420
    %v5422 = vpop.f32.mrb[0].mxu0
    %v5423 = vadd.f32 %v4043, %v5422
    %v5424 = vpop.f32.mrb[0].mxu0
    %v5425 = vadd.f32 %v4039, %v5424
    %v5426 = vpop.f32.mrb[0].mxu0
    %v5427 = vadd.f32 %v4043, %v5426
    %5428 = vmatprep.mubr.bf16.mxu0 %v3699
    %5429 = vmatmul.mubr.bf16.gmra.mrb[0].mxu0 %v3698
    %v5430 = vpop.f32.mrb[0].mxu0
    %v5431 = vadd.f32 %v4039, %v5430
    %v5432 = vpop.f32.mrb[0].mxu0
    %v5433 = vadd.f32 %v4043, %v5432
    %v5434 = vpop.f32.mrb[0].mxu0
    %v5435 = vadd.f32 %v4039, %v5434
    %v5436 = vpop.f32.mrb[0].mxu0
    %v5437 = vadd.f32 %v4043, %v5436
    %5438 = vmatprep.mubr.bf16.mxu0 %v3707
    %5439 = vmatmul.mubr.bf16.gmra.mrb[0].mxu0 %v3706
    %v5440 = vpop.f32.mrb[0].mxu0
    %v5441 = vadd.f32 %v4039, %v5440
    %v5442 = vpop.f32.mrb[0].mxu0
    %v5443 = vadd.f32 %v4043, %v5442
    %v5444 = vpop.f32.mrb[0].mxu0
    %v5445 = vadd.f32 %v4039, %v5444
    %v5446 = vpop.f32.mrb[0].mxu0
    %v5447 = vadd.f32 %v4043, %v5446
    %5448 = vmatprep.mubr.bf16.mxu0 %v3715
    %5449 = vmatmul.mubr.bf16.gmra.mrb[0].mxu0 %v3714
    %v5450 = vpop.f32.mrb[0].mxu0
    %v5451 = vadd.f32 %v4039, %v5450
    %v5452 = vpop.f32.mrb[0].mxu0
    %v5453 = vadd.f32 %v4043, %v5452
    %v5454 = vpop.f32.mrb[0].mxu0
    %v5455 = vadd.f32 %v4039, %v5454
    %v5456 = vpop.f32.mrb[0].mxu0
    %v5457 = vadd.f32 %v4043, %v5456
    %5458 = vmatprep.mubr.bf16.mxu0 %v3723
    %5459 = vmatmul.mubr.bf16.gmra.mrb[0].mxu0 %v3722
    %v5460 = vpop.f32.mrb[0].mxu0
    %v5461 = vadd.f32 %v4039, %v5460
    %v5462 = vpop.f32.mrb[0].mxu0
    %v5463 = vadd.f32 %v4043, %v5462
    %v5464 = vpop.f32.mrb[0].mxu0
    %v5465 = vadd.f32 %v4039, %v5464
    %v5466 = vpop.f32.mrb[0].mxu0
    %v5467 = vadd.f32 %v4043, %v5466
    %5468 = vmatprep.mubr.bf16.mxu0 %v3731
    %5469 = vmatmul.mubr.bf16.gmra.mrb[0].mxu0 %v3730
    %v5470 = vpop.f32.mrb[0].mxu0
    %v5471 = vadd.f32 %v4039, %v5470
    %v5472 = vpop.f32.mrb[0].mxu0
    %v5473 = vadd.f32 %v4043, %v5472
    %v5474 = vpop.f32.mrb[0].mxu0
    %v5475 = vadd.f32 %v4039, %v5474
    %v5476 = vpop.f32.mrb[0].mxu0
    %v5477 = vadd.f32 %v4043, %v5476
    %5478 = vmatprep.mubr.bf16.mxu0 %v3739
    %5479 = vmatmul.mubr.bf16.gmra.mrb[0].mxu0 %v3738
    %v5480 = vpop.f32.mrb[0].mxu0
    %v5481 = vadd.f32 %v4039, %v5480
    %v5482 = vpop.f32.mrb[0].mxu0
    %v5483 = vadd.f32 %v4043, %v5482
    %v5484 = vpop.f32.mrb[0].mxu0
    %v5485 = vadd.f32 %v4039, %v5484
    %v5486 = vpop.f32.mrb[0].mxu0
    %v5487 = vadd.f32 %v4043, %v5486
    %5488 = vmatprep.mubr.bf16.mxu0 %v3747
    %5489 = vmatmul.mubr.bf16.gmra.mrb[0].mxu0 %v3746
    %v5490 = vpop.f32.mrb[0].mxu0
    %v5491 = vadd.f32 %v4039, %v5490
    %v5492 = vpop.f32.mrb[0].mxu0
    %v5493 = vadd.f32 %v4043, %v5492
    %v5494 = vpop.f32.mrb[0].mxu0
    %v5495 = vadd.f32 %v4039, %v5494
    %v5496 = vpop.f32.mrb[0].mxu0
    %v5497 = vadd.f32 %v4043, %v5496
    %5498 = vmatprep.mubr.bf16.mxu0 %v3755
    %5499 = vmatmul.mubr.bf16.gmra.mrb[0].mxu0 %v3754
    %v5500 = vpop.f32.mrb[0].mxu0
    %v5501 = vadd.f32 %v4039, %v5500
    %v5502 = vpop.f32.mrb[0].mxu0
    %v5503 = vadd.f32 %v4043, %v5502
    %v5504 = vpop.f32.mrb[0].mxu0
    %v5505 = vadd.f32 %v4039, %v5504
    %v5506 = vpop.f32.mrb[0].mxu0
    %v5507 = vadd.f32 %v4043, %v5506
    %5508 = vmatprep.mubr.bf16.mxu0 %v3763
    %5509 = vmatmul.mubr.bf16.gmra.mrb[0].mxu0 %v3762
    %v5510 = vpop.f32.mrb[0].mxu0
    %v5511 = vadd.f32 %v4039, %v5510
    %v5512 = vpop.f32.mrb[0].mxu0
    %v5513 = vadd.f32 %v4043, %v5512
    %v5514 = vpop.f32.mrb[0].mxu0
    %v5515 = vadd.f32 %v4039, %v5514
    %v5516 = vpop.f32.mrb[0].mxu0
    %v5517 = vadd.f32 %v4043, %v5516
    %5518 = vmatprep.mubr.bf16.mxu0 %v3771
    %5519 = vmatmul.mubr.bf16.gmra.mrb[0].mxu0 %v3770
    %v5520 = vpop.f32.mrb[0].mxu0
    %v5521 = vadd.f32 %v4039, %v5520
    %v5522 = vpop.f32.mrb[0].mxu0
    %v5523 = vadd.f32 %v4043, %v5522
    %v5524 = vpop.f32.mrb[0].mxu0
    %v5525 = vadd.f32 %v4039, %v5524
    %v5526 = vpop.f32.mrb[0].mxu0
    %v5527 = vadd.f32 %v4043, %v5526
    %5528 = vdwg.mxu0
    %5529 = vmatprep.subr.bf16.mxu0 %v4889
    %5530 = vmatpush1.bf16.msra.mxu0 %v4888
    %5531 = vmatprep.subr.bf16.mxu0 %v4893
    %5532 = vmatpush1.bf16.msra.mxu0 %v4892
    %5533 = vmatprep.subr.bf16.mxu0 %v4897
    %5534 = vmatpush1.bf16.msra.mxu0 %v4896
    %5535 = vmatprep.subr.bf16.mxu0 %v4901
    %5536 = vmatpush1.bf16.msra.mxu0 %v4900
    %5537 = vmatprep.subr.bf16.mxu0 %v4905
    %5538 = vmatpush1.bf16.msra.mxu0 %v4904
    %5539 = vmatprep.subr.bf16.mxu0 %v4909
    %5540 = vmatpush1.bf16.msra.mxu0 %v4908
    %5541 = vmatprep.subr.bf16.mxu0 %v4913
    %5542 = vmatpush1.bf16.msra.mxu0 %v4912
    %5543 = vmatprep.subr.bf16.mxu0 %v4917
    %5544 = vmatpush1.bf16.msra.mxu0 %v4916
    %5545 = vmatprep.subr.bf16.mxu0 %v4921
    %5546 = vmatpush1.bf16.msra.mxu0 %v4920
    %5547 = vmatprep.subr.bf16.mxu0 %v4925
    %5548 = vmatpush1.bf16.msra.mxu0 %v4924
    %5549 = vmatprep.subr.bf16.mxu0 %v4929
    %5550 = vmatpush1.bf16.msra.mxu0 %v4928
    %5551 = vmatprep.subr.bf16.mxu0 %v4933
    %5552 = vmatpush1.bf16.msra.mxu0 %v4932
    %5553 = vmatprep.subr.bf16.mxu0 %v4937
    %5554 = vmatpush1.bf16.msra.mxu0 %v4936
    %5555 = vmatprep.subr.bf16.mxu0 %v4941
    %5556 = vmatpush1.bf16.msra.mxu0 %v4940
    %5557 = vmatprep.subr.bf16.mxu0 %v4945
    %5558 = vmatpush1.bf16.msra.mxu0 %v4944
    %5559 = vmatprep.subr.bf16.mxu0 %v4949
    %5560 = vmatpush1.bf16.msra.mxu0 %v4948
    %5561 = vmatprep.mubr.bf16.mxu0 %v3653
    %5562 = vmatmul.mubr.bf16.gmra.mrb[0].mxu0 %v3652
    %v5563 = vpop.f32.mrb[0].mxu0
    %v5564 = vadd.f32 %v5371, %v5563
    %v5565 = vpop.f32.mrb[0].mxu0
    %v5566 = vadd.f32 %v5373, %v5565
    %v5567 = vpop.f32.mrb[0].mxu0
    %v5568 = vadd.f32 %v5375, %v5567
    %v5569 = vpop.f32.mrb[0].mxu0
    %v5570 = vadd.f32 %v5377, %v5569
    %5571 = vmatprep.mubr.bf16.mxu0 %v3661
    %5572 = vmatmul.mubr.bf16.gmra.mrb[0].mxu0 %v3660
    %v5573 = vpop.f32.mrb[0].mxu0
    %v5574 = vadd.f32 %v5381, %v5573
    %v5575 = vpop.f32.mrb[0].mxu0
    %v5576 = vadd.f32 %v5383, %v5575
    %v5577 = vpop.f32.mrb[0].mxu0
    %v5578 = vadd.f32 %v5385, %v5577
    %v5579 = vpop.f32.mrb[0].mxu0
    %v5580 = vadd.f32 %v5387, %v5579
    %5581 = vmatprep.mubr.bf16.mxu0 %v3669
    %5582 = vmatmul.mubr.bf16.gmra.mrb[0].mxu0 %v3668
    %v5583 = vpop.f32.mrb[0].mxu0
    %v5584 = vadd.f32 %v5391, %v5583
    %v5585 = vpop.f32.mrb[0].mxu0
    %v5586 = vadd.f32 %v5393, %v5585
    %v5587 = vpop.f32.mrb[0].mxu0
    %v5588 = vadd.f32 %v5395, %v5587
    %v5589 = vpop.f32.mrb[0].mxu0
    %v5590 = vadd.f32 %v5397, %v5589
    %5591 = vmatprep.mubr.bf16.mxu0 %v3677
    %5592 = vmatmul.mubr.bf16.gmra.mrb[0].mxu0 %v3676
    %v5593 = vpop.f32.mrb[0].mxu0
    %v5594 = vadd.f32 %v5401, %v5593
    %v5595 = vpop.f32.mrb[0].mxu0
    %v5596 = vadd.f32 %v5403, %v5595
    %v5597 = vpop.f32.mrb[0].mxu0
    %v5598 = vadd.f32 %v5405, %v5597
    %v5599 = vpop.f32.mrb[0].mxu0
    %v5600 = vadd.f32 %v5407, %v5599
    %5601 = vmatprep.mubr.bf16.mxu0 %v3685
    %5602 = vmatmul.mubr.bf16.gmra.mrb[0].mxu0 %v3684
    %v5603 = vpop.f32.mrb[0].mxu0
    %v5604 = vadd.f32 %v5411, %v5603
    %v5605 = vpop.f32.mrb[0].mxu0
    %v5606 = vadd.f32 %v5413, %v5605
    %v5607 = vpop.f32.mrb[0].mxu0
    %v5608 = vadd.f32 %v5415, %v5607
    %v5609 = vpop.f32.mrb[0].mxu0
    %v5610 = vadd.f32 %v5417, %v5609
    %5611 = vmatprep.mubr.bf16.mxu0 %v3693
    %5612 = vmatmul.mubr.bf16.gmra.mrb[0].mxu0 %v3692
    %v5613 = vpop.f32.mrb[0].mxu0
    %v5614 = vadd.f32 %v5421, %v5613
    %v5615 = vpop.f32.mrb[0].mxu0
    %v5616 = vadd.f32 %v5423, %v5615
    %v5617 = vpop.f32.mrb[0].mxu0
    %v5618 = vadd.f32 %v5425, %v5617
    %v5619 = vpop.f32.mrb[0].mxu0
    %v5620 = vadd.f32 %v5427, %v5619
    %5621 = vmatprep.mubr.bf16.mxu0 %v3701
    %5622 = vmatmul.mubr.bf16.gmra.mrb[0].mxu0 %v3700
    %v5623 = vpop.f32.mrb[0].mxu0
    %v5624 = vadd.f32 %v5431, %v5623
    %v5625 = vpop.f32.mrb[0].mxu0
    %v5626 = vadd.f32 %v5433, %v5625
    %v5627 = vpop.f32.mrb[0].mxu0
    %v5628 = vadd.f32 %v5435, %v5627
    %v5629 = vpop.f32.mrb[0].mxu0
    %v5630 = vadd.f32 %v5437, %v5629
    %5631 = vmatprep.mubr.bf16.mxu0 %v3709
    %5632 = vmatmul.mubr.bf16.gmra.mrb[0].mxu0 %v3708
    %v5633 = vpop.f32.mrb[0].mxu0
    %v5634 = vadd.f32 %v5441, %v5633
    %v5635 = vpop.f32.mrb[0].mxu0
    %v5636 = vadd.f32 %v5443, %v5635
    %v5637 = vpop.f32.mrb[0].mxu0
    %v5638 = vadd.f32 %v5445, %v5637
    %v5639 = vpop.f32.mrb[0].mxu0
    %v5640 = vadd.f32 %v5447, %v5639
    %5641 = vmatprep.mubr.bf16.mxu0 %v3717
    %5642 = vmatmul.mubr.bf16.gmra.mrb[0].mxu0 %v3716
    %v5643 = vpop.f32.mrb[0].mxu0
    %v5644 = vadd.f32 %v5451, %v5643
    %v5645 = vpop.f32.mrb[0].mxu0
    %v5646 = vadd.f32 %v5453, %v5645
    %v5647 = vpop.f32.mrb[0].mxu0
    %v5648 = vadd.f32 %v5455, %v5647
    %v5649 = vpop.f32.mrb[0].mxu0
    %v5650 = vadd.f32 %v5457, %v5649
    %5651 = vmatprep.mubr.bf16.mxu0 %v3725
    %5652 = vmatmul.mubr.bf16.gmra.mrb[0].mxu0 %v3724
    %v5653 = vpop.f32.mrb[0].mxu0
    %v5654 = vadd.f32 %v5461, %v5653
    %v5655 = vpop.f32.mrb[0].mxu0
    %v5656 = vadd.f32 %v5463, %v5655
    %v5657 = vpop.f32.mrb[0].mxu0
    %v5658 = vadd.f32 %v5465, %v5657
    %v5659 = vpop.f32.mrb[0].mxu0
    %v5660 = vadd.f32 %v5467, %v5659
    %5661 = vmatprep.mubr.bf16.mxu0 %v3733
    %5662 = vmatmul.mubr.bf16.gmra.mrb[0].mxu0 %v3732
    %v5663 = vpop.f32.mrb[0].mxu0
    %v5664 = vadd.f32 %v5471, %v5663
    %v5665 = vpop.f32.mrb[0].mxu0
    %v5666 = vadd.f32 %v5473, %v5665
    %v5667 = vpop.f32.mrb[0].mxu0
    %v5668 = vadd.f32 %v5475, %v5667
    %v5669 = vpop.f32.mrb[0].mxu0
    %v5670 = vadd.f32 %v5477, %v5669
    %5671 = vmatprep.mubr.bf16.mxu0 %v3741
    %5672 = vmatmul.mubr.bf16.gmra.mrb[0].mxu0 %v3740
    %v5673 = vpop.f32.mrb[0].mxu0
    %v5674 = vadd.f32 %v5481, %v5673
    %v5675 = vpop.f32.mrb[0].mxu0
    %v5676 = vadd.f32 %v5483, %v5675
    %v5677 = vpop.f32.mrb[0].mxu0
    %v5678 = vadd.f32 %v5485, %v5677
    %v5679 = vpop.f32.mrb[0].mxu0
    %v5680 = vadd.f32 %v5487, %v5679
    %5681 = vmatprep.mubr.bf16.mxu0 %v3749
    %5682 = vmatmul.mubr.bf16.gmra.mrb[0].mxu0 %v3748
    %v5683 = vpop.f32.mrb[0].mxu0
    %v5684 = vadd.f32 %v5491, %v5683
    %v5685 = vpop.f32.mrb[0].mxu0
    %v5686 = vadd.f32 %v5493, %v5685
    %v5687 = vpop.f32.mrb[0].mxu0
    %v5688 = vadd.f32 %v5495, %v5687
    %v5689 = vpop.f32.mrb[0].mxu0
    %v5690 = vadd.f32 %v5497, %v5689
    %5691 = vmatprep.mubr.bf16.mxu0 %v3757
    %5692 = vmatmul.mubr.bf16.gmra.mrb[0].mxu0 %v3756
    %v5693 = vpop.f32.mrb[0].mxu0
    %v5694 = vadd.f32 %v5501, %v5693
    %v5695 = vpop.f32.mrb[0].mxu0
    %v5696 = vadd.f32 %v5503, %v5695
    %v5697 = vpop.f32.mrb[0].mxu0
    %v5698 = vadd.f32 %v5505, %v5697
    %v5699 = vpop.f32.mrb[0].mxu0
    %v5700 = vadd.f32 %v5507, %v5699
    %5701 = vmatprep.mubr.bf16.mxu0 %v3765
    %5702 = vmatmul.mubr.bf16.gmra.mrb[0].mxu0 %v3764
    %v5703 = vpop.f32.mrb[0].mxu0
    %v5704 = vadd.f32 %v5511, %v5703
    %v5705 = vpop.f32.mrb[0].mxu0
    %v5706 = vadd.f32 %v5513, %v5705
    %v5707 = vpop.f32.mrb[0].mxu0
    %v5708 = vadd.f32 %v5515, %v5707
    %v5709 = vpop.f32.mrb[0].mxu0
    %v5710 = vadd.f32 %v5517, %v5709
    %5711 = vmatprep.mubr.bf16.mxu0 %v3773
    %5712 = vmatmul.mubr.bf16.gmra.mrb[0].mxu0 %v3772
    %v5713 = vpop.f32.mrb[0].mxu0
    %v5714 = vadd.f32 %v5521, %v5713
    %v5715 = vpop.f32.mrb[0].mxu0
    %v5716 = vadd.f32 %v5523, %v5715
    %v5717 = vpop.f32.mrb[0].mxu0
    %v5718 = vadd.f32 %v5525, %v5717
    %v5719 = vpop.f32.mrb[0].mxu0
    %v5720 = vadd.f32 %v5527, %v5719
    %5721 = vdwg.mxu0
    %5722 = vmatprep.subr.bf16.mxu0 %v4953
    %5723 = vmatpush1.bf16.msra.mxu0 %v4952
    %5724 = vmatprep.subr.bf16.mxu0 %v4957
    %5725 = vmatpush1.bf16.msra.mxu0 %v4956
    %5726 = vmatprep.subr.bf16.mxu0 %v4961
    %5727 = vmatpush1.bf16.msra.mxu0 %v4960
    %5728 = vmatprep.subr.bf16.mxu0 %v4965
    %5729 = vmatpush1.bf16.msra.mxu0 %v4964
    %5730 = vmatprep.subr.bf16.mxu0 %v4969
    %5731 = vmatpush1.bf16.msra.mxu0 %v4968
    %5732 = vmatprep.subr.bf16.mxu0 %v4973
    %5733 = vmatpush1.bf16.msra.mxu0 %v4972
    %5734 = vmatprep.subr.bf16.mxu0 %v4977
    %5735 = vmatpush1.bf16.msra.mxu0 %v4976
    %5736 = vmatprep.subr.bf16.mxu0 %v4981
    %5737 = vmatpush1.bf16.msra.mxu0 %v4980
    %5738 = vmatprep.subr.bf16.mxu0 %v4985
    %5739 = vmatpush1.bf16.msra.mxu0 %v4984
    %5740 = vmatprep.subr.bf16.mxu0 %v4989
    %5741 = vmatpush1.bf16.msra.mxu0 %v4988
    %5742 = vmatprep.subr.bf16.mxu0 %v4993
    %5743 = vmatpush1.bf16.msra.mxu0 %v4992
    %5744 = vmatprep.subr.bf16.mxu0 %v4997
    %5745 = vmatpush1.bf16.msra.mxu0 %v4996
    %5746 = vmatprep.subr.bf16.mxu0 %v5001
    %5747 = vmatpush1.bf16.msra.mxu0 %v5000
    %5748 = vmatprep.subr.bf16.mxu0 %v5005
    %5749 = vmatpush1.bf16.msra.mxu0 %v5004
    %5750 = vmatprep.subr.bf16.mxu0 %v5009
    %5751 = vmatpush1.bf16.msra.mxu0 %v5008
    %5752 = vmatprep.subr.bf16.mxu0 %v5013
    %5753 = vmatpush1.bf16.msra.mxu0 %v5012
    %5754 = vmatprep.mubr.bf16.mxu0 %v3655
    %5755 = vmatmul.mubr.bf16.gmra.mrb[0].mxu0 %v3654
    %v5756 = vpop.f32.mrb[0].mxu0
    %v5757 = vadd.f32 %v5564, %v5756
    %v5758 = vpop.f32.mrb[0].mxu0
    %v5759 = vadd.f32 %v5566, %v5758
    %v5760 = vpop.f32.mrb[0].mxu0
    %v5761 = vadd.f32 %v5568, %v5760
    %v5762 = vpop.f32.mrb[0].mxu0
    %v5763 = vadd.f32 %v5570, %v5762
    %5764 = vmatprep.mubr.bf16.mxu0 %v3663
    %5765 = vmatmul.mubr.bf16.gmra.mrb[0].mxu0 %v3662
    %v5766 = vpop.f32.mrb[0].mxu0
    %v5767 = vadd.f32 %v5574, %v5766
    %v5768 = vpop.f32.mrb[0].mxu0
    %v5769 = vadd.f32 %v5576, %v5768
    %v5770 = vpop.f32.mrb[0].mxu0
    %v5771 = vadd.f32 %v5578, %v5770
    %v5772 = vpop.f32.mrb[0].mxu0
    %v5773 = vadd.f32 %v5580, %v5772
    %5774 = vmatprep.mubr.bf16.mxu0 %v3671
    %5775 = vmatmul.mubr.bf16.gmra.mrb[0].mxu0 %v3670
    %v5776 = vpop.f32.mrb[0].mxu0
    %v5777 = vadd.f32 %v5584, %v5776
    %v5778 = vpop.f32.mrb[0].mxu0
    %v5779 = vadd.f32 %v5586, %v5778
    %v5780 = vpop.f32.mrb[0].mxu0
    %v5781 = vadd.f32 %v5588, %v5780
    %v5782 = vpop.f32.mrb[0].mxu0
    %v5783 = vadd.f32 %v5590, %v5782
    %5784 = vmatprep.mubr.bf16.mxu0 %v3679
    %5785 = vmatmul.mubr.bf16.gmra.mrb[0].mxu0 %v3678
    %v5786 = vpop.f32.mrb[0].mxu0
    %v5787 = vadd.f32 %v5594, %v5786
    %v5788 = vpop.f32.mrb[0].mxu0
    %v5789 = vadd.f32 %v5596, %v5788
    %v5790 = vpop.f32.mrb[0].mxu0
    %v5791 = vadd.f32 %v5598, %v5790
    %v5792 = vpop.f32.mrb[0].mxu0
    %v5793 = vadd.f32 %v5600, %v5792
    %5794 = vmatprep.mubr.bf16.mxu0 %v3687
    %5795 = vmatmul.mubr.bf16.gmra.mrb[0].mxu0 %v3686
    %v5796 = vpop.f32.mrb[0].mxu0
    %v5797 = vadd.f32 %v5604, %v5796
    %v5798 = vpop.f32.mrb[0].mxu0
    %v5799 = vadd.f32 %v5606, %v5798
    %v5800 = vpop.f32.mrb[0].mxu0
    %v5801 = vadd.f32 %v5608, %v5800
    %v5802 = vpop.f32.mrb[0].mxu0
    %v5803 = vadd.f32 %v5610, %v5802
    %5804 = vmatprep.mubr.bf16.mxu0 %v3695
    %5805 = vmatmul.mubr.bf16.gmra.mrb[0].mxu0 %v3694
    %v5806 = vpop.f32.mrb[0].mxu0
    %v5807 = vadd.f32 %v5614, %v5806
    %v5808 = vpop.f32.mrb[0].mxu0
    %v5809 = vadd.f32 %v5616, %v5808
    %v5810 = vpop.f32.mrb[0].mxu0
    %v5811 = vadd.f32 %v5618, %v5810
    %v5812 = vpop.f32.mrb[0].mxu0
    %v5813 = vadd.f32 %v5620, %v5812
    %5814 = vmatprep.mubr.bf16.mxu0 %v3703
    %5815 = vmatmul.mubr.bf16.gmra.mrb[0].mxu0 %v3702
    %v5816 = vpop.f32.mrb[0].mxu0
    %v5817 = vadd.f32 %v5624, %v5816
    %v5818 = vpop.f32.mrb[0].mxu0
    %v5819 = vadd.f32 %v5626, %v5818
    %v5820 = vpop.f32.mrb[0].mxu0
    %v5821 = vadd.f32 %v5628, %v5820
    %v5822 = vpop.f32.mrb[0].mxu0
    %v5823 = vadd.f32 %v5630, %v5822
    %5824 = vmatprep.mubr.bf16.mxu0 %v3711
    %5825 = vmatmul.mubr.bf16.gmra.mrb[0].mxu0 %v3710
    %v5826 = vpop.f32.mrb[0].mxu0
    %v5827 = vadd.f32 %v5634, %v5826
    %v5828 = vpop.f32.mrb[0].mxu0
    %v5829 = vadd.f32 %v5636, %v5828
    %v5830 = vpop.f32.mrb[0].mxu0
    %v5831 = vadd.f32 %v5638, %v5830
    %v5832 = vpop.f32.mrb[0].mxu0
    %v5833 = vadd.f32 %v5640, %v5832
    %5834 = vmatprep.mubr.bf16.mxu0 %v3719
    %5835 = vmatmul.mubr.bf16.gmra.mrb[0].mxu0 %v3718
    %v5836 = vpop.f32.mrb[0].mxu0
    %v5837 = vadd.f32 %v5644, %v5836
    %v5838 = vpop.f32.mrb[0].mxu0
    %v5839 = vadd.f32 %v5646, %v5838
    %v5840 = vpop.f32.mrb[0].mxu0
    %v5841 = vadd.f32 %v5648, %v5840
    %v5842 = vpop.f32.mrb[0].mxu0
    %v5843 = vadd.f32 %v5650, %v5842
    %5844 = vmatprep.mubr.bf16.mxu0 %v3727
    %5845 = vmatmul.mubr.bf16.gmra.mrb[0].mxu0 %v3726
    %v5846 = vpop.f32.mrb[0].mxu0
    %v5847 = vadd.f32 %v5654, %v5846
    %v5848 = vpop.f32.mrb[0].mxu0
    %v5849 = vadd.f32 %v5656, %v5848
    %v5850 = vpop.f32.mrb[0].mxu0
    %v5851 = vadd.f32 %v5658, %v5850
    %v5852 = vpop.f32.mrb[0].mxu0
    %v5853 = vadd.f32 %v5660, %v5852
    %5854 = vmatprep.mubr.bf16.mxu0 %v3735
    %5855 = vmatmul.mubr.bf16.gmra.mrb[0].mxu0 %v3734
    %v5856 = vpop.f32.mrb[0].mxu0
    %v5857 = vadd.f32 %v5664, %v5856
    %v5858 = vpop.f32.mrb[0].mxu0
    %v5859 = vadd.f32 %v5666, %v5858
    %v5860 = vpop.f32.mrb[0].mxu0
    %v5861 = vadd.f32 %v5668, %v5860
    %v5862 = vpop.f32.mrb[0].mxu0
    %v5863 = vadd.f32 %v5670, %v5862
    %5864 = vmatprep.mubr.bf16.mxu0 %v3743
    %5865 = vmatmul.mubr.bf16.gmra.mrb[0].mxu0 %v3742
    %v5866 = vpop.f32.mrb[0].mxu0
    %v5867 = vadd.f32 %v5674, %v5866
    %v5868 = vpop.f32.mrb[0].mxu0
    %v5869 = vadd.f32 %v5676, %v5868
    %v5870 = vpop.f32.mrb[0].mxu0
    %v5871 = vadd.f32 %v5678, %v5870
    %v5872 = vpop.f32.mrb[0].mxu0
    %v5873 = vadd.f32 %v5680, %v5872
    %5874 = vmatprep.mubr.bf16.mxu0 %v3751
    %5875 = vmatmul.mubr.bf16.gmra.mrb[0].mxu0 %v3750
    %v5876 = vpop.f32.mrb[0].mxu0
    %v5877 = vadd.f32 %v5684, %v5876
    %v5878 = vpop.f32.mrb[0].mxu0
    %v5879 = vadd.f32 %v5686, %v5878
    %v5880 = vpop.f32.mrb[0].mxu0
    %v5881 = vadd.f32 %v5688, %v5880
    %v5882 = vpop.f32.mrb[0].mxu0
    %v5883 = vadd.f32 %v5690, %v5882
    %5884 = vmatprep.mubr.bf16.mxu0 %v3759
    %5885 = vmatmul.mubr.bf16.gmra.mrb[0].mxu0 %v3758
    %v5886 = vpop.f32.mrb[0].mxu0
    %v5887 = vadd.f32 %v5694, %v5886
    %v5888 = vpop.f32.mrb[0].mxu0
    %v5889 = vadd.f32 %v5696, %v5888
    %v5890 = vpop.f32.mrb[0].mxu0
    %v5891 = vadd.f32 %v5698, %v5890
    %v5892 = vpop.f32.mrb[0].mxu0
    %v5893 = vadd.f32 %v5700, %v5892
    %5894 = vmatprep.mubr.bf16.mxu0 %v3767
    %5895 = vmatmul.mubr.bf16.gmra.mrb[0].mxu0 %v3766
    %v5896 = vpop.f32.mrb[0].mxu0
    %v5897 = vadd.f32 %v5704, %v5896
    %v5898 = vpop.f32.mrb[0].mxu0
    %v5899 = vadd.f32 %v5706, %v5898
    %v5900 = vpop.f32.mrb[0].mxu0
    %v5901 = vadd.f32 %v5708, %v5900
    %v5902 = vpop.f32.mrb[0].mxu0
    %v5903 = vadd.f32 %v5710, %v5902
    %5904 = vmatprep.mubr.bf16.mxu0 %v3775
    %5905 = vmatmul.mubr.bf16.gmra.mrb[0].mxu0 %v3774
    %v5906 = vpop.f32.mrb[0].mxu0
    %v5907 = vadd.f32 %v5714, %v5906
    %v5908 = vpop.f32.mrb[0].mxu0
    %v5909 = vadd.f32 %v5716, %v5908
    %v5910 = vpop.f32.mrb[0].mxu0
    %v5911 = vadd.f32 %v5718, %v5910
    %v5912 = vpop.f32.mrb[0].mxu0
    %v5913 = vadd.f32 %v5720, %v5912
    %5914 = vdwg.mxu0
    %5915 = vmatprep.subr.bf16.mxu0 %v5017
    %5916 = vmatpush1.bf16.msra.mxu0 %v5016
    %5917 = vmatprep.subr.bf16.mxu0 %v5021
    %5918 = vmatpush1.bf16.msra.mxu0 %v5020
    %5919 = vmatprep.subr.bf16.mxu0 %v5025
    %5920 = vmatpush1.bf16.msra.mxu0 %v5024
    %5921 = vmatprep.subr.bf16.mxu0 %v5029
    %5922 = vmatpush1.bf16.msra.mxu0 %v5028
    %5923 = vmatprep.subr.bf16.mxu0 %v5033
    %5924 = vmatpush1.bf16.msra.mxu0 %v5032
    %5925 = vmatprep.subr.bf16.mxu0 %v5037
    %5926 = vmatpush1.bf16.msra.mxu0 %v5036
    %5927 = vmatprep.subr.bf16.mxu0 %v5041
    %5928 = vmatpush1.bf16.msra.mxu0 %v5040
    %5929 = vmatprep.subr.bf16.mxu0 %v5045
    %5930 = vmatpush1.bf16.msra.mxu0 %v5044
    %5931 = vmatprep.subr.bf16.mxu0 %v5049
    %5932 = vmatpush1.bf16.msra.mxu0 %v5048
    %5933 = vmatprep.subr.bf16.mxu0 %v5053
    %5934 = vmatpush1.bf16.msra.mxu0 %v5052
    %5935 = vmatprep.subr.bf16.mxu0 %v5057
    %5936 = vmatpush1.bf16.msra.mxu0 %v5056
    %5937 = vmatprep.subr.bf16.mxu0 %v5061
    %5938 = vmatpush1.bf16.msra.mxu0 %v5060
    %5939 = vmatprep.subr.bf16.mxu0 %v5065
    %5940 = vmatpush1.bf16.msra.mxu0 %v5064
    %5941 = vmatprep.subr.bf16.mxu0 %v5069
    %5942 = vmatpush1.bf16.msra.mxu0 %v5068
    %5943 = vmatprep.subr.bf16.mxu0 %v5073
    %5944 = vmatpush1.bf16.msra.mxu0 %v5072
    %5945 = vmatprep.subr.bf16.mxu0 %v5077
    %5946 = vmatpush1.bf16.msra.mxu0 %v5076
    %5947 = vmatprep.mubr.bf16.mxu0 %v3657
    %5948 = vmatmul.mubr.bf16.gmra.mrb[0].mxu0 %v3656
    %v5949 = vpop.f32.mrb[0].mxu0
    %v5950 = vadd.f32 %v5757, %v5949
    %v5951 = vpop.f32.mrb[0].mxu0
    %v5952 = vadd.f32 %v5759, %v5951
    %v5953 = vpop.f32.mrb[0].mxu0
    %v5954 = vadd.f32 %v5761, %v5953
    %v5955 = vpop.f32.mrb[0].mxu0
    %v5956 = vadd.f32 %v5763, %v5955
    %5957 = vmatprep.mubr.bf16.mxu0 %v3665
    %5958 = vmatmul.mubr.bf16.gmra.mrb[0].mxu0 %v3664
    %v5959 = vpop.f32.mrb[0].mxu0
    %v5960 = vadd.f32 %v5767, %v5959
    %v5961 = vpop.f32.mrb[0].mxu0
    %v5962 = vadd.f32 %v5769, %v5961
    %v5963 = vpop.f32.mrb[0].mxu0
    %v5964 = vadd.f32 %v5771, %v5963
    %v5965 = vpop.f32.mrb[0].mxu0
    %v5966 = vadd.f32 %v5773, %v5965
    %5967 = vmatprep.mubr.bf16.mxu0 %v3673
    %5968 = vmatmul.mubr.bf16.gmra.mrb[0].mxu0 %v3672
    %v5969 = vpop.f32.mrb[0].mxu0
    %v5970 = vadd.f32 %v5777, %v5969
    %v5971 = vpop.f32.mrb[0].mxu0
    %v5972 = vadd.f32 %v5779, %v5971
    %v5973 = vpop.f32.mrb[0].mxu0
    %v5974 = vadd.f32 %v5781, %v5973
    %v5975 = vpop.f32.mrb[0].mxu0
    %v5976 = vadd.f32 %v5783, %v5975
    %5977 = vmatprep.mubr.bf16.mxu0 %v3681
    %5978 = vmatmul.mubr.bf16.gmra.mrb[0].mxu0 %v3680
    %v5979 = vpop.f32.mrb[0].mxu0
    %v5980 = vadd.f32 %v5787, %v5979
    %v5981 = vpop.f32.mrb[0].mxu0
    %v5982 = vadd.f32 %v5789, %v5981
    %v5983 = vpop.f32.mrb[0].mxu0
    %v5984 = vadd.f32 %v5791, %v5983
    %v5985 = vpop.f32.mrb[0].mxu0
    %v5986 = vadd.f32 %v5793, %v5985
    %5987 = vmatprep.mubr.bf16.mxu0 %v3689
    %5988 = vmatmul.mubr.bf16.gmra.mrb[0].mxu0 %v3688
    %v5989 = vpop.f32.mrb[0].mxu0
    %v5990 = vadd.f32 %v5797, %v5989
    %v5991 = vpop.f32.mrb[0].mxu0
    %v5992 = vadd.f32 %v5799, %v5991
    %v5993 = vpop.f32.mrb[0].mxu0
    %v5994 = vadd.f32 %v5801, %v5993
    %v5995 = vpop.f32.mrb[0].mxu0
    %v5996 = vadd.f32 %v5803, %v5995
    %5997 = vmatprep.mubr.bf16.mxu0 %v3697
    %5998 = vmatmul.mubr.bf16.gmra.mrb[0].mxu0 %v3696
    %v5999 = vpop.f32.mrb[0].mxu0
    %v6000 = vadd.f32 %v5807, %v5999
    %v6001 = vpop.f32.mrb[0].mxu0
    %v6002 = vadd.f32 %v5809, %v6001
    %v6003 = vpop.f32.mrb[0].mxu0
    %v6004 = vadd.f32 %v5811, %v6003
    %v6005 = vpop.f32.mrb[0].mxu0
    %v6006 = vadd.f32 %v5813, %v6005
    %6007 = vmatprep.mubr.bf16.mxu0 %v3705
    %6008 = vmatmul.mubr.bf16.gmra.mrb[0].mxu0 %v3704
    %v6009 = vpop.f32.mrb[0].mxu0
    %v6010 = vadd.f32 %v5817, %v6009
    %v6011 = vpop.f32.mrb[0].mxu0
    %v6012 = vadd.f32 %v5819, %v6011
    %v6013 = vpop.f32.mrb[0].mxu0
    %v6014 = vadd.f32 %v5821, %v6013
    %v6015 = vpop.f32.mrb[0].mxu0
    %v6016 = vadd.f32 %v5823, %v6015
    %6017 = vmatprep.mubr.bf16.mxu0 %v3713
    %6018 = vmatmul.mubr.bf16.gmra.mrb[0].mxu0 %v3712
    %v6019 = vpop.f32.mrb[0].mxu0
    %v6020 = vadd.f32 %v5827, %v6019
    %v6021 = vpop.f32.mrb[0].mxu0
    %v6022 = vadd.f32 %v5829, %v6021
    %v6023 = vpop.f32.mrb[0].mxu0
    %v6024 = vadd.f32 %v5831, %v6023
    %v6025 = vpop.f32.mrb[0].mxu0
    %v6026 = vadd.f32 %v5833, %v6025
    %6027 = vmatprep.mubr.bf16.mxu0 %v3721
    %6028 = vmatmul.mubr.bf16.gmra.mrb[0].mxu0 %v3720
    %v6029 = vpop.f32.mrb[0].mxu0
    %v6030 = vadd.f32 %v5837, %v6029
    %v6031 = vpop.f32.mrb[0].mxu0
    %v6032 = vadd.f32 %v5839, %v6031
    %v6033 = vpop.f32.mrb[0].mxu0
    %v6034 = vadd.f32 %v5841, %v6033
    %v6035 = vpop.f32.mrb[0].mxu0
    %v6036 = vadd.f32 %v5843, %v6035
    %6037 = vmatprep.mubr.bf16.mxu0 %v3729
    %6038 = vmatmul.mubr.bf16.gmra.mrb[0].mxu0 %v3728
    %v6039 = vpop.f32.mrb[0].mxu0
    %v6040 = vadd.f32 %v5847, %v6039
    %v6041 = vpop.f32.mrb[0].mxu0
    %v6042 = vadd.f32 %v5849, %v6041
    %v6043 = vpop.f32.mrb[0].mxu0
    %v6044 = vadd.f32 %v5851, %v6043
    %v6045 = vpop.f32.mrb[0].mxu0
    %v6046 = vadd.f32 %v5853, %v6045
    %6047 = vmatprep.mubr.bf16.mxu0 %v3737
    %6048 = vmatmul.mubr.bf16.gmra.mrb[0].mxu0 %v3736
    %v6049 = vpop.f32.mrb[0].mxu0
    %v6050 = vadd.f32 %v5857, %v6049
    %v6051 = vpop.f32.mrb[0].mxu0
    %v6052 = vadd.f32 %v5859, %v6051
    %v6053 = vpop.f32.mrb[0].mxu0
    %v6054 = vadd.f32 %v5861, %v6053
    %v6055 = vpop.f32.mrb[0].mxu0
    %v6056 = vadd.f32 %v5863, %v6055
    %6057 = vmatprep.mubr.bf16.mxu0 %v3745
    %6058 = vmatmul.mubr.bf16.gmra.mrb[0].mxu0 %v3744
    %v6059 = vpop.f32.mrb[0].mxu0
    %v6060 = vadd.f32 %v5867, %v6059
    %v6061 = vpop.f32.mrb[0].mxu0
    %v6062 = vadd.f32 %v5869, %v6061
    %v6063 = vpop.f32.mrb[0].mxu0
    %v6064 = vadd.f32 %v5871, %v6063
    %v6065 = vpop.f32.mrb[0].mxu0
    %v6066 = vadd.f32 %v5873, %v6065
    %6067 = vmatprep.mubr.bf16.mxu0 %v3753
    %6068 = vmatmul.mubr.bf16.gmra.mrb[0].mxu0 %v3752
    %v6069 = vpop.f32.mrb[0].mxu0
    %v6070 = vadd.f32 %v5877, %v6069
    %v6071 = vpop.f32.mrb[0].mxu0
    %v6072 = vadd.f32 %v5879, %v6071
    %v6073 = vpop.f32.mrb[0].mxu0
    %v6074 = vadd.f32 %v5881, %v6073
    %v6075 = vpop.f32.mrb[0].mxu0
    %v6076 = vadd.f32 %v5883, %v6075
    %6077 = vmatprep.mubr.bf16.mxu0 %v3761
    %6078 = vmatmul.mubr.bf16.gmra.mrb[0].mxu0 %v3760
    %v6079 = vpop.f32.mrb[0].mxu0
    %v6080 = vadd.f32 %v5887, %v6079
    %v6081 = vpop.f32.mrb[0].mxu0
    %v6082 = vadd.f32 %v5889, %v6081
    %v6083 = vpop.f32.mrb[0].mxu0
    %v6084 = vadd.f32 %v5891, %v6083
    %v6085 = vpop.f32.mrb[0].mxu0
    %v6086 = vadd.f32 %v5893, %v6085
    %6087 = vmatprep.mubr.bf16.mxu0 %v3769
    %6088 = vmatmul.mubr.bf16.gmra.mrb[0].mxu0 %v3768
    %v6089 = vpop.f32.mrb[0].mxu0
    %v6090 = vadd.f32 %v5897, %v6089
    %v6091 = vpop.f32.mrb[0].mxu0
    %v6092 = vadd.f32 %v5899, %v6091
    %v6093 = vpop.f32.mrb[0].mxu0
    %v6094 = vadd.f32 %v5901, %v6093
    %v6095 = vpop.f32.mrb[0].mxu0
    %v6096 = vadd.f32 %v5903, %v6095
    %6097 = vmatprep.mubr.bf16.mxu0 %v3777
    %6098 = vmatmul.mubr.bf16.gmra.mrb[0].mxu0 %v3776
    %v6099 = vpop.f32.mrb[0].mxu0
    %v6100 = vadd.f32 %v5907, %v6099
    %v6101 = vpop.f32.mrb[0].mxu0
    %v6102 = vadd.f32 %v5909, %v6101
    %v6103 = vpop.f32.mrb[0].mxu0
    %v6104 = vadd.f32 %v5911, %v6103
    %v6105 = vpop.f32.mrb[0].mxu0
    %v6106 = vadd.f32 %v5913, %v6105
    %6107 = vdwg.mxu0
    %6108 = vmatprep.subr.bf16.mxu0 %v4827
    %6109 = vmatpush1.bf16.msra.mxu0 %v4826
    %6110 = vmatprep.subr.bf16.mxu0 %v4831
    %6111 = vmatpush1.bf16.msra.mxu0 %v4830
    %6112 = vmatprep.subr.bf16.mxu0 %v4835
    %6113 = vmatpush1.bf16.msra.mxu0 %v4834
    %6114 = vmatprep.subr.bf16.mxu0 %v4839
    %6115 = vmatpush1.bf16.msra.mxu0 %v4838
    %6116 = vmatprep.subr.bf16.mxu0 %v4843
    %6117 = vmatpush1.bf16.msra.mxu0 %v4842
    %6118 = vmatprep.subr.bf16.mxu0 %v4847
    %6119 = vmatpush1.bf16.msra.mxu0 %v4846
    %6120 = vmatprep.subr.bf16.mxu0 %v4851
    %6121 = vmatpush1.bf16.msra.mxu0 %v4850
    %6122 = vmatprep.subr.bf16.mxu0 %v4855
    %6123 = vmatpush1.bf16.msra.mxu0 %v4854
    %6124 = vmatprep.subr.bf16.mxu0 %v4859
    %6125 = vmatpush1.bf16.msra.mxu0 %v4858
    %6126 = vmatprep.subr.bf16.mxu0 %v4863
    %6127 = vmatpush1.bf16.msra.mxu0 %v4862
    %6128 = vmatprep.subr.bf16.mxu0 %v4867
    %6129 = vmatpush1.bf16.msra.mxu0 %v4866
    %6130 = vmatprep.subr.bf16.mxu0 %v4871
    %6131 = vmatpush1.bf16.msra.mxu0 %v4870
    %6132 = vmatprep.subr.bf16.mxu0 %v4875
    %6133 = vmatpush1.bf16.msra.mxu0 %v4874
    %6134 = vmatprep.subr.bf16.mxu0 %v4879
    %6135 = vmatpush1.bf16.msra.mxu0 %v4878
    %6136 = vmatprep.subr.bf16.mxu0 %v4883
    %6137 = vmatpush1.bf16.msra.mxu0 %v4882
    %6138 = vmatprep.subr.bf16.mxu0 %v4887
    %6139 = vmatpush1.bf16.msra.mxu0 %v4886
    %6140 = vmatprep.mubr.bf16.mxu0 %v3651
    %6141 = vmatmul.mubr.bf16.gmra.mrb[0].mxu0 %v3650
    %v6142 = vpop.f32.mrb[0].mxu0
    %v6143 = vadd.f32 %v4047, %v6142
    %v6144 = vpop.f32.mrb[0].mxu0
    %v6145 = vadd.f32 %v4051, %v6144
    %v6146 = vpop.f32.mrb[0].mxu0
    %v6147 = vadd.f32 %v4047, %v6146
    %v6148 = vpop.f32.mrb[0].mxu0
    %v6149 = vadd.f32 %v4051, %v6148
    %6150 = vmatprep.mubr.bf16.mxu0 %v3659
    %6151 = vmatmul.mubr.bf16.gmra.mrb[0].mxu0 %v3658
    %v6152 = vpop.f32.mrb[0].mxu0
    %v6153 = vadd.f32 %v4047, %v6152
    %v6154 = vpop.f32.mrb[0].mxu0
    %v6155 = vadd.f32 %v4051, %v6154
    %v6156 = vpop.f32.mrb[0].mxu0
    %v6157 = vadd.f32 %v4047, %v6156
    %v6158 = vpop.f32.mrb[0].mxu0
    %v6159 = vadd.f32 %v4051, %v6158
    %6160 = vmatprep.mubr.bf16.mxu0 %v3667
    %6161 = vmatmul.mubr.bf16.gmra.mrb[0].mxu0 %v3666
    %v6162 = vpop.f32.mrb[0].mxu0
    %v6163 = vadd.f32 %v4047, %v6162
    %v6164 = vpop.f32.mrb[0].mxu0
    %v6165 = vadd.f32 %v4051, %v6164
    %v6166 = vpop.f32.mrb[0].mxu0
    %v6167 = vadd.f32 %v4047, %v6166
    %v6168 = vpop.f32.mrb[0].mxu0
    %v6169 = vadd.f32 %v4051, %v6168
    %6170 = vmatprep.mubr.bf16.mxu0 %v3675
    %6171 = vmatmul.mubr.bf16.gmra.mrb[0].mxu0 %v3674
    %v6172 = vpop.f32.mrb[0].mxu0
    %v6173 = vadd.f32 %v4047, %v6172
    %v6174 = vpop.f32.mrb[0].mxu0
    %v6175 = vadd.f32 %v4051, %v6174
    %v6176 = vpop.f32.mrb[0].mxu0
    %v6177 = vadd.f32 %v4047, %v6176
    %v6178 = vpop.f32.mrb[0].mxu0
    %v6179 = vadd.f32 %v4051, %v6178
    %6180 = vmatprep.mubr.bf16.mxu0 %v3683
    %6181 = vmatmul.mubr.bf16.gmra.mrb[0].mxu0 %v3682
    %v6182 = vpop.f32.mrb[0].mxu0
    %v6183 = vadd.f32 %v4047, %v6182
    %v6184 = vpop.f32.mrb[0].mxu0
    %v6185 = vadd.f32 %v4051, %v6184
    %v6186 = vpop.f32.mrb[0].mxu0
    %v6187 = vadd.f32 %v4047, %v6186
    %v6188 = vpop.f32.mrb[0].mxu0
    %v6189 = vadd.f32 %v4051, %v6188
    %6190 = vmatprep.mubr.bf16.mxu0 %v3691
    %6191 = vmatmul.mubr.bf16.gmra.mrb[0].mxu0 %v3690
    %v6192 = vpop.f32.mrb[0].mxu0
    %v6193 = vadd.f32 %v4047, %v6192
    %v6194 = vpop.f32.mrb[0].mxu0
    %v6195 = vadd.f32 %v4051, %v6194
    %v6196 = vpop.f32.mrb[0].mxu0
    %v6197 = vadd.f32 %v4047, %v6196
    %v6198 = vpop.f32.mrb[0].mxu0
    %v6199 = vadd.f32 %v4051, %v6198
    %6200 = vmatprep.mubr.bf16.mxu0 %v3699
    %6201 = vmatmul.mubr.bf16.gmra.mrb[0].mxu0 %v3698
    %v6202 = vpop.f32.mrb[0].mxu0
    %v6203 = vadd.f32 %v4047, %v6202
    %v6204 = vpop.f32.mrb[0].mxu0
    %v6205 = vadd.f32 %v4051, %v6204
    %v6206 = vpop.f32.mrb[0].mxu0
    %v6207 = vadd.f32 %v4047, %v6206
    %v6208 = vpop.f32.mrb[0].mxu0
    %v6209 = vadd.f32 %v4051, %v6208
    %6210 = vmatprep.mubr.bf16.mxu0 %v3707
    %6211 = vmatmul.mubr.bf16.gmra.mrb[0].mxu0 %v3706
    %v6212 = vpop.f32.mrb[0].mxu0
    %v6213 = vadd.f32 %v4047, %v6212
    %v6214 = vpop.f32.mrb[0].mxu0
    %v6215 = vadd.f32 %v4051, %v6214
    %v6216 = vpop.f32.mrb[0].mxu0
    %v6217 = vadd.f32 %v4047, %v6216
    %v6218 = vpop.f32.mrb[0].mxu0
    %v6219 = vadd.f32 %v4051, %v6218
    %6220 = vmatprep.mubr.bf16.mxu0 %v3715
    %6221 = vmatmul.mubr.bf16.gmra.mrb[0].mxu0 %v3714
    %v6222 = vpop.f32.mrb[0].mxu0
    %v6223 = vadd.f32 %v4047, %v6222
    %v6224 = vpop.f32.mrb[0].mxu0
    %v6225 = vadd.f32 %v4051, %v6224
    %v6226 = vpop.f32.mrb[0].mxu0
    %v6227 = vadd.f32 %v4047, %v6226
    %v6228 = vpop.f32.mrb[0].mxu0
    %v6229 = vadd.f32 %v4051, %v6228
    %6230 = vmatprep.mubr.bf16.mxu0 %v3723
    %6231 = vmatmul.mubr.bf16.gmra.mrb[0].mxu0 %v3722
    %v6232 = vpop.f32.mrb[0].mxu0
    %v6233 = vadd.f32 %v4047, %v6232
    %v6234 = vpop.f32.mrb[0].mxu0
    %v6235 = vadd.f32 %v4051, %v6234
    %v6236 = vpop.f32.mrb[0].mxu0
    %v6237 = vadd.f32 %v4047, %v6236
    %v6238 = vpop.f32.mrb[0].mxu0
    %v6239 = vadd.f32 %v4051, %v6238
    %6240 = vmatprep.mubr.bf16.mxu0 %v3731
    %6241 = vmatmul.mubr.bf16.gmra.mrb[0].mxu0 %v3730
    %v6242 = vpop.f32.mrb[0].mxu0
    %v6243 = vadd.f32 %v4047, %v6242
    %v6244 = vpop.f32.mrb[0].mxu0
    %v6245 = vadd.f32 %v4051, %v6244
    %v6246 = vpop.f32.mrb[0].mxu0
    %v6247 = vadd.f32 %v4047, %v6246
    %v6248 = vpop.f32.mrb[0].mxu0
    %v6249 = vadd.f32 %v4051, %v6248
    %6250 = vmatprep.mubr.bf16.mxu0 %v3739
    %6251 = vmatmul.mubr.bf16.gmra.mrb[0].mxu0 %v3738
    %v6252 = vpop.f32.mrb[0].mxu0
    %v6253 = vadd.f32 %v4047, %v6252
    %v6254 = vpop.f32.mrb[0].mxu0
    %v6255 = vadd.f32 %v4051, %v6254
    %v6256 = vpop.f32.mrb[0].mxu0
    %v6257 = vadd.f32 %v4047, %v6256
    %v6258 = vpop.f32.mrb[0].mxu0
    %v6259 = vadd.f32 %v4051, %v6258
    %6260 = vmatprep.mubr.bf16.mxu0 %v3747
    %6261 = vmatmul.mubr.bf16.gmra.mrb[0].mxu0 %v3746
    %v6262 = vpop.f32.mrb[0].mxu0
    %v6263 = vadd.f32 %v4047, %v6262
    %v6264 = vpop.f32.mrb[0].mxu0
    %v6265 = vadd.f32 %v4051, %v6264
    %v6266 = vpop.f32.mrb[0].mxu0
    %v6267 = vadd.f32 %v4047, %v6266
    %v6268 = vpop.f32.mrb[0].mxu0
    %v6269 = vadd.f32 %v4051, %v6268
    %6270 = vmatprep.mubr.bf16.mxu0 %v3755
    %6271 = vmatmul.mubr.bf16.gmra.mrb[0].mxu0 %v3754
    %v6272 = vpop.f32.mrb[0].mxu0
    %v6273 = vadd.f32 %v4047, %v6272
    %v6274 = vpop.f32.mrb[0].mxu0
    %v6275 = vadd.f32 %v4051, %v6274
    %v6276 = vpop.f32.mrb[0].mxu0
    %v6277 = vadd.f32 %v4047, %v6276
    %v6278 = vpop.f32.mrb[0].mxu0
    %v6279 = vadd.f32 %v4051, %v6278
    %6280 = vmatprep.mubr.bf16.mxu0 %v3763
    %6281 = vmatmul.mubr.bf16.gmra.mrb[0].mxu0 %v3762
    %v6282 = vpop.f32.mrb[0].mxu0
    %v6283 = vadd.f32 %v4047, %v6282
    %v6284 = vpop.f32.mrb[0].mxu0
    %v6285 = vadd.f32 %v4051, %v6284
    %v6286 = vpop.f32.mrb[0].mxu0
    %v6287 = vadd.f32 %v4047, %v6286
    %v6288 = vpop.f32.mrb[0].mxu0
    %v6289 = vadd.f32 %v4051, %v6288
    %6290 = vmatprep.mubr.bf16.mxu0 %v3771
    %6291 = vmatmul.mubr.bf16.gmra.mrb[0].mxu0 %v3770
    %v6292 = vpop.f32.mrb[0].mxu0
    %v6293 = vadd.f32 %v4047, %v6292
    %v6294 = vpop.f32.mrb[0].mxu0
    %v6295 = vadd.f32 %v4051, %v6294
    %v6296 = vpop.f32.mrb[0].mxu0
    %v6297 = vadd.f32 %v4047, %v6296
    %v6298 = vpop.f32.mrb[0].mxu0
    %v6299 = vadd.f32 %v4051, %v6298
    %6300 = vdwg.mxu0
    %6301 = vmatprep.subr.bf16.mxu0 %v4891
    %6302 = vmatpush1.bf16.msra.mxu0 %v4890
    %6303 = vmatprep.subr.bf16.mxu0 %v4895
    %6304 = vmatpush1.bf16.msra.mxu0 %v4894
    %6305 = vmatprep.subr.bf16.mxu0 %v4899
    %6306 = vmatpush1.bf16.msra.mxu0 %v4898
    %6307 = vmatprep.subr.bf16.mxu0 %v4903
    %6308 = vmatpush1.bf16.msra.mxu0 %v4902
    %6309 = vmatprep.subr.bf16.mxu0 %v4907
    %6310 = vmatpush1.bf16.msra.mxu0 %v4906
    %6311 = vmatprep.subr.bf16.mxu0 %v4911
    %6312 = vmatpush1.bf16.msra.mxu0 %v4910
    %6313 = vmatprep.subr.bf16.mxu0 %v4915
    %6314 = vmatpush1.bf16.msra.mxu0 %v4914
    %6315 = vmatprep.subr.bf16.mxu0 %v4919
    %6316 = vmatpush1.bf16.msra.mxu0 %v4918
    %6317 = vmatprep.subr.bf16.mxu0 %v4923
    %6318 = vmatpush1.bf16.msra.mxu0 %v4922
    %6319 = vmatprep.subr.bf16.mxu0 %v4927
    %6320 = vmatpush1.bf16.msra.mxu0 %v4926
    %6321 = vmatprep.subr.bf16.mxu0 %v4931
    %6322 = vmatpush1.bf16.msra.mxu0 %v4930
    %6323 = vmatprep.subr.bf16.mxu0 %v4935
    %6324 = vmatpush1.bf16.msra.mxu0 %v4934
    %6325 = vmatprep.subr.bf16.mxu0 %v4939
    %6326 = vmatpush1.bf16.msra.mxu0 %v4938
    %6327 = vmatprep.subr.bf16.mxu0 %v4943
    %6328 = vmatpush1.bf16.msra.mxu0 %v4942
    %6329 = vmatprep.subr.bf16.mxu0 %v4947
    %6330 = vmatpush1.bf16.msra.mxu0 %v4946
    %6331 = vmatprep.subr.bf16.mxu0 %v4951
    %6332 = vmatpush1.bf16.msra.mxu0 %v4950
    %6333 = vmatprep.mubr.bf16.mxu0 %v3653
    %6334 = vmatmul.mubr.bf16.gmra.mrb[0].mxu0 %v3652
    %v6335 = vpop.f32.mrb[0].mxu0
    %v6336 = vadd.f32 %v6143, %v6335
    %v6337 = vpop.f32.mrb[0].mxu0
    %v6338 = vadd.f32 %v6145, %v6337
    %v6339 = vpop.f32.mrb[0].mxu0
    %v6340 = vadd.f32 %v6147, %v6339
    %v6341 = vpop.f32.mrb[0].mxu0
    %v6342 = vadd.f32 %v6149, %v6341
    %6343 = vmatprep.mubr.bf16.mxu0 %v3661
    %6344 = vmatmul.mubr.bf16.gmra.mrb[0].mxu0 %v3660
    %v6345 = vpop.f32.mrb[0].mxu0
    %v6346 = vadd.f32 %v6153, %v6345
    %v6347 = vpop.f32.mrb[0].mxu0
    %v6348 = vadd.f32 %v6155, %v6347
    %v6349 = vpop.f32.mrb[0].mxu0
    %v6350 = vadd.f32 %v6157, %v6349
    %v6351 = vpop.f32.mrb[0].mxu0
    %v6352 = vadd.f32 %v6159, %v6351
    %6353 = vmatprep.mubr.bf16.mxu0 %v3669
    %6354 = vmatmul.mubr.bf16.gmra.mrb[0].mxu0 %v3668
    %v6355 = vpop.f32.mrb[0].mxu0
    %v6356 = vadd.f32 %v6163, %v6355
    %v6357 = vpop.f32.mrb[0].mxu0
    %v6358 = vadd.f32 %v6165, %v6357
    %v6359 = vpop.f32.mrb[0].mxu0
    %v6360 = vadd.f32 %v6167, %v6359
    %v6361 = vpop.f32.mrb[0].mxu0
    %v6362 = vadd.f32 %v6169, %v6361
    %6363 = vmatprep.mubr.bf16.mxu0 %v3677
    %6364 = vmatmul.mubr.bf16.gmra.mrb[0].mxu0 %v3676
    %v6365 = vpop.f32.mrb[0].mxu0
    %v6366 = vadd.f32 %v6173, %v6365
    %v6367 = vpop.f32.mrb[0].mxu0
    %v6368 = vadd.f32 %v6175, %v6367
    %v6369 = vpop.f32.mrb[0].mxu0
    %v6370 = vadd.f32 %v6177, %v6369
    %v6371 = vpop.f32.mrb[0].mxu0
    %v6372 = vadd.f32 %v6179, %v6371
    %6373 = vmatprep.mubr.bf16.mxu0 %v3685
    %6374 = vmatmul.mubr.bf16.gmra.mrb[0].mxu0 %v3684
    %v6375 = vpop.f32.mrb[0].mxu0
    %v6376 = vadd.f32 %v6183, %v6375
    %v6377 = vpop.f32.mrb[0].mxu0
    %v6378 = vadd.f32 %v6185, %v6377
    %v6379 = vpop.f32.mrb[0].mxu0
    %v6380 = vadd.f32 %v6187, %v6379
    %v6381 = vpop.f32.mrb[0].mxu0
    %v6382 = vadd.f32 %v6189, %v6381
    %6383 = vmatprep.mubr.bf16.mxu0 %v3693
    %6384 = vmatmul.mubr.bf16.gmra.mrb[0].mxu0 %v3692
    %v6385 = vpop.f32.mrb[0].mxu0
    %v6386 = vadd.f32 %v6193, %v6385
    %v6387 = vpop.f32.mrb[0].mxu0
    %v6388 = vadd.f32 %v6195, %v6387
    %v6389 = vpop.f32.mrb[0].mxu0
    %v6390 = vadd.f32 %v6197, %v6389
    %v6391 = vpop.f32.mrb[0].mxu0
    %v6392 = vadd.f32 %v6199, %v6391
    %6393 = vmatprep.mubr.bf16.mxu0 %v3701
    %6394 = vmatmul.mubr.bf16.gmra.mrb[0].mxu0 %v3700
    %v6395 = vpop.f32.mrb[0].mxu0
    %v6396 = vadd.f32 %v6203, %v6395
    %v6397 = vpop.f32.mrb[0].mxu0
    %v6398 = vadd.f32 %v6205, %v6397
    %v6399 = vpop.f32.mrb[0].mxu0
    %v6400 = vadd.f32 %v6207, %v6399
    %v6401 = vpop.f32.mrb[0].mxu0
    %v6402 = vadd.f32 %v6209, %v6401
    %6403 = vmatprep.mubr.bf16.mxu0 %v3709
    %6404 = vmatmul.mubr.bf16.gmra.mrb[0].mxu0 %v3708
    %v6405 = vpop.f32.mrb[0].mxu0
    %v6406 = vadd.f32 %v6213, %v6405
    %v6407 = vpop.f32.mrb[0].mxu0
    %v6408 = vadd.f32 %v6215, %v6407
    %v6409 = vpop.f32.mrb[0].mxu0
    %v6410 = vadd.f32 %v6217, %v6409
    %v6411 = vpop.f32.mrb[0].mxu0
    %v6412 = vadd.f32 %v6219, %v6411
    %6413 = vmatprep.mubr.bf16.mxu0 %v3717
    %6414 = vmatmul.mubr.bf16.gmra.mrb[0].mxu0 %v3716
    %v6415 = vpop.f32.mrb[0].mxu0
    %v6416 = vadd.f32 %v6223, %v6415
    %v6417 = vpop.f32.mrb[0].mxu0
    %v6418 = vadd.f32 %v6225, %v6417
    %v6419 = vpop.f32.mrb[0].mxu0
    %v6420 = vadd.f32 %v6227, %v6419
    %v6421 = vpop.f32.mrb[0].mxu0
    %v6422 = vadd.f32 %v6229, %v6421
    %6423 = vmatprep.mubr.bf16.mxu0 %v3725
    %6424 = vmatmul.mubr.bf16.gmra.mrb[0].mxu0 %v3724
    %v6425 = vpop.f32.mrb[0].mxu0
    %v6426 = vadd.f32 %v6233, %v6425
    %v6427 = vpop.f32.mrb[0].mxu0
    %v6428 = vadd.f32 %v6235, %v6427
    %v6429 = vpop.f32.mrb[0].mxu0
    %v6430 = vadd.f32 %v6237, %v6429
    %v6431 = vpop.f32.mrb[0].mxu0
    %v6432 = vadd.f32 %v6239, %v6431
    %6433 = vmatprep.mubr.bf16.mxu0 %v3733
    %6434 = vmatmul.mubr.bf16.gmra.mrb[0].mxu0 %v3732
    %v6435 = vpop.f32.mrb[0].mxu0
    %v6436 = vadd.f32 %v6243, %v6435
    %v6437 = vpop.f32.mrb[0].mxu0
    %v6438 = vadd.f32 %v6245, %v6437
    %v6439 = vpop.f32.mrb[0].mxu0
    %v6440 = vadd.f32 %v6247, %v6439
    %v6441 = vpop.f32.mrb[0].mxu0
    %v6442 = vadd.f32 %v6249, %v6441
    %6443 = vmatprep.mubr.bf16.mxu0 %v3741
    %6444 = vmatmul.mubr.bf16.gmra.mrb[0].mxu0 %v3740
    %v6445 = vpop.f32.mrb[0].mxu0
    %v6446 = vadd.f32 %v6253, %v6445
    %v6447 = vpop.f32.mrb[0].mxu0
    %v6448 = vadd.f32 %v6255, %v6447
    %v6449 = vpop.f32.mrb[0].mxu0
    %v6450 = vadd.f32 %v6257, %v6449
    %v6451 = vpop.f32.mrb[0].mxu0
    %v6452 = vadd.f32 %v6259, %v6451
    %6453 = vmatprep.mubr.bf16.mxu0 %v3749
    %6454 = vmatmul.mubr.bf16.gmra.mrb[0].mxu0 %v3748
    %v6455 = vpop.f32.mrb[0].mxu0
    %v6456 = vadd.f32 %v6263, %v6455
    %v6457 = vpop.f32.mrb[0].mxu0
    %v6458 = vadd.f32 %v6265, %v6457
    %v6459 = vpop.f32.mrb[0].mxu0
    %v6460 = vadd.f32 %v6267, %v6459
    %v6461 = vpop.f32.mrb[0].mxu0
    %v6462 = vadd.f32 %v6269, %v6461
    %6463 = vmatprep.mubr.bf16.mxu0 %v3757
    %6464 = vmatmul.mubr.bf16.gmra.mrb[0].mxu0 %v3756
    %v6465 = vpop.f32.mrb[0].mxu0
    %v6466 = vadd.f32 %v6273, %v6465
    %v6467 = vpop.f32.mrb[0].mxu0
    %v6468 = vadd.f32 %v6275, %v6467
    %v6469 = vpop.f32.mrb[0].mxu0
    %v6470 = vadd.f32 %v6277, %v6469
    %v6471 = vpop.f32.mrb[0].mxu0
    %v6472 = vadd.f32 %v6279, %v6471
    %6473 = vmatprep.mubr.bf16.mxu0 %v3765
    %6474 = vmatmul.mubr.bf16.gmra.mrb[0].mxu0 %v3764
    %v6475 = vpop.f32.mrb[0].mxu0
    %v6476 = vadd.f32 %v6283, %v6475
    %v6477 = vpop.f32.mrb[0].mxu0
    %v6478 = vadd.f32 %v6285, %v6477
    %v6479 = vpop.f32.mrb[0].mxu0
    %v6480 = vadd.f32 %v6287, %v6479
    %v6481 = vpop.f32.mrb[0].mxu0
    %v6482 = vadd.f32 %v6289, %v6481
    %6483 = vmatprep.mubr.bf16.mxu0 %v3773
    %6484 = vmatmul.mubr.bf16.gmra.mrb[0].mxu0 %v3772
    %v6485 = vpop.f32.mrb[0].mxu0
    %v6486 = vadd.f32 %v6293, %v6485
    %v6487 = vpop.f32.mrb[0].mxu0
    %v6488 = vadd.f32 %v6295, %v6487
    %v6489 = vpop.f32.mrb[0].mxu0
    %v6490 = vadd.f32 %v6297, %v6489
    %v6491 = vpop.f32.mrb[0].mxu0
    %v6492 = vadd.f32 %v6299, %v6491
    %6493 = vdwg.mxu0
    %6494 = vmatprep.subr.bf16.mxu0 %v4955
    %6495 = vmatpush1.bf16.msra.mxu0 %v4954
    %6496 = vmatprep.subr.bf16.mxu0 %v4959
    %6497 = vmatpush1.bf16.msra.mxu0 %v4958
    %6498 = vmatprep.subr.bf16.mxu0 %v4963
    %6499 = vmatpush1.bf16.msra.mxu0 %v4962
    %6500 = vmatprep.subr.bf16.mxu0 %v4967
    %6501 = vmatpush1.bf16.msra.mxu0 %v4966
    %6502 = vmatprep.subr.bf16.mxu0 %v4971
    %6503 = vmatpush1.bf16.msra.mxu0 %v4970
    %6504 = vmatprep.subr.bf16.mxu0 %v4975
    %6505 = vmatpush1.bf16.msra.mxu0 %v4974
    %6506 = vmatprep.subr.bf16.mxu0 %v4979
    %6507 = vmatpush1.bf16.msra.mxu0 %v4978
    %6508 = vmatprep.subr.bf16.mxu0 %v4983
    %6509 = vmatpush1.bf16.msra.mxu0 %v4982
    %6510 = vmatprep.subr.bf16.mxu0 %v4987
    %6511 = vmatpush1.bf16.msra.mxu0 %v4986
    %6512 = vmatprep.subr.bf16.mxu0 %v4991
    %6513 = vmatpush1.bf16.msra.mxu0 %v4990
    %6514 = vmatprep.subr.bf16.mxu0 %v4995
    %6515 = vmatpush1.bf16.msra.mxu0 %v4994
    %6516 = vmatprep.subr.bf16.mxu0 %v4999
    %6517 = vmatpush1.bf16.msra.mxu0 %v4998
    %6518 = vmatprep.subr.bf16.mxu0 %v5003
    %6519 = vmatpush1.bf16.msra.mxu0 %v5002
    %6520 = vmatprep.subr.bf16.mxu0 %v5007
    %6521 = vmatpush1.bf16.msra.mxu0 %v5006
    %6522 = vmatprep.subr.bf16.mxu0 %v5011
    %6523 = vmatpush1.bf16.msra.mxu0 %v5010
    %6524 = vmatprep.subr.bf16.mxu0 %v5015
    %6525 = vmatpush1.bf16.msra.mxu0 %v5014
    %6526 = vmatprep.mubr.bf16.mxu0 %v3655
    %6527 = vmatmul.mubr.bf16.gmra.mrb[0].mxu0 %v3654
    %v6528 = vpop.f32.mrb[0].mxu0
    %v6529 = vadd.f32 %v6336, %v6528
    %v6530 = vpop.f32.mrb[0].mxu0
    %v6531 = vadd.f32 %v6338, %v6530
    %v6532 = vpop.f32.mrb[0].mxu0
    %v6533 = vadd.f32 %v6340, %v6532
    %v6534 = vpop.f32.mrb[0].mxu0
    %v6535 = vadd.f32 %v6342, %v6534
    %6536 = vmatprep.mubr.bf16.mxu0 %v3663
    %6537 = vmatmul.mubr.bf16.gmra.mrb[0].mxu0 %v3662
    %v6538 = vpop.f32.mrb[0].mxu0
    %v6539 = vadd.f32 %v6346, %v6538
    %v6540 = vpop.f32.mrb[0].mxu0
    %v6541 = vadd.f32 %v6348, %v6540
    %v6542 = vpop.f32.mrb[0].mxu0
    %v6543 = vadd.f32 %v6350, %v6542
    %v6544 = vpop.f32.mrb[0].mxu0
    %v6545 = vadd.f32 %v6352, %v6544
    %6546 = vmatprep.mubr.bf16.mxu0 %v3671
    %6547 = vmatmul.mubr.bf16.gmra.mrb[0].mxu0 %v3670
    %v6548 = vpop.f32.mrb[0].mxu0
    %v6549 = vadd.f32 %v6356, %v6548
    %v6550 = vpop.f32.mrb[0].mxu0
    %v6551 = vadd.f32 %v6358, %v6550
    %v6552 = vpop.f32.mrb[0].mxu0
    %v6553 = vadd.f32 %v6360, %v6552
    %v6554 = vpop.f32.mrb[0].mxu0
    %v6555 = vadd.f32 %v6362, %v6554
    %6556 = vmatprep.mubr.bf16.mxu0 %v3679
    %6557 = vmatmul.mubr.bf16.gmra.mrb[0].mxu0 %v3678
    %v6558 = vpop.f32.mrb[0].mxu0
    %v6559 = vadd.f32 %v6366, %v6558
    %v6560 = vpop.f32.mrb[0].mxu0
    %v6561 = vadd.f32 %v6368, %v6560
    %v6562 = vpop.f32.mrb[0].mxu0
    %v6563 = vadd.f32 %v6370, %v6562
    %v6564 = vpop.f32.mrb[0].mxu0
    %v6565 = vadd.f32 %v6372, %v6564
    %6566 = vmatprep.mubr.bf16.mxu0 %v3687
    %6567 = vmatmul.mubr.bf16.gmra.mrb[0].mxu0 %v3686
    %v6568 = vpop.f32.mrb[0].mxu0
    %v6569 = vadd.f32 %v6376, %v6568
    %v6570 = vpop.f32.mrb[0].mxu0
    %v6571 = vadd.f32 %v6378, %v6570
    %v6572 = vpop.f32.mrb[0].mxu0
    %v6573 = vadd.f32 %v6380, %v6572
    %v6574 = vpop.f32.mrb[0].mxu0
    %v6575 = vadd.f32 %v6382, %v6574
    %6576 = vmatprep.mubr.bf16.mxu0 %v3695
    %6577 = vmatmul.mubr.bf16.gmra.mrb[0].mxu0 %v3694
    %v6578 = vpop.f32.mrb[0].mxu0
    %v6579 = vadd.f32 %v6386, %v6578
    %v6580 = vpop.f32.mrb[0].mxu0
    %v6581 = vadd.f32 %v6388, %v6580
    %v6582 = vpop.f32.mrb[0].mxu0
    %v6583 = vadd.f32 %v6390, %v6582
    %v6584 = vpop.f32.mrb[0].mxu0
    %v6585 = vadd.f32 %v6392, %v6584
    %6586 = vmatprep.mubr.bf16.mxu0 %v3703
    %6587 = vmatmul.mubr.bf16.gmra.mrb[0].mxu0 %v3702
    %v6588 = vpop.f32.mrb[0].mxu0
    %v6589 = vadd.f32 %v6396, %v6588
    %v6590 = vpop.f32.mrb[0].mxu0
    %v6591 = vadd.f32 %v6398, %v6590
    %v6592 = vpop.f32.mrb[0].mxu0
    %v6593 = vadd.f32 %v6400, %v6592
    %v6594 = vpop.f32.mrb[0].mxu0
    %v6595 = vadd.f32 %v6402, %v6594
    %6596 = vmatprep.mubr.bf16.mxu0 %v3711
    %6597 = vmatmul.mubr.bf16.gmra.mrb[0].mxu0 %v3710
    %v6598 = vpop.f32.mrb[0].mxu0
    %v6599 = vadd.f32 %v6406, %v6598
    %v6600 = vpop.f32.mrb[0].mxu0
    %v6601 = vadd.f32 %v6408, %v6600
    %v6602 = vpop.f32.mrb[0].mxu0
    %v6603 = vadd.f32 %v6410, %v6602
    %v6604 = vpop.f32.mrb[0].mxu0
    %v6605 = vadd.f32 %v6412, %v6604
    %6606 = vmatprep.mubr.bf16.mxu0 %v3719
    %6607 = vmatmul.mubr.bf16.gmra.mrb[0].mxu0 %v3718
    %v6608 = vpop.f32.mrb[0].mxu0
    %v6609 = vadd.f32 %v6416, %v6608
    %v6610 = vpop.f32.mrb[0].mxu0
    %v6611 = vadd.f32 %v6418, %v6610
    %v6612 = vpop.f32.mrb[0].mxu0
    %v6613 = vadd.f32 %v6420, %v6612
    %v6614 = vpop.f32.mrb[0].mxu0
    %v6615 = vadd.f32 %v6422, %v6614
    %6616 = vmatprep.mubr.bf16.mxu0 %v3727
    %6617 = vmatmul.mubr.bf16.gmra.mrb[0].mxu0 %v3726
    %v6618 = vpop.f32.mrb[0].mxu0
    %v6619 = vadd.f32 %v6426, %v6618
    %v6620 = vpop.f32.mrb[0].mxu0
    %v6621 = vadd.f32 %v6428, %v6620
    %v6622 = vpop.f32.mrb[0].mxu0
    %v6623 = vadd.f32 %v6430, %v6622
    %v6624 = vpop.f32.mrb[0].mxu0
    %v6625 = vadd.f32 %v6432, %v6624
    %6626 = vmatprep.mubr.bf16.mxu0 %v3735
    %6627 = vmatmul.mubr.bf16.gmra.mrb[0].mxu0 %v3734
    %v6628 = vpop.f32.mrb[0].mxu0
    %v6629 = vadd.f32 %v6436, %v6628
    %v6630 = vpop.f32.mrb[0].mxu0
    %v6631 = vadd.f32 %v6438, %v6630
    %v6632 = vpop.f32.mrb[0].mxu0
    %v6633 = vadd.f32 %v6440, %v6632
    %v6634 = vpop.f32.mrb[0].mxu0
    %v6635 = vadd.f32 %v6442, %v6634
    %6636 = vmatprep.mubr.bf16.mxu0 %v3743
    %6637 = vmatmul.mubr.bf16.gmra.mrb[0].mxu0 %v3742
    %v6638 = vpop.f32.mrb[0].mxu0
    %v6639 = vadd.f32 %v6446, %v6638
    %v6640 = vpop.f32.mrb[0].mxu0
    %v6641 = vadd.f32 %v6448, %v6640
    %v6642 = vpop.f32.mrb[0].mxu0
    %v6643 = vadd.f32 %v6450, %v6642
    %v6644 = vpop.f32.mrb[0].mxu0
    %v6645 = vadd.f32 %v6452, %v6644
    %6646 = vmatprep.mubr.bf16.mxu0 %v3751
    %6647 = vmatmul.mubr.bf16.gmra.mrb[0].mxu0 %v3750
    %v6648 = vpop.f32.mrb[0].mxu0
    %v6649 = vadd.f32 %v6456, %v6648
    %v6650 = vpop.f32.mrb[0].mxu0
    %v6651 = vadd.f32 %v6458, %v6650
    %v6652 = vpop.f32.mrb[0].mxu0
    %v6653 = vadd.f32 %v6460, %v6652
    %v6654 = vpop.f32.mrb[0].mxu0
    %v6655 = vadd.f32 %v6462, %v6654
    %6656 = vmatprep.mubr.bf16.mxu0 %v3759
    %6657 = vmatmul.mubr.bf16.gmra.mrb[0].mxu0 %v3758
    %v6658 = vpop.f32.mrb[0].mxu0
    %v6659 = vadd.f32 %v6466, %v6658
    %v6660 = vpop.f32.mrb[0].mxu0
    %v6661 = vadd.f32 %v6468, %v6660
    %v6662 = vpop.f32.mrb[0].mxu0
    %v6663 = vadd.f32 %v6470, %v6662
    %v6664 = vpop.f32.mrb[0].mxu0
    %v6665 = vadd.f32 %v6472, %v6664
    %6666 = vmatprep.mubr.bf16.mxu0 %v3767
    %6667 = vmatmul.mubr.bf16.gmra.mrb[0].mxu0 %v3766
    %v6668 = vpop.f32.mrb[0].mxu0
    %v6669 = vadd.f32 %v6476, %v6668
    %v6670 = vpop.f32.mrb[0].mxu0
    %v6671 = vadd.f32 %v6478, %v6670
    %v6672 = vpop.f32.mrb[0].mxu0
    %v6673 = vadd.f32 %v6480, %v6672
    %v6674 = vpop.f32.mrb[0].mxu0
    %v6675 = vadd.f32 %v6482, %v6674
    %6676 = vmatprep.mubr.bf16.mxu0 %v3775
    %6677 = vmatmul.mubr.bf16.gmra.mrb[0].mxu0 %v3774
    %v6678 = vpop.f32.mrb[0].mxu0
    %v6679 = vadd.f32 %v6486, %v6678
    %v6680 = vpop.f32.mrb[0].mxu0
    %v6681 = vadd.f32 %v6488, %v6680
    %v6682 = vpop.f32.mrb[0].mxu0
    %v6683 = vadd.f32 %v6490, %v6682
    %v6684 = vpop.f32.mrb[0].mxu0
    %v6685 = vadd.f32 %v6492, %v6684
    %6686 = vdwg.mxu0
    %6687 = vmatprep.subr.bf16.mxu0 %v5019
    %6688 = vmatpush1.bf16.msra.mxu0 %v5018
    %6689 = vmatprep.subr.bf16.mxu0 %v5023
    %6690 = vmatpush1.bf16.msra.mxu0 %v5022
    %6691 = vmatprep.subr.bf16.mxu0 %v5027
    %6692 = vmatpush1.bf16.msra.mxu0 %v5026
    %6693 = vmatprep.subr.bf16.mxu0 %v5031
    %6694 = vmatpush1.bf16.msra.mxu0 %v5030
    %6695 = vmatprep.subr.bf16.mxu0 %v5035
    %6696 = vmatpush1.bf16.msra.mxu0 %v5034
    %6697 = vmatprep.subr.bf16.mxu0 %v5039
    %6698 = vmatpush1.bf16.msra.mxu0 %v5038
    %6699 = vmatprep.subr.bf16.mxu0 %v5043
    %6700 = vmatpush1.bf16.msra.mxu0 %v5042
    %6701 = vmatprep.subr.bf16.mxu0 %v5047
    %6702 = vmatpush1.bf16.msra.mxu0 %v5046
    %6703 = vmatprep.subr.bf16.mxu0 %v5051
    %6704 = vmatpush1.bf16.msra.mxu0 %v5050
    %6705 = vmatprep.subr.bf16.mxu0 %v5055
    %6706 = vmatpush1.bf16.msra.mxu0 %v5054
    %6707 = vmatprep.subr.bf16.mxu0 %v5059
    %6708 = vmatpush1.bf16.msra.mxu0 %v5058
    %6709 = vmatprep.subr.bf16.mxu0 %v5063
    %6710 = vmatpush1.bf16.msra.mxu0 %v5062
    %6711 = vmatprep.subr.bf16.mxu0 %v5067
    %6712 = vmatpush1.bf16.msra.mxu0 %v5066
    %6713 = vmatprep.subr.bf16.mxu0 %v5071
    %6714 = vmatpush1.bf16.msra.mxu0 %v5070
    %6715 = vmatprep.subr.bf16.mxu0 %v5075
    %6716 = vmatpush1.bf16.msra.mxu0 %v5074
    %6717 = vmatprep.subr.bf16.mxu0 %v5079
    %6718 = vmatpush1.bf16.msra.mxu0 %v5078
    %6719 = vmatprep.mubr.bf16.mxu0 %v3657
    %6720 = vmatmul.mubr.bf16.gmra.mrb[0].mxu0 %v3656
    %v6721 = vpop.f32.mrb[0].mxu0
    %v6722 = vadd.f32 %v6529, %v6721
    %v6723 = vpop.f32.mrb[0].mxu0
    %v6724 = vadd.f32 %v6531, %v6723
    %v6725 = vpop.f32.mrb[0].mxu0
    %v6726 = vadd.f32 %v6533, %v6725
    %v6727 = vpop.f32.mrb[0].mxu0
    %v6728 = vadd.f32 %v6535, %v6727
    %6729 = vmatprep.mubr.bf16.mxu0 %v3665
    %6730 = vmatmul.mubr.bf16.gmra.mrb[0].mxu0 %v3664
    %v6731 = vpop.f32.mrb[0].mxu0
    %v6732 = vadd.f32 %v6539, %v6731
    %v6733 = vpop.f32.mrb[0].mxu0
    %v6734 = vadd.f32 %v6541, %v6733
    %v6735 = vpop.f32.mrb[0].mxu0
    %v6736 = vadd.f32 %v6543, %v6735
    %v6737 = vpop.f32.mrb[0].mxu0
    %v6738 = vadd.f32 %v6545, %v6737
    %6739 = vmatprep.mubr.bf16.mxu0 %v3673
    %6740 = vmatmul.mubr.bf16.gmra.mrb[0].mxu0 %v3672
    %v6741 = vpop.f32.mrb[0].mxu0
    %v6742 = vadd.f32 %v6549, %v6741
    %v6743 = vpop.f32.mrb[0].mxu0
    %v6744 = vadd.f32 %v6551, %v6743
    %v6745 = vpop.f32.mrb[0].mxu0
    %v6746 = vadd.f32 %v6553, %v6745
    %v6747 = vpop.f32.mrb[0].mxu0
    %v6748 = vadd.f32 %v6555, %v6747
    %6749 = vmatprep.mubr.bf16.mxu0 %v3681
    %6750 = vmatmul.mubr.bf16.gmra.mrb[0].mxu0 %v3680
    %v6751 = vpop.f32.mrb[0].mxu0
    %v6752 = vadd.f32 %v6559, %v6751
    %v6753 = vpop.f32.mrb[0].mxu0
    %v6754 = vadd.f32 %v6561, %v6753
    %v6755 = vpop.f32.mrb[0].mxu0
    %v6756 = vadd.f32 %v6563, %v6755
    %v6757 = vpop.f32.mrb[0].mxu0
    %v6758 = vadd.f32 %v6565, %v6757
    %6759 = vmatprep.mubr.bf16.mxu0 %v3689
    %6760 = vmatmul.mubr.bf16.gmra.mrb[0].mxu0 %v3688
    %v6761 = vpop.f32.mrb[0].mxu0
    %v6762 = vadd.f32 %v6569, %v6761
    %v6763 = vpop.f32.mrb[0].mxu0
    %v6764 = vadd.f32 %v6571, %v6763
    %v6765 = vpop.f32.mrb[0].mxu0
    %v6766 = vadd.f32 %v6573, %v6765
    %v6767 = vpop.f32.mrb[0].mxu0
    %v6768 = vadd.f32 %v6575, %v6767
    %6769 = vmatprep.mubr.bf16.mxu0 %v3697
    %6770 = vmatmul.mubr.bf16.gmra.mrb[0].mxu0 %v3696
    %v6771 = vpop.f32.mrb[0].mxu0
    %v6772 = vadd.f32 %v6579, %v6771
    %v6773 = vpop.f32.mrb[0].mxu0
    %v6774 = vadd.f32 %v6581, %v6773
    %v6775 = vpop.f32.mrb[0].mxu0
    %v6776 = vadd.f32 %v6583, %v6775
    %v6777 = vpop.f32.mrb[0].mxu0
    %v6778 = vadd.f32 %v6585, %v6777
    %6779 = vmatprep.mubr.bf16.mxu0 %v3705
    %6780 = vmatmul.mubr.bf16.gmra.mrb[0].mxu0 %v3704
    %v6781 = vpop.f32.mrb[0].mxu0
    %v6782 = vadd.f32 %v6589, %v6781
    %v6783 = vpop.f32.mrb[0].mxu0
    %v6784 = vadd.f32 %v6591, %v6783
    %v6785 = vpop.f32.mrb[0].mxu0
    %v6786 = vadd.f32 %v6593, %v6785
    %v6787 = vpop.f32.mrb[0].mxu0
    %v6788 = vadd.f32 %v6595, %v6787
    %6789 = vmatprep.mubr.bf16.mxu0 %v3713
    %6790 = vmatmul.mubr.bf16.gmra.mrb[0].mxu0 %v3712
    %v6791 = vpop.f32.mrb[0].mxu0
    %v6792 = vadd.f32 %v6599, %v6791
    %v6793 = vpop.f32.mrb[0].mxu0
    %v6794 = vadd.f32 %v6601, %v6793
    %v6795 = vpop.f32.mrb[0].mxu0
    %v6796 = vadd.f32 %v6603, %v6795
    %v6797 = vpop.f32.mrb[0].mxu0
    %v6798 = vadd.f32 %v6605, %v6797
    %6799 = vmatprep.mubr.bf16.mxu0 %v3721
    %6800 = vmatmul.mubr.bf16.gmra.mrb[0].mxu0 %v3720
    %v6801 = vpop.f32.mrb[0].mxu0
    %v6802 = vadd.f32 %v6609, %v6801
    %v6803 = vpop.f32.mrb[0].mxu0
    %v6804 = vadd.f32 %v6611, %v6803
    %v6805 = vpop.f32.mrb[0].mxu0
    %v6806 = vadd.f32 %v6613, %v6805
    %v6807 = vpop.f32.mrb[0].mxu0
    %v6808 = vadd.f32 %v6615, %v6807
    %6809 = vmatprep.mubr.bf16.mxu0 %v3729
    %6810 = vmatmul.mubr.bf16.gmra.mrb[0].mxu0 %v3728
    %v6811 = vpop.f32.mrb[0].mxu0
    %v6812 = vadd.f32 %v6619, %v6811
    %v6813 = vpop.f32.mrb[0].mxu0
    %v6814 = vadd.f32 %v6621, %v6813
    %v6815 = vpop.f32.mrb[0].mxu0
    %v6816 = vadd.f32 %v6623, %v6815
    %v6817 = vpop.f32.mrb[0].mxu0
    %v6818 = vadd.f32 %v6625, %v6817
    %6819 = vmatprep.mubr.bf16.mxu0 %v3737
    %6820 = vmatmul.mubr.bf16.gmra.mrb[0].mxu0 %v3736
    %v6821 = vpop.f32.mrb[0].mxu0
    %v6822 = vadd.f32 %v6629, %v6821
    %v6823 = vpop.f32.mrb[0].mxu0
    %v6824 = vadd.f32 %v6631, %v6823
    %v6825 = vpop.f32.mrb[0].mxu0
    %v6826 = vadd.f32 %v6633, %v6825
    %v6827 = vpop.f32.mrb[0].mxu0
    %v6828 = vadd.f32 %v6635, %v6827
    %6829 = vmatprep.mubr.bf16.mxu0 %v3745
    %6830 = vmatmul.mubr.bf16.gmra.mrb[0].mxu0 %v3744
    %v6831 = vpop.f32.mrb[0].mxu0
    %v6832 = vadd.f32 %v6639, %v6831
    %v6833 = vpop.f32.mrb[0].mxu0
    %v6834 = vadd.f32 %v6641, %v6833
    %v6835 = vpop.f32.mrb[0].mxu0
    %v6836 = vadd.f32 %v6643, %v6835
    %v6837 = vpop.f32.mrb[0].mxu0
    %v6838 = vadd.f32 %v6645, %v6837
    %6839 = vmatprep.mubr.bf16.mxu0 %v3753
    %6840 = vmatmul.mubr.bf16.gmra.mrb[0].mxu0 %v3752
    %v6841 = vpop.f32.mrb[0].mxu0
    %v6842 = vadd.f32 %v6649, %v6841
    %v6843 = vpop.f32.mrb[0].mxu0
    %v6844 = vadd.f32 %v6651, %v6843
    %v6845 = vpop.f32.mrb[0].mxu0
    %v6846 = vadd.f32 %v6653, %v6845
    %v6847 = vpop.f32.mrb[0].mxu0
    %v6848 = vadd.f32 %v6655, %v6847
    %6849 = vmatprep.mubr.bf16.mxu0 %v3761
    %6850 = vmatmul.mubr.bf16.gmra.mrb[0].mxu0 %v3760
    %v6851 = vpop.f32.mrb[0].mxu0
    %v6852 = vadd.f32 %v6659, %v6851
    %v6853 = vpop.f32.mrb[0].mxu0
    %v6854 = vadd.f32 %v6661, %v6853
    %v6855 = vpop.f32.mrb[0].mxu0
    %v6856 = vadd.f32 %v6663, %v6855
    %v6857 = vpop.f32.mrb[0].mxu0
    %v6858 = vadd.f32 %v6665, %v6857
    %6859 = vmatprep.mubr.bf16.mxu0 %v3769
    %6860 = vmatmul.mubr.bf16.gmra.mrb[0].mxu0 %v3768
    %v6861 = vpop.f32.mrb[0].mxu0
    %v6862 = vadd.f32 %v6669, %v6861
    %v6863 = vpop.f32.mrb[0].mxu0
    %v6864 = vadd.f32 %v6671, %v6863
    %v6865 = vpop.f32.mrb[0].mxu0
    %v6866 = vadd.f32 %v6673, %v6865
    %v6867 = vpop.f32.mrb[0].mxu0
    %v6868 = vadd.f32 %v6675, %v6867
    %6869 = vmatprep.mubr.bf16.mxu0 %v3777
    %6870 = vmatmul.mubr.bf16.gmra.mrb[0].mxu0 %v3776
    %v6871 = vpop.f32.mrb[0].mxu0
    %v6872 = vadd.f32 %v6679, %v6871
    %v6873 = vpop.f32.mrb[0].mxu0
    %v6874 = vadd.f32 %v6681, %v6873
    %v6875 = vpop.f32.mrb[0].mxu0
    %v6876 = vadd.f32 %v6683, %v6875
    %v6877 = vpop.f32.mrb[0].mxu0
    %v6878 = vadd.f32 %v6685, %v6877
    %6879 = vdwg.mxu0
    %v6880 = vadd.f32 %v5950, %v80
    %v6881 = vadd.f32 %v5952, %v81
    %v6882 = vadd.f32 %v6722, %v82
    %v6883 = vadd.f32 %v6724, %v83
    %v6884 = vadd.f32 %v5954, %v84
    %v6885 = vadd.f32 %v5956, %v85
    %v6886 = vadd.f32 %v6726, %v86
    %v6887 = vadd.f32 %v6728, %v87
    %v6888 = vadd.f32 %v5960, %v88
    %v6889 = vadd.f32 %v5962, %v89
    %v6890 = vadd.f32 %v6732, %v90
    %v6891 = vadd.f32 %v6734, %v91
    %v6892 = vadd.f32 %v5964, %v92
    %v6893 = vadd.f32 %v5966, %v93
    %v6894 = vadd.f32 %v6736, %v94
    %v6895 = vadd.f32 %v6738, %v95
    %v6896 = vadd.f32 %v5970, %v96
    %v6897 = vadd.f32 %v5972, %v97
    %v6898 = vadd.f32 %v6742, %v98
    %v6899 = vadd.f32 %v6744, %v99
    %v6900 = vadd.f32 %v5974, %v100
    %v6901 = vadd.f32 %v5976, %v101
    %v6902 = vadd.f32 %v6746, %v102
    %v6903 = vadd.f32 %v6748, %v103
    %v6904 = vadd.f32 %v5980, %v104
    %v6905 = vadd.f32 %v5982, %v105
    %v6906 = vadd.f32 %v6752, %v106
    %v6907 = vadd.f32 %v6754, %v107
    %v6908 = vadd.f32 %v5984, %v108
    %v6909 = vadd.f32 %v5986, %v109
    %v6910 = vadd.f32 %v6756, %v110
    %v6911 = vadd.f32 %v6758, %v111
    %v6912 = vadd.f32 %v5990, %v112
    %v6913 = vadd.f32 %v5992, %v113
    %v6914 = vadd.f32 %v6762, %v114
    %v6915 = vadd.f32 %v6764, %v115
    %v6916 = vadd.f32 %v5994, %v116
    %v6917 = vadd.f32 %v5996, %v117
    %v6918 = vadd.f32 %v6766, %v118
    %v6919 = vadd.f32 %v6768, %v119
    %v6920 = vadd.f32 %v6000, %v120
    %v6921 = vadd.f32 %v6002, %v121
    %v6922 = vadd.f32 %v6772, %v122
    %v6923 = vadd.f32 %v6774, %v123
    %v6924 = vadd.f32 %v6004, %v124
    %v6925 = vadd.f32 %v6006, %v125
    %v6926 = vadd.f32 %v6776, %v126
    %v6927 = vadd.f32 %v6778, %v127
    %v6928 = vadd.f32 %v6010, %v128
    %v6929 = vadd.f32 %v6012, %v129
    %v6930 = vadd.f32 %v6782, %v130
    %v6931 = vadd.f32 %v6784, %v131
    %v6932 = vadd.f32 %v6014, %v132
    %v6933 = vadd.f32 %v6016, %v133
    %v6934 = vadd.f32 %v6786, %v134
    %v6935 = vadd.f32 %v6788, %v135
    %v6936 = vadd.f32 %v6020, %v136
    %v6937 = vadd.f32 %v6022, %v137
    %v6938 = vadd.f32 %v6792, %v138
    %v6939 = vadd.f32 %v6794, %v139
    %v6940 = vadd.f32 %v6024, %v140
    %v6941 = vadd.f32 %v6026, %v141
    %v6942 = vadd.f32 %v6796, %v142
    %v6943 = vadd.f32 %v6798, %v143
    %v6944 = vadd.f32 %v6030, %v144
    %v6945 = vadd.f32 %v6032, %v145
    %v6946 = vadd.f32 %v6802, %v146
    %v6947 = vadd.f32 %v6804, %v147
    %v6948 = vadd.f32 %v6034, %v148
    %v6949 = vadd.f32 %v6036, %v149
    %v6950 = vadd.f32 %v6806, %v150
    %v6951 = vadd.f32 %v6808, %v151
    %v6952 = vadd.f32 %v6040, %v152
    %v6953 = vadd.f32 %v6042, %v153
    %v6954 = vadd.f32 %v6812, %v154
    %v6955 = vadd.f32 %v6814, %v155
    %v6956 = vadd.f32 %v6044, %v156
    %v6957 = vadd.f32 %v6046, %v157
    %v6958 = vadd.f32 %v6816, %v158
    %v6959 = vadd.f32 %v6818, %v159
    %v6960 = vadd.f32 %v6050, %v160
    %v6961 = vadd.f32 %v6052, %v161
    %v6962 = vadd.f32 %v6822, %v162
    %v6963 = vadd.f32 %v6824, %v163
    %v6964 = vadd.f32 %v6054, %v164
    %v6965 = vadd.f32 %v6056, %v165
    %v6966 = vadd.f32 %v6826, %v166
    %v6967 = vadd.f32 %v6828, %v167
    %v6968 = vadd.f32 %v6060, %v168
    %v6969 = vadd.f32 %v6062, %v169
    %v6970 = vadd.f32 %v6832, %v170
    %v6971 = vadd.f32 %v6834, %v171
    %v6972 = vadd.f32 %v6064, %v172
    %v6973 = vadd.f32 %v6066, %v173
    %v6974 = vadd.f32 %v6836, %v174
    %v6975 = vadd.f32 %v6838, %v175
    %v6976 = vadd.f32 %v6070, %v176
    %v6977 = vadd.f32 %v6072, %v177
    %v6978 = vadd.f32 %v6842, %v178
    %v6979 = vadd.f32 %v6844, %v179
    %v6980 = vadd.f32 %v6074, %v180
    %v6981 = vadd.f32 %v6076, %v181
    %v6982 = vadd.f32 %v6846, %v182
    %v6983 = vadd.f32 %v6848, %v183
    %v6984 = vadd.f32 %v6080, %v184
    %v6985 = vadd.f32 %v6082, %v185
    %v6986 = vadd.f32 %v6852, %v186
    %v6987 = vadd.f32 %v6854, %v187
    %v6988 = vadd.f32 %v6084, %v188
    %v6989 = vadd.f32 %v6086, %v189
    %v6990 = vadd.f32 %v6856, %v190
    %v6991 = vadd.f32 %v6858, %v191
    %v6992 = vadd.f32 %v6090, %v192
    %v6993 = vadd.f32 %v6092, %v193
    %v6994 = vadd.f32 %v6862, %v194
    %v6995 = vadd.f32 %v6864, %v195
    %v6996 = vadd.f32 %v6094, %v196
    %v6997 = vadd.f32 %v6096, %v197
    %v6998 = vadd.f32 %v6866, %v198
    %v6999 = vadd.f32 %v6868, %v199
    %v7000 = vadd.f32 %v6100, %v200
    %v7001 = vadd.f32 %v6102, %v201
    %v7002 = vadd.f32 %v6872, %v202
    %v7003 = vadd.f32 %v6874, %v203
    %v7004 = vadd.f32 %v6104, %v204
    %v7005 = vadd.f32 %v6106, %v205
    %v7006 = vadd.f32 %v6876, %v206
    %v7007 = vadd.f32 %v6878, %v207
    %v7008 = vadd.f32 %v6880, %v6881
    %v7009 = vadd.f32 %v7008, %v6882
    %v7010 = vadd.f32 %v7009, %v6883
    %7011 = vadd.xlane.f32.xlu0 %v7010
    %v7012 = vpop.xlane.xlu0 %7011
    %v7013 = vadd.f32 %v6884, %v6885
    %v7014 = vadd.f32 %v7013, %v6886
    %v7015 = vadd.f32 %v7014, %v6887
    %7016 = vadd.xlane.f32.xlu0 %v7015
    %v7017 = vpop.xlane.xlu0 %7016
    %v7018 = vadd.f32 %v6888, %v6889
    %v7019 = vadd.f32 %v7018, %v6890
    %v7020 = vadd.f32 %v7019, %v6891
    %7021 = vadd.xlane.f32.xlu0 %v7020
    %v7022 = vpop.xlane.xlu0 %7021
    %v7023 = vadd.f32 %v6892, %v6893
    %v7024 = vadd.f32 %v7023, %v6894
    %v7025 = vadd.f32 %v7024, %v6895
    %7026 = vadd.xlane.f32.xlu0 %v7025
    %v7027 = vpop.xlane.xlu0 %7026
    %v7028 = vadd.f32 %v6896, %v6897
    %v7029 = vadd.f32 %v7028, %v6898
    %v7030 = vadd.f32 %v7029, %v6899
    %7031 = vadd.xlane.f32.xlu0 %v7030
    %v7032 = vpop.xlane.xlu0 %7031
    %v7033 = vadd.f32 %v6900, %v6901
    %v7034 = vadd.f32 %v7033, %v6902
    %v7035 = vadd.f32 %v7034, %v6903
    %7036 = vadd.xlane.f32.xlu0 %v7035
    %v7037 = vpop.xlane.xlu0 %7036
    %v7038 = vadd.f32 %v6904, %v6905
    %v7039 = vadd.f32 %v7038, %v6906
    %v7040 = vadd.f32 %v7039, %v6907
    %7041 = vadd.xlane.f32.xlu0 %v7040
    %v7042 = vpop.xlane.xlu0 %7041
    %v7043 = vadd.f32 %v6908, %v6909
    %v7044 = vadd.f32 %v7043, %v6910
    %v7045 = vadd.f32 %v7044, %v6911
    %7046 = vadd.xlane.f32.xlu0 %v7045
    %v7047 = vpop.xlane.xlu0 %7046
    %v7048 = vadd.f32 %v6912, %v6913
    %v7049 = vadd.f32 %v7048, %v6914
    %v7050 = vadd.f32 %v7049, %v6915
    %7051 = vadd.xlane.f32.xlu0 %v7050
    %v7052 = vpop.xlane.xlu0 %7051
    %v7053 = vadd.f32 %v6916, %v6917
    %v7054 = vadd.f32 %v7053, %v6918
    %v7055 = vadd.f32 %v7054, %v6919
    %7056 = vadd.xlane.f32.xlu0 %v7055
    %v7057 = vpop.xlane.xlu0 %7056
    %v7058 = vadd.f32 %v6920, %v6921
    %v7059 = vadd.f32 %v7058, %v6922
    %v7060 = vadd.f32 %v7059, %v6923
    %7061 = vadd.xlane.f32.xlu0 %v7060
    %v7062 = vpop.xlane.xlu0 %7061
    %v7063 = vadd.f32 %v6924, %v6925
    %v7064 = vadd.f32 %v7063, %v6926
    %v7065 = vadd.f32 %v7064, %v6927
    %7066 = vadd.xlane.f32.xlu0 %v7065
    %v7067 = vpop.xlane.xlu0 %7066
    %v7068 = vadd.f32 %v6928, %v6929
    %v7069 = vadd.f32 %v7068, %v6930
    %v7070 = vadd.f32 %v7069, %v6931
    %7071 = vadd.xlane.f32.xlu0 %v7070
    %v7072 = vpop.xlane.xlu0 %7071
    %v7073 = vadd.f32 %v6932, %v6933
    %v7074 = vadd.f32 %v7073, %v6934
    %v7075 = vadd.f32 %v7074, %v6935
    %7076 = vadd.xlane.f32.xlu0 %v7075
    %v7077 = vpop.xlane.xlu0 %7076
    %v7078 = vadd.f32 %v6936, %v6937
    %v7079 = vadd.f32 %v7078, %v6938
    %v7080 = vadd.f32 %v7079, %v6939
    %7081 = vadd.xlane.f32.xlu0 %v7080
    %v7082 = vpop.xlane.xlu0 %7081
    %v7083 = vadd.f32 %v6940, %v6941
    %v7084 = vadd.f32 %v7083, %v6942
    %v7085 = vadd.f32 %v7084, %v6943
    %7086 = vadd.xlane.f32.xlu0 %v7085
    %v7087 = vpop.xlane.xlu0 %7086
    %v7088 = vadd.f32 %v6944, %v6945
    %v7089 = vadd.f32 %v7088, %v6946
    %v7090 = vadd.f32 %v7089, %v6947
    %7091 = vadd.xlane.f32.xlu0 %v7090
    %v7092 = vpop.xlane.xlu0 %7091
    %v7093 = vadd.f32 %v6948, %v6949
    %v7094 = vadd.f32 %v7093, %v6950
    %v7095 = vadd.f32 %v7094, %v6951
    %7096 = vadd.xlane.f32.xlu0 %v7095
    %v7097 = vpop.xlane.xlu0 %7096
    %v7098 = vadd.f32 %v6952, %v6953
    %v7099 = vadd.f32 %v7098, %v6954
    %v7100 = vadd.f32 %v7099, %v6955
    %7101 = vadd.xlane.f32.xlu0 %v7100
    %v7102 = vpop.xlane.xlu0 %7101
    %v7103 = vadd.f32 %v6956, %v6957
    %v7104 = vadd.f32 %v7103, %v6958
    %v7105 = vadd.f32 %v7104, %v6959
    %7106 = vadd.xlane.f32.xlu0 %v7105
    %v7107 = vpop.xlane.xlu0 %7106
    %v7108 = vadd.f32 %v6960, %v6961
    %v7109 = vadd.f32 %v7108, %v6962
    %v7110 = vadd.f32 %v7109, %v6963
    %7111 = vadd.xlane.f32.xlu0 %v7110
    %v7112 = vpop.xlane.xlu0 %7111
    %v7113 = vadd.f32 %v6964, %v6965
    %v7114 = vadd.f32 %v7113, %v6966
    %v7115 = vadd.f32 %v7114, %v6967
    %7116 = vadd.xlane.f32.xlu0 %v7115
    %v7117 = vpop.xlane.xlu0 %7116
    %v7118 = vadd.f32 %v6968, %v6969
    %v7119 = vadd.f32 %v7118, %v6970
    %v7120 = vadd.f32 %v7119, %v6971
    %7121 = vadd.xlane.f32.xlu0 %v7120
    %v7122 = vpop.xlane.xlu0 %7121
    %v7123 = vadd.f32 %v6972, %v6973
    %v7124 = vadd.f32 %v7123, %v6974
    %v7125 = vadd.f32 %v7124, %v6975
    %7126 = vadd.xlane.f32.xlu0 %v7125
    %v7127 = vpop.xlane.xlu0 %7126
    %v7128 = vadd.f32 %v6976, %v6977
    %v7129 = vadd.f32 %v7128, %v6978
    %v7130 = vadd.f32 %v7129, %v6979
    %7131 = vadd.xlane.f32.xlu0 %v7130
    %v7132 = vpop.xlane.xlu0 %7131
    %v7133 = vadd.f32 %v6980, %v6981
    %v7134 = vadd.f32 %v7133, %v6982
    %v7135 = vadd.f32 %v7134, %v6983
    %7136 = vadd.xlane.f32.xlu0 %v7135
    %v7137 = vpop.xlane.xlu0 %7136
    %v7138 = vadd.f32 %v6984, %v6985
    %v7139 = vadd.f32 %v7138, %v6986
    %v7140 = vadd.f32 %v7139, %v6987
    %7141 = vadd.xlane.f32.xlu0 %v7140
    %v7142 = vpop.xlane.xlu0 %7141
    %v7143 = vadd.f32 %v6988, %v6989
    %v7144 = vadd.f32 %v7143, %v6990
    %v7145 = vadd.f32 %v7144, %v6991
    %7146 = vadd.xlane.f32.xlu0 %v7145
    %v7147 = vpop.xlane.xlu0 %7146
    %v7148 = vadd.f32 %v6992, %v6993
    %v7149 = vadd.f32 %v7148, %v6994
    %v7150 = vadd.f32 %v7149, %v6995
    %7151 = vadd.xlane.f32.xlu0 %v7150
    %v7152 = vpop.xlane.xlu0 %7151
    %v7153 = vadd.f32 %v6996, %v6997
    %v7154 = vadd.f32 %v7153, %v6998
    %v7155 = vadd.f32 %v7154, %v6999
    %7156 = vadd.xlane.f32.xlu0 %v7155
    %v7157 = vpop.xlane.xlu0 %7156
    %v7158 = vadd.f32 %v7000, %v7001
    %v7159 = vadd.f32 %v7158, %v7002
    %v7160 = vadd.f32 %v7159, %v7003
    %7161 = vadd.xlane.f32.xlu0 %v7160
    %v7162 = vpop.xlane.xlu0 %7161
    %v7163 = vadd.f32 %v7004, %v7005
    %v7164 = vadd.f32 %v7163, %v7006
    %v7165 = vadd.f32 %v7164, %v7007
    %7166 = vadd.xlane.f32.xlu0 %v7165
    %v7167 = vpop.xlane.xlu0 %7166
    %v7168 = vmul.f32 %v7012, 0.001953125
    %v7169 = vmul.f32 %v7017, 0.001953125
    %v7170 = vmul.f32 %v7022, 0.001953125
    %v7171 = vmul.f32 %v7027, 0.001953125
    %v7172 = vmul.f32 %v7032, 0.001953125
    %v7173 = vmul.f32 %v7037, 0.001953125
    %v7174 = vmul.f32 %v7042, 0.001953125
    %v7175 = vmul.f32 %v7047, 0.001953125
    %v7176 = vmul.f32 %v7052, 0.001953125
    %v7177 = vmul.f32 %v7057, 0.001953125
    %v7178 = vmul.f32 %v7062, 0.001953125
    %v7179 = vmul.f32 %v7067, 0.001953125
    %v7180 = vmul.f32 %v7072, 0.001953125
    %v7181 = vmul.f32 %v7077, 0.001953125
    %v7182 = vmul.f32 %v7082, 0.001953125
    %v7183 = vmul.f32 %v7087, 0.001953125
    %v7184 = vmul.f32 %v7092, 0.001953125
    %v7185 = vmul.f32 %v7097, 0.001953125
    %v7186 = vmul.f32 %v7102, 0.001953125
    %v7187 = vmul.f32 %v7107, 0.001953125
    %v7188 = vmul.f32 %v7112, 0.001953125
    %v7189 = vmul.f32 %v7117, 0.001953125
    %v7190 = vmul.f32 %v7122, 0.001953125
    %v7191 = vmul.f32 %v7127, 0.001953125
    %v7192 = vmul.f32 %v7132, 0.001953125
    %v7193 = vmul.f32 %v7137, 0.001953125
    %v7194 = vmul.f32 %v7142, 0.001953125
    %v7195 = vmul.f32 %v7147, 0.001953125
    %v7196 = vmul.f32 %v7152, 0.001953125
    %v7197 = vmul.f32 %v7157, 0.001953125
    %v7198 = vmul.f32 %v7162, 0.001953125
    %v7199 = vmul.f32 %v7167, 0.001953125
    %v7200 = vmul.f32 %v6880, %v6880
    %v7201 = vmul.f32 %v6881, %v6881
    %v7202 = vmul.f32 %v6882, %v6882
    %v7203 = vmul.f32 %v6883, %v6883
    %v7204 = vmul.f32 %v6884, %v6884
    %v7205 = vmul.f32 %v6885, %v6885
    %v7206 = vmul.f32 %v6886, %v6886
    %v7207 = vmul.f32 %v6887, %v6887
    %v7208 = vmul.f32 %v6888, %v6888
    %v7209 = vmul.f32 %v6889, %v6889
    %v7210 = vmul.f32 %v6890, %v6890
    %v7211 = vmul.f32 %v6891, %v6891
    %v7212 = vmul.f32 %v6892, %v6892
    %v7213 = vmul.f32 %v6893, %v6893
    %v7214 = vmul.f32 %v6894, %v6894
    %v7215 = vmul.f32 %v6895, %v6895
    %v7216 = vmul.f32 %v6896, %v6896
    %v7217 = vmul.f32 %v6897, %v6897
    %v7218 = vmul.f32 %v6898, %v6898
    %v7219 = vmul.f32 %v6899, %v6899
    %v7220 = vmul.f32 %v6900, %v6900
    %v7221 = vmul.f32 %v6901, %v6901
    %v7222 = vmul.f32 %v6902, %v6902
    %v7223 = vmul.f32 %v6903, %v6903
    %v7224 = vmul.f32 %v6904, %v6904
    %v7225 = vmul.f32 %v6905, %v6905
    %v7226 = vmul.f32 %v6906, %v6906
    %v7227 = vmul.f32 %v6907, %v6907
    %v7228 = vmul.f32 %v6908, %v6908
    %v7229 = vmul.f32 %v6909, %v6909
    %v7230 = vmul.f32 %v6910, %v6910
    %v7231 = vmul.f32 %v6911, %v6911
    %v7232 = vmul.f32 %v6912, %v6912
    %v7233 = vmul.f32 %v6913, %v6913
    %v7234 = vmul.f32 %v6914, %v6914
    %v7235 = vmul.f32 %v6915, %v6915
    %v7236 = vmul.f32 %v6916, %v6916
    %v7237 = vmul.f32 %v6917, %v6917
    %v7238 = vmul.f32 %v6918, %v6918
    %v7239 = vmul.f32 %v6919, %v6919
    %v7240 = vmul.f32 %v6920, %v6920
    %v7241 = vmul.f32 %v6921, %v6921
    %v7242 = vmul.f32 %v6922, %v6922
    %v7243 = vmul.f32 %v6923, %v6923
    %v7244 = vmul.f32 %v6924, %v6924
    %v7245 = vmul.f32 %v6925, %v6925
    %v7246 = vmul.f32 %v6926, %v6926
    %v7247 = vmul.f32 %v6927, %v6927
    %v7248 = vmul.f32 %v6928, %v6928
    %v7249 = vmul.f32 %v6929, %v6929
    %v7250 = vmul.f32 %v6930, %v6930
    %v7251 = vmul.f32 %v6931, %v6931
    %v7252 = vmul.f32 %v6932, %v6932
    %v7253 = vmul.f32 %v6933, %v6933
    %v7254 = vmul.f32 %v6934, %v6934
    %v7255 = vmul.f32 %v6935, %v6935
    %v7256 = vmul.f32 %v6936, %v6936
    %v7257 = vmul.f32 %v6937, %v6937
    %v7258 = vmul.f32 %v6938, %v6938
    %v7259 = vmul.f32 %v6939, %v6939
    %v7260 = vmul.f32 %v6940, %v6940
    %v7261 = vmul.f32 %v6941, %v6941
    %v7262 = vmul.f32 %v6942, %v6942
    %v7263 = vmul.f32 %v6943, %v6943
    %v7264 = vmul.f32 %v6944, %v6944
    %v7265 = vmul.f32 %v6945, %v6945
    %v7266 = vmul.f32 %v6946, %v6946
    %v7267 = vmul.f32 %v6947, %v6947
    %v7268 = vmul.f32 %v6948, %v6948
    %v7269 = vmul.f32 %v6949, %v6949
    %v7270 = vmul.f32 %v6950, %v6950
    %v7271 = vmul.f32 %v6951, %v6951
    %v7272 = vmul.f32 %v6952, %v6952
    %v7273 = vmul.f32 %v6953, %v6953
    %v7274 = vmul.f32 %v6954, %v6954
    %v7275 = vmul.f32 %v6955, %v6955
    %v7276 = vmul.f32 %v6956, %v6956
    %v7277 = vmul.f32 %v6957, %v6957
    %v7278 = vmul.f32 %v6958, %v6958
    %v7279 = vmul.f32 %v6959, %v6959
    %v7280 = vmul.f32 %v6960, %v6960
    %v7281 = vmul.f32 %v6961, %v6961
    %v7282 = vmul.f32 %v6962, %v6962
    %v7283 = vmul.f32 %v6963, %v6963
    %v7284 = vmul.f32 %v6964, %v6964
    %v7285 = vmul.f32 %v6965, %v6965
    %v7286 = vmul.f32 %v6966, %v6966
    %v7287 = vmul.f32 %v6967, %v6967
    %v7288 = vmul.f32 %v6968, %v6968
    %v7289 = vmul.f32 %v6969, %v6969
    %v7290 = vmul.f32 %v6970, %v6970
    %v7291 = vmul.f32 %v6971, %v6971
    %v7292 = vmul.f32 %v6972, %v6972
    %v7293 = vmul.f32 %v6973, %v6973
    %v7294 = vmul.f32 %v6974, %v6974
    %v7295 = vmul.f32 %v6975, %v6975
    %v7296 = vmul.f32 %v6976, %v6976
    %v7297 = vmul.f32 %v6977, %v6977
    %v7298 = vmul.f32 %v6978, %v6978
    %v7299 = vmul.f32 %v6979, %v6979
    %v7300 = vmul.f32 %v6980, %v6980
    %v7301 = vmul.f32 %v6981, %v6981
    %v7302 = vmul.f32 %v6982, %v6982
    %v7303 = vmul.f32 %v6983, %v6983
    %v7304 = vmul.f32 %v6984, %v6984
    %v7305 = vmul.f32 %v6985, %v6985
    %v7306 = vmul.f32 %v6986, %v6986
    %v7307 = vmul.f32 %v6987, %v6987
    %v7308 = vmul.f32 %v6988, %v6988
    %v7309 = vmul.f32 %v6989, %v6989
    %v7310 = vmul.f32 %v6990, %v6990
    %v7311 = vmul.f32 %v6991, %v6991
    %v7312 = vmul.f32 %v6992, %v6992
    %v7313 = vmul.f32 %v6993, %v6993
    %v7314 = vmul.f32 %v6994, %v6994
    %v7315 = vmul.f32 %v6995, %v6995
    %v7316 = vmul.f32 %v6996, %v6996
    %v7317 = vmul.f32 %v6997, %v6997
    %v7318 = vmul.f32 %v6998, %v6998
    %v7319 = vmul.f32 %v6999, %v6999
    %v7320 = vmul.f32 %v7000, %v7000
    %v7321 = vmul.f32 %v7001, %v7001
    %v7322 = vmul.f32 %v7002, %v7002
    %v7323 = vmul.f32 %v7003, %v7003
    %v7324 = vmul.f32 %v7004, %v7004
    %v7325 = vmul.f32 %v7005, %v7005
    %v7326 = vmul.f32 %v7006, %v7006
    %v7327 = vmul.f32 %v7007, %v7007
    %v7328 = vadd.f32 %v7200, %v7201
    %v7329 = vadd.f32 %v7328, %v7202
    %v7330 = vadd.f32 %v7329, %v7203
    %7331 = vadd.xlane.f32.xlu0 %v7330
    %v7332 = vpop.xlane.xlu0 %7331
    %v7333 = vadd.f32 %v7204, %v7205
    %v7334 = vadd.f32 %v7333, %v7206
    %v7335 = vadd.f32 %v7334, %v7207
    %7336 = vadd.xlane.f32.xlu0 %v7335
    %v7337 = vpop.xlane.xlu0 %7336
    %v7338 = vadd.f32 %v7208, %v7209
    %v7339 = vadd.f32 %v7338, %v7210
    %v7340 = vadd.f32 %v7339, %v7211
    %7341 = vadd.xlane.f32.xlu0 %v7340
    %v7342 = vpop.xlane.xlu0 %7341
    %v7343 = vadd.f32 %v7212, %v7213
    %v7344 = vadd.f32 %v7343, %v7214
    %v7345 = vadd.f32 %v7344, %v7215
    %7346 = vadd.xlane.f32.xlu0 %v7345
    %v7347 = vpop.xlane.xlu0 %7346
    %v7348 = vadd.f32 %v7216, %v7217
    %v7349 = vadd.f32 %v7348, %v7218
    %v7350 = vadd.f32 %v7349, %v7219
    %7351 = vadd.xlane.f32.xlu0 %v7350
    %v7352 = vpop.xlane.xlu0 %7351
    %v7353 = vadd.f32 %v7220, %v7221
    %v7354 = vadd.f32 %v7353, %v7222
    %v7355 = vadd.f32 %v7354, %v7223
    %7356 = vadd.xlane.f32.xlu0 %v7355
    %v7357 = vpop.xlane.xlu0 %7356
    %v7358 = vadd.f32 %v7224, %v7225
    %v7359 = vadd.f32 %v7358, %v7226
    %v7360 = vadd.f32 %v7359, %v7227
    %7361 = vadd.xlane.f32.xlu0 %v7360
    %v7362 = vpop.xlane.xlu0 %7361
    %v7363 = vadd.f32 %v7228, %v7229
    %v7364 = vadd.f32 %v7363, %v7230
    %v7365 = vadd.f32 %v7364, %v7231
    %7366 = vadd.xlane.f32.xlu0 %v7365
    %v7367 = vpop.xlane.xlu0 %7366
    %v7368 = vadd.f32 %v7232, %v7233
    %v7369 = vadd.f32 %v7368, %v7234
    %v7370 = vadd.f32 %v7369, %v7235
    %7371 = vadd.xlane.f32.xlu0 %v7370
    %v7372 = vpop.xlane.xlu0 %7371
    %v7373 = vadd.f32 %v7236, %v7237
    %v7374 = vadd.f32 %v7373, %v7238
    %v7375 = vadd.f32 %v7374, %v7239
    %7376 = vadd.xlane.f32.xlu0 %v7375
    %v7377 = vpop.xlane.xlu0 %7376
    %v7378 = vadd.f32 %v7240, %v7241
    %v7379 = vadd.f32 %v7378, %v7242
    %v7380 = vadd.f32 %v7379, %v7243
    %7381 = vadd.xlane.f32.xlu0 %v7380
    %v7382 = vpop.xlane.xlu0 %7381
    %v7383 = vadd.f32 %v7244, %v7245
    %v7384 = vadd.f32 %v7383, %v7246
    %v7385 = vadd.f32 %v7384, %v7247
    %7386 = vadd.xlane.f32.xlu0 %v7385
    %v7387 = vpop.xlane.xlu0 %7386
    %v7388 = vadd.f32 %v7248, %v7249
    %v7389 = vadd.f32 %v7388, %v7250
    %v7390 = vadd.f32 %v7389, %v7251
    %7391 = vadd.xlane.f32.xlu0 %v7390
    %v7392 = vpop.xlane.xlu0 %7391
    %v7393 = vadd.f32 %v7252, %v7253
    %v7394 = vadd.f32 %v7393, %v7254
    %v7395 = vadd.f32 %v7394, %v7255
    %7396 = vadd.xlane.f32.xlu0 %v7395
    %v7397 = vpop.xlane.xlu0 %7396
    %v7398 = vadd.f32 %v7256, %v7257
    %v7399 = vadd.f32 %v7398, %v7258
    %v7400 = vadd.f32 %v7399, %v7259
    %7401 = vadd.xlane.f32.xlu0 %v7400
    %v7402 = vpop.xlane.xlu0 %7401
    %v7403 = vadd.f32 %v7260, %v7261
    %v7404 = vadd.f32 %v7403, %v7262
    %v7405 = vadd.f32 %v7404, %v7263
    %7406 = vadd.xlane.f32.xlu0 %v7405
    %v7407 = vpop.xlane.xlu0 %7406
    %v7408 = vadd.f32 %v7264, %v7265
    %v7409 = vadd.f32 %v7408, %v7266
    %v7410 = vadd.f32 %v7409, %v7267
    %7411 = vadd.xlane.f32.xlu0 %v7410
    %v7412 = vpop.xlane.xlu0 %7411
    %v7413 = vadd.f32 %v7268, %v7269
    %v7414 = vadd.f32 %v7413, %v7270
    %v7415 = vadd.f32 %v7414, %v7271
    %7416 = vadd.xlane.f32.xlu0 %v7415
    %v7417 = vpop.xlane.xlu0 %7416
    %v7418 = vadd.f32 %v7272, %v7273
    %v7419 = vadd.f32 %v7418, %v7274
    %v7420 = vadd.f32 %v7419, %v7275
    %7421 = vadd.xlane.f32.xlu0 %v7420
    %v7422 = vpop.xlane.xlu0 %7421
    %v7423 = vadd.f32 %v7276, %v7277
    %v7424 = vadd.f32 %v7423, %v7278
    %v7425 = vadd.f32 %v7424, %v7279
    %7426 = vadd.xlane.f32.xlu0 %v7425
    %v7427 = vpop.xlane.xlu0 %7426
    %v7428 = vadd.f32 %v7280, %v7281
    %v7429 = vadd.f32 %v7428, %v7282
    %v7430 = vadd.f32 %v7429, %v7283
    %7431 = vadd.xlane.f32.xlu0 %v7430
    %v7432 = vpop.xlane.xlu0 %7431
    %v7433 = vadd.f32 %v7284, %v7285
    %v7434 = vadd.f32 %v7433, %v7286
    %v7435 = vadd.f32 %v7434, %v7287
    %7436 = vadd.xlane.f32.xlu0 %v7435
    %v7437 = vpop.xlane.xlu0 %7436
    %v7438 = vadd.f32 %v7288, %v7289
    %v7439 = vadd.f32 %v7438, %v7290
    %v7440 = vadd.f32 %v7439, %v7291
    %7441 = vadd.xlane.f32.xlu0 %v7440
    %v7442 = vpop.xlane.xlu0 %7441
    %v7443 = vadd.f32 %v7292, %v7293
    %v7444 = vadd.f32 %v7443, %v7294
    %v7445 = vadd.f32 %v7444, %v7295
    %7446 = vadd.xlane.f32.xlu0 %v7445
    %v7447 = vpop.xlane.xlu0 %7446
    %v7448 = vadd.f32 %v7296, %v7297
    %v7449 = vadd.f32 %v7448, %v7298
    %v7450 = vadd.f32 %v7449, %v7299
    %7451 = vadd.xlane.f32.xlu0 %v7450
    %v7452 = vpop.xlane.xlu0 %7451
    %v7453 = vadd.f32 %v7300, %v7301
    %v7454 = vadd.f32 %v7453, %v7302
    %v7455 = vadd.f32 %v7454, %v7303
    %7456 = vadd.xlane.f32.xlu0 %v7455
    %v7457 = vpop.xlane.xlu0 %7456
    %v7458 = vadd.f32 %v7304, %v7305
    %v7459 = vadd.f32 %v7458, %v7306
    %v7460 = vadd.f32 %v7459, %v7307
    %7461 = vadd.xlane.f32.xlu0 %v7460
    %v7462 = vpop.xlane.xlu0 %7461
    %v7463 = vadd.f32 %v7308, %v7309
    %v7464 = vadd.f32 %v7463, %v7310
    %v7465 = vadd.f32 %v7464, %v7311
    %7466 = vadd.xlane.f32.xlu0 %v7465
    %v7467 = vpop.xlane.xlu0 %7466
    %v7468 = vadd.f32 %v7312, %v7313
    %v7469 = vadd.f32 %v7468, %v7314
    %v7470 = vadd.f32 %v7469, %v7315
    %7471 = vadd.xlane.f32.xlu0 %v7470
    %v7472 = vpop.xlane.xlu0 %7471
    %v7473 = vadd.f32 %v7316, %v7317
    %v7474 = vadd.f32 %v7473, %v7318
    %v7475 = vadd.f32 %v7474, %v7319
    %7476 = vadd.xlane.f32.xlu0 %v7475
    %v7477 = vpop.xlane.xlu0 %7476
    %v7478 = vadd.f32 %v7320, %v7321
    %v7479 = vadd.f32 %v7478, %v7322
    %v7480 = vadd.f32 %v7479, %v7323
    %7481 = vadd.xlane.f32.xlu0 %v7480
    %v7482 = vpop.xlane.xlu0 %7481
    %v7483 = vadd.f32 %v7324, %v7325
    %v7484 = vadd.f32 %v7483, %v7326
    %v7485 = vadd.f32 %v7484, %v7327
    %7486 = vadd.xlane.f32.xlu0 %v7485
    %v7487 = vpop.xlane.xlu0 %7486
    %v7488 = vmul.f32 %v7332, 0.001953125
    %v7489 = vmul.f32 %v7337, 0.001953125
    %v7490 = vmul.f32 %v7342, 0.001953125
    %v7491 = vmul.f32 %v7347, 0.001953125
    %v7492 = vmul.f32 %v7352, 0.001953125
    %v7493 = vmul.f32 %v7357, 0.001953125
    %v7494 = vmul.f32 %v7362, 0.001953125
    %v7495 = vmul.f32 %v7367, 0.001953125
    %v7496 = vmul.f32 %v7372, 0.001953125
    %v7497 = vmul.f32 %v7377, 0.001953125
    %v7498 = vmul.f32 %v7382, 0.001953125
    %v7499 = vmul.f32 %v7387, 0.001953125
    %v7500 = vmul.f32 %v7392, 0.001953125
    %v7501 = vmul.f32 %v7397, 0.001953125
    %v7502 = vmul.f32 %v7402, 0.001953125
    %v7503 = vmul.f32 %v7407, 0.001953125
    %v7504 = vmul.f32 %v7412, 0.001953125
    %v7505 = vmul.f32 %v7417, 0.001953125
    %v7506 = vmul.f32 %v7422, 0.001953125
    %v7507 = vmul.f32 %v7427, 0.001953125
    %v7508 = vmul.f32 %v7432, 0.001953125
    %v7509 = vmul.f32 %v7437, 0.001953125
    %v7510 = vmul.f32 %v7442, 0.001953125
    %v7511 = vmul.f32 %v7447, 0.001953125
    %v7512 = vmul.f32 %v7452, 0.001953125
    %v7513 = vmul.f32 %v7457, 0.001953125
    %v7514 = vmul.f32 %v7462, 0.001953125
    %v7515 = vmul.f32 %v7467, 0.001953125
    %v7516 = vmul.f32 %v7472, 0.001953125
    %v7517 = vmul.f32 %v7477, 0.001953125
    %v7518 = vmul.f32 %v7482, 0.001953125
    %v7519 = vmul.f32 %v7487, 0.001953125
    %v7520 = vmul.f32 %v7168, %v7168
    %v7521 = vmul.f32 %v7169, %v7169
    %v7522 = vmul.f32 %v7170, %v7170
    %v7523 = vmul.f32 %v7171, %v7171
    %v7524 = vmul.f32 %v7172, %v7172
    %v7525 = vmul.f32 %v7173, %v7173
    %v7526 = vmul.f32 %v7174, %v7174
    %v7527 = vmul.f32 %v7175, %v7175
    %v7528 = vmul.f32 %v7176, %v7176
    %v7529 = vmul.f32 %v7177, %v7177
    %v7530 = vmul.f32 %v7178, %v7178
    %v7531 = vmul.f32 %v7179, %v7179
    %v7532 = vmul.f32 %v7180, %v7180
    %v7533 = vmul.f32 %v7181, %v7181
    %v7534 = vmul.f32 %v7182, %v7182
    %v7535 = vmul.f32 %v7183, %v7183
    %v7536 = vmul.f32 %v7184, %v7184
    %v7537 = vmul.f32 %v7185, %v7185
    %v7538 = vmul.f32 %v7186, %v7186
    %v7539 = vmul.f32 %v7187, %v7187
    %v7540 = vmul.f32 %v7188, %v7188
    %v7541 = vmul.f32 %v7189, %v7189
    %v7542 = vmul.f32 %v7190, %v7190
    %v7543 = vmul.f32 %v7191, %v7191
    %v7544 = vmul.f32 %v7192, %v7192
    %v7545 = vmul.f32 %v7193, %v7193
    %v7546 = vmul.f32 %v7194, %v7194
    %v7547 = vmul.f32 %v7195, %v7195
    %v7548 = vmul.f32 %v7196, %v7196
    %v7549 = vmul.f32 %v7197, %v7197
    %v7550 = vmul.f32 %v7198, %v7198
    %v7551 = vmul.f32 %v7199, %v7199
    %v7552 = vsub.f32 %v7488, %v7520
    %v7553 = vsub.f32 %v7489, %v7521
    %v7554 = vsub.f32 %v7490, %v7522
    %v7555 = vsub.f32 %v7491, %v7523
    %v7556 = vsub.f32 %v7492, %v7524
    %v7557 = vsub.f32 %v7493, %v7525
    %v7558 = vsub.f32 %v7494, %v7526
    %v7559 = vsub.f32 %v7495, %v7527
    %v7560 = vsub.f32 %v7496, %v7528
    %v7561 = vsub.f32 %v7497, %v7529
    %v7562 = vsub.f32 %v7498, %v7530
    %v7563 = vsub.f32 %v7499, %v7531
    %v7564 = vsub.f32 %v7500, %v7532
    %v7565 = vsub.f32 %v7501, %v7533
    %v7566 = vsub.f32 %v7502, %v7534
    %v7567 = vsub.f32 %v7503, %v7535
    %v7568 = vsub.f32 %v7504, %v7536
    %v7569 = vsub.f32 %v7505, %v7537
    %v7570 = vsub.f32 %v7506, %v7538
    %v7571 = vsub.f32 %v7507, %v7539
    %v7572 = vsub.f32 %v7508, %v7540
    %v7573 = vsub.f32 %v7509, %v7541
    %v7574 = vsub.f32 %v7510, %v7542
    %v7575 = vsub.f32 %v7511, %v7543
    %v7576 = vsub.f32 %v7512, %v7544
    %v7577 = vsub.f32 %v7513, %v7545
    %v7578 = vsub.f32 %v7514, %v7546
    %v7579 = vsub.f32 %v7515, %v7547
    %v7580 = vsub.f32 %v7516, %v7548
    %v7581 = vsub.f32 %v7517, %v7549
    %v7582 = vsub.f32 %v7518, %v7550
    %v7583 = vsub.f32 %v7519, %v7551
    %v7584 = vadd.f32 %v7552, 1e-05
    %v7585 = vadd.f32 %v7553, 1e-05
    %v7586 = vadd.f32 %v7554, 1e-05
    %v7587 = vadd.f32 %v7555, 1e-05
    %v7588 = vadd.f32 %v7556, 1e-05
    %v7589 = vadd.f32 %v7557, 1e-05
    %v7590 = vadd.f32 %v7558, 1e-05
    %v7591 = vadd.f32 %v7559, 1e-05
    %v7592 = vadd.f32 %v7560, 1e-05
    %v7593 = vadd.f32 %v7561, 1e-05
    %v7594 = vadd.f32 %v7562, 1e-05
    %v7595 = vadd.f32 %v7563, 1e-05
    %v7596 = vadd.f32 %v7564, 1e-05
    %v7597 = vadd.f32 %v7565, 1e-05
    %v7598 = vadd.f32 %v7566, 1e-05
    %v7599 = vadd.f32 %v7567, 1e-05
    %v7600 = vadd.f32 %v7568, 1e-05
    %v7601 = vadd.f32 %v7569, 1e-05
    %v7602 = vadd.f32 %v7570, 1e-05
    %v7603 = vadd.f32 %v7571, 1e-05
    %v7604 = vadd.f32 %v7572, 1e-05
    %v7605 = vadd.f32 %v7573, 1e-05
    %v7606 = vadd.f32 %v7574, 1e-05
    %v7607 = vadd.f32 %v7575, 1e-05
    %v7608 = vadd.f32 %v7576, 1e-05
    %v7609 = vadd.f32 %v7577, 1e-05
    %v7610 = vadd.f32 %v7578, 1e-05
    %v7611 = vadd.f32 %v7579, 1e-05
    %v7612 = vadd.f32 %v7580, 1e-05
    %v7613 = vadd.f32 %v7581, 1e-05
    %v7614 = vadd.f32 %v7582, 1e-05
    %v7615 = vadd.f32 %v7583, 1e-05
    %v7616 = vrsqrt.pop %v7584
    %v7617 = vrsqrt.pop %v7585
    %v7618 = vrsqrt.pop %v7586
    %v7619 = vrsqrt.pop %v7587
    %v7620 = vrsqrt.pop %v7588
    %v7621 = vrsqrt.pop %v7589
    %v7622 = vrsqrt.pop %v7590
    %v7623 = vrsqrt.pop %v7591
    %v7624 = vrsqrt.pop %v7592
    %v7625 = vrsqrt.pop %v7593
    %v7626 = vrsqrt.pop %v7594
    %v7627 = vrsqrt.pop %v7595
    %v7628 = vrsqrt.pop %v7596
    %v7629 = vrsqrt.pop %v7597
    %v7630 = vrsqrt.pop %v7598
    %v7631 = vrsqrt.pop %v7599
    %v7632 = vrsqrt.pop %v7600
    %v7633 = vrsqrt.pop %v7601
    %v7634 = vrsqrt.pop %v7602
    %v7635 = vrsqrt.pop %v7603
    %v7636 = vrsqrt.pop %v7604
    %v7637 = vrsqrt.pop %v7605
    %v7638 = vrsqrt.pop %v7606
    %v7639 = vrsqrt.pop %v7607
    %v7640 = vrsqrt.pop %v7608
    %v7641 = vrsqrt.pop %v7609
    %v7642 = vrsqrt.pop %v7610
    %v7643 = vrsqrt.pop %v7611
    %v7644 = vrsqrt.pop %v7612
    %v7645 = vrsqrt.pop %v7613
    %v7646 = vrsqrt.pop %v7614
    %v7647 = vrsqrt.pop %v7615
    %v7648 = vsub.f32 %v6880, %v7168
    %v7649 = vsub.f32 %v6881, %v7168
    %v7650 = vsub.f32 %v6882, %v7168
    %v7651 = vsub.f32 %v6883, %v7168
    %v7652 = vsub.f32 %v6884, %v7169
    %v7653 = vsub.f32 %v6885, %v7169
    %v7654 = vsub.f32 %v6886, %v7169
    %v7655 = vsub.f32 %v6887, %v7169
    %v7656 = vsub.f32 %v6888, %v7170
    %v7657 = vsub.f32 %v6889, %v7170
    %v7658 = vsub.f32 %v6890, %v7170
    %v7659 = vsub.f32 %v6891, %v7170
    %v7660 = vsub.f32 %v6892, %v7171
    %v7661 = vsub.f32 %v6893, %v7171
    %v7662 = vsub.f32 %v6894, %v7171
    %v7663 = vsub.f32 %v6895, %v7171
    %v7664 = vsub.f32 %v6896, %v7172
    %v7665 = vsub.f32 %v6897, %v7172
    %v7666 = vsub.f32 %v6898, %v7172
    %v7667 = vsub.f32 %v6899, %v7172
    %v7668 = vsub.f32 %v6900, %v7173
    %v7669 = vsub.f32 %v6901, %v7173
    %v7670 = vsub.f32 %v6902, %v7173
    %v7671 = vsub.f32 %v6903, %v7173
    %v7672 = vsub.f32 %v6904, %v7174
    %v7673 = vsub.f32 %v6905, %v7174
    %v7674 = vsub.f32 %v6906, %v7174
    %v7675 = vsub.f32 %v6907, %v7174
    %v7676 = vsub.f32 %v6908, %v7175
    %v7677 = vsub.f32 %v6909, %v7175
    %v7678 = vsub.f32 %v6910, %v7175
    %v7679 = vsub.f32 %v6911, %v7175
    %v7680 = vsub.f32 %v6912, %v7176
    %v7681 = vsub.f32 %v6913, %v7176
    %v7682 = vsub.f32 %v6914, %v7176
    %v7683 = vsub.f32 %v6915, %v7176
    %v7684 = vsub.f32 %v6916, %v7177
    %v7685 = vsub.f32 %v6917, %v7177
    %v7686 = vsub.f32 %v6918, %v7177
    %v7687 = vsub.f32 %v6919, %v7177
    %v7688 = vsub.f32 %v6920, %v7178
    %v7689 = vsub.f32 %v6921, %v7178
    %v7690 = vsub.f32 %v6922, %v7178
    %v7691 = vsub.f32 %v6923, %v7178
    %v7692 = vsub.f32 %v6924, %v7179
    %v7693 = vsub.f32 %v6925, %v7179
    %v7694 = vsub.f32 %v6926, %v7179
    %v7695 = vsub.f32 %v6927, %v7179
    %v7696 = vsub.f32 %v6928, %v7180
    %v7697 = vsub.f32 %v6929, %v7180
    %v7698 = vsub.f32 %v6930, %v7180
    %v7699 = vsub.f32 %v6931, %v7180
    %v7700 = vsub.f32 %v6932, %v7181
    %v7701 = vsub.f32 %v6933, %v7181
    %v7702 = vsub.f32 %v6934, %v7181
    %v7703 = vsub.f32 %v6935, %v7181
    %v7704 = vsub.f32 %v6936, %v7182
    %v7705 = vsub.f32 %v6937, %v7182
    %v7706 = vsub.f32 %v6938, %v7182
    %v7707 = vsub.f32 %v6939, %v7182
    %v7708 = vsub.f32 %v6940, %v7183
    %v7709 = vsub.f32 %v6941, %v7183
    %v7710 = vsub.f32 %v6942, %v7183
    %v7711 = vsub.f32 %v6943, %v7183
    %v7712 = vsub.f32 %v6944, %v7184
    %v7713 = vsub.f32 %v6945, %v7184
    %v7714 = vsub.f32 %v6946, %v7184
    %v7715 = vsub.f32 %v6947, %v7184
    %v7716 = vsub.f32 %v6948, %v7185
    %v7717 = vsub.f32 %v6949, %v7185
    %v7718 = vsub.f32 %v6950, %v7185
    %v7719 = vsub.f32 %v6951, %v7185
    %v7720 = vsub.f32 %v6952, %v7186
    %v7721 = vsub.f32 %v6953, %v7186
    %v7722 = vsub.f32 %v6954, %v7186
    %v7723 = vsub.f32 %v6955, %v7186
    %v7724 = vsub.f32 %v6956, %v7187
    %v7725 = vsub.f32 %v6957, %v7187
    %v7726 = vsub.f32 %v6958, %v7187
    %v7727 = vsub.f32 %v6959, %v7187
    %v7728 = vsub.f32 %v6960, %v7188
    %v7729 = vsub.f32 %v6961, %v7188
    %v7730 = vsub.f32 %v6962, %v7188
    %v7731 = vsub.f32 %v6963, %v7188
    %v7732 = vsub.f32 %v6964, %v7189
    %v7733 = vsub.f32 %v6965, %v7189
    %v7734 = vsub.f32 %v6966, %v7189
    %v7735 = vsub.f32 %v6967, %v7189
    %v7736 = vsub.f32 %v6968, %v7190
    %v7737 = vsub.f32 %v6969, %v7190
    %v7738 = vsub.f32 %v6970, %v7190
    %v7739 = vsub.f32 %v6971, %v7190
    %v7740 = vsub.f32 %v6972, %v7191
    %v7741 = vsub.f32 %v6973, %v7191
    %v7742 = vsub.f32 %v6974, %v7191
    %v7743 = vsub.f32 %v6975, %v7191
    %v7744 = vsub.f32 %v6976, %v7192
    %v7745 = vsub.f32 %v6977, %v7192
    %v7746 = vsub.f32 %v6978, %v7192
    %v7747 = vsub.f32 %v6979, %v7192
    %v7748 = vsub.f32 %v6980, %v7193
    %v7749 = vsub.f32 %v6981, %v7193
    %v7750 = vsub.f32 %v6982, %v7193
    %v7751 = vsub.f32 %v6983, %v7193
    %v7752 = vsub.f32 %v6984, %v7194
    %v7753 = vsub.f32 %v6985, %v7194
    %v7754 = vsub.f32 %v6986, %v7194
    %v7755 = vsub.f32 %v6987, %v7194
    %v7756 = vsub.f32 %v6988, %v7195
    %v7757 = vsub.f32 %v6989, %v7195
    %v7758 = vsub.f32 %v6990, %v7195
    %v7759 = vsub.f32 %v6991, %v7195
    %v7760 = vsub.f32 %v6992, %v7196
    %v7761 = vsub.f32 %v6993, %v7196
    %v7762 = vsub.f32 %v6994, %v7196
    %v7763 = vsub.f32 %v6995, %v7196
    %v7764 = vsub.f32 %v6996, %v7197
    %v7765 = vsub.f32 %v6997, %v7197
    %v7766 = vsub.f32 %v6998, %v7197
    %v7767 = vsub.f32 %v6999, %v7197
    %v7768 = vsub.f32 %v7000, %v7198
    %v7769 = vsub.f32 %v7001, %v7198
    %v7770 = vsub.f32 %v7002, %v7198
    %v7771 = vsub.f32 %v7003, %v7198
    %v7772 = vsub.f32 %v7004, %v7199
    %v7773 = vsub.f32 %v7005, %v7199
    %v7774 = vsub.f32 %v7006, %v7199
    %v7775 = vsub.f32 %v7007, %v7199
    %v7776 = vmul.f32 %v7648, %v7616
    %v7777 = vmul.f32 %v7649, %v7616
    %v7778 = vmul.f32 %v7650, %v7616
    %v7779 = vmul.f32 %v7651, %v7616
    %v7780 = vmul.f32 %v7652, %v7617
    %v7781 = vmul.f32 %v7653, %v7617
    %v7782 = vmul.f32 %v7654, %v7617
    %v7783 = vmul.f32 %v7655, %v7617
    %v7784 = vmul.f32 %v7656, %v7618
    %v7785 = vmul.f32 %v7657, %v7618
    %v7786 = vmul.f32 %v7658, %v7618
    %v7787 = vmul.f32 %v7659, %v7618
    %v7788 = vmul.f32 %v7660, %v7619
    %v7789 = vmul.f32 %v7661, %v7619
    %v7790 = vmul.f32 %v7662, %v7619
    %v7791 = vmul.f32 %v7663, %v7619
    %v7792 = vmul.f32 %v7664, %v7620
    %v7793 = vmul.f32 %v7665, %v7620
    %v7794 = vmul.f32 %v7666, %v7620
    %v7795 = vmul.f32 %v7667, %v7620
    %v7796 = vmul.f32 %v7668, %v7621
    %v7797 = vmul.f32 %v7669, %v7621
    %v7798 = vmul.f32 %v7670, %v7621
    %v7799 = vmul.f32 %v7671, %v7621
    %v7800 = vmul.f32 %v7672, %v7622
    %v7801 = vmul.f32 %v7673, %v7622
    %v7802 = vmul.f32 %v7674, %v7622
    %v7803 = vmul.f32 %v7675, %v7622
    %v7804 = vmul.f32 %v7676, %v7623
    %v7805 = vmul.f32 %v7677, %v7623
    %v7806 = vmul.f32 %v7678, %v7623
    %v7807 = vmul.f32 %v7679, %v7623
    %v7808 = vmul.f32 %v7680, %v7624
    %v7809 = vmul.f32 %v7681, %v7624
    %v7810 = vmul.f32 %v7682, %v7624
    %v7811 = vmul.f32 %v7683, %v7624
    %v7812 = vmul.f32 %v7684, %v7625
    %v7813 = vmul.f32 %v7685, %v7625
    %v7814 = vmul.f32 %v7686, %v7625
    %v7815 = vmul.f32 %v7687, %v7625
    %v7816 = vmul.f32 %v7688, %v7626
    %v7817 = vmul.f32 %v7689, %v7626
    %v7818 = vmul.f32 %v7690, %v7626
    %v7819 = vmul.f32 %v7691, %v7626
    %v7820 = vmul.f32 %v7692, %v7627
    %v7821 = vmul.f32 %v7693, %v7627
    %v7822 = vmul.f32 %v7694, %v7627
    %v7823 = vmul.f32 %v7695, %v7627
    %v7824 = vmul.f32 %v7696, %v7628
    %v7825 = vmul.f32 %v7697, %v7628
    %v7826 = vmul.f32 %v7698, %v7628
    %v7827 = vmul.f32 %v7699, %v7628
    %v7828 = vmul.f32 %v7700, %v7629
    %v7829 = vmul.f32 %v7701, %v7629
    %v7830 = vmul.f32 %v7702, %v7629
    %v7831 = vmul.f32 %v7703, %v7629
    %v7832 = vmul.f32 %v7704, %v7630
    %v7833 = vmul.f32 %v7705, %v7630
    %v7834 = vmul.f32 %v7706, %v7630
    %v7835 = vmul.f32 %v7707, %v7630
    %v7836 = vmul.f32 %v7708, %v7631
    %v7837 = vmul.f32 %v7709, %v7631
    %v7838 = vmul.f32 %v7710, %v7631
    %v7839 = vmul.f32 %v7711, %v7631
    %v7840 = vmul.f32 %v7712, %v7632
    %v7841 = vmul.f32 %v7713, %v7632
    %v7842 = vmul.f32 %v7714, %v7632
    %v7843 = vmul.f32 %v7715, %v7632
    %v7844 = vmul.f32 %v7716, %v7633
    %v7845 = vmul.f32 %v7717, %v7633
    %v7846 = vmul.f32 %v7718, %v7633
    %v7847 = vmul.f32 %v7719, %v7633
    %v7848 = vmul.f32 %v7720, %v7634
    %v7849 = vmul.f32 %v7721, %v7634
    %v7850 = vmul.f32 %v7722, %v7634
    %v7851 = vmul.f32 %v7723, %v7634
    %v7852 = vmul.f32 %v7724, %v7635
    %v7853 = vmul.f32 %v7725, %v7635
    %v7854 = vmul.f32 %v7726, %v7635
    %v7855 = vmul.f32 %v7727, %v7635
    %v7856 = vmul.f32 %v7728, %v7636
    %v7857 = vmul.f32 %v7729, %v7636
    %v7858 = vmul.f32 %v7730, %v7636
    %v7859 = vmul.f32 %v7731, %v7636
    %v7860 = vmul.f32 %v7732, %v7637
    %v7861 = vmul.f32 %v7733, %v7637
    %v7862 = vmul.f32 %v7734, %v7637
    %v7863 = vmul.f32 %v7735, %v7637
    %v7864 = vmul.f32 %v7736, %v7638
    %v7865 = vmul.f32 %v7737, %v7638
    %v7866 = vmul.f32 %v7738, %v7638
    %v7867 = vmul.f32 %v7739, %v7638
    %v7868 = vmul.f32 %v7740, %v7639
    %v7869 = vmul.f32 %v7741, %v7639
    %v7870 = vmul.f32 %v7742, %v7639
    %v7871 = vmul.f32 %v7743, %v7639
    %v7872 = vmul.f32 %v7744, %v7640
    %v7873 = vmul.f32 %v7745, %v7640
    %v7874 = vmul.f32 %v7746, %v7640
    %v7875 = vmul.f32 %v7747, %v7640
    %v7876 = vmul.f32 %v7748, %v7641
    %v7877 = vmul.f32 %v7749, %v7641
    %v7878 = vmul.f32 %v7750, %v7641
    %v7879 = vmul.f32 %v7751, %v7641
    %v7880 = vmul.f32 %v7752, %v7642
    %v7881 = vmul.f32 %v7753, %v7642
    %v7882 = vmul.f32 %v7754, %v7642
    %v7883 = vmul.f32 %v7755, %v7642
    %v7884 = vmul.f32 %v7756, %v7643
    %v7885 = vmul.f32 %v7757, %v7643
    %v7886 = vmul.f32 %v7758, %v7643
    %v7887 = vmul.f32 %v7759, %v7643
    %v7888 = vmul.f32 %v7760, %v7644
    %v7889 = vmul.f32 %v7761, %v7644
    %v7890 = vmul.f32 %v7762, %v7644
    %v7891 = vmul.f32 %v7763, %v7644
    %v7892 = vmul.f32 %v7764, %v7645
    %v7893 = vmul.f32 %v7765, %v7645
    %v7894 = vmul.f32 %v7766, %v7645
    %v7895 = vmul.f32 %v7767, %v7645
    %v7896 = vmul.f32 %v7768, %v7646
    %v7897 = vmul.f32 %v7769, %v7646
    %v7898 = vmul.f32 %v7770, %v7646
    %v7899 = vmul.f32 %v7771, %v7646
    %v7900 = vmul.f32 %v7772, %v7647
    %v7901 = vmul.f32 %v7773, %v7647
    %v7902 = vmul.f32 %v7774, %v7647
    %v7903 = vmul.f32 %v7775, %v7647
    %v7904 = vld [vmem:[%s5] sm:$0xf]
    %v7906 = vlaneseq
    %v7907 = vshrl.u32 %v7906, 7
    %v7908 = vsub.s32 0, %v7907
    %v7909 = vrot.slane %v7904, %v7908
    %v7910 = vlaneseq
    %v7911 = vshrl.u32 %v7910, 7
    %v7912 = vsub.s32 1, %v7911
    %v7913 = vrot.slane %v7904, %v7912
    %v7914 = vlaneseq
    %v7915 = vshrl.u32 %v7914, 7
    %v7916 = vsub.s32 2, %v7915
    %v7917 = vrot.slane %v7904, %v7916
    %v7918 = vlaneseq
    %v7919 = vshrl.u32 %v7918, 7
    %v7920 = vsub.s32 3, %v7919
    %v7921 = vrot.slane %v7904, %v7920
    %v7926 = vmul.f32 %v7776, %v7909
    %v7927 = vmul.f32 %v7777, %v7913
    %v7928 = vmul.f32 %v7778, %v7917
    %v7929 = vmul.f32 %v7779, %v7921
    %v7930 = vmul.f32 %v7780, %v7909
    %v7931 = vmul.f32 %v7781, %v7913
    %v7932 = vmul.f32 %v7782, %v7917
    %v7933 = vmul.f32 %v7783, %v7921
    %v7934 = vmul.f32 %v7784, %v7909
    %v7935 = vmul.f32 %v7785, %v7913
    %v7936 = vmul.f32 %v7786, %v7917
    %v7937 = vmul.f32 %v7787, %v7921
    %v7938 = vmul.f32 %v7788, %v7909
    %v7939 = vmul.f32 %v7789, %v7913
    %v7940 = vmul.f32 %v7790, %v7917
    %v7941 = vmul.f32 %v7791, %v7921
    %v7942 = vmul.f32 %v7792, %v7909
    %v7943 = vmul.f32 %v7793, %v7913
    %v7944 = vmul.f32 %v7794, %v7917
    %v7945 = vmul.f32 %v7795, %v7921
    %v7946 = vmul.f32 %v7796, %v7909
    %v7947 = vmul.f32 %v7797, %v7913
    %v7948 = vmul.f32 %v7798, %v7917
    %v7949 = vmul.f32 %v7799, %v7921
    %v7950 = vmul.f32 %v7800, %v7909
    %v7951 = vmul.f32 %v7801, %v7913
    %v7952 = vmul.f32 %v7802, %v7917
    %v7953 = vmul.f32 %v7803, %v7921
    %v7954 = vmul.f32 %v7804, %v7909
    %v7955 = vmul.f32 %v7805, %v7913
    %v7956 = vmul.f32 %v7806, %v7917
    %v7957 = vmul.f32 %v7807, %v7921
    %v7958 = vmul.f32 %v7808, %v7909
    %v7959 = vmul.f32 %v7809, %v7913
    %v7960 = vmul.f32 %v7810, %v7917
    %v7961 = vmul.f32 %v7811, %v7921
    %v7962 = vmul.f32 %v7812, %v7909
    %v7963 = vmul.f32 %v7813, %v7913
    %v7964 = vmul.f32 %v7814, %v7917
    %v7965 = vmul.f32 %v7815, %v7921
    %v7966 = vmul.f32 %v7816, %v7909
    %v7967 = vmul.f32 %v7817, %v7913
    %v7968 = vmul.f32 %v7818, %v7917
    %v7969 = vmul.f32 %v7819, %v7921
    %v7970 = vmul.f32 %v7820, %v7909
    %v7971 = vmul.f32 %v7821, %v7913
    %v7972 = vmul.f32 %v7822, %v7917
    %v7973 = vmul.f32 %v7823, %v7921
    %v7974 = vmul.f32 %v7824, %v7909
    %v7975 = vmul.f32 %v7825, %v7913
    %v7976 = vmul.f32 %v7826, %v7917
    %v7977 = vmul.f32 %v7827, %v7921
    %v7978 = vmul.f32 %v7828, %v7909
    %v7979 = vmul.f32 %v7829, %v7913
    %v7980 = vmul.f32 %v7830, %v7917
    %v7981 = vmul.f32 %v7831, %v7921
    %v7982 = vmul.f32 %v7832, %v7909
    %v7983 = vmul.f32 %v7833, %v7913
    %v7984 = vmul.f32 %v7834, %v7917
    %v7985 = vmul.f32 %v7835, %v7921
    %v7986 = vmul.f32 %v7836, %v7909
    %v7987 = vmul.f32 %v7837, %v7913
    %v7988 = vmul.f32 %v7838, %v7917
    %v7989 = vmul.f32 %v7839, %v7921
    %v7990 = vmul.f32 %v7840, %v7909
    %v7991 = vmul.f32 %v7841, %v7913
    %v7992 = vmul.f32 %v7842, %v7917
    %v7993 = vmul.f32 %v7843, %v7921
    %v7994 = vmul.f32 %v7844, %v7909
    %v7995 = vmul.f32 %v7845, %v7913
    %v7996 = vmul.f32 %v7846, %v7917
    %v7997 = vmul.f32 %v7847, %v7921
    %v7998 = vmul.f32 %v7848, %v7909
    %v7999 = vmul.f32 %v7849, %v7913
    %v8000 = vmul.f32 %v7850, %v7917
    %v8001 = vmul.f32 %v7851, %v7921
    %v8002 = vmul.f32 %v7852, %v7909
    %v8003 = vmul.f32 %v7853, %v7913
    %v8004 = vmul.f32 %v7854, %v7917
    %v8005 = vmul.f32 %v7855, %v7921
    %v8006 = vmul.f32 %v7856, %v7909
    %v8007 = vmul.f32 %v7857, %v7913
    %v8008 = vmul.f32 %v7858, %v7917
    %v8009 = vmul.f32 %v7859, %v7921
    %v8010 = vmul.f32 %v7860, %v7909
    %v8011 = vmul.f32 %v7861, %v7913
    %v8012 = vmul.f32 %v7862, %v7917
    %v8013 = vmul.f32 %v7863, %v7921
    %v8014 = vmul.f32 %v7864, %v7909
    %v8015 = vmul.f32 %v7865, %v7913
    %v8016 = vmul.f32 %v7866, %v7917
    %v8017 = vmul.f32 %v7867, %v7921
    %v8018 = vmul.f32 %v7868, %v7909
    %v8019 = vmul.f32 %v7869, %v7913
    %v8020 = vmul.f32 %v7870, %v7917
    %v8021 = vmul.f32 %v7871, %v7921
    %v8022 = vmul.f32 %v7872, %v7909
    %v8023 = vmul.f32 %v7873, %v7913
    %v8024 = vmul.f32 %v7874, %v7917
    %v8025 = vmul.f32 %v7875, %v7921
    %v8026 = vmul.f32 %v7876, %v7909
    %v8027 = vmul.f32 %v7877, %v7913
    %v8028 = vmul.f32 %v7878, %v7917
    %v8029 = vmul.f32 %v7879, %v7921
    %v8030 = vmul.f32 %v7880, %v7909
    %v8031 = vmul.f32 %v7881, %v7913
    %v8032 = vmul.f32 %v7882, %v7917
    %v8033 = vmul.f32 %v7883, %v7921
    %v8034 = vmul.f32 %v7884, %v7909
    %v8035 = vmul.f32 %v7885, %v7913
    %v8036 = vmul.f32 %v7886, %v7917
    %v8037 = vmul.f32 %v7887, %v7921
    %v8038 = vmul.f32 %v7888, %v7909
    %v8039 = vmul.f32 %v7889, %v7913
    %v8040 = vmul.f32 %v7890, %v7917
    %v8041 = vmul.f32 %v7891, %v7921
    %v8042 = vmul.f32 %v7892, %v7909
    %v8043 = vmul.f32 %v7893, %v7913
    %v8044 = vmul.f32 %v7894, %v7917
    %v8045 = vmul.f32 %v7895, %v7921
    %v8046 = vmul.f32 %v7896, %v7909
    %v8047 = vmul.f32 %v7897, %v7913
    %v8048 = vmul.f32 %v7898, %v7917
    %v8049 = vmul.f32 %v7899, %v7921
    %v8050 = vmul.f32 %v7900, %v7909
    %v8051 = vmul.f32 %v7901, %v7913
    %v8052 = vmul.f32 %v7902, %v7917
    %v8053 = vmul.f32 %v7903, %v7921
    %v8054 = vld [vmem:[%s6] sm:$0xf]
    %v8056 = vlaneseq
    %v8057 = vshrl.u32 %v8056, 7
    %v8058 = vsub.s32 0, %v8057
    %v8059 = vrot.slane %v8054, %v8058
    %v8060 = vlaneseq
    %v8061 = vshrl.u32 %v8060, 7
    %v8062 = vsub.s32 1, %v8061
    %v8063 = vrot.slane %v8054, %v8062
    %v8064 = vlaneseq
    %v8065 = vshrl.u32 %v8064, 7
    %v8066 = vsub.s32 2, %v8065
    %v8067 = vrot.slane %v8054, %v8066
    %v8068 = vlaneseq
    %v8069 = vshrl.u32 %v8068, 7
    %v8070 = vsub.s32 3, %v8069
    %v8071 = vrot.slane %v8054, %v8070
    %v8076 = vadd.f32 %v7926, %v8059
    %v8077 = vadd.f32 %v7927, %v8063
    %v8078 = vadd.f32 %v7928, %v8067
    %v8079 = vadd.f32 %v7929, %v8071
    %v8080 = vadd.f32 %v7930, %v8059
    %v8081 = vadd.f32 %v7931, %v8063
    %v8082 = vadd.f32 %v7932, %v8067
    %v8083 = vadd.f32 %v7933, %v8071
    %v8084 = vadd.f32 %v7934, %v8059
    %v8085 = vadd.f32 %v7935, %v8063
    %v8086 = vadd.f32 %v7936, %v8067
    %v8087 = vadd.f32 %v7937, %v8071
    %v8088 = vadd.f32 %v7938, %v8059
    %v8089 = vadd.f32 %v7939, %v8063
    %v8090 = vadd.f32 %v7940, %v8067
    %v8091 = vadd.f32 %v7941, %v8071
    %v8092 = vadd.f32 %v7942, %v8059
    %v8093 = vadd.f32 %v7943, %v8063
    %v8094 = vadd.f32 %v7944, %v8067
    %v8095 = vadd.f32 %v7945, %v8071
    %v8096 = vadd.f32 %v7946, %v8059
    %v8097 = vadd.f32 %v7947, %v8063
    %v8098 = vadd.f32 %v7948, %v8067
    %v8099 = vadd.f32 %v7949, %v8071
    %v8100 = vadd.f32 %v7950, %v8059
    %v8101 = vadd.f32 %v7951, %v8063
    %v8102 = vadd.f32 %v7952, %v8067
    %v8103 = vadd.f32 %v7953, %v8071
    %v8104 = vadd.f32 %v7954, %v8059
    %v8105 = vadd.f32 %v7955, %v8063
    %v8106 = vadd.f32 %v7956, %v8067
    %v8107 = vadd.f32 %v7957, %v8071
    %v8108 = vadd.f32 %v7958, %v8059
    %v8109 = vadd.f32 %v7959, %v8063
    %v8110 = vadd.f32 %v7960, %v8067
    %v8111 = vadd.f32 %v7961, %v8071
    %v8112 = vadd.f32 %v7962, %v8059
    %v8113 = vadd.f32 %v7963, %v8063
    %v8114 = vadd.f32 %v7964, %v8067
    %v8115 = vadd.f32 %v7965, %v8071
    %v8116 = vadd.f32 %v7966, %v8059
    %v8117 = vadd.f32 %v7967, %v8063
    %v8118 = vadd.f32 %v7968, %v8067
    %v8119 = vadd.f32 %v7969, %v8071
    %v8120 = vadd.f32 %v7970, %v8059
    %v8121 = vadd.f32 %v7971, %v8063
    %v8122 = vadd.f32 %v7972, %v8067
    %v8123 = vadd.f32 %v7973, %v8071
    %v8124 = vadd.f32 %v7974, %v8059
    %v8125 = vadd.f32 %v7975, %v8063
    %v8126 = vadd.f32 %v7976, %v8067
    %v8127 = vadd.f32 %v7977, %v8071
    %v8128 = vadd.f32 %v7978, %v8059
    %v8129 = vadd.f32 %v7979, %v8063
    %v8130 = vadd.f32 %v7980, %v8067
    %v8131 = vadd.f32 %v7981, %v8071
    %v8132 = vadd.f32 %v7982, %v8059
    %v8133 = vadd.f32 %v7983, %v8063
    %v8134 = vadd.f32 %v7984, %v8067
    %v8135 = vadd.f32 %v7985, %v8071
    %v8136 = vadd.f32 %v7986, %v8059
    %v8137 = vadd.f32 %v7987, %v8063
    %v8138 = vadd.f32 %v7988, %v8067
    %v8139 = vadd.f32 %v7989, %v8071
    %v8140 = vadd.f32 %v7990, %v8059
    %v8141 = vadd.f32 %v7991, %v8063
    %v8142 = vadd.f32 %v7992, %v8067
    %v8143 = vadd.f32 %v7993, %v8071
    %v8144 = vadd.f32 %v7994, %v8059
    %v8145 = vadd.f32 %v7995, %v8063
    %v8146 = vadd.f32 %v7996, %v8067
    %v8147 = vadd.f32 %v7997, %v8071
    %v8148 = vadd.f32 %v7998, %v8059
    %v8149 = vadd.f32 %v7999, %v8063
    %v8150 = vadd.f32 %v8000, %v8067
    %v8151 = vadd.f32 %v8001, %v8071
    %v8152 = vadd.f32 %v8002, %v8059
    %v8153 = vadd.f32 %v8003, %v8063
    %v8154 = vadd.f32 %v8004, %v8067
    %v8155 = vadd.f32 %v8005, %v8071
    %v8156 = vadd.f32 %v8006, %v8059
    %v8157 = vadd.f32 %v8007, %v8063
    %v8158 = vadd.f32 %v8008, %v8067
    %v8159 = vadd.f32 %v8009, %v8071
    %v8160 = vadd.f32 %v8010, %v8059
    %v8161 = vadd.f32 %v8011, %v8063
    %v8162 = vadd.f32 %v8012, %v8067
    %v8163 = vadd.f32 %v8013, %v8071
    %v8164 = vadd.f32 %v8014, %v8059
    %v8165 = vadd.f32 %v8015, %v8063
    %v8166 = vadd.f32 %v8016, %v8067
    %v8167 = vadd.f32 %v8017, %v8071
    %v8168 = vadd.f32 %v8018, %v8059
    %v8169 = vadd.f32 %v8019, %v8063
    %v8170 = vadd.f32 %v8020, %v8067
    %v8171 = vadd.f32 %v8021, %v8071
    %v8172 = vadd.f32 %v8022, %v8059
    %v8173 = vadd.f32 %v8023, %v8063
    %v8174 = vadd.f32 %v8024, %v8067
    %v8175 = vadd.f32 %v8025, %v8071
    %v8176 = vadd.f32 %v8026, %v8059
    %v8177 = vadd.f32 %v8027, %v8063
    %v8178 = vadd.f32 %v8028, %v8067
    %v8179 = vadd.f32 %v8029, %v8071
    %v8180 = vadd.f32 %v8030, %v8059
    %v8181 = vadd.f32 %v8031, %v8063
    %v8182 = vadd.f32 %v8032, %v8067
    %v8183 = vadd.f32 %v8033, %v8071
    %v8184 = vadd.f32 %v8034, %v8059
    %v8185 = vadd.f32 %v8035, %v8063
    %v8186 = vadd.f32 %v8036, %v8067
    %v8187 = vadd.f32 %v8037, %v8071
    %v8188 = vadd.f32 %v8038, %v8059
    %v8189 = vadd.f32 %v8039, %v8063
    %v8190 = vadd.f32 %v8040, %v8067
    %v8191 = vadd.f32 %v8041, %v8071
    %v8192 = vadd.f32 %v8042, %v8059
    %v8193 = vadd.f32 %v8043, %v8063
    %v8194 = vadd.f32 %v8044, %v8067
    %v8195 = vadd.f32 %v8045, %v8071
    %v8196 = vadd.f32 %v8046, %v8059
    %v8197 = vadd.f32 %v8047, %v8063
    %v8198 = vadd.f32 %v8048, %v8067
    %v8199 = vadd.f32 %v8049, %v8071
    %v8200 = vadd.f32 %v8050, %v8059
    %v8201 = vadd.f32 %v8051, %v8063
    %v8202 = vadd.f32 %v8052, %v8067
    %v8203 = vadd.f32 %v8053, %v8071
    %8204 = vst [vmem:[#allocation10] sm:$0xff] %v8076
    %8205 = vst [vmem:[#allocation10 + $0x8] sm:$0xff] %v8077
    %8206 = vst [vmem:[#allocation10 + $0x10] sm:$0xff] %v8078
    %8207 = vst [vmem:[#allocation10 + $0x18] sm:$0xff] %v8079
    %8208 = vst [vmem:[#allocation10 + $0x20] sm:$0xff] %v8080
    %8209 = vst [vmem:[#allocation10 + $0x28] sm:$0xff] %v8081
    %8210 = vst [vmem:[#allocation10 + $0x30] sm:$0xff] %v8082
    %8211 = vst [vmem:[#allocation10 + $0x38] sm:$0xff] %v8083
    %8212 = vst [vmem:[#allocation10 + $0x40] sm:$0xff] %v8084
    %8213 = vst [vmem:[#allocation10 + $0x48] sm:$0xff] %v8085
    %8214 = vst [vmem:[#allocation10 + $0x50] sm:$0xff] %v8086
    %8215 = vst [vmem:[#allocation10 + $0x58] sm:$0xff] %v8087
    %8216 = vst [vmem:[#allocation10 + $0x60] sm:$0xff] %v8088
    %8217 = vst [vmem:[#allocation10 + $0x68] sm:$0xff] %v8089
    %8218 = vst [vmem:[#allocation10 + $0x70] sm:$0xff] %v8090
    %8219 = vst [vmem:[#allocation10 + $0x78] sm:$0xff] %v8091
    %8220 = vst [vmem:[#allocation10 + $0x80] sm:$0xff] %v8092
    %8221 = vst [vmem:[#allocation10 + $0x88] sm:$0xff] %v8093
    %8222 = vst [vmem:[#allocation10 + $0x90] sm:$0xff] %v8094
    %8223 = vst [vmem:[#allocation10 + $0x98] sm:$0xff] %v8095
    %8224 = vst [vmem:[#allocation10 + $0xa0] sm:$0xff] %v8096
    %8225 = vst [vmem:[#allocation10 + $0xa8] sm:$0xff] %v8097
    %8226 = vst [vmem:[#allocation10 + $0xb0] sm:$0xff] %v8098
    %8227 = vst [vmem:[#allocation10 + $0xb8] sm:$0xff] %v8099
    %8228 = vst [vmem:[#allocation10 + $0xc0] sm:$0xff] %v8100
    %8229 = vst [vmem:[#allocation10 + $0xc8] sm:$0xff] %v8101
    %8230 = vst [vmem:[#allocation10 + $0xd0] sm:$0xff] %v8102
    %8231 = vst [vmem:[#allocation10 + $0xd8] sm:$0xff] %v8103
    %8232 = vst [vmem:[#allocation10 + $0xe0] sm:$0xff] %v8104
    %8233 = vst [vmem:[#allocation10 + $0xe8] sm:$0xff] %v8105
    %8234 = vst [vmem:[#allocation10 + $0xf0] sm:$0xff] %v8106
    %8235 = vst [vmem:[#allocation10 + $0xf8] sm:$0xff] %v8107
    %8236 = vst [vmem:[#allocation10 + $0x100] sm:$0xff] %v8108
    %8237 = vst [vmem:[#allocation10 + $0x108] sm:$0xff] %v8109
    %8238 = vst [vmem:[#allocation10 + $0x110] sm:$0xff] %v8110
    %8239 = vst [vmem:[#allocation10 + $0x118] sm:$0xff] %v8111
    %8240 = vst [vmem:[#allocation10 + $0x120] sm:$0xff] %v8112
    %8241 = vst [vmem:[#allocation10 + $0x128] sm:$0xff] %v8113
    %8242 = vst [vmem:[#allocation10 + $0x130] sm:$0xff] %v8114
    %8243 = vst [vmem:[#allocation10 + $0x138] sm:$0xff] %v8115
    %8244 = vst [vmem:[#allocation10 + $0x140] sm:$0xff] %v8116
    %8245 = vst [vmem:[#allocation10 + $0x148] sm:$0xff] %v8117
    %8246 = vst [vmem:[#allocation10 + $0x150] sm:$0xff] %v8118
    %8247 = vst [vmem:[#allocation10 + $0x158] sm:$0xff] %v8119
    %8248 = vst [vmem:[#allocation10 + $0x160] sm:$0xff] %v8120
    %8249 = vst [vmem:[#allocation10 + $0x168] sm:$0xff] %v8121
    %8250 = vst [vmem:[#allocation10 + $0x170] sm:$0xff] %v8122
    %8251 = vst [vmem:[#allocation10 + $0x178] sm:$0xff] %v8123
    %8252 = vst [vmem:[#allocation10 + $0x180] sm:$0xff] %v8124
    %8253 = vst [vmem:[#allocation10 + $0x188] sm:$0xff] %v8125
    %8254 = vst [vmem:[#allocation10 + $0x190] sm:$0xff] %v8126
    %8255 = vst [vmem:[#allocation10 + $0x198] sm:$0xff] %v8127
    %8256 = vst [vmem:[#allocation10 + $0x1a0] sm:$0xff] %v8128
    %8257 = vst [vmem:[#allocation10 + $0x1a8] sm:$0xff] %v8129
    %8258 = vst [vmem:[#allocation10 + $0x1b0] sm:$0xff] %v8130
    %8259 = vst [vmem:[#allocation10 + $0x1b8] sm:$0xff] %v8131
    %8260 = vst [vmem:[#allocation10 + $0x1c0] sm:$0xff] %v8132
    %8261 = vst [vmem:[#allocation10 + $0x1c8] sm:$0xff] %v8133
    %8262 = vst [vmem:[#allocation10 + $0x1d0] sm:$0xff] %v8134
    %8263 = vst [vmem:[#allocation10 + $0x1d8] sm:$0xff] %v8135
    %8264 = vst [vmem:[#allocation10 + $0x1e0] sm:$0xff] %v8136
    %8265 = vst [vmem:[#allocation10 + $0x1e8] sm:$0xff] %v8137
    %8266 = vst [vmem:[#allocation10 + $0x1f0] sm:$0xff] %v8138
    %8267 = vst [vmem:[#allocation10 + $0x1f8] sm:$0xff] %v8139
    %8268 = vst [vmem:[#allocation10 + $0x200] sm:$0xff] %v8140
    %8269 = vst [vmem:[#allocation10 + $0x208] sm:$0xff] %v8141
    %8270 = vst [vmem:[#allocation10 + $0x210] sm:$0xff] %v8142
    %8271 = vst [vmem:[#allocation10 + $0x218] sm:$0xff] %v8143
    %8272 = vst [vmem:[#allocation10 + $0x220] sm:$0xff] %v8144
    %8273 = vst [vmem:[#allocation10 + $0x228] sm:$0xff] %v8145
    %8274 = vst [vmem:[#allocation10 + $0x230] sm:$0xff] %v8146
    %8275 = vst [vmem:[#allocation10 + $0x238] sm:$0xff] %v8147
    %8276 = vst [vmem:[#allocation10 + $0x240] sm:$0xff] %v8148
    %8277 = vst [vmem:[#allocation10 + $0x248] sm:$0xff] %v8149
    %8278 = vst [vmem:[#allocation10 + $0x250] sm:$0xff] %v8150
    %8279 = vst [vmem:[#allocation10 + $0x258] sm:$0xff] %v8151
    %8280 = vst [vmem:[#allocation10 + $0x260] sm:$0xff] %v8152
    %8281 = vst [vmem:[#allocation10 + $0x268] sm:$0xff] %v8153
    %8282 = vst [vmem:[#allocation10 + $0x270] sm:$0xff] %v8154
    %8283 = vst [vmem:[#allocation10 + $0x278] sm:$0xff] %v8155
    %8284 = vst [vmem:[#allocation10 + $0x280] sm:$0xff] %v8156
    %8285 = vst [vmem:[#allocation10 + $0x288] sm:$0xff] %v8157
    %8286 = vst [vmem:[#allocation10 + $0x290] sm:$0xff] %v8158
    %8287 = vst [vmem:[#allocation10 + $0x298] sm:$0xff] %v8159
    %8288 = vst [vmem:[#allocation10 + $0x2a0] sm:$0xff] %v8160
    %8289 = vst [vmem:[#allocation10 + $0x2a8] sm:$0xff] %v8161
    %8290 = vst [vmem:[#allocation10 + $0x2b0] sm:$0xff] %v8162
    %8291 = vst [vmem:[#allocation10 + $0x2b8] sm:$0xff] %v8163
    %8292 = vst [vmem:[#allocation10 + $0x2c0] sm:$0xff] %v8164
    %8293 = vst [vmem:[#allocation10 + $0x2c8] sm:$0xff] %v8165
    %8294 = vst [vmem:[#allocation10 + $0x2d0] sm:$0xff] %v8166
    %8295 = vst [vmem:[#allocation10 + $0x2d8] sm:$0xff] %v8167
    %8296 = vst [vmem:[#allocation10 + $0x2e0] sm:$0xff] %v8168
    %8297 = vst [vmem:[#allocation10 + $0x2e8] sm:$0xff] %v8169
    %8298 = vst [vmem:[#allocation10 + $0x2f0] sm:$0xff] %v8170
    %8299 = vst [vmem:[#allocation10 + $0x2f8] sm:$0xff] %v8171
    %8300 = vst [vmem:[#allocation10 + $0x300] sm:$0xff] %v8172
    %8301 = vst [vmem:[#allocation10 + $0x308] sm:$0xff] %v8173
    %8302 = vst [vmem:[#allocation10 + $0x310] sm:$0xff] %v8174
    %8303 = vst [vmem:[#allocation10 + $0x318] sm:$0xff] %v8175
    %8304 = vst [vmem:[#allocation10 + $0x320] sm:$0xff] %v8176
    %8305 = vst [vmem:[#allocation10 + $0x328] sm:$0xff] %v8177
    %8306 = vst [vmem:[#allocation10 + $0x330] sm:$0xff] %v8178
    %8307 = vst [vmem:[#allocation10 + $0x338] sm:$0xff] %v8179
    %8308 = vst [vmem:[#allocation10 + $0x340] sm:$0xff] %v8180
    %8309 = vst [vmem:[#allocation10 + $0x348] sm:$0xff] %v8181
    %8310 = vst [vmem:[#allocation10 + $0x350] sm:$0xff] %v8182
    %8311 = vst [vmem:[#allocation10 + $0x358] sm:$0xff] %v8183
    %8312 = vst [vmem:[#allocation10 + $0x360] sm:$0xff] %v8184
    %8313 = vst [vmem:[#allocation10 + $0x368] sm:$0xff] %v8185
    %8314 = vst [vmem:[#allocation10 + $0x370] sm:$0xff] %v8186
    %8315 = vst [vmem:[#allocation10 + $0x378] sm:$0xff] %v8187
    %8316 = vst [vmem:[#allocation10 + $0x380] sm:$0xff] %v8188
    %8317 = vst [vmem:[#allocation10 + $0x388] sm:$0xff] %v8189
    %8318 = vst [vmem:[#allocation10 + $0x390] sm:$0xff] %v8190
    %8319 = vst [vmem:[#allocation10 + $0x398] sm:$0xff] %v8191
    %8320 = vst [vmem:[#allocation10 + $0x3a0] sm:$0xff] %v8192
    %8321 = vst [vmem:[#allocation10 + $0x3a8] sm:$0xff] %v8193
    %8322 = vst [vmem:[#allocation10 + $0x3b0] sm:$0xff] %v8194
    %8323 = vst [vmem:[#allocation10 + $0x3b8] sm:$0xff] %v8195
    %8324 = vst [vmem:[#allocation10 + $0x3c0] sm:$0xff] %v8196
    %8325 = vst [vmem:[#allocation10 + $0x3c8] sm:$0xff] %v8197
    %8326 = vst [vmem:[#allocation10 + $0x3d0] sm:$0xff] %v8198
    %8327 = vst [vmem:[#allocation10 + $0x3d8] sm:$0xff] %v8199
    %8328 = vst [vmem:[#allocation10 + $0x3e0] sm:$0xff] %v8200
    %8329 = vst [vmem:[#allocation10 + $0x3e8] sm:$0xff] %v8201
    %8330 = vst [vmem:[#allocation10 + $0x3f0] sm:$0xff] %v8202
    %8331 = vst [vmem:[#allocation10 + $0x3f8] sm:$0xff] %v8203
    // Predicated region
    $region46: #{tpu_custom_call.1} parent=1 // pred_check
      _
    $region47: #{tpu_custom_call.1} parent=1 // pred_check_branch
      %8333 = sbr.rel (0) target = $region49
    $region48: #{tpu_custom_call.1} parent=1 // pred_region
      %s8335 = ssub.s32 16384, 16384
      %8336 = vsyncadd [#allocation4], %s8335
      %s8337 = sshll.u32 [#allocation10], 4
      %s8338 = int_to_ptr.vmem [resolvable:$true] %s8337
      %8343 = dma.vmem_to_hbm [thread:$0]  %s8338, 16384, %s7, [#allocation4], 512, 512, 32
    $region49: #{tpu_custom_call.1} parent=1 // pred_fallthru
      _
    // Predicated region
    $region50: #{tpu_custom_call.1} parent=1 // pred_check
      _
    $region51: #{tpu_custom_call.1} parent=1 // pred_check_branch
      %8345 = sbr.rel (0) target = $region53
    $region52: #{tpu_custom_call.1} parent=1 // pred_region
      %8346 = dma.done [#allocation4], 16384
    $region53: #{tpu_custom_call.1} parent=1 // pred_fallthru
      _
    %8347 = vsyncpa [#allocation3], 1
    %8348 = vsyncpa [#allocation6], 1
    %8349 = vsyncpa [#allocation9], 1
    %8350 = vsyncpa [#allocation4], 1

</llo_original>
